<compile_context>
chip_gen: v7x
topology: tpu7x:2x2x1
jax: 0.10.0
libtpu: 0.0.40
codegen_flags: <defaults>
</compile_context>

<pallas_src>
import functools
import math

import jax
import jax.numpy as jnp
import numpy as np
from jax.experimental import pallas as pl
from jax.experimental.pallas import tpu as pltpu


def _erf(x):
    # Abramowitz & Stegun 7.1.26 rational approximation (max abs err ~1.5e-7).
    # Exact division here: the previous approx reciprocal cost ~1e-4 accuracy.
    a1, a2, a3, a4, a5 = 0.254829592, -0.284496736, 1.421413741, -1.453152027, 1.061405429
    p = 0.3275911
    s = jnp.where(x < 0.0, -1.0, 1.0)
    ax = jnp.abs(x)
    t = 1.0 / (1.0 + p * ax)
    poly = ((((a5 * t + a4) * t + a3) * t + a2) * t + a1) * t
    return s * (1.0 - poly * jnp.exp(-ax * ax))


def _gelu_exact(x):
    return 0.5 * x * (1.0 + _erf(x * np.float32(1.0 / math.sqrt(2.0))))


def mapreduce_kernel(x_ref, w1_ref, b1_ref, g_ref, bln_ref, w2_ref, b2_ref, o_ref,
                     *, wp, ns_pad):
    # x_ref  : (Bt, C, L_pad)   padded-flat images, row stride wp = W+2
    # w1_ref : (9, C, C)        3x3 conv weights, tap-major (dy, dx), each (out, in)
    # b1_ref : (C, 1)           3x3 conv bias
    # g_ref  : (C, 1)           LayerNorm_conv scale
    # bln_ref: (C, 1)           LayerNorm_conv shift
    # w2_ref : (8, C)           1x1 conv weights, zero-padded from 2 -> 8 rows
    # b2_ref : (8, 1)           1x1 conv bias, zero-padded
    # o_ref  : (Bt, 8, ns_pad)  lane-dense output in padded-flat coords
    eps = np.float32(1e-5)
    prec = jax.lax.Precision.HIGHEST

    for bt in range(x_ref.shape[0]):            # static unroll over folded batch
        xim = x_ref[bt]                         # (C, L_pad)

        # --- conv1: accumulate 9 per-tap MXU matmuls (no im2col concat). ----
        # Output flat index m = y*wp + x; tap (dy,dx) reads xflat[:, m + dy*wp + dx].
        acc = None
        for t in range(9):
            dy, dx = divmod(t, 3)
            start = dy * wp + dx
            part = jnp.dot(w1_ref[t], xim[:, start:start + ns_pad],
                           precision=prec, preferred_element_type=jnp.float32)
            acc = part if acc is None else acc + part
        acc = acc + b1_ref[...]                 # (C, ns_pad)

        # --- LayerNorm_conv over the channel (sublane) axis: (x-mean)/(std+eps) ---
        mean = jnp.mean(acc, axis=0, keepdims=True)
        xc = acc - mean
        var = jnp.mean(xc * xc, axis=0, keepdims=True)
        inv = 1.0 / (jnp.sqrt(var) + eps)       # exact divide (matches reference)
        y = xc * inv * g_ref[...] + bln_ref[...]

        # --- exact (erf-based) GELU --------------------------------------------
        y = _gelu_exact(y)

        # --- conv2: 1x1, C -> 8 (2 real + 6 zero rows), full-tile lane-dense store
        out = jnp.dot(w2_ref[...], y, precision=prec,
                      preferred_element_type=jnp.float32) + b2_ref[...]
        o_ref[bt] = out.astype(o_ref.dtype)


def _round_up(x, m):
    return ((x + m - 1) // m) * m


def _choose_batch_tile(batch, ns_pad):
    """Images folded per grid step: target >= ~1024 output lanes per step to
    amortize the ~600-cycle step overhead / MXU fill, while keeping grid >= 2
    so v7x can shard the "parallel" batch axis across its 2 TensorCores."""
    if batch < 2:
        return max(batch, 1)
    want = max(1, -(-1024 // ns_pad))           # ceil(1024 / ns_pad)
    bt = max(1, min(batch // 2, want))
    while batch % bt:                           # keep every block full
        bt -= 1
    return max(bt, 1)


def map_reduce_pallas(x_nchw, w1_oihw, b1, g, b_ln, w2_oc, b2):
    """x_nchw: (B, C, H, W) f32 (PyTorch layout). Returns (B, 2, H, W)."""
    B, C, H, W = x_nchw.shape
    Hp, Wp = H + 2, W + 2
    L = Hp * Wp                                  # flat padded-image length
    HWp = H * Wp                                 # flat span covering every output row
    ns_pad = _round_up(HWp, 128)                 # lane-dense output width
    l_pad = _round_up(ns_pad + 2 * Wp + 2, 128)  # room for the furthest 3x3 tap
    assert l_pad >= L

    # Glue: NCHW-native zero-pad + free flatten (no layout transposes). Extra
    # zero columns up to l_pad keep every tap slice in bounds and lane-dense.
    xflat = jnp.pad(x_nchw, ((0, 0), (0, 0), (1, 1), (1, 1))).reshape(B, C, L)
    xflat = jnp.pad(xflat, ((0, 0), (0, 0), (0, l_pad - L)))

    # conv1 weights as 9 per-tap (C_out, C_in) matrices, tap-major (dy, dx).
    w1t = jnp.transpose(w1_oihw, (2, 3, 0, 1)).reshape(9, C, C)
    b1c = b1.reshape(C, 1)
    gc = g.reshape(C, 1)
    blnc = b_ln.reshape(C, 1)
    # 1x1 conv padded 2 -> 8 output channels: full unmasked sublane store tiles.
    w2m = jnp.zeros((8, C), x_nchw.dtype).at[:2, :].set(w2_oc.reshape(2, C))
    b2c = jnp.zeros((8, 1), x_nchw.dtype).at[:2, 0].set(b2)

    Bt = _choose_batch_tile(B, ns_pad)
    grid = (B // Bt,)
    # Per-step VMEM ~ 2*(Bt*C*l_pad + Bt*8*ns_pad)*4 B (double-buffered) -- tiny
    # here; re-budget against pltpu.get_tpu_info().vmem_capacity_bytes (64 MiB
    # on v7x vs 128 MiB on v5e/v6e) before growing Bt or the spatial size.
    kernel = functools.partial(mapreduce_kernel, wp=Wp, ns_pad=ns_pad)

    out_flat = pl.pallas_call(
        kernel,
        out_shape=jax.ShapeDtypeStruct((B, 8, ns_pad), jnp.float32),
        grid=grid,
        in_specs=[
            pl.BlockSpec((Bt, C, l_pad), lambda b: (b, 0, 0)),
            pl.BlockSpec((9, C, C), lambda b: (0, 0, 0)),
            pl.BlockSpec((C, 1), lambda b: (0, 0)),
            pl.BlockSpec((C, 1), lambda b: (0, 0)),
            pl.BlockSpec((C, 1), lambda b: (0, 0)),
            pl.BlockSpec((8, C), lambda b: (0, 0)),
            pl.BlockSpec((8, 1), lambda b: (0, 0)),
        ],
        out_specs=pl.BlockSpec((Bt, 8, ns_pad), lambda b: (b, 0, 0)),
        compiler_params=pltpu.CompilerParams(
            dimension_semantics=("parallel",),       # shard batch steps over TCs (v7x)
            vmem_limit_bytes=32 * 1024 * 1024,
        ),
    )(xflat, w1t, b1c, gc, blnc, w2m, b2c)

    # Un-flatten: flat position m = y*Wp + x -> (y, x); drop the 2 padded columns
    # per row and the 6 padded output channels. (Load-bearing unpack; keep assert.)
    out = out_flat[:, :2, :HWp].reshape(B, 2, H, Wp)[:, :, :, :W]
    assert out.shape == (B, 2, H, W)
    return out


def map_reduce_reference(x, w1_oihw, b1, g, b_ln, w2_oc, b2, eps=1e-5):
    """Pure-JAX reference mirroring the PyTorch forward (NCHW), full f32 precision."""
    C = x.shape[1]
    y = jax.lax.conv_general_dilated(
        x, w1_oihw, window_strides=(1, 1), padding="SAME",
        dimension_numbers=("NCHW", "OIHW", "NCHW"),
        precision=jax.lax.Precision.HIGHEST)
    y = y + b1.reshape(1, C, 1, 1)
    mean = jnp.mean(y, axis=1, keepdims=True)
    var = jnp.mean((y - mean) ** 2, axis=1, keepdims=True)
    y = (y - mean) / (jnp.sqrt(var) + eps) * g.reshape(1, C, 1, 1) + b_ln.reshape(1, C, 1, 1)
    y = 0.5 * y * (1.0 + jax.scipy.special.erf(y * np.float32(1.0 / math.sqrt(2.0))))
    out = jnp.einsum("bchw,oc->bohw", y, w2_oc,
                     precision=jax.lax.Precision.HIGHEST) + b2.reshape(1, 2, 1, 1)
    return out


if __name__ == "__main__":
    B, C, H, W = 2, 8, 16, 16

    key = jax.random.PRNGKey(0)
    kx, kw1, kb1, kg, kbln, kw2, kb2 = jax.random.split(key, 7)

    x = jax.random.normal(kx, (B, C, H, W), dtype=jnp.float32)

    # Parameters in PyTorch conventions (shapes from MapReduce.__init__).
    w1 = jax.random.normal(kw1, (C, C, 3, 3), dtype=jnp.float32) * 0.1       # conv1 OIHW
    b1 = jax.random.normal(kb1, (C,), dtype=jnp.float32) * 0.1
    g = 1.0 + 0.1 * jax.random.normal(kg, (C,), dtype=jnp.float32)           # LayerNorm_conv g
    b_ln = 0.1 * jax.random.normal(kbln, (C,), dtype=jnp.float32)            # LayerNorm_conv b
    w2 = jax.random.normal(kw2, (2, C), dtype=jnp.float32) * 0.1             # conv2 (1x1) weights
    b2 = jax.random.normal(kb2, (2,), dtype=jnp.float32) * 0.1

    out = jax.block_until_ready(map_reduce_pallas(x, w1, b1, g, b_ln, w2, b2))
    ref = jax.block_until_ready(map_reduce_reference(x, w1, b1, g, b_ln, w2, b2))

    assert out.shape == (B, 2, H, W), out.shape
    np.testing.assert_allclose(np.asarray(out), np.asarray(ref), atol=5e-4, rtol=5e-4)

    print("KERNEL_OK")
</pallas_src>

<mosaic_0001>
module attributes {stable_mosaic.version = 11 : i64} {
  func.func @mapreduce_kernel(%arg0: i32, %arg1: memref<1x8x512xf32, #tpu.memory_space<vmem>>, %arg2: memref<9x8x8xf32, #tpu.memory_space<vmem>>, %arg3: memref<8x1xf32, #tpu.memory_space<vmem>>, %arg4: memref<8x1xf32, #tpu.memory_space<vmem>>, %arg5: memref<8x1xf32, #tpu.memory_space<vmem>>, %arg6: memref<8x8xf32, #tpu.memory_space<vmem>>, %arg7: memref<8x1xf32, #tpu.memory_space<vmem>>, %arg8: memref<1x8x384xf32, #tpu.memory_space<vmem>>) attributes {dimension_semantics = [#tpu.dimension_semantics<parallel>], iteration_bounds = array<i64: 2>, scalar_prefetch = 0 : i64, scratch_operands = 0 : i64, tpu.core_type = #tpu.core_type<tc>, window_params = [{transform_indices = @transform_0, window_bounds = array<i64: 1, 8, 512>}, {pipeline_mode = #tpu.pipeline_mode<synchronous>, transform_indices = @transform_1, window_bounds = array<i64: 9, 8, 8>}, {pipeline_mode = #tpu.pipeline_mode<synchronous>, transform_indices = @transform_2, window_bounds = array<i64: 8, 1>}, {pipeline_mode = #tpu.pipeline_mode<synchronous>, transform_indices = @transform_3, window_bounds = array<i64: 8, 1>}, {pipeline_mode = #tpu.pipeline_mode<synchronous>, transform_indices = @transform_4, window_bounds = array<i64: 8, 1>}, {pipeline_mode = #tpu.pipeline_mode<synchronous>, transform_indices = @transform_5, window_bounds = array<i64: 8, 8>}, {pipeline_mode = #tpu.pipeline_mode<synchronous>, transform_indices = @transform_6, window_bounds = array<i64: 8, 1>}, {transform_indices = @transform_7, window_bounds = array<i64: 1, 8, 384>}]} {
    %c0 = arith.constant 0 : index
    %c0_0 = arith.constant 0 : index
    %c0_1 = arith.constant 0 : index
    %0 = vector.load %arg1[%c0, %c0_0, %c0_1] : memref<1x8x512xf32, #tpu.memory_space<vmem>>, vector<1x8x512xf32>
    %1 = vector.shape_cast %0 : vector<1x8x512xf32> to vector<8x512xf32>
    %c0_2 = arith.constant 0 : index
    %c0_3 = arith.constant 0 : index
    %c0_4 = arith.constant 0 : index
    %2 = vector.load %arg2[%c0_2, %c0_3, %c0_4] : memref<9x8x8xf32, #tpu.memory_space<vmem>>, vector<1x8x8xf32>
    %3 = vector.shape_cast %2 : vector<1x8x8xf32> to vector<8x8xf32>
    %4 = vector.extract_strided_slice %1 {offsets = [0, 0], sizes = [8, 384], strides = [1, 1]} : vector<8x512xf32> to vector<8x384xf32>
    %cst = arith.constant dense<0.000000e+00> : vector<8x384xf32>
    %5 = tpu.matmul %3, %4, %cst {dimension_numbers = #tpu.dot_dimension_numbers<[1], [0], [0], [1], [0, 0, 1, 1], [], []>, precision = #tpu.contract_precision<fp32>} : vector<8x8xf32>, vector<8x384xf32>, vector<8x384xf32> -> vector<8x384xf32>
    %c1 = arith.constant 1 : index
    %c0_5 = arith.constant 0 : index
    %c0_6 = arith.constant 0 : index
    %6 = vector.load %arg2[%c1, %c0_5, %c0_6] : memref<9x8x8xf32, #tpu.memory_space<vmem>>, vector<1x8x8xf32>
    %7 = vector.shape_cast %6 : vector<1x8x8xf32> to vector<8x8xf32>
    %8 = vector.extract_strided_slice %1 {offsets = [0, 1], sizes = [8, 384], strides = [1, 1]} : vector<8x512xf32> to vector<8x384xf32>
    %cst_7 = arith.constant dense<0.000000e+00> : vector<8x384xf32>
    %9 = tpu.matmul %7, %8, %cst_7 {dimension_numbers = #tpu.dot_dimension_numbers<[1], [0], [0], [1], [0, 0, 1, 1], [], []>, precision = #tpu.contract_precision<fp32>} : vector<8x8xf32>, vector<8x384xf32>, vector<8x384xf32> -> vector<8x384xf32>
    %10 = arith.addf %5, %9 : vector<8x384xf32>
    %c2 = arith.constant 2 : index
    %c0_8 = arith.constant 0 : index
    %c0_9 = arith.constant 0 : index
    %11 = vector.load %arg2[%c2, %c0_8, %c0_9] : memref<9x8x8xf32, #tpu.memory_space<vmem>>, vector<1x8x8xf32>
    %12 = vector.shape_cast %11 : vector<1x8x8xf32> to vector<8x8xf32>
    %13 = vector.extract_strided_slice %1 {offsets = [0, 2], sizes = [8, 384], strides = [1, 1]} : vector<8x512xf32> to vector<8x384xf32>
    %cst_10 = arith.constant dense<0.000000e+00> : vector<8x384xf32>
    %14 = tpu.matmul %12, %13, %cst_10 {dimension_numbers = #tpu.dot_dimension_numbers<[1], [0], [0], [1], [0, 0, 1, 1], [], []>, precision = #tpu.contract_precision<fp32>} : vector<8x8xf32>, vector<8x384xf32>, vector<8x384xf32> -> vector<8x384xf32>
    %15 = arith.addf %10, %14 : vector<8x384xf32>
    %c3 = arith.constant 3 : index
    %c0_11 = arith.constant 0 : index
    %c0_12 = arith.constant 0 : index
    %16 = vector.load %arg2[%c3, %c0_11, %c0_12] : memref<9x8x8xf32, #tpu.memory_space<vmem>>, vector<1x8x8xf32>
    %17 = vector.shape_cast %16 : vector<1x8x8xf32> to vector<8x8xf32>
    %18 = vector.extract_strided_slice %1 {offsets = [0, 18], sizes = [8, 384], strides = [1, 1]} : vector<8x512xf32> to vector<8x384xf32>
    %cst_13 = arith.constant dense<0.000000e+00> : vector<8x384xf32>
    %19 = tpu.matmul %17, %18, %cst_13 {dimension_numbers = #tpu.dot_dimension_numbers<[1], [0], [0], [1], [0, 0, 1, 1], [], []>, precision = #tpu.contract_precision<fp32>} : vector<8x8xf32>, vector<8x384xf32>, vector<8x384xf32> -> vector<8x384xf32>
    %20 = arith.addf %15, %19 : vector<8x384xf32>
    %c4 = arith.constant 4 : index
    %c0_14 = arith.constant 0 : index
    %c0_15 = arith.constant 0 : index
    %21 = vector.load %arg2[%c4, %c0_14, %c0_15] : memref<9x8x8xf32, #tpu.memory_space<vmem>>, vector<1x8x8xf32>
    %22 = vector.shape_cast %21 : vector<1x8x8xf32> to vector<8x8xf32>
    %23 = vector.extract_strided_slice %1 {offsets = [0, 19], sizes = [8, 384], strides = [1, 1]} : vector<8x512xf32> to vector<8x384xf32>
    %cst_16 = arith.constant dense<0.000000e+00> : vector<8x384xf32>
    %24 = tpu.matmul %22, %23, %cst_16 {dimension_numbers = #tpu.dot_dimension_numbers<[1], [0], [0], [1], [0, 0, 1, 1], [], []>, precision = #tpu.contract_precision<fp32>} : vector<8x8xf32>, vector<8x384xf32>, vector<8x384xf32> -> vector<8x384xf32>
    %25 = arith.addf %20, %24 : vector<8x384xf32>
    %c5 = arith.constant 5 : index
    %c0_17 = arith.constant 0 : index
    %c0_18 = arith.constant 0 : index
    %26 = vector.load %arg2[%c5, %c0_17, %c0_18] : memref<9x8x8xf32, #tpu.memory_space<vmem>>, vector<1x8x8xf32>
    %27 = vector.shape_cast %26 : vector<1x8x8xf32> to vector<8x8xf32>
    %28 = vector.extract_strided_slice %1 {offsets = [0, 20], sizes = [8, 384], strides = [1, 1]} : vector<8x512xf32> to vector<8x384xf32>
    %cst_19 = arith.constant dense<0.000000e+00> : vector<8x384xf32>
    %29 = tpu.matmul %27, %28, %cst_19 {dimension_numbers = #tpu.dot_dimension_numbers<[1], [0], [0], [1], [0, 0, 1, 1], [], []>, precision = #tpu.contract_precision<fp32>} : vector<8x8xf32>, vector<8x384xf32>, vector<8x384xf32> -> vector<8x384xf32>
    %30 = arith.addf %25, %29 : vector<8x384xf32>
    %c6 = arith.constant 6 : index
    %c0_20 = arith.constant 0 : index
    %c0_21 = arith.constant 0 : index
    %31 = vector.load %arg2[%c6, %c0_20, %c0_21] : memref<9x8x8xf32, #tpu.memory_space<vmem>>, vector<1x8x8xf32>
    %32 = vector.shape_cast %31 : vector<1x8x8xf32> to vector<8x8xf32>
    %33 = vector.extract_strided_slice %1 {offsets = [0, 36], sizes = [8, 384], strides = [1, 1]} : vector<8x512xf32> to vector<8x384xf32>
    %cst_22 = arith.constant dense<0.000000e+00> : vector<8x384xf32>
    %34 = tpu.matmul %32, %33, %cst_22 {dimension_numbers = #tpu.dot_dimension_numbers<[1], [0], [0], [1], [0, 0, 1, 1], [], []>, precision = #tpu.contract_precision<fp32>} : vector<8x8xf32>, vector<8x384xf32>, vector<8x384xf32> -> vector<8x384xf32>
    %35 = arith.addf %30, %34 : vector<8x384xf32>
    %c7 = arith.constant 7 : index
    %c0_23 = arith.constant 0 : index
    %c0_24 = arith.constant 0 : index
    %36 = vector.load %arg2[%c7, %c0_23, %c0_24] : memref<9x8x8xf32, #tpu.memory_space<vmem>>, vector<1x8x8xf32>
    %37 = vector.shape_cast %36 : vector<1x8x8xf32> to vector<8x8xf32>
    %38 = vector.extract_strided_slice %1 {offsets = [0, 37], sizes = [8, 384], strides = [1, 1]} : vector<8x512xf32> to vector<8x384xf32>
    %cst_25 = arith.constant dense<0.000000e+00> : vector<8x384xf32>
    %39 = tpu.matmul %37, %38, %cst_25 {dimension_numbers = #tpu.dot_dimension_numbers<[1], [0], [0], [1], [0, 0, 1, 1], [], []>, precision = #tpu.contract_precision<fp32>} : vector<8x8xf32>, vector<8x384xf32>, vector<8x384xf32> -> vector<8x384xf32>
    %40 = arith.addf %35, %39 : vector<8x384xf32>
    %c8 = arith.constant 8 : index
    %c0_26 = arith.constant 0 : index
    %c0_27 = arith.constant 0 : index
    %41 = vector.load %arg2[%c8, %c0_26, %c0_27] : memref<9x8x8xf32, #tpu.memory_space<vmem>>, vector<1x8x8xf32>
    %42 = vector.shape_cast %41 : vector<1x8x8xf32> to vector<8x8xf32>
    %43 = vector.extract_strided_slice %1 {offsets = [0, 38], sizes = [8, 384], strides = [1, 1]} : vector<8x512xf32> to vector<8x384xf32>
    %cst_28 = arith.constant dense<0.000000e+00> : vector<8x384xf32>
    %44 = tpu.matmul %42, %43, %cst_28 {dimension_numbers = #tpu.dot_dimension_numbers<[1], [0], [0], [1], [0, 0, 1, 1], [], []>, precision = #tpu.contract_precision<fp32>} : vector<8x8xf32>, vector<8x384xf32>, vector<8x384xf32> -> vector<8x384xf32>
    %45 = arith.addf %40, %44 : vector<8x384xf32>
    %c0_29 = arith.constant 0 : index
    %c0_30 = arith.constant 0 : index
    %46 = vector.load %arg3[%c0_29, %c0_30] : memref<8x1xf32, #tpu.memory_space<vmem>>, vector<8x1xf32>
    %47 = vector.broadcast %46 : vector<8x1xf32> to vector<8x384xf32>
    %48 = arith.addf %45, %47 : vector<8x384xf32>
    %cst_31 = arith.constant dense<0.000000e+00> : vector<384xf32>
    %49 = vector.multi_reduction <add>, %48, %cst_31 [0] : vector<8x384xf32> to vector<384xf32>
    %50 = vector.shape_cast %49 : vector<384xf32> to vector<1x384xf32>
    %cst_32 = arith.constant 8.000000e+00 : f32
    %51 = vector.broadcast %cst_32 : f32 to vector<1x384xf32>
    %52 = arith.divf %50, %51 : vector<1x384xf32>
    %53 = vector.broadcast %52 : vector<1x384xf32> to vector<8x384xf32>
    %54 = arith.subf %48, %53 : vector<8x384xf32>
    %55 = arith.mulf %54, %54 : vector<8x384xf32>
    %cst_33 = arith.constant dense<0.000000e+00> : vector<384xf32>
    %56 = vector.multi_reduction <add>, %55, %cst_33 [0] : vector<8x384xf32> to vector<384xf32>
    %57 = vector.shape_cast %56 : vector<384xf32> to vector<1x384xf32>
    %cst_34 = arith.constant 8.000000e+00 : f32
    %58 = vector.broadcast %cst_34 : f32 to vector<1x384xf32>
    %59 = arith.divf %57, %58 : vector<1x384xf32>
    %60 = math.sqrt %59 : vector<1x384xf32>
    %cst_35 = arith.constant 9.99999974E-6 : f32
    %61 = vector.broadcast %cst_35 : f32 to vector<1x384xf32>
    %62 = arith.addf %60, %61 : vector<1x384xf32>
    %cst_36 = arith.constant 1.000000e+00 : f32
    %63 = vector.broadcast %cst_36 : f32 to vector<1x384xf32>
    %64 = arith.divf %63, %62 : vector<1x384xf32>
    %65 = vector.broadcast %64 : vector<1x384xf32> to vector<8x384xf32>
    %66 = arith.mulf %54, %65 : vector<8x384xf32>
    %c0_37 = arith.constant 0 : index
    %c0_38 = arith.constant 0 : index
    %67 = vector.load %arg4[%c0_37, %c0_38] : memref<8x1xf32, #tpu.memory_space<vmem>>, vector<8x1xf32>
    %68 = vector.broadcast %67 : vector<8x1xf32> to vector<8x384xf32>
    %69 = arith.mulf %66, %68 : vector<8x384xf32>
    %c0_39 = arith.constant 0 : index
    %c0_40 = arith.constant 0 : index
    %70 = vector.load %arg5[%c0_39, %c0_40] : memref<8x1xf32, #tpu.memory_space<vmem>>, vector<8x1xf32>
    %71 = vector.broadcast %70 : vector<8x1xf32> to vector<8x384xf32>
    %72 = arith.addf %69, %71 : vector<8x384xf32>
    %cst_41 = arith.constant 5.000000e-01 : f32
    %73 = vector.broadcast %cst_41 : f32 to vector<8x384xf32>
    %74 = arith.mulf %73, %72 : vector<8x384xf32>
    %cst_42 = arith.constant 0.707106769 : f32
    %75 = vector.broadcast %cst_42 : f32 to vector<8x384xf32>
    %76 = arith.mulf %72, %75 : vector<8x384xf32>
    %cst_43 = arith.constant 0.000000e+00 : f32
    %77 = vector.broadcast %cst_43 : f32 to vector<8x384xf32>
    %78 = arith.cmpf olt, %76, %77 : vector<8x384xf32>
    %cst_44 = arith.constant -1.000000e+00 : f32
    %cst_45 = arith.constant 1.000000e+00 : f32
    %79 = vector.broadcast %cst_44 : f32 to vector<8x384xf32>
    %80 = vector.broadcast %cst_45 : f32 to vector<8x384xf32>
    %81 = arith.select %78, %79, %80 : vector<8x384xi1>, vector<8x384xf32>
    %82 = math.absf %76 : vector<8x384xf32>
    %cst_46 = arith.constant 0.327591091 : f32
    %83 = vector.broadcast %cst_46 : f32 to vector<8x384xf32>
    %84 = arith.mulf %83, %82 : vector<8x384xf32>
    %cst_47 = arith.constant 1.000000e+00 : f32
    %85 = vector.broadcast %cst_47 : f32 to vector<8x384xf32>
    %86 = arith.addf %85, %84 : vector<8x384xf32>
    %cst_48 = arith.constant 1.000000e+00 : f32
    %87 = vector.broadcast %cst_48 : f32 to vector<8x384xf32>
    %88 = arith.divf %87, %86 : vector<8x384xf32>
    %cst_49 = arith.constant 1.06140542 : f32
    %89 = vector.broadcast %cst_49 : f32 to vector<8x384xf32>
    %90 = arith.mulf %89, %88 : vector<8x384xf32>
    %cst_50 = arith.constant -1.45315206 : f32
    %91 = vector.broadcast %cst_50 : f32 to vector<8x384xf32>
    %92 = arith.addf %90, %91 : vector<8x384xf32>
    %93 = arith.mulf %92, %88 : vector<8x384xf32>
    %cst_51 = arith.constant 1.42141378 : f32
    %94 = vector.broadcast %cst_51 : f32 to vector<8x384xf32>
    %95 = arith.addf %93, %94 : vector<8x384xf32>
    %96 = arith.mulf %95, %88 : vector<8x384xf32>
    %cst_52 = arith.constant -0.284496725 : f32
    %97 = vector.broadcast %cst_52 : f32 to vector<8x384xf32>
    %98 = arith.addf %96, %97 : vector<8x384xf32>
    %99 = arith.mulf %98, %88 : vector<8x384xf32>
    %cst_53 = arith.constant 0.254829586 : f32
    %100 = vector.broadcast %cst_53 : f32 to vector<8x384xf32>
    %101 = arith.addf %99, %100 : vector<8x384xf32>
    %102 = arith.mulf %101, %88 : vector<8x384xf32>
    %cst_54 = arith.constant 0.000000e+00 : f32
    %103 = vector.broadcast %cst_54 : f32 to vector<8x384xf32>
    %104 = arith.subf %103, %82 : vector<8x384xf32>
    %105 = arith.mulf %104, %82 : vector<8x384xf32>
    %106 = math.exp %105 : vector<8x384xf32>
    %107 = arith.mulf %102, %106 : vector<8x384xf32>
    %cst_55 = arith.constant 1.000000e+00 : f32
    %108 = vector.broadcast %cst_55 : f32 to vector<8x384xf32>
    %109 = arith.subf %108, %107 : vector<8x384xf32>
    %110 = arith.mulf %81, %109 : vector<8x384xf32>
    %cst_56 = arith.constant 1.000000e+00 : f32
    %111 = vector.broadcast %cst_56 : f32 to vector<8x384xf32>
    %112 = arith.addf %111, %110 : vector<8x384xf32>
    %113 = arith.mulf %74, %112 : vector<8x384xf32>
    %c0_57 = arith.constant 0 : index
    %c0_58 = arith.constant 0 : index
    %114 = vector.load %arg6[%c0_57, %c0_58] : memref<8x8xf32, #tpu.memory_space<vmem>>, vector<8x8xf32>
    %cst_59 = arith.constant dense<0.000000e+00> : vector<8x384xf32>
    %115 = tpu.matmul %114, %113, %cst_59 {dimension_numbers = #tpu.dot_dimension_numbers<[1], [0], [0], [1], [0, 0, 1, 1], [], []>, precision = #tpu.contract_precision<fp32>} : vector<8x8xf32>, vector<8x384xf32>, vector<8x384xf32> -> vector<8x384xf32>
    %c0_60 = arith.constant 0 : index
    %c0_61 = arith.constant 0 : index
    %116 = vector.load %arg7[%c0_60, %c0_61] : memref<8x1xf32, #tpu.memory_space<vmem>>, vector<8x1xf32>
    %117 = vector.broadcast %116 : vector<8x1xf32> to vector<8x384xf32>
    %118 = arith.addf %115, %117 : vector<8x384xf32>
    %c0_62 = arith.constant 0 : index
    %c0_63 = arith.constant 0 : index
    %c0_64 = arith.constant 0 : index
    %119 = vector.load %arg8[%c0_62, %c0_63, %c0_64] : memref<1x8x384xf32, #tpu.memory_space<vmem>>, vector<1x8x384xf32>
    %120 = vector.shape_cast %119 : vector<1x8x384xf32> to vector<8x384xf32>
    %121 = vector.shape_cast %118 : vector<8x384xf32> to vector<1x8x384xf32>
    tpu.vector_store %arg8[%c0_62, %c0_63, %c0_64], %121 {strides = array<i32>} : memref<1x8x384xf32, #tpu.memory_space<vmem>>, vector<1x8x384xf32>,
    return
  }
  func.func @transform_0(%arg0: i32) -> (i32, i32, i32) {
    %c0_i32 = arith.constant 0 : i32
    %c0_i32_0 = arith.constant 0 : i32
    %c0_i32_1 = arith.constant 0 : i32
    return %arg0, %c0_i32, %c0_i32_0 : i32, i32, i32
  }
  func.func @transform_1(%arg0: i32) -> (i32, i32, i32) {
    %c0_i32 = arith.constant 0 : i32
    %c0_i32_0 = arith.constant 0 : i32
    %c0_i32_1 = arith.constant 0 : i32
    %c0_i32_2 = arith.constant 0 : i32
    return %c0_i32, %c0_i32_0, %c0_i32_1 : i32, i32, i32
  }
  func.func @transform_2(%arg0: i32) -> (i32, i32) {
    %c0_i32 = arith.constant 0 : i32
    %c0_i32_0 = arith.constant 0 : i32
    %c0_i32_1 = arith.constant 0 : i32
    return %c0_i32, %c0_i32_0 : i32, i32
  }
  func.func @transform_3(%arg0: i32) -> (i32, i32) {
    %c0_i32 = arith.constant 0 : i32
    %c0_i32_0 = arith.constant 0 : i32
    %c0_i32_1 = arith.constant 0 : i32
    return %c0_i32, %c0_i32_0 : i32, i32
  }
  func.func @transform_4(%arg0: i32) -> (i32, i32) {
    %c0_i32 = arith.constant 0 : i32
    %c0_i32_0 = arith.constant 0 : i32
    %c0_i32_1 = arith.constant 0 : i32
    return %c0_i32, %c0_i32_0 : i32, i32
  }
  func.func @transform_5(%arg0: i32) -> (i32, i32) {
    %c0_i32 = arith.constant 0 : i32
    %c0_i32_0 = arith.constant 0 : i32
    %c0_i32_1 = arith.constant 0 : i32
    return %c0_i32, %c0_i32_0 : i32, i32
  }
  func.func @transform_6(%arg0: i32) -> (i32, i32) {
    %c0_i32 = arith.constant 0 : i32
    %c0_i32_0 = arith.constant 0 : i32
    %c0_i32_1 = arith.constant 0 : i32
    return %c0_i32, %c0_i32_0 : i32, i32
  }
  func.func @transform_7(%arg0: i32) -> (i32, i32, i32) {
    %c0_i32 = arith.constant 0 : i32
    %c0_i32_0 = arith.constant 0 : i32
    %c0_i32_1 = arith.constant 0 : i32
    return %arg0, %c0_i32, %c0_i32_0 : i32, i32, i32
  }
}

</mosaic_0001>

<llo_original>
// kernel: tpu_custom_call.1
$region0: #{tpu_custom_call.1}
  #allocation0 [shape = 'u32[]', space=smem, size = 0x4, offset = 0x4, fixed_abs, tag = 'smem constant byte address 0x4 - core index']
  #allocation1 [shape = 'u32[144,128]{1,0:T(1,128)}', space=vmem, size = 0x12000, scoped, tag = 'internal scratch']
  %s0 = inlined_call_operand.vmem [shape: f32[2,8,512], index: 0, kind: input, shape index: {}]
  %s1 = inlined_call_operand.vmem [shape: f32[9,8,8], index: 1, kind: input, shape index: {}]
  %s2 = inlined_call_operand.vmem [shape: f32[8,1], index: 2, kind: input, shape index: {}]
  %s3 = inlined_call_operand.vmem [shape: f32[8,1], index: 3, kind: input, shape index: {}]
  %s4 = inlined_call_operand.vmem [shape: f32[8,1], index: 4, kind: input, shape index: {}]
  %s5 = inlined_call_operand.vmem [shape: f32[8,8], index: 5, kind: input, shape index: {}]
  %s6 = inlined_call_operand.vmem [shape: f32[8,1], index: 6, kind: input, shape index: {}]
  %s7 = inlined_call_operand.hbm [shape: f32[2,8,384], index: 7, kind: output, shape index: {}]
  %s8 = sld [smem:[#allocation0]]
  $region61: #{tpu_custom_call.1} parent=0
    _
  %s10 = ssub.s32 1, %s8
  %s11 = scalar_select 0, %s10, %s8
  $region1: #{tpu_custom_call.1} parent=0
    #allocation2 [shape = 'u8[24576]{0}', space=vmem, size = 0x6000, scoped, tag = 'output window, operand 0']
    #allocation3 [shape = 's32[2]{0}', space=sflag, size = 0x8, scoped, tag = 'scoped memory for tpu_custom_call.1']
    %12 = vsyncpa [#allocation3], 0
    %s13 = scalar_lea.sflag [#allocation3], 1
    %14 = vsyncpa %s13, 0
    loop: start=0, step=1, limit=4
    $region2: #{tpu_custom_call.1} parent=1 // loop_pre_header
      _
    $region3: #{tpu_custom_call.1} parent=1 // loop_header
      %s16 = sphi 0, %s20
      %p17 = scmp.ge.s32.totalorder %s16, 4
      %s26 = sphi 0, %s28
      %s29 = sphi 0, %s26
      %s30 = sphi 0, %s29
      %s46 = sphi 0, %s30
      %s50 = sphi 0, %s50
      %s52 = sphi 0, %s50
      %s53 = sphi 0, %s52
      %s67 = sphi 0, %s53
      %s71 = sphi 0, %s71
      %s73 = sphi 0, %s71
      %s74 = sphi 0, %s73
      %s88 = sphi 0, %s74
      %s92 = sphi 0, %s92
      %s94 = sphi 0, %s92
      %s95 = sphi 0, %s94
      %s109 = sphi 0, %s95
      %s113 = sphi 0, %s113
      %s115 = sphi 0, %s113
      %s116 = sphi 0, %s115
      %s130 = sphi 0, %s116
      %s134 = sphi 0, %s134
      %s136 = sphi 0, %s134
      %s137 = sphi 0, %s136
      %s151 = sphi 0, %s137
      %s155 = sphi 0, %s155
      %s157 = sphi 0, %s155
      %s158 = sphi 0, %s157
      %s172 = sphi 0, %s158
      %s178 = sphi 0, %s180
      %s181 = sphi 0, %s178
      %s182 = sphi 0, %s181
      %s198 = sphi 0, %s182
    $region4: #{tpu_custom_call.1} parent=1 // loop_header_branch
      %19 = sbr.rel (%p17) target = $region8
    $region5: #{tpu_custom_call.1} parent=1 // loop_body
      %s21 = ssub.s32 %s16, 1
      %s22 = ssub.s32 %s16, 2
      %s23 = sadd.s32 %s16, 1
      %s24 = ssub.s32 %s16, %s23
      %p25 = scmp.eq.s32.totalorder %s24, 0
      %s27 = sadd.s32 %s26, 1
      %s28 = scalar_select %p25, %s26, %s27
      %p31 = pneg %p25
      %p32 = scmp.eq.s32.totalorder %s16, 1
      %p33 = por %p31, %p32
      %p34 = scmp.ne.s32.totalorder %s26, %s29
      %p35 = scmp.eq.s32.totalorder %s16, 0
      %p36 = por %p34, %p35
      %p37 = scmp.ne.s32.totalorder %s26, %s29
      %p38 = scmp.eq.s32.totalorder %s21, 1
      %p39 = por %p37, %p38
      %p40 = scmp.ne.s32.totalorder %s29, %s30
      %p41 = scmp.eq.s32.totalorder %s21, 0
      %p42 = por %p40, %p41
      %p43 = scmp.ne.s32.totalorder %s29, %s30
      %p44 = scmp.eq.s32.totalorder %s22, 1
      %p45 = por %p43, %p44
      %p47 = scmp.ne.s32.totalorder %s30, %s46
      %p48 = scmp.eq.s32.totalorder %s22, 0
      %p49 = por %p47, %p48
      %s51 = sadd.s32 %s50, 1
      %p54 = scmp.eq.s32.totalorder %s16, 1
      %p55 = scmp.ne.s32.totalorder %s50, %s52
      %p56 = scmp.eq.s32.totalorder %s16, 0
      %p57 = por %p55, %p56
      %p58 = scmp.ne.s32.totalorder %s50, %s52
      %p59 = scmp.eq.s32.totalorder %s21, 1
      %p60 = por %p58, %p59
      %p61 = scmp.ne.s32.totalorder %s52, %s53
      %p62 = scmp.eq.s32.totalorder %s21, 0
      %p63 = por %p61, %p62
      %p64 = scmp.ne.s32.totalorder %s52, %s53
      %p65 = scmp.eq.s32.totalorder %s22, 1
      %p66 = por %p64, %p65
      %p68 = scmp.ne.s32.totalorder %s53, %s67
      %p69 = scmp.eq.s32.totalorder %s22, 0
      %p70 = por %p68, %p69
      %s72 = sadd.s32 %s71, 1
      %p75 = scmp.eq.s32.totalorder %s16, 1
      %p76 = scmp.ne.s32.totalorder %s71, %s73
      %p77 = scmp.eq.s32.totalorder %s16, 0
      %p78 = por %p76, %p77
      %p79 = scmp.ne.s32.totalorder %s71, %s73
      %p80 = scmp.eq.s32.totalorder %s21, 1
      %p81 = por %p79, %p80
      %p82 = scmp.ne.s32.totalorder %s73, %s74
      %p83 = scmp.eq.s32.totalorder %s21, 0
      %p84 = por %p82, %p83
      %p85 = scmp.ne.s32.totalorder %s73, %s74
      %p86 = scmp.eq.s32.totalorder %s22, 1
      %p87 = por %p85, %p86
      %p89 = scmp.ne.s32.totalorder %s74, %s88
      %p90 = scmp.eq.s32.totalorder %s22, 0
      %p91 = por %p89, %p90
      %s93 = sadd.s32 %s92, 1
      %p96 = scmp.eq.s32.totalorder %s16, 1
      %p97 = scmp.ne.s32.totalorder %s92, %s94
      %p98 = scmp.eq.s32.totalorder %s16, 0
      %p99 = por %p97, %p98
      %p100 = scmp.ne.s32.totalorder %s92, %s94
      %p101 = scmp.eq.s32.totalorder %s21, 1
      %p102 = por %p100, %p101
      %p103 = scmp.ne.s32.totalorder %s94, %s95
      %p104 = scmp.eq.s32.totalorder %s21, 0
      %p105 = por %p103, %p104
      %p106 = scmp.ne.s32.totalorder %s94, %s95
      %p107 = scmp.eq.s32.totalorder %s22, 1
      %p108 = por %p106, %p107
      %p110 = scmp.ne.s32.totalorder %s95, %s109
      %p111 = scmp.eq.s32.totalorder %s22, 0
      %p112 = por %p110, %p111
      %s114 = sadd.s32 %s113, 1
      %p117 = scmp.eq.s32.totalorder %s16, 1
      %p118 = scmp.ne.s32.totalorder %s113, %s115
      %p119 = scmp.eq.s32.totalorder %s16, 0
      %p120 = por %p118, %p119
      %p121 = scmp.ne.s32.totalorder %s113, %s115
      %p122 = scmp.eq.s32.totalorder %s21, 1
      %p123 = por %p121, %p122
      %p124 = scmp.ne.s32.totalorder %s115, %s116
      %p125 = scmp.eq.s32.totalorder %s21, 0
      %p126 = por %p124, %p125
      %p127 = scmp.ne.s32.totalorder %s115, %s116
      %p128 = scmp.eq.s32.totalorder %s22, 1
      %p129 = por %p127, %p128
      %p131 = scmp.ne.s32.totalorder %s116, %s130
      %p132 = scmp.eq.s32.totalorder %s22, 0
      %p133 = por %p131, %p132
      %s135 = sadd.s32 %s134, 1
      %p138 = scmp.eq.s32.totalorder %s16, 1
      %p139 = scmp.ne.s32.totalorder %s134, %s136
      %p140 = scmp.eq.s32.totalorder %s16, 0
      %p141 = por %p139, %p140
      %p142 = scmp.ne.s32.totalorder %s134, %s136
      %p143 = scmp.eq.s32.totalorder %s21, 1
      %p144 = por %p142, %p143
      %p145 = scmp.ne.s32.totalorder %s136, %s137
      %p146 = scmp.eq.s32.totalorder %s21, 0
      %p147 = por %p145, %p146
      %p148 = scmp.ne.s32.totalorder %s136, %s137
      %p149 = scmp.eq.s32.totalorder %s22, 1
      %p150 = por %p148, %p149
      %p152 = scmp.ne.s32.totalorder %s137, %s151
      %p153 = scmp.eq.s32.totalorder %s22, 0
      %p154 = por %p152, %p153
      %s156 = sadd.s32 %s155, 1
      %p159 = scmp.eq.s32.totalorder %s16, 1
      %p160 = scmp.ne.s32.totalorder %s155, %s157
      %p161 = scmp.eq.s32.totalorder %s16, 0
      %p162 = por %p160, %p161
      %p163 = scmp.ne.s32.totalorder %s155, %s157
      %p164 = scmp.eq.s32.totalorder %s21, 1
      %p165 = por %p163, %p164
      %p166 = scmp.ne.s32.totalorder %s157, %s158
      %p167 = scmp.eq.s32.totalorder %s21, 0
      %p168 = por %p166, %p167
      %p169 = scmp.ne.s32.totalorder %s157, %s158
      %p170 = scmp.eq.s32.totalorder %s22, 1
      %p171 = por %p169, %p170
      %p173 = scmp.ne.s32.totalorder %s158, %s172
      %p174 = scmp.eq.s32.totalorder %s22, 0
      %p175 = por %p173, %p174
      %s176 = ssub.s32 %s16, %s23
      %p177 = scmp.eq.s32.totalorder %s176, 0
      %s179 = sadd.s32 %s178, 1
      %s180 = scalar_select %p177, %s178, %s179
      %p183 = pneg %p177
      %p184 = scmp.eq.s32.totalorder %s16, 1
      %p185 = por %p183, %p184
      %p186 = scmp.ne.s32.totalorder %s178, %s181
      %p187 = scmp.eq.s32.totalorder %s16, 0
      %p188 = por %p186, %p187
      %p189 = scmp.ne.s32.totalorder %s178, %s181
      %p190 = scmp.eq.s32.totalorder %s21, 1
      %p191 = por %p189, %p190
      %p192 = scmp.ne.s32.totalorder %s181, %s182
      %p193 = scmp.eq.s32.totalorder %s21, 0
      %p194 = por %p192, %p193
      %p195 = scmp.ne.s32.totalorder %s181, %s182
      %p196 = scmp.eq.s32.totalorder %s22, 1
      %p197 = por %p195, %p196
      %p199 = scmp.ne.s32.totalorder %s182, %s198
      %p200 = scmp.eq.s32.totalorder %s22, 0
      %p201 = por %p199, %p200
      %p202 = scmp.le.s32.totalorder 1, %s16
      %p203 = scmp.lt.s32.totalorder %s16, 3
      %p204 = pnand %p202, %p203
      %p205 = pneg %p204
      // Predicated region
      $region9: #{tpu_custom_call.1} parent=5 // pred_check
        _
      $region10: #{tpu_custom_call.1} parent=5 // pred_check_branch
        %207 = sbr.rel (%p204) target = $region12
      $region11: #{tpu_custom_call.1} parent=5 // pred_region
        %s208 = ssub.s32 %s16, 1
        // Predicated region
        $region13: #{tpu_custom_call.1} parent=11 // pred_check
          %p209 = pneg %p63
        $region14: #{tpu_custom_call.1} parent=11 // pred_check_branch
          %211 = sbr.rel (%p209) target = $region16
        $region15: #{tpu_custom_call.1} parent=11 // pred_region
          _
        $region16: #{tpu_custom_call.1} parent=11 // pred_fallthru
          _
        // Predicated region
        $region17: #{tpu_custom_call.1} parent=11 // pred_check
          %p212 = pneg %p84
        $region18: #{tpu_custom_call.1} parent=11 // pred_check_branch
          %214 = sbr.rel (%p212) target = $region20
        $region19: #{tpu_custom_call.1} parent=11 // pred_region
          _
        $region20: #{tpu_custom_call.1} parent=11 // pred_fallthru
          _
        // Predicated region
        $region21: #{tpu_custom_call.1} parent=11 // pred_check
          %p215 = pneg %p105
        $region22: #{tpu_custom_call.1} parent=11 // pred_check_branch
          %217 = sbr.rel (%p215) target = $region24
        $region23: #{tpu_custom_call.1} parent=11 // pred_region
          _
        $region24: #{tpu_custom_call.1} parent=11 // pred_fallthru
          _
        // Predicated region
        $region25: #{tpu_custom_call.1} parent=11 // pred_check
          %p218 = pneg %p126
        $region26: #{tpu_custom_call.1} parent=11 // pred_check_branch
          %220 = sbr.rel (%p218) target = $region28
        $region27: #{tpu_custom_call.1} parent=11 // pred_region
          _
        $region28: #{tpu_custom_call.1} parent=11 // pred_fallthru
          _
        // Predicated region
        $region29: #{tpu_custom_call.1} parent=11 // pred_check
          %p221 = pneg %p147
        $region30: #{tpu_custom_call.1} parent=11 // pred_check_branch
          %223 = sbr.rel (%p221) target = $region32
        $region31: #{tpu_custom_call.1} parent=11 // pred_region
          _
        $region32: #{tpu_custom_call.1} parent=11 // pred_fallthru
          _
        // Predicated region
        $region33: #{tpu_custom_call.1} parent=11 // pred_check
          %p224 = pneg %p168
        $region34: #{tpu_custom_call.1} parent=11 // pred_check_branch
          %226 = sbr.rel (%p224) target = $region36
        $region35: #{tpu_custom_call.1} parent=11 // pred_region
          _
        $region36: #{tpu_custom_call.1} parent=11 // pred_fallthru
          _
      $region12: #{tpu_custom_call.1} parent=5 // pred_fallthru
        _
      %p227 = scmp.lt.s32.totalorder %s16, 2
      // Predicated region
      $region37: #{tpu_custom_call.1} parent=5 // pred_check
        %p228 = pneg %p227
      $region38: #{tpu_custom_call.1} parent=5 // pred_check_branch
        %230 = sbr.rel (%p228) target = $region40
      $region39: #{tpu_custom_call.1} parent=5 // pred_region
        // Predicated region
        $region41: #{tpu_custom_call.1} parent=39 // pred_check
          %p231 = pneg %p36
        $region42: #{tpu_custom_call.1} parent=39 // pred_check_branch
          %233 = sbr.rel (%p231) target = $region44
        $region43: #{tpu_custom_call.1} parent=39 // pred_region
          %p234 = scmp.lt.s32.totalorder %s16, 1
          %s235 = scalar_select %p234, %s16, 1
          %s236 = smul.addr %s235, 4
          %s237 = smul.addr %s236, 8
          %s238 = scalar_lea.vmem %s0, %s237
        $region44: #{tpu_custom_call.1} parent=39 // pred_fallthru
          _
      $region40: #{tpu_custom_call.1} parent=5 // pred_fallthru
        _
      %p239 = scmp.le.s32.totalorder 1, %s16
      %p240 = scmp.lt.s32.totalorder %s16, 3
      %p241 = pnand %p239, %p240
      %p242 = pneg %p241
      // Predicated region
      $region45: #{tpu_custom_call.1} parent=5 // pred_check
        _
      $region46: #{tpu_custom_call.1} parent=5 // pred_check_branch
        %244 = sbr.rel (%p241) target = $region48
      $region47: #{tpu_custom_call.1} parent=5 // pred_region
        %s245 = ssub.s32 %s16, 1
        %p246 = scmp.lt.s32.totalorder %s21, 1
        %s247 = scalar_select %p246, %s21, 1
        %s248 = smul.addr %s247, 4
        %s249 = smul.addr %s248, 8
        %s250 = scalar_lea.vmem %s0, %s249
        %p251 = pneg %p42
        %p252 = pneg %p39
        %p253 = pneg %p63
        %p254 = pneg %p60
        %p255 = pneg %p84
        %p256 = pneg %p81
        %p257 = pneg %p105
        %p258 = pneg %p102
        %p259 = pneg %p126
        %p260 = pneg %p123
        %p261 = pneg %p147
        %p262 = pneg %p144
        %p263 = pneg %p168
        %p264 = pneg %p165
        %p265 = pneg %p194
        %p266 = pneg %p191
        %s267 = sand.u32 %s181, 1
        %s268 = scalar_lea.sflag [#allocation3], %s267
        %s269 = sand.u32 %s181, 1
        %s270 = smul.addr %s269, 24
        %s271 = scalar_lea.vmem [#allocation2], %s270
        %p272 = scmp.lt.s32.totalorder %s21, 1
        %s273 = scalar_select %p272, %s21, 1
        %s274 = smul.addr %s273, 4
        %s275 = smul.addr %s274, 8
        %s276 = scalar_lea.vmem %s0, %s275
        %v277 = vld [vmem:[%s276] sm:$0xff]
        %v278 = vld [vmem:[%s276 + $0x8] sm:$0xff]
        %v279 = vld [vmem:[%s276 + $0x10] sm:$0xff]
        %v280 = vld [vmem:[%s276 + $0x18] sm:$0xff]
        %v281 = vld [vmem:[%s1] sm:$0xff]
        %s282 = scalar_lea.vmem %s1, 8
        %v283 = vld [vmem:[%s282] sm:$0xff]
        %288 = vrot.lane.b32.xlu0 %v277, 127
        %v289 = vpop.permute.xlu0 %288
        %290 = vrot.lane.b32.xlu0 %v278, 127
        %v291 = vpop.permute.xlu0 %290
        %292 = vrot.lane.b32.xlu0 %v279, 127
        %v293 = vpop.permute.xlu0 %292
        %294 = vrot.lane.b32.xlu0 %v280, 127
        %v295 = vpop.permute.xlu0 %294
        %vm296 = vcmask 1039360
        %v297 = vsel %vm296, %v289, %v291
        %v298 = vsel %vm296, %v291, %v293
        %v299 = vsel %vm296, %v293, %v295
        %vm303 = vcmask 64512
        %v305 = vsel %vm303, %v283, 0
        %v307 = vand.u32 %v298, 4294901760
        %308 = vmatprep.subr.mxu0 %v307
        %v309 = vand.u32 %v297, 4294901760
        %310 = vmatpush1.msra.mxu0 %v309
        %311 = vmatprep.subr.mxu0 0.0
        %312 = vmatpush1.msra.mxu0 0.0
        %313 = vmatprep.subr.mxu0 0.0
        %314 = vmatpush1.msra.mxu0 0.0
        %315 = vmatprep.subr.mxu0 0.0
        %316 = vmatpush1.msra.mxu0 0.0
        %317 = vmatprep.subr.mxu0 0.0
        %318 = vmatpush1.msra.mxu0 0.0
        %319 = vmatprep.subr.mxu0 0.0
        %320 = vmatpush1.msra.mxu0 0.0
        %321 = vmatprep.subr.mxu0 0.0
        %322 = vmatpush1.msra.mxu0 0.0
        %323 = vmatprep.subr.mxu0 0.0
        %324 = vmatpush1.msra.mxu0 0.0
        %325 = vmatprep.subr.mxu0 0.0
        %326 = vmatpush1.msra.mxu0 0.0
        %327 = vmatprep.subr.mxu0 0.0
        %328 = vmatpush1.msra.mxu0 0.0
        %329 = vmatprep.subr.mxu0 0.0
        %330 = vmatpush1.msra.mxu0 0.0
        %331 = vmatprep.subr.mxu0 0.0
        %332 = vmatpush1.msra.mxu0 0.0
        %333 = vmatprep.subr.mxu0 0.0
        %334 = vmatpush1.msra.mxu0 0.0
        %335 = vmatprep.subr.mxu0 0.0
        %336 = vmatpush1.msra.mxu0 0.0
        %337 = vmatprep.subr.mxu0 0.0
        %338 = vmatpush1.msra.mxu0 0.0
        %339 = vmatprep.subr.mxu0 0.0
        %340 = vmatpush1.msra.mxu0 0.0
        %341 = vmatprep.subr.mxu0 0.0
        %342 = vmatpush1.msra.mxu0 0.0
        %343 = vmatprep.subr.mxu0 0.0
        %344 = vmatpush1.msra.mxu0 0.0
        %345 = vmatprep.subr.mxu0 0.0
        %346 = vmatpush1.msra.mxu0 0.0
        %347 = vmatprep.subr.mxu0 0.0
        %348 = vmatpush1.msra.mxu0 0.0
        %349 = vmatprep.subr.mxu0 0.0
        %350 = vmatpush1.msra.mxu0 0.0
        %351 = vmatprep.subr.mxu0 0.0
        %352 = vmatpush1.msra.mxu0 0.0
        %353 = vmatprep.subr.mxu0 0.0
        %354 = vmatpush1.msra.mxu0 0.0
        %355 = vmatprep.subr.mxu0 0.0
        %356 = vmatpush1.msra.mxu0 0.0
        %357 = vmatprep.subr.mxu0 0.0
        %358 = vmatpush1.msra.mxu0 0.0
        %359 = vmatprep.subr.mxu0 0.0
        %360 = vmatpush1.msra.mxu0 0.0
        %361 = vmatprep.subr.mxu0 0.0
        %362 = vmatpush1.msra.mxu0 0.0
        %363 = vmatprep.subr.mxu0 0.0
        %364 = vmatpush1.msra.mxu0 0.0
        %365 = vmatprep.subr.mxu0 0.0
        %366 = vmatpush1.msra.mxu0 0.0
        %367 = vmatprep.subr.mxu0 0.0
        %368 = vmatpush1.msra.mxu0 0.0
        %369 = vmatprep.subr.mxu0 0.0
        %370 = vmatpush1.msra.mxu0 0.0
        %371 = vmatprep.subr.mxu0 0.0
        %372 = vmatpush1.msra.mxu0 0.0
        %373 = vmatprep.mubr.f32.mxu0 0.0
        %v374 = vand.u32 %v305, 4294901760
        %v375 = vsub.f32 %v305, %v374
        %v376 = vand.u32 %v375, 4294901760
        %v377 = vsub.f32 %v375, %v376
        %v378 = vand.u32 %v377, 4294901760
        %379 = vmatmul.mubr.f32.gmra.mrb[0].mxu0 %v378
        %v380 = vpop.f32.mrb[0].mxu0
        %v381 = vadd.f32 0.0, %v380
        %v382 = vpop.f32.mrb[0].mxu0
        %v383 = vadd.f32 0.0, %v382
        %384 = vdwg.mxu0
        %v385 = vand.u32 %v298, 4294901760
        %v386 = vsub.f32 %v298, %v385
        %v387 = vand.u32 %v386, 4294901760
        %v388 = vsub.f32 %v386, %v387
        %v389 = vand.u32 %v388, 4294901760
        %390 = vmatprep.subr.mxu0 %v389
        %v391 = vand.u32 %v297, 4294901760
        %v392 = vsub.f32 %v297, %v391
        %v393 = vand.u32 %v392, 4294901760
        %v394 = vsub.f32 %v392, %v393
        %v395 = vand.u32 %v394, 4294901760
        %396 = vmatpush1.msra.mxu0 %v395
        %397 = vmatprep.subr.mxu0 0.0
        %398 = vmatpush1.msra.mxu0 0.0
        %399 = vmatprep.subr.mxu0 0.0
        %400 = vmatpush1.msra.mxu0 0.0
        %401 = vmatprep.subr.mxu0 0.0
        %402 = vmatpush1.msra.mxu0 0.0
        %403 = vmatprep.subr.mxu0 0.0
        %404 = vmatpush1.msra.mxu0 0.0
        %405 = vmatprep.subr.mxu0 0.0
        %406 = vmatpush1.msra.mxu0 0.0
        %407 = vmatprep.subr.mxu0 0.0
        %408 = vmatpush1.msra.mxu0 0.0
        %409 = vmatprep.subr.mxu0 0.0
        %410 = vmatpush1.msra.mxu0 0.0
        %411 = vmatprep.subr.mxu0 0.0
        %412 = vmatpush1.msra.mxu0 0.0
        %413 = vmatprep.subr.mxu0 0.0
        %414 = vmatpush1.msra.mxu0 0.0
        %415 = vmatprep.subr.mxu0 0.0
        %416 = vmatpush1.msra.mxu0 0.0
        %417 = vmatprep.subr.mxu0 0.0
        %418 = vmatpush1.msra.mxu0 0.0
        %419 = vmatprep.subr.mxu0 0.0
        %420 = vmatpush1.msra.mxu0 0.0
        %421 = vmatprep.subr.mxu0 0.0
        %422 = vmatpush1.msra.mxu0 0.0
        %423 = vmatprep.subr.mxu0 0.0
        %424 = vmatpush1.msra.mxu0 0.0
        %425 = vmatprep.subr.mxu0 0.0
        %426 = vmatpush1.msra.mxu0 0.0
        %427 = vmatprep.subr.mxu0 0.0
        %428 = vmatpush1.msra.mxu0 0.0
        %429 = vmatprep.subr.mxu0 0.0
        %430 = vmatpush1.msra.mxu0 0.0
        %431 = vmatprep.subr.mxu0 0.0
        %432 = vmatpush1.msra.mxu0 0.0
        %433 = vmatprep.subr.mxu0 0.0
        %434 = vmatpush1.msra.mxu0 0.0
        %435 = vmatprep.subr.mxu0 0.0
        %436 = vmatpush1.msra.mxu0 0.0
        %437 = vmatprep.subr.mxu0 0.0
        %438 = vmatpush1.msra.mxu0 0.0
        %439 = vmatprep.subr.mxu0 0.0
        %440 = vmatpush1.msra.mxu0 0.0
        %441 = vmatprep.subr.mxu0 0.0
        %442 = vmatpush1.msra.mxu0 0.0
        %443 = vmatprep.subr.mxu0 0.0
        %444 = vmatpush1.msra.mxu0 0.0
        %445 = vmatprep.subr.mxu0 0.0
        %446 = vmatpush1.msra.mxu0 0.0
        %447 = vmatprep.subr.mxu0 0.0
        %448 = vmatpush1.msra.mxu0 0.0
        %449 = vmatprep.subr.mxu0 0.0
        %450 = vmatpush1.msra.mxu0 0.0
        %451 = vmatprep.subr.mxu0 0.0
        %452 = vmatpush1.msra.mxu0 0.0
        %453 = vmatprep.subr.mxu0 0.0
        %454 = vmatpush1.msra.mxu0 0.0
        %455 = vmatprep.subr.mxu0 0.0
        %456 = vmatpush1.msra.mxu0 0.0
        %457 = vmatprep.subr.mxu0 0.0
        %458 = vmatpush1.msra.mxu0 0.0
        %459 = vmatprep.mubr.f32.mxu0 0.0
        %v460 = vand.u32 %v305, 4294901760
        %461 = vmatmul.mubr.f32.gmra.mrb[0].mxu0 %v460
        %v462 = vpop.f32.mrb[0].mxu0
        %v463 = vadd.f32 %v381, %v462
        %v464 = vpop.f32.mrb[0].mxu0
        %v465 = vadd.f32 %v383, %v464
        %466 = vdwg.mxu0
        %v467 = vand.u32 %v298, 4294901760
        %v468 = vsub.f32 %v298, %v467
        %469 = vmatprep.subr.mxu0 %v468
        %v470 = vand.u32 %v297, 4294901760
        %v471 = vsub.f32 %v297, %v470
        %472 = vmatpush1.msra.mxu0 %v471
        %473 = vmatprep.subr.mxu0 0.0
        %474 = vmatpush1.msra.mxu0 0.0
        %475 = vmatprep.subr.mxu0 0.0
        %476 = vmatpush1.msra.mxu0 0.0
        %477 = vmatprep.subr.mxu0 0.0
        %478 = vmatpush1.msra.mxu0 0.0
        %479 = vmatprep.subr.mxu0 0.0
        %480 = vmatpush1.msra.mxu0 0.0
        %481 = vmatprep.subr.mxu0 0.0
        %482 = vmatpush1.msra.mxu0 0.0
        %483 = vmatprep.subr.mxu0 0.0
        %484 = vmatpush1.msra.mxu0 0.0
        %485 = vmatprep.subr.mxu0 0.0
        %486 = vmatpush1.msra.mxu0 0.0
        %487 = vmatprep.subr.mxu0 0.0
        %488 = vmatpush1.msra.mxu0 0.0
        %489 = vmatprep.subr.mxu0 0.0
        %490 = vmatpush1.msra.mxu0 0.0
        %491 = vmatprep.subr.mxu0 0.0
        %492 = vmatpush1.msra.mxu0 0.0
        %493 = vmatprep.subr.mxu0 0.0
        %494 = vmatpush1.msra.mxu0 0.0
        %495 = vmatprep.subr.mxu0 0.0
        %496 = vmatpush1.msra.mxu0 0.0
        %497 = vmatprep.subr.mxu0 0.0
        %498 = vmatpush1.msra.mxu0 0.0
        %499 = vmatprep.subr.mxu0 0.0
        %500 = vmatpush1.msra.mxu0 0.0
        %501 = vmatprep.subr.mxu0 0.0
        %502 = vmatpush1.msra.mxu0 0.0
        %503 = vmatprep.subr.mxu0 0.0
        %504 = vmatpush1.msra.mxu0 0.0
        %505 = vmatprep.subr.mxu0 0.0
        %506 = vmatpush1.msra.mxu0 0.0
        %507 = vmatprep.subr.mxu0 0.0
        %508 = vmatpush1.msra.mxu0 0.0
        %509 = vmatprep.subr.mxu0 0.0
        %510 = vmatpush1.msra.mxu0 0.0
        %511 = vmatprep.subr.mxu0 0.0
        %512 = vmatpush1.msra.mxu0 0.0
        %513 = vmatprep.subr.mxu0 0.0
        %514 = vmatpush1.msra.mxu0 0.0
        %515 = vmatprep.subr.mxu0 0.0
        %516 = vmatpush1.msra.mxu0 0.0
        %517 = vmatprep.subr.mxu0 0.0
        %518 = vmatpush1.msra.mxu0 0.0
        %519 = vmatprep.subr.mxu0 0.0
        %520 = vmatpush1.msra.mxu0 0.0
        %521 = vmatprep.subr.mxu0 0.0
        %522 = vmatpush1.msra.mxu0 0.0
        %523 = vmatprep.subr.mxu0 0.0
        %524 = vmatpush1.msra.mxu0 0.0
        %525 = vmatprep.subr.mxu0 0.0
        %526 = vmatpush1.msra.mxu0 0.0
        %527 = vmatprep.subr.mxu0 0.0
        %528 = vmatpush1.msra.mxu0 0.0
        %529 = vmatprep.subr.mxu0 0.0
        %530 = vmatpush1.msra.mxu0 0.0
        %531 = vmatprep.subr.mxu0 0.0
        %532 = vmatpush1.msra.mxu0 0.0
        %533 = vmatprep.subr.mxu0 0.0
        %534 = vmatpush1.msra.mxu0 0.0
        %535 = vmatprep.mubr.f32.mxu0 0.0
        %v536 = vand.u32 %v305, 4294901760
        %v537 = vsub.f32 %v305, %v536
        %538 = vmatmul.mubr.f32.gmra.mrb[0].mxu0 %v537
        %v539 = vpop.f32.mrb[0].mxu0
        %v540 = vadd.f32 %v463, %v539
        %v541 = vpop.f32.mrb[0].mxu0
        %v542 = vadd.f32 %v465, %v541
        %543 = vdwg.mxu0
        %v544 = vand.u32 %v298, 4294901760
        %545 = vmatprep.subr.mxu0 %v544
        %v546 = vand.u32 %v297, 4294901760
        %547 = vmatpush1.msra.mxu0 %v546
        %548 = vmatprep.subr.mxu0 0.0
        %549 = vmatpush1.msra.mxu0 0.0
        %550 = vmatprep.subr.mxu0 0.0
        %551 = vmatpush1.msra.mxu0 0.0
        %552 = vmatprep.subr.mxu0 0.0
        %553 = vmatpush1.msra.mxu0 0.0
        %554 = vmatprep.subr.mxu0 0.0
        %555 = vmatpush1.msra.mxu0 0.0
        %556 = vmatprep.subr.mxu0 0.0
        %557 = vmatpush1.msra.mxu0 0.0
        %558 = vmatprep.subr.mxu0 0.0
        %559 = vmatpush1.msra.mxu0 0.0
        %560 = vmatprep.subr.mxu0 0.0
        %561 = vmatpush1.msra.mxu0 0.0
        %562 = vmatprep.subr.mxu0 0.0
        %563 = vmatpush1.msra.mxu0 0.0
        %564 = vmatprep.subr.mxu0 0.0
        %565 = vmatpush1.msra.mxu0 0.0
        %566 = vmatprep.subr.mxu0 0.0
        %567 = vmatpush1.msra.mxu0 0.0
        %568 = vmatprep.subr.mxu0 0.0
        %569 = vmatpush1.msra.mxu0 0.0
        %570 = vmatprep.subr.mxu0 0.0
        %571 = vmatpush1.msra.mxu0 0.0
        %572 = vmatprep.subr.mxu0 0.0
        %573 = vmatpush1.msra.mxu0 0.0
        %574 = vmatprep.subr.mxu0 0.0
        %575 = vmatpush1.msra.mxu0 0.0
        %576 = vmatprep.subr.mxu0 0.0
        %577 = vmatpush1.msra.mxu0 0.0
        %578 = vmatprep.subr.mxu0 0.0
        %579 = vmatpush1.msra.mxu0 0.0
        %580 = vmatprep.subr.mxu0 0.0
        %581 = vmatpush1.msra.mxu0 0.0
        %582 = vmatprep.subr.mxu0 0.0
        %583 = vmatpush1.msra.mxu0 0.0
        %584 = vmatprep.subr.mxu0 0.0
        %585 = vmatpush1.msra.mxu0 0.0
        %586 = vmatprep.subr.mxu0 0.0
        %587 = vmatpush1.msra.mxu0 0.0
        %588 = vmatprep.subr.mxu0 0.0
        %589 = vmatpush1.msra.mxu0 0.0
        %590 = vmatprep.subr.mxu0 0.0
        %591 = vmatpush1.msra.mxu0 0.0
        %592 = vmatprep.subr.mxu0 0.0
        %593 = vmatpush1.msra.mxu0 0.0
        %594 = vmatprep.subr.mxu0 0.0
        %595 = vmatpush1.msra.mxu0 0.0
        %596 = vmatprep.subr.mxu0 0.0
        %597 = vmatpush1.msra.mxu0 0.0
        %598 = vmatprep.subr.mxu0 0.0
        %599 = vmatpush1.msra.mxu0 0.0
        %600 = vmatprep.subr.mxu0 0.0
        %601 = vmatpush1.msra.mxu0 0.0
        %602 = vmatprep.subr.mxu0 0.0
        %603 = vmatpush1.msra.mxu0 0.0
        %604 = vmatprep.subr.mxu0 0.0
        %605 = vmatpush1.msra.mxu0 0.0
        %606 = vmatprep.subr.mxu0 0.0
        %607 = vmatpush1.msra.mxu0 0.0
        %608 = vmatprep.subr.mxu0 0.0
        %609 = vmatpush1.msra.mxu0 0.0
        %610 = vmatprep.mubr.f32.mxu0 0.0
        %v611 = vand.u32 %v305, 4294901760
        %v612 = vsub.f32 %v305, %v611
        %v613 = vand.u32 %v612, 4294901760
        %614 = vmatmul.mubr.f32.gmra.mrb[0].mxu0 %v613
        %v615 = vpop.f32.mrb[0].mxu0
        %v616 = vadd.f32 %v540, %v615
        %v617 = vpop.f32.mrb[0].mxu0
        %v618 = vadd.f32 %v542, %v617
        %619 = vdwg.mxu0
        %v620 = vand.u32 %v298, 4294901760
        %v621 = vsub.f32 %v298, %v620
        %v622 = vand.u32 %v621, 4294901760
        %623 = vmatprep.subr.mxu0 %v622
        %v624 = vand.u32 %v297, 4294901760
        %v625 = vsub.f32 %v297, %v624
        %v626 = vand.u32 %v625, 4294901760
        %627 = vmatpush1.msra.mxu0 %v626
        %628 = vmatprep.subr.mxu0 0.0
        %629 = vmatpush1.msra.mxu0 0.0
        %630 = vmatprep.subr.mxu0 0.0
        %631 = vmatpush1.msra.mxu0 0.0
        %632 = vmatprep.subr.mxu0 0.0
        %633 = vmatpush1.msra.mxu0 0.0
        %634 = vmatprep.subr.mxu0 0.0
        %635 = vmatpush1.msra.mxu0 0.0
        %636 = vmatprep.subr.mxu0 0.0
        %637 = vmatpush1.msra.mxu0 0.0
        %638 = vmatprep.subr.mxu0 0.0
        %639 = vmatpush1.msra.mxu0 0.0
        %640 = vmatprep.subr.mxu0 0.0
        %641 = vmatpush1.msra.mxu0 0.0
        %642 = vmatprep.subr.mxu0 0.0
        %643 = vmatpush1.msra.mxu0 0.0
        %644 = vmatprep.subr.mxu0 0.0
        %645 = vmatpush1.msra.mxu0 0.0
        %646 = vmatprep.subr.mxu0 0.0
        %647 = vmatpush1.msra.mxu0 0.0
        %648 = vmatprep.subr.mxu0 0.0
        %649 = vmatpush1.msra.mxu0 0.0
        %650 = vmatprep.subr.mxu0 0.0
        %651 = vmatpush1.msra.mxu0 0.0
        %652 = vmatprep.subr.mxu0 0.0
        %653 = vmatpush1.msra.mxu0 0.0
        %654 = vmatprep.subr.mxu0 0.0
        %655 = vmatpush1.msra.mxu0 0.0
        %656 = vmatprep.subr.mxu0 0.0
        %657 = vmatpush1.msra.mxu0 0.0
        %658 = vmatprep.subr.mxu0 0.0
        %659 = vmatpush1.msra.mxu0 0.0
        %660 = vmatprep.subr.mxu0 0.0
        %661 = vmatpush1.msra.mxu0 0.0
        %662 = vmatprep.subr.mxu0 0.0
        %663 = vmatpush1.msra.mxu0 0.0
        %664 = vmatprep.subr.mxu0 0.0
        %665 = vmatpush1.msra.mxu0 0.0
        %666 = vmatprep.subr.mxu0 0.0
        %667 = vmatpush1.msra.mxu0 0.0
        %668 = vmatprep.subr.mxu0 0.0
        %669 = vmatpush1.msra.mxu0 0.0
        %670 = vmatprep.subr.mxu0 0.0
        %671 = vmatpush1.msra.mxu0 0.0
        %672 = vmatprep.subr.mxu0 0.0
        %673 = vmatpush1.msra.mxu0 0.0
        %674 = vmatprep.subr.mxu0 0.0
        %675 = vmatpush1.msra.mxu0 0.0
        %676 = vmatprep.subr.mxu0 0.0
        %677 = vmatpush1.msra.mxu0 0.0
        %678 = vmatprep.subr.mxu0 0.0
        %679 = vmatpush1.msra.mxu0 0.0
        %680 = vmatprep.subr.mxu0 0.0
        %681 = vmatpush1.msra.mxu0 0.0
        %682 = vmatprep.subr.mxu0 0.0
        %683 = vmatpush1.msra.mxu0 0.0
        %684 = vmatprep.subr.mxu0 0.0
        %685 = vmatpush1.msra.mxu0 0.0
        %686 = vmatprep.subr.mxu0 0.0
        %687 = vmatpush1.msra.mxu0 0.0
        %688 = vmatprep.subr.mxu0 0.0
        %689 = vmatpush1.msra.mxu0 0.0
        %690 = vmatprep.mubr.f32.mxu0 0.0
        %v691 = vand.u32 %v305, 4294901760
        %692 = vmatmul.mubr.f32.gmra.mrb[0].mxu0 %v691
        %v693 = vpop.f32.mrb[0].mxu0
        %v694 = vadd.f32 %v616, %v693
        %v695 = vpop.f32.mrb[0].mxu0
        %v696 = vadd.f32 %v618, %v695
        %697 = vdwg.mxu0
        %v698 = vand.u32 %v298, 4294901760
        %699 = vmatprep.subr.mxu0 %v698
        %v700 = vand.u32 %v297, 4294901760
        %701 = vmatpush1.msra.mxu0 %v700
        %702 = vmatprep.subr.mxu0 0.0
        %703 = vmatpush1.msra.mxu0 0.0
        %704 = vmatprep.subr.mxu0 0.0
        %705 = vmatpush1.msra.mxu0 0.0
        %706 = vmatprep.subr.mxu0 0.0
        %707 = vmatpush1.msra.mxu0 0.0
        %708 = vmatprep.subr.mxu0 0.0
        %709 = vmatpush1.msra.mxu0 0.0
        %710 = vmatprep.subr.mxu0 0.0
        %711 = vmatpush1.msra.mxu0 0.0
        %712 = vmatprep.subr.mxu0 0.0
        %713 = vmatpush1.msra.mxu0 0.0
        %714 = vmatprep.subr.mxu0 0.0
        %715 = vmatpush1.msra.mxu0 0.0
        %716 = vmatprep.subr.mxu0 0.0
        %717 = vmatpush1.msra.mxu0 0.0
        %718 = vmatprep.subr.mxu0 0.0
        %719 = vmatpush1.msra.mxu0 0.0
        %720 = vmatprep.subr.mxu0 0.0
        %721 = vmatpush1.msra.mxu0 0.0
        %722 = vmatprep.subr.mxu0 0.0
        %723 = vmatpush1.msra.mxu0 0.0
        %724 = vmatprep.subr.mxu0 0.0
        %725 = vmatpush1.msra.mxu0 0.0
        %726 = vmatprep.subr.mxu0 0.0
        %727 = vmatpush1.msra.mxu0 0.0
        %728 = vmatprep.subr.mxu0 0.0
        %729 = vmatpush1.msra.mxu0 0.0
        %730 = vmatprep.subr.mxu0 0.0
        %731 = vmatpush1.msra.mxu0 0.0
        %732 = vmatprep.subr.mxu0 0.0
        %733 = vmatpush1.msra.mxu0 0.0
        %734 = vmatprep.subr.mxu0 0.0
        %735 = vmatpush1.msra.mxu0 0.0
        %736 = vmatprep.subr.mxu0 0.0
        %737 = vmatpush1.msra.mxu0 0.0
        %738 = vmatprep.subr.mxu0 0.0
        %739 = vmatpush1.msra.mxu0 0.0
        %740 = vmatprep.subr.mxu0 0.0
        %741 = vmatpush1.msra.mxu0 0.0
        %742 = vmatprep.subr.mxu0 0.0
        %743 = vmatpush1.msra.mxu0 0.0
        %744 = vmatprep.subr.mxu0 0.0
        %745 = vmatpush1.msra.mxu0 0.0
        %746 = vmatprep.subr.mxu0 0.0
        %747 = vmatpush1.msra.mxu0 0.0
        %748 = vmatprep.subr.mxu0 0.0
        %749 = vmatpush1.msra.mxu0 0.0
        %750 = vmatprep.subr.mxu0 0.0
        %751 = vmatpush1.msra.mxu0 0.0
        %752 = vmatprep.subr.mxu0 0.0
        %753 = vmatpush1.msra.mxu0 0.0
        %754 = vmatprep.subr.mxu0 0.0
        %755 = vmatpush1.msra.mxu0 0.0
        %756 = vmatprep.subr.mxu0 0.0
        %757 = vmatpush1.msra.mxu0 0.0
        %758 = vmatprep.subr.mxu0 0.0
        %759 = vmatpush1.msra.mxu0 0.0
        %760 = vmatprep.subr.mxu0 0.0
        %761 = vmatpush1.msra.mxu0 0.0
        %762 = vmatprep.subr.mxu0 0.0
        %763 = vmatpush1.msra.mxu0 0.0
        %764 = vmatprep.mubr.f32.mxu0 0.0
        %v765 = vand.u32 %v305, 4294901760
        %766 = vmatmul.mubr.f32.gmra.mrb[0].mxu0 %v765
        %v767 = vpop.f32.mrb[0].mxu0
        %v768 = vadd.f32 %v694, %v767
        %v769 = vpop.f32.mrb[0].mxu0
        %v770 = vadd.f32 %v696, %v769
        %771 = vdwg.mxu0
        %772 = vmatprep.subr.mxu0 0.0
        %v773 = vand.u32 %v299, 4294901760
        %774 = vmatpush1.msra.mxu0 %v773
        %775 = vmatprep.subr.mxu0 0.0
        %776 = vmatpush1.msra.mxu0 0.0
        %777 = vmatprep.subr.mxu0 0.0
        %778 = vmatpush1.msra.mxu0 0.0
        %779 = vmatprep.subr.mxu0 0.0
        %780 = vmatpush1.msra.mxu0 0.0
        %781 = vmatprep.subr.mxu0 0.0
        %782 = vmatpush1.msra.mxu0 0.0
        %783 = vmatprep.subr.mxu0 0.0
        %784 = vmatpush1.msra.mxu0 0.0
        %785 = vmatprep.subr.mxu0 0.0
        %786 = vmatpush1.msra.mxu0 0.0
        %787 = vmatprep.subr.mxu0 0.0
        %788 = vmatpush1.msra.mxu0 0.0
        %789 = vmatprep.subr.mxu0 0.0
        %790 = vmatpush1.msra.mxu0 0.0
        %791 = vmatprep.subr.mxu0 0.0
        %792 = vmatpush1.msra.mxu0 0.0
        %793 = vmatprep.subr.mxu0 0.0
        %794 = vmatpush1.msra.mxu0 0.0
        %795 = vmatprep.subr.mxu0 0.0
        %796 = vmatpush1.msra.mxu0 0.0
        %797 = vmatprep.subr.mxu0 0.0
        %798 = vmatpush1.msra.mxu0 0.0
        %799 = vmatprep.subr.mxu0 0.0
        %800 = vmatpush1.msra.mxu0 0.0
        %801 = vmatprep.subr.mxu0 0.0
        %802 = vmatpush1.msra.mxu0 0.0
        %803 = vmatprep.subr.mxu0 0.0
        %804 = vmatpush1.msra.mxu0 0.0
        %805 = vmatprep.subr.mxu0 0.0
        %806 = vmatpush1.msra.mxu0 0.0
        %807 = vmatprep.subr.mxu0 0.0
        %808 = vmatpush1.msra.mxu0 0.0
        %809 = vmatprep.subr.mxu0 0.0
        %810 = vmatpush1.msra.mxu0 0.0
        %811 = vmatprep.subr.mxu0 0.0
        %812 = vmatpush1.msra.mxu0 0.0
        %813 = vmatprep.subr.mxu0 0.0
        %814 = vmatpush1.msra.mxu0 0.0
        %815 = vmatprep.subr.mxu0 0.0
        %816 = vmatpush1.msra.mxu0 0.0
        %817 = vmatprep.subr.mxu0 0.0
        %818 = vmatpush1.msra.mxu0 0.0
        %819 = vmatprep.subr.mxu0 0.0
        %820 = vmatpush1.msra.mxu0 0.0
        %821 = vmatprep.subr.mxu0 0.0
        %822 = vmatpush1.msra.mxu0 0.0
        %823 = vmatprep.subr.mxu0 0.0
        %824 = vmatpush1.msra.mxu0 0.0
        %825 = vmatprep.subr.mxu0 0.0
        %826 = vmatpush1.msra.mxu0 0.0
        %827 = vmatprep.subr.mxu0 0.0
        %828 = vmatpush1.msra.mxu0 0.0
        %829 = vmatprep.subr.mxu0 0.0
        %830 = vmatpush1.msra.mxu0 0.0
        %831 = vmatprep.subr.mxu0 0.0
        %832 = vmatpush1.msra.mxu0 0.0
        %833 = vmatprep.subr.mxu0 0.0
        %834 = vmatpush1.msra.mxu0 0.0
        %835 = vmatprep.subr.mxu0 0.0
        %836 = vmatpush1.msra.mxu0 0.0
        %837 = vmatprep.mubr.f32.mxu0 0.0
        %v838 = vand.u32 %v305, 4294901760
        %v839 = vsub.f32 %v305, %v838
        %v840 = vand.u32 %v839, 4294901760
        %v841 = vsub.f32 %v839, %v840
        %v842 = vand.u32 %v841, 4294901760
        %843 = vmatmul.mubr.f32.gmra.mrb[0].mxu0 %v842
        %v844 = vpop.f32.mrb[0].mxu0
        %v845 = vadd.f32 0.0, %v844
        %v846 = vpop.f32.mrb[0].mxu0
        %847 = vdwg.mxu0
        %848 = vmatprep.subr.mxu0 0.0
        %v849 = vand.u32 %v299, 4294901760
        %v850 = vsub.f32 %v299, %v849
        %v851 = vand.u32 %v850, 4294901760
        %v852 = vsub.f32 %v850, %v851
        %v853 = vand.u32 %v852, 4294901760
        %854 = vmatpush1.msra.mxu0 %v853
        %855 = vmatprep.subr.mxu0 0.0
        %856 = vmatpush1.msra.mxu0 0.0
        %857 = vmatprep.subr.mxu0 0.0
        %858 = vmatpush1.msra.mxu0 0.0
        %859 = vmatprep.subr.mxu0 0.0
        %860 = vmatpush1.msra.mxu0 0.0
        %861 = vmatprep.subr.mxu0 0.0
        %862 = vmatpush1.msra.mxu0 0.0
        %863 = vmatprep.subr.mxu0 0.0
        %864 = vmatpush1.msra.mxu0 0.0
        %865 = vmatprep.subr.mxu0 0.0
        %866 = vmatpush1.msra.mxu0 0.0
        %867 = vmatprep.subr.mxu0 0.0
        %868 = vmatpush1.msra.mxu0 0.0
        %869 = vmatprep.subr.mxu0 0.0
        %870 = vmatpush1.msra.mxu0 0.0
        %871 = vmatprep.subr.mxu0 0.0
        %872 = vmatpush1.msra.mxu0 0.0
        %873 = vmatprep.subr.mxu0 0.0
        %874 = vmatpush1.msra.mxu0 0.0
        %875 = vmatprep.subr.mxu0 0.0
        %876 = vmatpush1.msra.mxu0 0.0
        %877 = vmatprep.subr.mxu0 0.0
        %878 = vmatpush1.msra.mxu0 0.0
        %879 = vmatprep.subr.mxu0 0.0
        %880 = vmatpush1.msra.mxu0 0.0
        %881 = vmatprep.subr.mxu0 0.0
        %882 = vmatpush1.msra.mxu0 0.0
        %883 = vmatprep.subr.mxu0 0.0
        %884 = vmatpush1.msra.mxu0 0.0
        %885 = vmatprep.subr.mxu0 0.0
        %886 = vmatpush1.msra.mxu0 0.0
        %887 = vmatprep.subr.mxu0 0.0
        %888 = vmatpush1.msra.mxu0 0.0
        %889 = vmatprep.subr.mxu0 0.0
        %890 = vmatpush1.msra.mxu0 0.0
        %891 = vmatprep.subr.mxu0 0.0
        %892 = vmatpush1.msra.mxu0 0.0
        %893 = vmatprep.subr.mxu0 0.0
        %894 = vmatpush1.msra.mxu0 0.0
        %895 = vmatprep.subr.mxu0 0.0
        %896 = vmatpush1.msra.mxu0 0.0
        %897 = vmatprep.subr.mxu0 0.0
        %898 = vmatpush1.msra.mxu0 0.0
        %899 = vmatprep.subr.mxu0 0.0
        %900 = vmatpush1.msra.mxu0 0.0
        %901 = vmatprep.subr.mxu0 0.0
        %902 = vmatpush1.msra.mxu0 0.0
        %903 = vmatprep.subr.mxu0 0.0
        %904 = vmatpush1.msra.mxu0 0.0
        %905 = vmatprep.subr.mxu0 0.0
        %906 = vmatpush1.msra.mxu0 0.0
        %907 = vmatprep.subr.mxu0 0.0
        %908 = vmatpush1.msra.mxu0 0.0
        %909 = vmatprep.subr.mxu0 0.0
        %910 = vmatpush1.msra.mxu0 0.0
        %911 = vmatprep.subr.mxu0 0.0
        %912 = vmatpush1.msra.mxu0 0.0
        %913 = vmatprep.subr.mxu0 0.0
        %914 = vmatpush1.msra.mxu0 0.0
        %915 = vmatprep.subr.mxu0 0.0
        %916 = vmatpush1.msra.mxu0 0.0
        %917 = vmatprep.mubr.f32.mxu0 0.0
        %v918 = vand.u32 %v305, 4294901760
        %919 = vmatmul.mubr.f32.gmra.mrb[0].mxu0 %v918
        %v920 = vpop.f32.mrb[0].mxu0
        %v921 = vadd.f32 %v845, %v920
        %v922 = vpop.f32.mrb[0].mxu0
        %923 = vdwg.mxu0
        %924 = vmatprep.subr.mxu0 0.0
        %v925 = vand.u32 %v299, 4294901760
        %v926 = vsub.f32 %v299, %v925
        %927 = vmatpush1.msra.mxu0 %v926
        %928 = vmatprep.subr.mxu0 0.0
        %929 = vmatpush1.msra.mxu0 0.0
        %930 = vmatprep.subr.mxu0 0.0
        %931 = vmatpush1.msra.mxu0 0.0
        %932 = vmatprep.subr.mxu0 0.0
        %933 = vmatpush1.msra.mxu0 0.0
        %934 = vmatprep.subr.mxu0 0.0
        %935 = vmatpush1.msra.mxu0 0.0
        %936 = vmatprep.subr.mxu0 0.0
        %937 = vmatpush1.msra.mxu0 0.0
        %938 = vmatprep.subr.mxu0 0.0
        %939 = vmatpush1.msra.mxu0 0.0
        %940 = vmatprep.subr.mxu0 0.0
        %941 = vmatpush1.msra.mxu0 0.0
        %942 = vmatprep.subr.mxu0 0.0
        %943 = vmatpush1.msra.mxu0 0.0
        %944 = vmatprep.subr.mxu0 0.0
        %945 = vmatpush1.msra.mxu0 0.0
        %946 = vmatprep.subr.mxu0 0.0
        %947 = vmatpush1.msra.mxu0 0.0
        %948 = vmatprep.subr.mxu0 0.0
        %949 = vmatpush1.msra.mxu0 0.0
        %950 = vmatprep.subr.mxu0 0.0
        %951 = vmatpush1.msra.mxu0 0.0
        %952 = vmatprep.subr.mxu0 0.0
        %953 = vmatpush1.msra.mxu0 0.0
        %954 = vmatprep.subr.mxu0 0.0
        %955 = vmatpush1.msra.mxu0 0.0
        %956 = vmatprep.subr.mxu0 0.0
        %957 = vmatpush1.msra.mxu0 0.0
        %958 = vmatprep.subr.mxu0 0.0
        %959 = vmatpush1.msra.mxu0 0.0
        %960 = vmatprep.subr.mxu0 0.0
        %961 = vmatpush1.msra.mxu0 0.0
        %962 = vmatprep.subr.mxu0 0.0
        %963 = vmatpush1.msra.mxu0 0.0
        %964 = vmatprep.subr.mxu0 0.0
        %965 = vmatpush1.msra.mxu0 0.0
        %966 = vmatprep.subr.mxu0 0.0
        %967 = vmatpush1.msra.mxu0 0.0
        %968 = vmatprep.subr.mxu0 0.0
        %969 = vmatpush1.msra.mxu0 0.0
        %970 = vmatprep.subr.mxu0 0.0
        %971 = vmatpush1.msra.mxu0 0.0
        %972 = vmatprep.subr.mxu0 0.0
        %973 = vmatpush1.msra.mxu0 0.0
        %974 = vmatprep.subr.mxu0 0.0
        %975 = vmatpush1.msra.mxu0 0.0
        %976 = vmatprep.subr.mxu0 0.0
        %977 = vmatpush1.msra.mxu0 0.0
        %978 = vmatprep.subr.mxu0 0.0
        %979 = vmatpush1.msra.mxu0 0.0
        %980 = vmatprep.subr.mxu0 0.0
        %981 = vmatpush1.msra.mxu0 0.0
        %982 = vmatprep.subr.mxu0 0.0
        %983 = vmatpush1.msra.mxu0 0.0
        %984 = vmatprep.subr.mxu0 0.0
        %985 = vmatpush1.msra.mxu0 0.0
        %986 = vmatprep.subr.mxu0 0.0
        %987 = vmatpush1.msra.mxu0 0.0
        %988 = vmatprep.subr.mxu0 0.0
        %989 = vmatpush1.msra.mxu0 0.0
        %990 = vmatprep.mubr.f32.mxu0 0.0
        %v991 = vand.u32 %v305, 4294901760
        %v992 = vsub.f32 %v305, %v991
        %993 = vmatmul.mubr.f32.gmra.mrb[0].mxu0 %v992
        %v994 = vpop.f32.mrb[0].mxu0
        %v995 = vadd.f32 %v921, %v994
        %v996 = vpop.f32.mrb[0].mxu0
        %997 = vdwg.mxu0
        %998 = vmatprep.subr.mxu0 0.0
        %v999 = vand.u32 %v299, 4294901760
        %1000 = vmatpush1.msra.mxu0 %v999
        %1001 = vmatprep.subr.mxu0 0.0
        %1002 = vmatpush1.msra.mxu0 0.0
        %1003 = vmatprep.subr.mxu0 0.0
        %1004 = vmatpush1.msra.mxu0 0.0
        %1005 = vmatprep.subr.mxu0 0.0
        %1006 = vmatpush1.msra.mxu0 0.0
        %1007 = vmatprep.subr.mxu0 0.0
        %1008 = vmatpush1.msra.mxu0 0.0
        %1009 = vmatprep.subr.mxu0 0.0
        %1010 = vmatpush1.msra.mxu0 0.0
        %1011 = vmatprep.subr.mxu0 0.0
        %1012 = vmatpush1.msra.mxu0 0.0
        %1013 = vmatprep.subr.mxu0 0.0
        %1014 = vmatpush1.msra.mxu0 0.0
        %1015 = vmatprep.subr.mxu0 0.0
        %1016 = vmatpush1.msra.mxu0 0.0
        %1017 = vmatprep.subr.mxu0 0.0
        %1018 = vmatpush1.msra.mxu0 0.0
        %1019 = vmatprep.subr.mxu0 0.0
        %1020 = vmatpush1.msra.mxu0 0.0
        %1021 = vmatprep.subr.mxu0 0.0
        %1022 = vmatpush1.msra.mxu0 0.0
        %1023 = vmatprep.subr.mxu0 0.0
        %1024 = vmatpush1.msra.mxu0 0.0
        %1025 = vmatprep.subr.mxu0 0.0
        %1026 = vmatpush1.msra.mxu0 0.0
        %1027 = vmatprep.subr.mxu0 0.0
        %1028 = vmatpush1.msra.mxu0 0.0
        %1029 = vmatprep.subr.mxu0 0.0
        %1030 = vmatpush1.msra.mxu0 0.0
        %1031 = vmatprep.subr.mxu0 0.0
        %1032 = vmatpush1.msra.mxu0 0.0
        %1033 = vmatprep.subr.mxu0 0.0
        %1034 = vmatpush1.msra.mxu0 0.0
        %1035 = vmatprep.subr.mxu0 0.0
        %1036 = vmatpush1.msra.mxu0 0.0
        %1037 = vmatprep.subr.mxu0 0.0
        %1038 = vmatpush1.msra.mxu0 0.0
        %1039 = vmatprep.subr.mxu0 0.0
        %1040 = vmatpush1.msra.mxu0 0.0
        %1041 = vmatprep.subr.mxu0 0.0
        %1042 = vmatpush1.msra.mxu0 0.0
        %1043 = vmatprep.subr.mxu0 0.0
        %1044 = vmatpush1.msra.mxu0 0.0
        %1045 = vmatprep.subr.mxu0 0.0
        %1046 = vmatpush1.msra.mxu0 0.0
        %1047 = vmatprep.subr.mxu0 0.0
        %1048 = vmatpush1.msra.mxu0 0.0
        %1049 = vmatprep.subr.mxu0 0.0
        %1050 = vmatpush1.msra.mxu0 0.0
        %1051 = vmatprep.subr.mxu0 0.0
        %1052 = vmatpush1.msra.mxu0 0.0
        %1053 = vmatprep.subr.mxu0 0.0
        %1054 = vmatpush1.msra.mxu0 0.0
        %1055 = vmatprep.subr.mxu0 0.0
        %1056 = vmatpush1.msra.mxu0 0.0
        %1057 = vmatprep.subr.mxu0 0.0
        %1058 = vmatpush1.msra.mxu0 0.0
        %1059 = vmatprep.subr.mxu0 0.0
        %1060 = vmatpush1.msra.mxu0 0.0
        %1061 = vmatprep.subr.mxu0 0.0
        %1062 = vmatpush1.msra.mxu0 0.0
        %1063 = vmatprep.mubr.f32.mxu0 0.0
        %v1064 = vand.u32 %v305, 4294901760
        %v1065 = vsub.f32 %v305, %v1064
        %v1066 = vand.u32 %v1065, 4294901760
        %1067 = vmatmul.mubr.f32.gmra.mrb[0].mxu0 %v1066
        %v1068 = vpop.f32.mrb[0].mxu0
        %v1069 = vadd.f32 %v995, %v1068
        %v1070 = vpop.f32.mrb[0].mxu0
        %1071 = vdwg.mxu0
        %1072 = vmatprep.subr.mxu0 0.0
        %v1073 = vand.u32 %v299, 4294901760
        %v1074 = vsub.f32 %v299, %v1073
        %v1075 = vand.u32 %v1074, 4294901760
        %1076 = vmatpush1.msra.mxu0 %v1075
        %1077 = vmatprep.subr.mxu0 0.0
        %1078 = vmatpush1.msra.mxu0 0.0
        %1079 = vmatprep.subr.mxu0 0.0
        %1080 = vmatpush1.msra.mxu0 0.0
        %1081 = vmatprep.subr.mxu0 0.0
        %1082 = vmatpush1.msra.mxu0 0.0
        %1083 = vmatprep.subr.mxu0 0.0
        %1084 = vmatpush1.msra.mxu0 0.0
        %1085 = vmatprep.subr.mxu0 0.0
        %1086 = vmatpush1.msra.mxu0 0.0
        %1087 = vmatprep.subr.mxu0 0.0
        %1088 = vmatpush1.msra.mxu0 0.0
        %1089 = vmatprep.subr.mxu0 0.0
        %1090 = vmatpush1.msra.mxu0 0.0
        %1091 = vmatprep.subr.mxu0 0.0
        %1092 = vmatpush1.msra.mxu0 0.0
        %1093 = vmatprep.subr.mxu0 0.0
        %1094 = vmatpush1.msra.mxu0 0.0
        %1095 = vmatprep.subr.mxu0 0.0
        %1096 = vmatpush1.msra.mxu0 0.0
        %1097 = vmatprep.subr.mxu0 0.0
        %1098 = vmatpush1.msra.mxu0 0.0
        %1099 = vmatprep.subr.mxu0 0.0
        %1100 = vmatpush1.msra.mxu0 0.0
        %1101 = vmatprep.subr.mxu0 0.0
        %1102 = vmatpush1.msra.mxu0 0.0
        %1103 = vmatprep.subr.mxu0 0.0
        %1104 = vmatpush1.msra.mxu0 0.0
        %1105 = vmatprep.subr.mxu0 0.0
        %1106 = vmatpush1.msra.mxu0 0.0
        %1107 = vmatprep.subr.mxu0 0.0
        %1108 = vmatpush1.msra.mxu0 0.0
        %1109 = vmatprep.subr.mxu0 0.0
        %1110 = vmatpush1.msra.mxu0 0.0
        %1111 = vmatprep.subr.mxu0 0.0
        %1112 = vmatpush1.msra.mxu0 0.0
        %1113 = vmatprep.subr.mxu0 0.0
        %1114 = vmatpush1.msra.mxu0 0.0
        %1115 = vmatprep.subr.mxu0 0.0
        %1116 = vmatpush1.msra.mxu0 0.0
        %1117 = vmatprep.subr.mxu0 0.0
        %1118 = vmatpush1.msra.mxu0 0.0
        %1119 = vmatprep.subr.mxu0 0.0
        %1120 = vmatpush1.msra.mxu0 0.0
        %1121 = vmatprep.subr.mxu0 0.0
        %1122 = vmatpush1.msra.mxu0 0.0
        %1123 = vmatprep.subr.mxu0 0.0
        %1124 = vmatpush1.msra.mxu0 0.0
        %1125 = vmatprep.subr.mxu0 0.0
        %1126 = vmatpush1.msra.mxu0 0.0
        %1127 = vmatprep.subr.mxu0 0.0
        %1128 = vmatpush1.msra.mxu0 0.0
        %1129 = vmatprep.subr.mxu0 0.0
        %1130 = vmatpush1.msra.mxu0 0.0
        %1131 = vmatprep.subr.mxu0 0.0
        %1132 = vmatpush1.msra.mxu0 0.0
        %1133 = vmatprep.subr.mxu0 0.0
        %1134 = vmatpush1.msra.mxu0 0.0
        %1135 = vmatprep.subr.mxu0 0.0
        %1136 = vmatpush1.msra.mxu0 0.0
        %1137 = vmatprep.subr.mxu0 0.0
        %1138 = vmatpush1.msra.mxu0 0.0
        %1139 = vmatprep.mubr.f32.mxu0 0.0
        %v1140 = vand.u32 %v305, 4294901760
        %1141 = vmatmul.mubr.f32.gmra.mrb[0].mxu0 %v1140
        %v1142 = vpop.f32.mrb[0].mxu0
        %v1143 = vadd.f32 %v1069, %v1142
        %v1144 = vpop.f32.mrb[0].mxu0
        %1145 = vdwg.mxu0
        %1146 = vmatprep.subr.mxu0 0.0
        %v1147 = vand.u32 %v299, 4294901760
        %1148 = vmatpush1.msra.mxu0 %v1147
        %1149 = vmatprep.subr.mxu0 0.0
        %1150 = vmatpush1.msra.mxu0 0.0
        %1151 = vmatprep.subr.mxu0 0.0
        %1152 = vmatpush1.msra.mxu0 0.0
        %1153 = vmatprep.subr.mxu0 0.0
        %1154 = vmatpush1.msra.mxu0 0.0
        %1155 = vmatprep.subr.mxu0 0.0
        %1156 = vmatpush1.msra.mxu0 0.0
        %1157 = vmatprep.subr.mxu0 0.0
        %1158 = vmatpush1.msra.mxu0 0.0
        %1159 = vmatprep.subr.mxu0 0.0
        %1160 = vmatpush1.msra.mxu0 0.0
        %1161 = vmatprep.subr.mxu0 0.0
        %1162 = vmatpush1.msra.mxu0 0.0
        %1163 = vmatprep.subr.mxu0 0.0
        %1164 = vmatpush1.msra.mxu0 0.0
        %1165 = vmatprep.subr.mxu0 0.0
        %1166 = vmatpush1.msra.mxu0 0.0
        %1167 = vmatprep.subr.mxu0 0.0
        %1168 = vmatpush1.msra.mxu0 0.0
        %1169 = vmatprep.subr.mxu0 0.0
        %1170 = vmatpush1.msra.mxu0 0.0
        %1171 = vmatprep.subr.mxu0 0.0
        %1172 = vmatpush1.msra.mxu0 0.0
        %1173 = vmatprep.subr.mxu0 0.0
        %1174 = vmatpush1.msra.mxu0 0.0
        %1175 = vmatprep.subr.mxu0 0.0
        %1176 = vmatpush1.msra.mxu0 0.0
        %1177 = vmatprep.subr.mxu0 0.0
        %1178 = vmatpush1.msra.mxu0 0.0
        %1179 = vmatprep.subr.mxu0 0.0
        %1180 = vmatpush1.msra.mxu0 0.0
        %1181 = vmatprep.subr.mxu0 0.0
        %1182 = vmatpush1.msra.mxu0 0.0
        %1183 = vmatprep.subr.mxu0 0.0
        %1184 = vmatpush1.msra.mxu0 0.0
        %1185 = vmatprep.subr.mxu0 0.0
        %1186 = vmatpush1.msra.mxu0 0.0
        %1187 = vmatprep.subr.mxu0 0.0
        %1188 = vmatpush1.msra.mxu0 0.0
        %1189 = vmatprep.subr.mxu0 0.0
        %1190 = vmatpush1.msra.mxu0 0.0
        %1191 = vmatprep.subr.mxu0 0.0
        %1192 = vmatpush1.msra.mxu0 0.0
        %1193 = vmatprep.subr.mxu0 0.0
        %1194 = vmatpush1.msra.mxu0 0.0
        %1195 = vmatprep.subr.mxu0 0.0
        %1196 = vmatpush1.msra.mxu0 0.0
        %1197 = vmatprep.subr.mxu0 0.0
        %1198 = vmatpush1.msra.mxu0 0.0
        %1199 = vmatprep.subr.mxu0 0.0
        %1200 = vmatpush1.msra.mxu0 0.0
        %1201 = vmatprep.subr.mxu0 0.0
        %1202 = vmatpush1.msra.mxu0 0.0
        %1203 = vmatprep.subr.mxu0 0.0
        %1204 = vmatpush1.msra.mxu0 0.0
        %1205 = vmatprep.subr.mxu0 0.0
        %1206 = vmatpush1.msra.mxu0 0.0
        %1207 = vmatprep.subr.mxu0 0.0
        %1208 = vmatpush1.msra.mxu0 0.0
        %1209 = vmatprep.subr.mxu0 0.0
        %1210 = vmatpush1.msra.mxu0 0.0
        %1211 = vmatprep.mubr.f32.mxu0 0.0
        %v1212 = vand.u32 %v305, 4294901760
        %1213 = vmatmul.mubr.f32.gmra.mrb[0].mxu0 %v1212
        %v1214 = vpop.f32.mrb[0].mxu0
        %v1215 = vadd.f32 %v1143, %v1214
        %v1216 = vpop.f32.mrb[0].mxu0
        %1217 = vdwg.mxu0
        %v1219 = vsel %vm303, %v281, 0
        %v1221 = vand.u32 %v278, 4294901760
        %1222 = vmatprep.subr.mxu0 %v1221
        %v1223 = vand.u32 %v277, 4294901760
        %1224 = vmatpush1.msra.mxu0 %v1223
        %1225 = vmatprep.subr.mxu0 0.0
        %1226 = vmatpush1.msra.mxu0 0.0
        %1227 = vmatprep.subr.mxu0 0.0
        %1228 = vmatpush1.msra.mxu0 0.0
        %1229 = vmatprep.subr.mxu0 0.0
        %1230 = vmatpush1.msra.mxu0 0.0
        %1231 = vmatprep.subr.mxu0 0.0
        %1232 = vmatpush1.msra.mxu0 0.0
        %1233 = vmatprep.subr.mxu0 0.0
        %1234 = vmatpush1.msra.mxu0 0.0
        %1235 = vmatprep.subr.mxu0 0.0
        %1236 = vmatpush1.msra.mxu0 0.0
        %1237 = vmatprep.subr.mxu0 0.0
        %1238 = vmatpush1.msra.mxu0 0.0
        %1239 = vmatprep.subr.mxu0 0.0
        %1240 = vmatpush1.msra.mxu0 0.0
        %1241 = vmatprep.subr.mxu0 0.0
        %1242 = vmatpush1.msra.mxu0 0.0
        %1243 = vmatprep.subr.mxu0 0.0
        %1244 = vmatpush1.msra.mxu0 0.0
        %1245 = vmatprep.subr.mxu0 0.0
        %1246 = vmatpush1.msra.mxu0 0.0
        %1247 = vmatprep.subr.mxu0 0.0
        %1248 = vmatpush1.msra.mxu0 0.0
        %1249 = vmatprep.subr.mxu0 0.0
        %1250 = vmatpush1.msra.mxu0 0.0
        %1251 = vmatprep.subr.mxu0 0.0
        %1252 = vmatpush1.msra.mxu0 0.0
        %1253 = vmatprep.subr.mxu0 0.0
        %1254 = vmatpush1.msra.mxu0 0.0
        %1255 = vmatprep.subr.mxu0 0.0
        %1256 = vmatpush1.msra.mxu0 0.0
        %1257 = vmatprep.subr.mxu0 0.0
        %1258 = vmatpush1.msra.mxu0 0.0
        %1259 = vmatprep.subr.mxu0 0.0
        %1260 = vmatpush1.msra.mxu0 0.0
        %1261 = vmatprep.subr.mxu0 0.0
        %1262 = vmatpush1.msra.mxu0 0.0
        %1263 = vmatprep.subr.mxu0 0.0
        %1264 = vmatpush1.msra.mxu0 0.0
        %1265 = vmatprep.subr.mxu0 0.0
        %1266 = vmatpush1.msra.mxu0 0.0
        %1267 = vmatprep.subr.mxu0 0.0
        %1268 = vmatpush1.msra.mxu0 0.0
        %1269 = vmatprep.subr.mxu0 0.0
        %1270 = vmatpush1.msra.mxu0 0.0
        %1271 = vmatprep.subr.mxu0 0.0
        %1272 = vmatpush1.msra.mxu0 0.0
        %1273 = vmatprep.subr.mxu0 0.0
        %1274 = vmatpush1.msra.mxu0 0.0
        %1275 = vmatprep.subr.mxu0 0.0
        %1276 = vmatpush1.msra.mxu0 0.0
        %1277 = vmatprep.subr.mxu0 0.0
        %1278 = vmatpush1.msra.mxu0 0.0
        %1279 = vmatprep.subr.mxu0 0.0
        %1280 = vmatpush1.msra.mxu0 0.0
        %1281 = vmatprep.subr.mxu0 0.0
        %1282 = vmatpush1.msra.mxu0 0.0
        %1283 = vmatprep.subr.mxu0 0.0
        %1284 = vmatpush1.msra.mxu0 0.0
        %1285 = vmatprep.subr.mxu0 0.0
        %1286 = vmatpush1.msra.mxu0 0.0
        %1287 = vmatprep.mubr.f32.mxu0 0.0
        %v1288 = vand.u32 %v1219, 4294901760
        %v1289 = vsub.f32 %v1219, %v1288
        %v1290 = vand.u32 %v1289, 4294901760
        %v1291 = vsub.f32 %v1289, %v1290
        %v1292 = vand.u32 %v1291, 4294901760
        %1293 = vmatmul.mubr.f32.gmra.mrb[0].mxu0 %v1292
        %v1294 = vpop.f32.mrb[0].mxu0
        %v1295 = vadd.f32 %v768, %v1294
        %v1296 = vpop.f32.mrb[0].mxu0
        %v1297 = vadd.f32 %v770, %v1296
        %1298 = vdwg.mxu0
        %v1299 = vand.u32 %v278, 4294901760
        %v1300 = vsub.f32 %v278, %v1299
        %v1301 = vand.u32 %v1300, 4294901760
        %v1302 = vsub.f32 %v1300, %v1301
        %v1303 = vand.u32 %v1302, 4294901760
        %1304 = vmatprep.subr.mxu0 %v1303
        %v1305 = vand.u32 %v277, 4294901760
        %v1306 = vsub.f32 %v277, %v1305
        %v1307 = vand.u32 %v1306, 4294901760
        %v1308 = vsub.f32 %v1306, %v1307
        %v1309 = vand.u32 %v1308, 4294901760
        %1310 = vmatpush1.msra.mxu0 %v1309
        %1311 = vmatprep.subr.mxu0 0.0
        %1312 = vmatpush1.msra.mxu0 0.0
        %1313 = vmatprep.subr.mxu0 0.0
        %1314 = vmatpush1.msra.mxu0 0.0
        %1315 = vmatprep.subr.mxu0 0.0
        %1316 = vmatpush1.msra.mxu0 0.0
        %1317 = vmatprep.subr.mxu0 0.0
        %1318 = vmatpush1.msra.mxu0 0.0
        %1319 = vmatprep.subr.mxu0 0.0
        %1320 = vmatpush1.msra.mxu0 0.0
        %1321 = vmatprep.subr.mxu0 0.0
        %1322 = vmatpush1.msra.mxu0 0.0
        %1323 = vmatprep.subr.mxu0 0.0
        %1324 = vmatpush1.msra.mxu0 0.0
        %1325 = vmatprep.subr.mxu0 0.0
        %1326 = vmatpush1.msra.mxu0 0.0
        %1327 = vmatprep.subr.mxu0 0.0
        %1328 = vmatpush1.msra.mxu0 0.0
        %1329 = vmatprep.subr.mxu0 0.0
        %1330 = vmatpush1.msra.mxu0 0.0
        %1331 = vmatprep.subr.mxu0 0.0
        %1332 = vmatpush1.msra.mxu0 0.0
        %1333 = vmatprep.subr.mxu0 0.0
        %1334 = vmatpush1.msra.mxu0 0.0
        %1335 = vmatprep.subr.mxu0 0.0
        %1336 = vmatpush1.msra.mxu0 0.0
        %1337 = vmatprep.subr.mxu0 0.0
        %1338 = vmatpush1.msra.mxu0 0.0
        %1339 = vmatprep.subr.mxu0 0.0
        %1340 = vmatpush1.msra.mxu0 0.0
        %1341 = vmatprep.subr.mxu0 0.0
        %1342 = vmatpush1.msra.mxu0 0.0
        %1343 = vmatprep.subr.mxu0 0.0
        %1344 = vmatpush1.msra.mxu0 0.0
        %1345 = vmatprep.subr.mxu0 0.0
        %1346 = vmatpush1.msra.mxu0 0.0
        %1347 = vmatprep.subr.mxu0 0.0
        %1348 = vmatpush1.msra.mxu0 0.0
        %1349 = vmatprep.subr.mxu0 0.0
        %1350 = vmatpush1.msra.mxu0 0.0
        %1351 = vmatprep.subr.mxu0 0.0
        %1352 = vmatpush1.msra.mxu0 0.0
        %1353 = vmatprep.subr.mxu0 0.0
        %1354 = vmatpush1.msra.mxu0 0.0
        %1355 = vmatprep.subr.mxu0 0.0
        %1356 = vmatpush1.msra.mxu0 0.0
        %1357 = vmatprep.subr.mxu0 0.0
        %1358 = vmatpush1.msra.mxu0 0.0
        %1359 = vmatprep.subr.mxu0 0.0
        %1360 = vmatpush1.msra.mxu0 0.0
        %1361 = vmatprep.subr.mxu0 0.0
        %1362 = vmatpush1.msra.mxu0 0.0
        %1363 = vmatprep.subr.mxu0 0.0
        %1364 = vmatpush1.msra.mxu0 0.0
        %1365 = vmatprep.subr.mxu0 0.0
        %1366 = vmatpush1.msra.mxu0 0.0
        %1367 = vmatprep.subr.mxu0 0.0
        %1368 = vmatpush1.msra.mxu0 0.0
        %1369 = vmatprep.subr.mxu0 0.0
        %1370 = vmatpush1.msra.mxu0 0.0
        %1371 = vmatprep.subr.mxu0 0.0
        %1372 = vmatpush1.msra.mxu0 0.0
        %1373 = vmatprep.mubr.f32.mxu0 0.0
        %v1374 = vand.u32 %v1219, 4294901760
        %1375 = vmatmul.mubr.f32.gmra.mrb[0].mxu0 %v1374
        %v1376 = vpop.f32.mrb[0].mxu0
        %v1377 = vadd.f32 %v1295, %v1376
        %v1378 = vpop.f32.mrb[0].mxu0
        %v1379 = vadd.f32 %v1297, %v1378
        %1380 = vdwg.mxu0
        %v1381 = vand.u32 %v278, 4294901760
        %v1382 = vsub.f32 %v278, %v1381
        %1383 = vmatprep.subr.mxu0 %v1382
        %v1384 = vand.u32 %v277, 4294901760
        %v1385 = vsub.f32 %v277, %v1384
        %1386 = vmatpush1.msra.mxu0 %v1385
        %1387 = vmatprep.subr.mxu0 0.0
        %1388 = vmatpush1.msra.mxu0 0.0
        %1389 = vmatprep.subr.mxu0 0.0
        %1390 = vmatpush1.msra.mxu0 0.0
        %1391 = vmatprep.subr.mxu0 0.0
        %1392 = vmatpush1.msra.mxu0 0.0
        %1393 = vmatprep.subr.mxu0 0.0
        %1394 = vmatpush1.msra.mxu0 0.0
        %1395 = vmatprep.subr.mxu0 0.0
        %1396 = vmatpush1.msra.mxu0 0.0
        %1397 = vmatprep.subr.mxu0 0.0
        %1398 = vmatpush1.msra.mxu0 0.0
        %1399 = vmatprep.subr.mxu0 0.0
        %1400 = vmatpush1.msra.mxu0 0.0
        %1401 = vmatprep.subr.mxu0 0.0
        %1402 = vmatpush1.msra.mxu0 0.0
        %1403 = vmatprep.subr.mxu0 0.0
        %1404 = vmatpush1.msra.mxu0 0.0
        %1405 = vmatprep.subr.mxu0 0.0
        %1406 = vmatpush1.msra.mxu0 0.0
        %1407 = vmatprep.subr.mxu0 0.0
        %1408 = vmatpush1.msra.mxu0 0.0
        %1409 = vmatprep.subr.mxu0 0.0
        %1410 = vmatpush1.msra.mxu0 0.0
        %1411 = vmatprep.subr.mxu0 0.0
        %1412 = vmatpush1.msra.mxu0 0.0
        %1413 = vmatprep.subr.mxu0 0.0
        %1414 = vmatpush1.msra.mxu0 0.0
        %1415 = vmatprep.subr.mxu0 0.0
        %1416 = vmatpush1.msra.mxu0 0.0
        %1417 = vmatprep.subr.mxu0 0.0
        %1418 = vmatpush1.msra.mxu0 0.0
        %1419 = vmatprep.subr.mxu0 0.0
        %1420 = vmatpush1.msra.mxu0 0.0
        %1421 = vmatprep.subr.mxu0 0.0
        %1422 = vmatpush1.msra.mxu0 0.0
        %1423 = vmatprep.subr.mxu0 0.0
        %1424 = vmatpush1.msra.mxu0 0.0
        %1425 = vmatprep.subr.mxu0 0.0
        %1426 = vmatpush1.msra.mxu0 0.0
        %1427 = vmatprep.subr.mxu0 0.0
        %1428 = vmatpush1.msra.mxu0 0.0
        %1429 = vmatprep.subr.mxu0 0.0
        %1430 = vmatpush1.msra.mxu0 0.0
        %1431 = vmatprep.subr.mxu0 0.0
        %1432 = vmatpush1.msra.mxu0 0.0
        %1433 = vmatprep.subr.mxu0 0.0
        %1434 = vmatpush1.msra.mxu0 0.0
        %1435 = vmatprep.subr.mxu0 0.0
        %1436 = vmatpush1.msra.mxu0 0.0
        %1437 = vmatprep.subr.mxu0 0.0
        %1438 = vmatpush1.msra.mxu0 0.0
        %1439 = vmatprep.subr.mxu0 0.0
        %1440 = vmatpush1.msra.mxu0 0.0
        %1441 = vmatprep.subr.mxu0 0.0
        %1442 = vmatpush1.msra.mxu0 0.0
        %1443 = vmatprep.subr.mxu0 0.0
        %1444 = vmatpush1.msra.mxu0 0.0
        %1445 = vmatprep.subr.mxu0 0.0
        %1446 = vmatpush1.msra.mxu0 0.0
        %1447 = vmatprep.subr.mxu0 0.0
        %1448 = vmatpush1.msra.mxu0 0.0
        %1449 = vmatprep.mubr.f32.mxu0 0.0
        %v1450 = vand.u32 %v1219, 4294901760
        %v1451 = vsub.f32 %v1219, %v1450
        %1452 = vmatmul.mubr.f32.gmra.mrb[0].mxu0 %v1451
        %v1453 = vpop.f32.mrb[0].mxu0
        %v1454 = vadd.f32 %v1377, %v1453
        %v1455 = vpop.f32.mrb[0].mxu0
        %v1456 = vadd.f32 %v1379, %v1455
        %1457 = vdwg.mxu0
        %v1458 = vand.u32 %v278, 4294901760
        %1459 = vmatprep.subr.mxu0 %v1458
        %v1460 = vand.u32 %v277, 4294901760
        %1461 = vmatpush1.msra.mxu0 %v1460
        %1462 = vmatprep.subr.mxu0 0.0
        %1463 = vmatpush1.msra.mxu0 0.0
        %1464 = vmatprep.subr.mxu0 0.0
        %1465 = vmatpush1.msra.mxu0 0.0
        %1466 = vmatprep.subr.mxu0 0.0
        %1467 = vmatpush1.msra.mxu0 0.0
        %1468 = vmatprep.subr.mxu0 0.0
        %1469 = vmatpush1.msra.mxu0 0.0
        %1470 = vmatprep.subr.mxu0 0.0
        %1471 = vmatpush1.msra.mxu0 0.0
        %1472 = vmatprep.subr.mxu0 0.0
        %1473 = vmatpush1.msra.mxu0 0.0
        %1474 = vmatprep.subr.mxu0 0.0
        %1475 = vmatpush1.msra.mxu0 0.0
        %1476 = vmatprep.subr.mxu0 0.0
        %1477 = vmatpush1.msra.mxu0 0.0
        %1478 = vmatprep.subr.mxu0 0.0
        %1479 = vmatpush1.msra.mxu0 0.0
        %1480 = vmatprep.subr.mxu0 0.0
        %1481 = vmatpush1.msra.mxu0 0.0
        %1482 = vmatprep.subr.mxu0 0.0
        %1483 = vmatpush1.msra.mxu0 0.0
        %1484 = vmatprep.subr.mxu0 0.0
        %1485 = vmatpush1.msra.mxu0 0.0
        %1486 = vmatprep.subr.mxu0 0.0
        %1487 = vmatpush1.msra.mxu0 0.0
        %1488 = vmatprep.subr.mxu0 0.0
        %1489 = vmatpush1.msra.mxu0 0.0
        %1490 = vmatprep.subr.mxu0 0.0
        %1491 = vmatpush1.msra.mxu0 0.0
        %1492 = vmatprep.subr.mxu0 0.0
        %1493 = vmatpush1.msra.mxu0 0.0
        %1494 = vmatprep.subr.mxu0 0.0
        %1495 = vmatpush1.msra.mxu0 0.0
        %1496 = vmatprep.subr.mxu0 0.0
        %1497 = vmatpush1.msra.mxu0 0.0
        %1498 = vmatprep.subr.mxu0 0.0
        %1499 = vmatpush1.msra.mxu0 0.0
        %1500 = vmatprep.subr.mxu0 0.0
        %1501 = vmatpush1.msra.mxu0 0.0
        %1502 = vmatprep.subr.mxu0 0.0
        %1503 = vmatpush1.msra.mxu0 0.0
        %1504 = vmatprep.subr.mxu0 0.0
        %1505 = vmatpush1.msra.mxu0 0.0
        %1506 = vmatprep.subr.mxu0 0.0
        %1507 = vmatpush1.msra.mxu0 0.0
        %1508 = vmatprep.subr.mxu0 0.0
        %1509 = vmatpush1.msra.mxu0 0.0
        %1510 = vmatprep.subr.mxu0 0.0
        %1511 = vmatpush1.msra.mxu0 0.0
        %1512 = vmatprep.subr.mxu0 0.0
        %1513 = vmatpush1.msra.mxu0 0.0
        %1514 = vmatprep.subr.mxu0 0.0
        %1515 = vmatpush1.msra.mxu0 0.0
        %1516 = vmatprep.subr.mxu0 0.0
        %1517 = vmatpush1.msra.mxu0 0.0
        %1518 = vmatprep.subr.mxu0 0.0
        %1519 = vmatpush1.msra.mxu0 0.0
        %1520 = vmatprep.subr.mxu0 0.0
        %1521 = vmatpush1.msra.mxu0 0.0
        %1522 = vmatprep.subr.mxu0 0.0
        %1523 = vmatpush1.msra.mxu0 0.0
        %1524 = vmatprep.mubr.f32.mxu0 0.0
        %v1525 = vand.u32 %v1219, 4294901760
        %v1526 = vsub.f32 %v1219, %v1525
        %v1527 = vand.u32 %v1526, 4294901760
        %1528 = vmatmul.mubr.f32.gmra.mrb[0].mxu0 %v1527
        %v1529 = vpop.f32.mrb[0].mxu0
        %v1530 = vadd.f32 %v1454, %v1529
        %v1531 = vpop.f32.mrb[0].mxu0
        %v1532 = vadd.f32 %v1456, %v1531
        %1533 = vdwg.mxu0
        %v1534 = vand.u32 %v278, 4294901760
        %v1535 = vsub.f32 %v278, %v1534
        %v1536 = vand.u32 %v1535, 4294901760
        %1537 = vmatprep.subr.mxu0 %v1536
        %v1538 = vand.u32 %v277, 4294901760
        %v1539 = vsub.f32 %v277, %v1538
        %v1540 = vand.u32 %v1539, 4294901760
        %1541 = vmatpush1.msra.mxu0 %v1540
        %1542 = vmatprep.subr.mxu0 0.0
        %1543 = vmatpush1.msra.mxu0 0.0
        %1544 = vmatprep.subr.mxu0 0.0
        %1545 = vmatpush1.msra.mxu0 0.0
        %1546 = vmatprep.subr.mxu0 0.0
        %1547 = vmatpush1.msra.mxu0 0.0
        %1548 = vmatprep.subr.mxu0 0.0
        %1549 = vmatpush1.msra.mxu0 0.0
        %1550 = vmatprep.subr.mxu0 0.0
        %1551 = vmatpush1.msra.mxu0 0.0
        %1552 = vmatprep.subr.mxu0 0.0
        %1553 = vmatpush1.msra.mxu0 0.0
        %1554 = vmatprep.subr.mxu0 0.0
        %1555 = vmatpush1.msra.mxu0 0.0
        %1556 = vmatprep.subr.mxu0 0.0
        %1557 = vmatpush1.msra.mxu0 0.0
        %1558 = vmatprep.subr.mxu0 0.0
        %1559 = vmatpush1.msra.mxu0 0.0
        %1560 = vmatprep.subr.mxu0 0.0
        %1561 = vmatpush1.msra.mxu0 0.0
        %1562 = vmatprep.subr.mxu0 0.0
        %1563 = vmatpush1.msra.mxu0 0.0
        %1564 = vmatprep.subr.mxu0 0.0
        %1565 = vmatpush1.msra.mxu0 0.0
        %1566 = vmatprep.subr.mxu0 0.0
        %1567 = vmatpush1.msra.mxu0 0.0
        %1568 = vmatprep.subr.mxu0 0.0
        %1569 = vmatpush1.msra.mxu0 0.0
        %1570 = vmatprep.subr.mxu0 0.0
        %1571 = vmatpush1.msra.mxu0 0.0
        %1572 = vmatprep.subr.mxu0 0.0
        %1573 = vmatpush1.msra.mxu0 0.0
        %1574 = vmatprep.subr.mxu0 0.0
        %1575 = vmatpush1.msra.mxu0 0.0
        %1576 = vmatprep.subr.mxu0 0.0
        %1577 = vmatpush1.msra.mxu0 0.0
        %1578 = vmatprep.subr.mxu0 0.0
        %1579 = vmatpush1.msra.mxu0 0.0
        %1580 = vmatprep.subr.mxu0 0.0
        %1581 = vmatpush1.msra.mxu0 0.0
        %1582 = vmatprep.subr.mxu0 0.0
        %1583 = vmatpush1.msra.mxu0 0.0
        %1584 = vmatprep.subr.mxu0 0.0
        %1585 = vmatpush1.msra.mxu0 0.0
        %1586 = vmatprep.subr.mxu0 0.0
        %1587 = vmatpush1.msra.mxu0 0.0
        %1588 = vmatprep.subr.mxu0 0.0
        %1589 = vmatpush1.msra.mxu0 0.0
        %1590 = vmatprep.subr.mxu0 0.0
        %1591 = vmatpush1.msra.mxu0 0.0
        %1592 = vmatprep.subr.mxu0 0.0
        %1593 = vmatpush1.msra.mxu0 0.0
        %1594 = vmatprep.subr.mxu0 0.0
        %1595 = vmatpush1.msra.mxu0 0.0
        %1596 = vmatprep.subr.mxu0 0.0
        %1597 = vmatpush1.msra.mxu0 0.0
        %1598 = vmatprep.subr.mxu0 0.0
        %1599 = vmatpush1.msra.mxu0 0.0
        %1600 = vmatprep.subr.mxu0 0.0
        %1601 = vmatpush1.msra.mxu0 0.0
        %1602 = vmatprep.subr.mxu0 0.0
        %1603 = vmatpush1.msra.mxu0 0.0
        %1604 = vmatprep.mubr.f32.mxu0 0.0
        %v1605 = vand.u32 %v1219, 4294901760
        %1606 = vmatmul.mubr.f32.gmra.mrb[0].mxu0 %v1605
        %v1607 = vpop.f32.mrb[0].mxu0
        %v1608 = vadd.f32 %v1530, %v1607
        %v1609 = vpop.f32.mrb[0].mxu0
        %v1610 = vadd.f32 %v1532, %v1609
        %1611 = vdwg.mxu0
        %v1612 = vand.u32 %v278, 4294901760
        %1613 = vmatprep.subr.mxu0 %v1612
        %v1614 = vand.u32 %v277, 4294901760
        %1615 = vmatpush1.msra.mxu0 %v1614
        %1616 = vmatprep.subr.mxu0 0.0
        %1617 = vmatpush1.msra.mxu0 0.0
        %1618 = vmatprep.subr.mxu0 0.0
        %1619 = vmatpush1.msra.mxu0 0.0
        %1620 = vmatprep.subr.mxu0 0.0
        %1621 = vmatpush1.msra.mxu0 0.0
        %1622 = vmatprep.subr.mxu0 0.0
        %1623 = vmatpush1.msra.mxu0 0.0
        %1624 = vmatprep.subr.mxu0 0.0
        %1625 = vmatpush1.msra.mxu0 0.0
        %1626 = vmatprep.subr.mxu0 0.0
        %1627 = vmatpush1.msra.mxu0 0.0
        %1628 = vmatprep.subr.mxu0 0.0
        %1629 = vmatpush1.msra.mxu0 0.0
        %1630 = vmatprep.subr.mxu0 0.0
        %1631 = vmatpush1.msra.mxu0 0.0
        %1632 = vmatprep.subr.mxu0 0.0
        %1633 = vmatpush1.msra.mxu0 0.0
        %1634 = vmatprep.subr.mxu0 0.0
        %1635 = vmatpush1.msra.mxu0 0.0
        %1636 = vmatprep.subr.mxu0 0.0
        %1637 = vmatpush1.msra.mxu0 0.0
        %1638 = vmatprep.subr.mxu0 0.0
        %1639 = vmatpush1.msra.mxu0 0.0
        %1640 = vmatprep.subr.mxu0 0.0
        %1641 = vmatpush1.msra.mxu0 0.0
        %1642 = vmatprep.subr.mxu0 0.0
        %1643 = vmatpush1.msra.mxu0 0.0
        %1644 = vmatprep.subr.mxu0 0.0
        %1645 = vmatpush1.msra.mxu0 0.0
        %1646 = vmatprep.subr.mxu0 0.0
        %1647 = vmatpush1.msra.mxu0 0.0
        %1648 = vmatprep.subr.mxu0 0.0
        %1649 = vmatpush1.msra.mxu0 0.0
        %1650 = vmatprep.subr.mxu0 0.0
        %1651 = vmatpush1.msra.mxu0 0.0
        %1652 = vmatprep.subr.mxu0 0.0
        %1653 = vmatpush1.msra.mxu0 0.0
        %1654 = vmatprep.subr.mxu0 0.0
        %1655 = vmatpush1.msra.mxu0 0.0
        %1656 = vmatprep.subr.mxu0 0.0
        %1657 = vmatpush1.msra.mxu0 0.0
        %1658 = vmatprep.subr.mxu0 0.0
        %1659 = vmatpush1.msra.mxu0 0.0
        %1660 = vmatprep.subr.mxu0 0.0
        %1661 = vmatpush1.msra.mxu0 0.0
        %1662 = vmatprep.subr.mxu0 0.0
        %1663 = vmatpush1.msra.mxu0 0.0
        %1664 = vmatprep.subr.mxu0 0.0
        %1665 = vmatpush1.msra.mxu0 0.0
        %1666 = vmatprep.subr.mxu0 0.0
        %1667 = vmatpush1.msra.mxu0 0.0
        %1668 = vmatprep.subr.mxu0 0.0
        %1669 = vmatpush1.msra.mxu0 0.0
        %1670 = vmatprep.subr.mxu0 0.0
        %1671 = vmatpush1.msra.mxu0 0.0
        %1672 = vmatprep.subr.mxu0 0.0
        %1673 = vmatpush1.msra.mxu0 0.0
        %1674 = vmatprep.subr.mxu0 0.0
        %1675 = vmatpush1.msra.mxu0 0.0
        %1676 = vmatprep.subr.mxu0 0.0
        %1677 = vmatpush1.msra.mxu0 0.0
        %1678 = vmatprep.mubr.f32.mxu0 0.0
        %v1679 = vand.u32 %v1219, 4294901760
        %1680 = vmatmul.mubr.f32.gmra.mrb[0].mxu0 %v1679
        %v1681 = vpop.f32.mrb[0].mxu0
        %v1682 = vadd.f32 %v1608, %v1681
        %v1683 = vpop.f32.mrb[0].mxu0
        %v1684 = vadd.f32 %v1610, %v1683
        %1685 = vdwg.mxu0
        %1686 = vmatprep.subr.mxu0 0.0
        %v1687 = vand.u32 %v279, 4294901760
        %1688 = vmatpush1.msra.mxu0 %v1687
        %1689 = vmatprep.subr.mxu0 0.0
        %1690 = vmatpush1.msra.mxu0 0.0
        %1691 = vmatprep.subr.mxu0 0.0
        %1692 = vmatpush1.msra.mxu0 0.0
        %1693 = vmatprep.subr.mxu0 0.0
        %1694 = vmatpush1.msra.mxu0 0.0
        %1695 = vmatprep.subr.mxu0 0.0
        %1696 = vmatpush1.msra.mxu0 0.0
        %1697 = vmatprep.subr.mxu0 0.0
        %1698 = vmatpush1.msra.mxu0 0.0
        %1699 = vmatprep.subr.mxu0 0.0
        %1700 = vmatpush1.msra.mxu0 0.0
        %1701 = vmatprep.subr.mxu0 0.0
        %1702 = vmatpush1.msra.mxu0 0.0
        %1703 = vmatprep.subr.mxu0 0.0
        %1704 = vmatpush1.msra.mxu0 0.0
        %1705 = vmatprep.subr.mxu0 0.0
        %1706 = vmatpush1.msra.mxu0 0.0
        %1707 = vmatprep.subr.mxu0 0.0
        %1708 = vmatpush1.msra.mxu0 0.0
        %1709 = vmatprep.subr.mxu0 0.0
        %1710 = vmatpush1.msra.mxu0 0.0
        %1711 = vmatprep.subr.mxu0 0.0
        %1712 = vmatpush1.msra.mxu0 0.0
        %1713 = vmatprep.subr.mxu0 0.0
        %1714 = vmatpush1.msra.mxu0 0.0
        %1715 = vmatprep.subr.mxu0 0.0
        %1716 = vmatpush1.msra.mxu0 0.0
        %1717 = vmatprep.subr.mxu0 0.0
        %1718 = vmatpush1.msra.mxu0 0.0
        %1719 = vmatprep.subr.mxu0 0.0
        %1720 = vmatpush1.msra.mxu0 0.0
        %1721 = vmatprep.subr.mxu0 0.0
        %1722 = vmatpush1.msra.mxu0 0.0
        %1723 = vmatprep.subr.mxu0 0.0
        %1724 = vmatpush1.msra.mxu0 0.0
        %1725 = vmatprep.subr.mxu0 0.0
        %1726 = vmatpush1.msra.mxu0 0.0
        %1727 = vmatprep.subr.mxu0 0.0
        %1728 = vmatpush1.msra.mxu0 0.0
        %1729 = vmatprep.subr.mxu0 0.0
        %1730 = vmatpush1.msra.mxu0 0.0
        %1731 = vmatprep.subr.mxu0 0.0
        %1732 = vmatpush1.msra.mxu0 0.0
        %1733 = vmatprep.subr.mxu0 0.0
        %1734 = vmatpush1.msra.mxu0 0.0
        %1735 = vmatprep.subr.mxu0 0.0
        %1736 = vmatpush1.msra.mxu0 0.0
        %1737 = vmatprep.subr.mxu0 0.0
        %1738 = vmatpush1.msra.mxu0 0.0
        %1739 = vmatprep.subr.mxu0 0.0
        %1740 = vmatpush1.msra.mxu0 0.0
        %1741 = vmatprep.subr.mxu0 0.0
        %1742 = vmatpush1.msra.mxu0 0.0
        %1743 = vmatprep.subr.mxu0 0.0
        %1744 = vmatpush1.msra.mxu0 0.0
        %1745 = vmatprep.subr.mxu0 0.0
        %1746 = vmatpush1.msra.mxu0 0.0
        %1747 = vmatprep.subr.mxu0 0.0
        %1748 = vmatpush1.msra.mxu0 0.0
        %1749 = vmatprep.subr.mxu0 0.0
        %1750 = vmatpush1.msra.mxu0 0.0
        %1751 = vmatprep.mubr.f32.mxu0 0.0
        %v1752 = vand.u32 %v1219, 4294901760
        %v1753 = vsub.f32 %v1219, %v1752
        %v1754 = vand.u32 %v1753, 4294901760
        %v1755 = vsub.f32 %v1753, %v1754
        %v1756 = vand.u32 %v1755, 4294901760
        %1757 = vmatmul.mubr.f32.gmra.mrb[0].mxu0 %v1756
        %v1758 = vpop.f32.mrb[0].mxu0
        %v1759 = vadd.f32 %v1215, %v1758
        %v1760 = vpop.f32.mrb[0].mxu0
        %1761 = vdwg.mxu0
        %1762 = vmatprep.subr.mxu0 0.0
        %v1763 = vand.u32 %v279, 4294901760
        %v1764 = vsub.f32 %v279, %v1763
        %v1765 = vand.u32 %v1764, 4294901760
        %v1766 = vsub.f32 %v1764, %v1765
        %v1767 = vand.u32 %v1766, 4294901760
        %1768 = vmatpush1.msra.mxu0 %v1767
        %1769 = vmatprep.subr.mxu0 0.0
        %1770 = vmatpush1.msra.mxu0 0.0
        %1771 = vmatprep.subr.mxu0 0.0
        %1772 = vmatpush1.msra.mxu0 0.0
        %1773 = vmatprep.subr.mxu0 0.0
        %1774 = vmatpush1.msra.mxu0 0.0
        %1775 = vmatprep.subr.mxu0 0.0
        %1776 = vmatpush1.msra.mxu0 0.0
        %1777 = vmatprep.subr.mxu0 0.0
        %1778 = vmatpush1.msra.mxu0 0.0
        %1779 = vmatprep.subr.mxu0 0.0
        %1780 = vmatpush1.msra.mxu0 0.0
        %1781 = vmatprep.subr.mxu0 0.0
        %1782 = vmatpush1.msra.mxu0 0.0
        %1783 = vmatprep.subr.mxu0 0.0
        %1784 = vmatpush1.msra.mxu0 0.0
        %1785 = vmatprep.subr.mxu0 0.0
        %1786 = vmatpush1.msra.mxu0 0.0
        %1787 = vmatprep.subr.mxu0 0.0
        %1788 = vmatpush1.msra.mxu0 0.0
        %1789 = vmatprep.subr.mxu0 0.0
        %1790 = vmatpush1.msra.mxu0 0.0
        %1791 = vmatprep.subr.mxu0 0.0
        %1792 = vmatpush1.msra.mxu0 0.0
        %1793 = vmatprep.subr.mxu0 0.0
        %1794 = vmatpush1.msra.mxu0 0.0
        %1795 = vmatprep.subr.mxu0 0.0
        %1796 = vmatpush1.msra.mxu0 0.0
        %1797 = vmatprep.subr.mxu0 0.0
        %1798 = vmatpush1.msra.mxu0 0.0
        %1799 = vmatprep.subr.mxu0 0.0
        %1800 = vmatpush1.msra.mxu0 0.0
        %1801 = vmatprep.subr.mxu0 0.0
        %1802 = vmatpush1.msra.mxu0 0.0
        %1803 = vmatprep.subr.mxu0 0.0
        %1804 = vmatpush1.msra.mxu0 0.0
        %1805 = vmatprep.subr.mxu0 0.0
        %1806 = vmatpush1.msra.mxu0 0.0
        %1807 = vmatprep.subr.mxu0 0.0
        %1808 = vmatpush1.msra.mxu0 0.0
        %1809 = vmatprep.subr.mxu0 0.0
        %1810 = vmatpush1.msra.mxu0 0.0
        %1811 = vmatprep.subr.mxu0 0.0
        %1812 = vmatpush1.msra.mxu0 0.0
        %1813 = vmatprep.subr.mxu0 0.0
        %1814 = vmatpush1.msra.mxu0 0.0
        %1815 = vmatprep.subr.mxu0 0.0
        %1816 = vmatpush1.msra.mxu0 0.0
        %1817 = vmatprep.subr.mxu0 0.0
        %1818 = vmatpush1.msra.mxu0 0.0
        %1819 = vmatprep.subr.mxu0 0.0
        %1820 = vmatpush1.msra.mxu0 0.0
        %1821 = vmatprep.subr.mxu0 0.0
        %1822 = vmatpush1.msra.mxu0 0.0
        %1823 = vmatprep.subr.mxu0 0.0
        %1824 = vmatpush1.msra.mxu0 0.0
        %1825 = vmatprep.subr.mxu0 0.0
        %1826 = vmatpush1.msra.mxu0 0.0
        %1827 = vmatprep.subr.mxu0 0.0
        %1828 = vmatpush1.msra.mxu0 0.0
        %1829 = vmatprep.subr.mxu0 0.0
        %1830 = vmatpush1.msra.mxu0 0.0
        %1831 = vmatprep.mubr.f32.mxu0 0.0
        %v1832 = vand.u32 %v1219, 4294901760
        %1833 = vmatmul.mubr.f32.gmra.mrb[0].mxu0 %v1832
        %v1834 = vpop.f32.mrb[0].mxu0
        %v1835 = vadd.f32 %v1759, %v1834
        %v1836 = vpop.f32.mrb[0].mxu0
        %1837 = vdwg.mxu0
        %1838 = vmatprep.subr.mxu0 0.0
        %v1839 = vand.u32 %v279, 4294901760
        %v1840 = vsub.f32 %v279, %v1839
        %1841 = vmatpush1.msra.mxu0 %v1840
        %1842 = vmatprep.subr.mxu0 0.0
        %1843 = vmatpush1.msra.mxu0 0.0
        %1844 = vmatprep.subr.mxu0 0.0
        %1845 = vmatpush1.msra.mxu0 0.0
        %1846 = vmatprep.subr.mxu0 0.0
        %1847 = vmatpush1.msra.mxu0 0.0
        %1848 = vmatprep.subr.mxu0 0.0
        %1849 = vmatpush1.msra.mxu0 0.0
        %1850 = vmatprep.subr.mxu0 0.0
        %1851 = vmatpush1.msra.mxu0 0.0
        %1852 = vmatprep.subr.mxu0 0.0
        %1853 = vmatpush1.msra.mxu0 0.0
        %1854 = vmatprep.subr.mxu0 0.0
        %1855 = vmatpush1.msra.mxu0 0.0
        %1856 = vmatprep.subr.mxu0 0.0
        %1857 = vmatpush1.msra.mxu0 0.0
        %1858 = vmatprep.subr.mxu0 0.0
        %1859 = vmatpush1.msra.mxu0 0.0
        %1860 = vmatprep.subr.mxu0 0.0
        %1861 = vmatpush1.msra.mxu0 0.0
        %1862 = vmatprep.subr.mxu0 0.0
        %1863 = vmatpush1.msra.mxu0 0.0
        %1864 = vmatprep.subr.mxu0 0.0
        %1865 = vmatpush1.msra.mxu0 0.0
        %1866 = vmatprep.subr.mxu0 0.0
        %1867 = vmatpush1.msra.mxu0 0.0
        %1868 = vmatprep.subr.mxu0 0.0
        %1869 = vmatpush1.msra.mxu0 0.0
        %1870 = vmatprep.subr.mxu0 0.0
        %1871 = vmatpush1.msra.mxu0 0.0
        %1872 = vmatprep.subr.mxu0 0.0
        %1873 = vmatpush1.msra.mxu0 0.0
        %1874 = vmatprep.subr.mxu0 0.0
        %1875 = vmatpush1.msra.mxu0 0.0
        %1876 = vmatprep.subr.mxu0 0.0
        %1877 = vmatpush1.msra.mxu0 0.0
        %1878 = vmatprep.subr.mxu0 0.0
        %1879 = vmatpush1.msra.mxu0 0.0
        %1880 = vmatprep.subr.mxu0 0.0
        %1881 = vmatpush1.msra.mxu0 0.0
        %1882 = vmatprep.subr.mxu0 0.0
        %1883 = vmatpush1.msra.mxu0 0.0
        %1884 = vmatprep.subr.mxu0 0.0
        %1885 = vmatpush1.msra.mxu0 0.0
        %1886 = vmatprep.subr.mxu0 0.0
        %1887 = vmatpush1.msra.mxu0 0.0
        %1888 = vmatprep.subr.mxu0 0.0
        %1889 = vmatpush1.msra.mxu0 0.0
        %1890 = vmatprep.subr.mxu0 0.0
        %1891 = vmatpush1.msra.mxu0 0.0
        %1892 = vmatprep.subr.mxu0 0.0
        %1893 = vmatpush1.msra.mxu0 0.0
        %1894 = vmatprep.subr.mxu0 0.0
        %1895 = vmatpush1.msra.mxu0 0.0
        %1896 = vmatprep.subr.mxu0 0.0
        %1897 = vmatpush1.msra.mxu0 0.0
        %1898 = vmatprep.subr.mxu0 0.0
        %1899 = vmatpush1.msra.mxu0 0.0
        %1900 = vmatprep.subr.mxu0 0.0
        %1901 = vmatpush1.msra.mxu0 0.0
        %1902 = vmatprep.subr.mxu0 0.0
        %1903 = vmatpush1.msra.mxu0 0.0
        %1904 = vmatprep.mubr.f32.mxu0 0.0
        %v1905 = vand.u32 %v1219, 4294901760
        %v1906 = vsub.f32 %v1219, %v1905
        %1907 = vmatmul.mubr.f32.gmra.mrb[0].mxu0 %v1906
        %v1908 = vpop.f32.mrb[0].mxu0
        %v1909 = vadd.f32 %v1835, %v1908
        %v1910 = vpop.f32.mrb[0].mxu0
        %1911 = vdwg.mxu0
        %1912 = vmatprep.subr.mxu0 0.0
        %v1913 = vand.u32 %v279, 4294901760
        %1914 = vmatpush1.msra.mxu0 %v1913
        %1915 = vmatprep.subr.mxu0 0.0
        %1916 = vmatpush1.msra.mxu0 0.0
        %1917 = vmatprep.subr.mxu0 0.0
        %1918 = vmatpush1.msra.mxu0 0.0
        %1919 = vmatprep.subr.mxu0 0.0
        %1920 = vmatpush1.msra.mxu0 0.0
        %1921 = vmatprep.subr.mxu0 0.0
        %1922 = vmatpush1.msra.mxu0 0.0
        %1923 = vmatprep.subr.mxu0 0.0
        %1924 = vmatpush1.msra.mxu0 0.0
        %1925 = vmatprep.subr.mxu0 0.0
        %1926 = vmatpush1.msra.mxu0 0.0
        %1927 = vmatprep.subr.mxu0 0.0
        %1928 = vmatpush1.msra.mxu0 0.0
        %1929 = vmatprep.subr.mxu0 0.0
        %1930 = vmatpush1.msra.mxu0 0.0
        %1931 = vmatprep.subr.mxu0 0.0
        %1932 = vmatpush1.msra.mxu0 0.0
        %1933 = vmatprep.subr.mxu0 0.0
        %1934 = vmatpush1.msra.mxu0 0.0
        %1935 = vmatprep.subr.mxu0 0.0
        %1936 = vmatpush1.msra.mxu0 0.0
        %1937 = vmatprep.subr.mxu0 0.0
        %1938 = vmatpush1.msra.mxu0 0.0
        %1939 = vmatprep.subr.mxu0 0.0
        %1940 = vmatpush1.msra.mxu0 0.0
        %1941 = vmatprep.subr.mxu0 0.0
        %1942 = vmatpush1.msra.mxu0 0.0
        %1943 = vmatprep.subr.mxu0 0.0
        %1944 = vmatpush1.msra.mxu0 0.0
        %1945 = vmatprep.subr.mxu0 0.0
        %1946 = vmatpush1.msra.mxu0 0.0
        %1947 = vmatprep.subr.mxu0 0.0
        %1948 = vmatpush1.msra.mxu0 0.0
        %1949 = vmatprep.subr.mxu0 0.0
        %1950 = vmatpush1.msra.mxu0 0.0
        %1951 = vmatprep.subr.mxu0 0.0
        %1952 = vmatpush1.msra.mxu0 0.0
        %1953 = vmatprep.subr.mxu0 0.0
        %1954 = vmatpush1.msra.mxu0 0.0
        %1955 = vmatprep.subr.mxu0 0.0
        %1956 = vmatpush1.msra.mxu0 0.0
        %1957 = vmatprep.subr.mxu0 0.0
        %1958 = vmatpush1.msra.mxu0 0.0
        %1959 = vmatprep.subr.mxu0 0.0
        %1960 = vmatpush1.msra.mxu0 0.0
        %1961 = vmatprep.subr.mxu0 0.0
        %1962 = vmatpush1.msra.mxu0 0.0
        %1963 = vmatprep.subr.mxu0 0.0
        %1964 = vmatpush1.msra.mxu0 0.0
        %1965 = vmatprep.subr.mxu0 0.0
        %1966 = vmatpush1.msra.mxu0 0.0
        %1967 = vmatprep.subr.mxu0 0.0
        %1968 = vmatpush1.msra.mxu0 0.0
        %1969 = vmatprep.subr.mxu0 0.0
        %1970 = vmatpush1.msra.mxu0 0.0
        %1971 = vmatprep.subr.mxu0 0.0
        %1972 = vmatpush1.msra.mxu0 0.0
        %1973 = vmatprep.subr.mxu0 0.0
        %1974 = vmatpush1.msra.mxu0 0.0
        %1975 = vmatprep.subr.mxu0 0.0
        %1976 = vmatpush1.msra.mxu0 0.0
        %1977 = vmatprep.mubr.f32.mxu0 0.0
        %v1978 = vand.u32 %v1219, 4294901760
        %v1979 = vsub.f32 %v1219, %v1978
        %v1980 = vand.u32 %v1979, 4294901760
        %1981 = vmatmul.mubr.f32.gmra.mrb[0].mxu0 %v1980
        %v1982 = vpop.f32.mrb[0].mxu0
        %v1983 = vadd.f32 %v1909, %v1982
        %v1984 = vpop.f32.mrb[0].mxu0
        %1985 = vdwg.mxu0
        %1986 = vmatprep.subr.mxu0 0.0
        %v1987 = vand.u32 %v279, 4294901760
        %v1988 = vsub.f32 %v279, %v1987
        %v1989 = vand.u32 %v1988, 4294901760
        %1990 = vmatpush1.msra.mxu0 %v1989
        %1991 = vmatprep.subr.mxu0 0.0
        %1992 = vmatpush1.msra.mxu0 0.0
        %1993 = vmatprep.subr.mxu0 0.0
        %1994 = vmatpush1.msra.mxu0 0.0
        %1995 = vmatprep.subr.mxu0 0.0
        %1996 = vmatpush1.msra.mxu0 0.0
        %1997 = vmatprep.subr.mxu0 0.0
        %1998 = vmatpush1.msra.mxu0 0.0
        %1999 = vmatprep.subr.mxu0 0.0
        %2000 = vmatpush1.msra.mxu0 0.0
        %2001 = vmatprep.subr.mxu0 0.0
        %2002 = vmatpush1.msra.mxu0 0.0
        %2003 = vmatprep.subr.mxu0 0.0
        %2004 = vmatpush1.msra.mxu0 0.0
        %2005 = vmatprep.subr.mxu0 0.0
        %2006 = vmatpush1.msra.mxu0 0.0
        %2007 = vmatprep.subr.mxu0 0.0
        %2008 = vmatpush1.msra.mxu0 0.0
        %2009 = vmatprep.subr.mxu0 0.0
        %2010 = vmatpush1.msra.mxu0 0.0
        %2011 = vmatprep.subr.mxu0 0.0
        %2012 = vmatpush1.msra.mxu0 0.0
        %2013 = vmatprep.subr.mxu0 0.0
        %2014 = vmatpush1.msra.mxu0 0.0
        %2015 = vmatprep.subr.mxu0 0.0
        %2016 = vmatpush1.msra.mxu0 0.0
        %2017 = vmatprep.subr.mxu0 0.0
        %2018 = vmatpush1.msra.mxu0 0.0
        %2019 = vmatprep.subr.mxu0 0.0
        %2020 = vmatpush1.msra.mxu0 0.0
        %2021 = vmatprep.subr.mxu0 0.0
        %2022 = vmatpush1.msra.mxu0 0.0
        %2023 = vmatprep.subr.mxu0 0.0
        %2024 = vmatpush1.msra.mxu0 0.0
        %2025 = vmatprep.subr.mxu0 0.0
        %2026 = vmatpush1.msra.mxu0 0.0
        %2027 = vmatprep.subr.mxu0 0.0
        %2028 = vmatpush1.msra.mxu0 0.0
        %2029 = vmatprep.subr.mxu0 0.0
        %2030 = vmatpush1.msra.mxu0 0.0
        %2031 = vmatprep.subr.mxu0 0.0
        %2032 = vmatpush1.msra.mxu0 0.0
        %2033 = vmatprep.subr.mxu0 0.0
        %2034 = vmatpush1.msra.mxu0 0.0
        %2035 = vmatprep.subr.mxu0 0.0
        %2036 = vmatpush1.msra.mxu0 0.0
        %2037 = vmatprep.subr.mxu0 0.0
        %2038 = vmatpush1.msra.mxu0 0.0
        %2039 = vmatprep.subr.mxu0 0.0
        %2040 = vmatpush1.msra.mxu0 0.0
        %2041 = vmatprep.subr.mxu0 0.0
        %2042 = vmatpush1.msra.mxu0 0.0
        %2043 = vmatprep.subr.mxu0 0.0
        %2044 = vmatpush1.msra.mxu0 0.0
        %2045 = vmatprep.subr.mxu0 0.0
        %2046 = vmatpush1.msra.mxu0 0.0
        %2047 = vmatprep.subr.mxu0 0.0
        %2048 = vmatpush1.msra.mxu0 0.0
        %2049 = vmatprep.subr.mxu0 0.0
        %2050 = vmatpush1.msra.mxu0 0.0
        %2051 = vmatprep.subr.mxu0 0.0
        %2052 = vmatpush1.msra.mxu0 0.0
        %2053 = vmatprep.mubr.f32.mxu0 0.0
        %v2054 = vand.u32 %v1219, 4294901760
        %2055 = vmatmul.mubr.f32.gmra.mrb[0].mxu0 %v2054
        %v2056 = vpop.f32.mrb[0].mxu0
        %v2057 = vadd.f32 %v1983, %v2056
        %v2058 = vpop.f32.mrb[0].mxu0
        %2059 = vdwg.mxu0
        %2060 = vmatprep.subr.mxu0 0.0
        %v2061 = vand.u32 %v279, 4294901760
        %2062 = vmatpush1.msra.mxu0 %v2061
        %2063 = vmatprep.subr.mxu0 0.0
        %2064 = vmatpush1.msra.mxu0 0.0
        %2065 = vmatprep.subr.mxu0 0.0
        %2066 = vmatpush1.msra.mxu0 0.0
        %2067 = vmatprep.subr.mxu0 0.0
        %2068 = vmatpush1.msra.mxu0 0.0
        %2069 = vmatprep.subr.mxu0 0.0
        %2070 = vmatpush1.msra.mxu0 0.0
        %2071 = vmatprep.subr.mxu0 0.0
        %2072 = vmatpush1.msra.mxu0 0.0
        %2073 = vmatprep.subr.mxu0 0.0
        %2074 = vmatpush1.msra.mxu0 0.0
        %2075 = vmatprep.subr.mxu0 0.0
        %2076 = vmatpush1.msra.mxu0 0.0
        %2077 = vmatprep.subr.mxu0 0.0
        %2078 = vmatpush1.msra.mxu0 0.0
        %2079 = vmatprep.subr.mxu0 0.0
        %2080 = vmatpush1.msra.mxu0 0.0
        %2081 = vmatprep.subr.mxu0 0.0
        %2082 = vmatpush1.msra.mxu0 0.0
        %2083 = vmatprep.subr.mxu0 0.0
        %2084 = vmatpush1.msra.mxu0 0.0
        %2085 = vmatprep.subr.mxu0 0.0
        %2086 = vmatpush1.msra.mxu0 0.0
        %2087 = vmatprep.subr.mxu0 0.0
        %2088 = vmatpush1.msra.mxu0 0.0
        %2089 = vmatprep.subr.mxu0 0.0
        %2090 = vmatpush1.msra.mxu0 0.0
        %2091 = vmatprep.subr.mxu0 0.0
        %2092 = vmatpush1.msra.mxu0 0.0
        %2093 = vmatprep.subr.mxu0 0.0
        %2094 = vmatpush1.msra.mxu0 0.0
        %2095 = vmatprep.subr.mxu0 0.0
        %2096 = vmatpush1.msra.mxu0 0.0
        %2097 = vmatprep.subr.mxu0 0.0
        %2098 = vmatpush1.msra.mxu0 0.0
        %2099 = vmatprep.subr.mxu0 0.0
        %2100 = vmatpush1.msra.mxu0 0.0
        %2101 = vmatprep.subr.mxu0 0.0
        %2102 = vmatpush1.msra.mxu0 0.0
        %2103 = vmatprep.subr.mxu0 0.0
        %2104 = vmatpush1.msra.mxu0 0.0
        %2105 = vmatprep.subr.mxu0 0.0
        %2106 = vmatpush1.msra.mxu0 0.0
        %2107 = vmatprep.subr.mxu0 0.0
        %2108 = vmatpush1.msra.mxu0 0.0
        %2109 = vmatprep.subr.mxu0 0.0
        %2110 = vmatpush1.msra.mxu0 0.0
        %2111 = vmatprep.subr.mxu0 0.0
        %2112 = vmatpush1.msra.mxu0 0.0
        %2113 = vmatprep.subr.mxu0 0.0
        %2114 = vmatpush1.msra.mxu0 0.0
        %2115 = vmatprep.subr.mxu0 0.0
        %2116 = vmatpush1.msra.mxu0 0.0
        %2117 = vmatprep.subr.mxu0 0.0
        %2118 = vmatpush1.msra.mxu0 0.0
        %2119 = vmatprep.subr.mxu0 0.0
        %2120 = vmatpush1.msra.mxu0 0.0
        %2121 = vmatprep.subr.mxu0 0.0
        %2122 = vmatpush1.msra.mxu0 0.0
        %2123 = vmatprep.subr.mxu0 0.0
        %2124 = vmatpush1.msra.mxu0 0.0
        %2125 = vmatprep.mubr.f32.mxu0 0.0
        %v2126 = vand.u32 %v1219, 4294901760
        %2127 = vmatmul.mubr.f32.gmra.mrb[0].mxu0 %v2126
        %v2128 = vpop.f32.mrb[0].mxu0
        %v2129 = vadd.f32 %v2057, %v2128
        %v2130 = vpop.f32.mrb[0].mxu0
        %2131 = vdwg.mxu0
        %s2132 = scalar_lea.vmem %s1, 16
        %v2133 = vld [vmem:[%s2132] sm:$0xff]
        %2134 = vrot.lane.b32.xlu0 %v277, 126
        %v2135 = vpop.permute.xlu0 %2134
        %2136 = vrot.lane.b32.xlu0 %v278, 126
        %v2137 = vpop.permute.xlu0 %2136
        %2138 = vrot.lane.b32.xlu0 %v279, 126
        %v2139 = vpop.permute.xlu0 %2138
        %2140 = vrot.lane.b32.xlu0 %v280, 126
        %v2141 = vpop.permute.xlu0 %2140
        %vm2142 = vcmask 1031168
        %v2143 = vsel %vm2142, %v2135, %v2137
        %v2144 = vsel %vm2142, %v2137, %v2139
        %v2145 = vsel %vm2142, %v2139, %v2141
        %v2150 = vsel %vm303, %v2133, 0
        %v2152 = vand.u32 %v2144, 4294901760
        %2153 = vmatprep.subr.mxu0 %v2152
        %v2154 = vand.u32 %v2143, 4294901760
        %2155 = vmatpush1.msra.mxu0 %v2154
        %2156 = vmatprep.subr.mxu0 0.0
        %2157 = vmatpush1.msra.mxu0 0.0
        %2158 = vmatprep.subr.mxu0 0.0
        %2159 = vmatpush1.msra.mxu0 0.0
        %2160 = vmatprep.subr.mxu0 0.0
        %2161 = vmatpush1.msra.mxu0 0.0
        %2162 = vmatprep.subr.mxu0 0.0
        %2163 = vmatpush1.msra.mxu0 0.0
        %2164 = vmatprep.subr.mxu0 0.0
        %2165 = vmatpush1.msra.mxu0 0.0
        %2166 = vmatprep.subr.mxu0 0.0
        %2167 = vmatpush1.msra.mxu0 0.0
        %2168 = vmatprep.subr.mxu0 0.0
        %2169 = vmatpush1.msra.mxu0 0.0
        %2170 = vmatprep.subr.mxu0 0.0
        %2171 = vmatpush1.msra.mxu0 0.0
        %2172 = vmatprep.subr.mxu0 0.0
        %2173 = vmatpush1.msra.mxu0 0.0
        %2174 = vmatprep.subr.mxu0 0.0
        %2175 = vmatpush1.msra.mxu0 0.0
        %2176 = vmatprep.subr.mxu0 0.0
        %2177 = vmatpush1.msra.mxu0 0.0
        %2178 = vmatprep.subr.mxu0 0.0
        %2179 = vmatpush1.msra.mxu0 0.0
        %2180 = vmatprep.subr.mxu0 0.0
        %2181 = vmatpush1.msra.mxu0 0.0
        %2182 = vmatprep.subr.mxu0 0.0
        %2183 = vmatpush1.msra.mxu0 0.0
        %2184 = vmatprep.subr.mxu0 0.0
        %2185 = vmatpush1.msra.mxu0 0.0
        %2186 = vmatprep.subr.mxu0 0.0
        %2187 = vmatpush1.msra.mxu0 0.0
        %2188 = vmatprep.subr.mxu0 0.0
        %2189 = vmatpush1.msra.mxu0 0.0
        %2190 = vmatprep.subr.mxu0 0.0
        %2191 = vmatpush1.msra.mxu0 0.0
        %2192 = vmatprep.subr.mxu0 0.0
        %2193 = vmatpush1.msra.mxu0 0.0
        %2194 = vmatprep.subr.mxu0 0.0
        %2195 = vmatpush1.msra.mxu0 0.0
        %2196 = vmatprep.subr.mxu0 0.0
        %2197 = vmatpush1.msra.mxu0 0.0
        %2198 = vmatprep.subr.mxu0 0.0
        %2199 = vmatpush1.msra.mxu0 0.0
        %2200 = vmatprep.subr.mxu0 0.0
        %2201 = vmatpush1.msra.mxu0 0.0
        %2202 = vmatprep.subr.mxu0 0.0
        %2203 = vmatpush1.msra.mxu0 0.0
        %2204 = vmatprep.subr.mxu0 0.0
        %2205 = vmatpush1.msra.mxu0 0.0
        %2206 = vmatprep.subr.mxu0 0.0
        %2207 = vmatpush1.msra.mxu0 0.0
        %2208 = vmatprep.subr.mxu0 0.0
        %2209 = vmatpush1.msra.mxu0 0.0
        %2210 = vmatprep.subr.mxu0 0.0
        %2211 = vmatpush1.msra.mxu0 0.0
        %2212 = vmatprep.subr.mxu0 0.0
        %2213 = vmatpush1.msra.mxu0 0.0
        %2214 = vmatprep.subr.mxu0 0.0
        %2215 = vmatpush1.msra.mxu0 0.0
        %2216 = vmatprep.subr.mxu0 0.0
        %2217 = vmatpush1.msra.mxu0 0.0
        %2218 = vmatprep.mubr.f32.mxu0 0.0
        %v2219 = vand.u32 %v2150, 4294901760
        %v2220 = vsub.f32 %v2150, %v2219
        %v2221 = vand.u32 %v2220, 4294901760
        %v2222 = vsub.f32 %v2220, %v2221
        %v2223 = vand.u32 %v2222, 4294901760
        %2224 = vmatmul.mubr.f32.gmra.mrb[0].mxu0 %v2223
        %v2225 = vpop.f32.mrb[0].mxu0
        %v2226 = vadd.f32 0.0, %v2225
        %v2227 = vpop.f32.mrb[0].mxu0
        %v2228 = vadd.f32 0.0, %v2227
        %2229 = vdwg.mxu0
        %v2230 = vand.u32 %v2144, 4294901760
        %v2231 = vsub.f32 %v2144, %v2230
        %v2232 = vand.u32 %v2231, 4294901760
        %v2233 = vsub.f32 %v2231, %v2232
        %v2234 = vand.u32 %v2233, 4294901760
        %2235 = vmatprep.subr.mxu0 %v2234
        %v2236 = vand.u32 %v2143, 4294901760
        %v2237 = vsub.f32 %v2143, %v2236
        %v2238 = vand.u32 %v2237, 4294901760
        %v2239 = vsub.f32 %v2237, %v2238
        %v2240 = vand.u32 %v2239, 4294901760
        %2241 = vmatpush1.msra.mxu0 %v2240
        %2242 = vmatprep.subr.mxu0 0.0
        %2243 = vmatpush1.msra.mxu0 0.0
        %2244 = vmatprep.subr.mxu0 0.0
        %2245 = vmatpush1.msra.mxu0 0.0
        %2246 = vmatprep.subr.mxu0 0.0
        %2247 = vmatpush1.msra.mxu0 0.0
        %2248 = vmatprep.subr.mxu0 0.0
        %2249 = vmatpush1.msra.mxu0 0.0
        %2250 = vmatprep.subr.mxu0 0.0
        %2251 = vmatpush1.msra.mxu0 0.0
        %2252 = vmatprep.subr.mxu0 0.0
        %2253 = vmatpush1.msra.mxu0 0.0
        %2254 = vmatprep.subr.mxu0 0.0
        %2255 = vmatpush1.msra.mxu0 0.0
        %2256 = vmatprep.subr.mxu0 0.0
        %2257 = vmatpush1.msra.mxu0 0.0
        %2258 = vmatprep.subr.mxu0 0.0
        %2259 = vmatpush1.msra.mxu0 0.0
        %2260 = vmatprep.subr.mxu0 0.0
        %2261 = vmatpush1.msra.mxu0 0.0
        %2262 = vmatprep.subr.mxu0 0.0
        %2263 = vmatpush1.msra.mxu0 0.0
        %2264 = vmatprep.subr.mxu0 0.0
        %2265 = vmatpush1.msra.mxu0 0.0
        %2266 = vmatprep.subr.mxu0 0.0
        %2267 = vmatpush1.msra.mxu0 0.0
        %2268 = vmatprep.subr.mxu0 0.0
        %2269 = vmatpush1.msra.mxu0 0.0
        %2270 = vmatprep.subr.mxu0 0.0
        %2271 = vmatpush1.msra.mxu0 0.0
        %2272 = vmatprep.subr.mxu0 0.0
        %2273 = vmatpush1.msra.mxu0 0.0
        %2274 = vmatprep.subr.mxu0 0.0
        %2275 = vmatpush1.msra.mxu0 0.0
        %2276 = vmatprep.subr.mxu0 0.0
        %2277 = vmatpush1.msra.mxu0 0.0
        %2278 = vmatprep.subr.mxu0 0.0
        %2279 = vmatpush1.msra.mxu0 0.0
        %2280 = vmatprep.subr.mxu0 0.0
        %2281 = vmatpush1.msra.mxu0 0.0
        %2282 = vmatprep.subr.mxu0 0.0
        %2283 = vmatpush1.msra.mxu0 0.0
        %2284 = vmatprep.subr.mxu0 0.0
        %2285 = vmatpush1.msra.mxu0 0.0
        %2286 = vmatprep.subr.mxu0 0.0
        %2287 = vmatpush1.msra.mxu0 0.0
        %2288 = vmatprep.subr.mxu0 0.0
        %2289 = vmatpush1.msra.mxu0 0.0
        %2290 = vmatprep.subr.mxu0 0.0
        %2291 = vmatpush1.msra.mxu0 0.0
        %2292 = vmatprep.subr.mxu0 0.0
        %2293 = vmatpush1.msra.mxu0 0.0
        %2294 = vmatprep.subr.mxu0 0.0
        %2295 = vmatpush1.msra.mxu0 0.0
        %2296 = vmatprep.subr.mxu0 0.0
        %2297 = vmatpush1.msra.mxu0 0.0
        %2298 = vmatprep.subr.mxu0 0.0
        %2299 = vmatpush1.msra.mxu0 0.0
        %2300 = vmatprep.subr.mxu0 0.0
        %2301 = vmatpush1.msra.mxu0 0.0
        %2302 = vmatprep.subr.mxu0 0.0
        %2303 = vmatpush1.msra.mxu0 0.0
        %2304 = vmatprep.mubr.f32.mxu0 0.0
        %v2305 = vand.u32 %v2150, 4294901760
        %2306 = vmatmul.mubr.f32.gmra.mrb[0].mxu0 %v2305
        %v2307 = vpop.f32.mrb[0].mxu0
        %v2308 = vadd.f32 %v2226, %v2307
        %v2309 = vpop.f32.mrb[0].mxu0
        %v2310 = vadd.f32 %v2228, %v2309
        %2311 = vdwg.mxu0
        %v2312 = vand.u32 %v2144, 4294901760
        %v2313 = vsub.f32 %v2144, %v2312
        %2314 = vmatprep.subr.mxu0 %v2313
        %v2315 = vand.u32 %v2143, 4294901760
        %v2316 = vsub.f32 %v2143, %v2315
        %2317 = vmatpush1.msra.mxu0 %v2316
        %2318 = vmatprep.subr.mxu0 0.0
        %2319 = vmatpush1.msra.mxu0 0.0
        %2320 = vmatprep.subr.mxu0 0.0
        %2321 = vmatpush1.msra.mxu0 0.0
        %2322 = vmatprep.subr.mxu0 0.0
        %2323 = vmatpush1.msra.mxu0 0.0
        %2324 = vmatprep.subr.mxu0 0.0
        %2325 = vmatpush1.msra.mxu0 0.0
        %2326 = vmatprep.subr.mxu0 0.0
        %2327 = vmatpush1.msra.mxu0 0.0
        %2328 = vmatprep.subr.mxu0 0.0
        %2329 = vmatpush1.msra.mxu0 0.0
        %2330 = vmatprep.subr.mxu0 0.0
        %2331 = vmatpush1.msra.mxu0 0.0
        %2332 = vmatprep.subr.mxu0 0.0
        %2333 = vmatpush1.msra.mxu0 0.0
        %2334 = vmatprep.subr.mxu0 0.0
        %2335 = vmatpush1.msra.mxu0 0.0
        %2336 = vmatprep.subr.mxu0 0.0
        %2337 = vmatpush1.msra.mxu0 0.0
        %2338 = vmatprep.subr.mxu0 0.0
        %2339 = vmatpush1.msra.mxu0 0.0
        %2340 = vmatprep.subr.mxu0 0.0
        %2341 = vmatpush1.msra.mxu0 0.0
        %2342 = vmatprep.subr.mxu0 0.0
        %2343 = vmatpush1.msra.mxu0 0.0
        %2344 = vmatprep.subr.mxu0 0.0
        %2345 = vmatpush1.msra.mxu0 0.0
        %2346 = vmatprep.subr.mxu0 0.0
        %2347 = vmatpush1.msra.mxu0 0.0
        %2348 = vmatprep.subr.mxu0 0.0
        %2349 = vmatpush1.msra.mxu0 0.0
        %2350 = vmatprep.subr.mxu0 0.0
        %2351 = vmatpush1.msra.mxu0 0.0
        %2352 = vmatprep.subr.mxu0 0.0
        %2353 = vmatpush1.msra.mxu0 0.0
        %2354 = vmatprep.subr.mxu0 0.0
        %2355 = vmatpush1.msra.mxu0 0.0
        %2356 = vmatprep.subr.mxu0 0.0
        %2357 = vmatpush1.msra.mxu0 0.0
        %2358 = vmatprep.subr.mxu0 0.0
        %2359 = vmatpush1.msra.mxu0 0.0
        %2360 = vmatprep.subr.mxu0 0.0
        %2361 = vmatpush1.msra.mxu0 0.0
        %2362 = vmatprep.subr.mxu0 0.0
        %2363 = vmatpush1.msra.mxu0 0.0
        %2364 = vmatprep.subr.mxu0 0.0
        %2365 = vmatpush1.msra.mxu0 0.0
        %2366 = vmatprep.subr.mxu0 0.0
        %2367 = vmatpush1.msra.mxu0 0.0
        %2368 = vmatprep.subr.mxu0 0.0
        %2369 = vmatpush1.msra.mxu0 0.0
        %2370 = vmatprep.subr.mxu0 0.0
        %2371 = vmatpush1.msra.mxu0 0.0
        %2372 = vmatprep.subr.mxu0 0.0
        %2373 = vmatpush1.msra.mxu0 0.0
        %2374 = vmatprep.subr.mxu0 0.0
        %2375 = vmatpush1.msra.mxu0 0.0
        %2376 = vmatprep.subr.mxu0 0.0
        %2377 = vmatpush1.msra.mxu0 0.0
        %2378 = vmatprep.subr.mxu0 0.0
        %2379 = vmatpush1.msra.mxu0 0.0
        %2380 = vmatprep.mubr.f32.mxu0 0.0
        %v2381 = vand.u32 %v2150, 4294901760
        %v2382 = vsub.f32 %v2150, %v2381
        %2383 = vmatmul.mubr.f32.gmra.mrb[0].mxu0 %v2382
        %v2384 = vpop.f32.mrb[0].mxu0
        %v2385 = vadd.f32 %v2308, %v2384
        %v2386 = vpop.f32.mrb[0].mxu0
        %v2387 = vadd.f32 %v2310, %v2386
        %2388 = vdwg.mxu0
        %v2389 = vand.u32 %v2144, 4294901760
        %2390 = vmatprep.subr.mxu0 %v2389
        %v2391 = vand.u32 %v2143, 4294901760
        %2392 = vmatpush1.msra.mxu0 %v2391
        %2393 = vmatprep.subr.mxu0 0.0
        %2394 = vmatpush1.msra.mxu0 0.0
        %2395 = vmatprep.subr.mxu0 0.0
        %2396 = vmatpush1.msra.mxu0 0.0
        %2397 = vmatprep.subr.mxu0 0.0
        %2398 = vmatpush1.msra.mxu0 0.0
        %2399 = vmatprep.subr.mxu0 0.0
        %2400 = vmatpush1.msra.mxu0 0.0
        %2401 = vmatprep.subr.mxu0 0.0
        %2402 = vmatpush1.msra.mxu0 0.0
        %2403 = vmatprep.subr.mxu0 0.0
        %2404 = vmatpush1.msra.mxu0 0.0
        %2405 = vmatprep.subr.mxu0 0.0
        %2406 = vmatpush1.msra.mxu0 0.0
        %2407 = vmatprep.subr.mxu0 0.0
        %2408 = vmatpush1.msra.mxu0 0.0
        %2409 = vmatprep.subr.mxu0 0.0
        %2410 = vmatpush1.msra.mxu0 0.0
        %2411 = vmatprep.subr.mxu0 0.0
        %2412 = vmatpush1.msra.mxu0 0.0
        %2413 = vmatprep.subr.mxu0 0.0
        %2414 = vmatpush1.msra.mxu0 0.0
        %2415 = vmatprep.subr.mxu0 0.0
        %2416 = vmatpush1.msra.mxu0 0.0
        %2417 = vmatprep.subr.mxu0 0.0
        %2418 = vmatpush1.msra.mxu0 0.0
        %2419 = vmatprep.subr.mxu0 0.0
        %2420 = vmatpush1.msra.mxu0 0.0
        %2421 = vmatprep.subr.mxu0 0.0
        %2422 = vmatpush1.msra.mxu0 0.0
        %2423 = vmatprep.subr.mxu0 0.0
        %2424 = vmatpush1.msra.mxu0 0.0
        %2425 = vmatprep.subr.mxu0 0.0
        %2426 = vmatpush1.msra.mxu0 0.0
        %2427 = vmatprep.subr.mxu0 0.0
        %2428 = vmatpush1.msra.mxu0 0.0
        %2429 = vmatprep.subr.mxu0 0.0
        %2430 = vmatpush1.msra.mxu0 0.0
        %2431 = vmatprep.subr.mxu0 0.0
        %2432 = vmatpush1.msra.mxu0 0.0
        %2433 = vmatprep.subr.mxu0 0.0
        %2434 = vmatpush1.msra.mxu0 0.0
        %2435 = vmatprep.subr.mxu0 0.0
        %2436 = vmatpush1.msra.mxu0 0.0
        %2437 = vmatprep.subr.mxu0 0.0
        %2438 = vmatpush1.msra.mxu0 0.0
        %2439 = vmatprep.subr.mxu0 0.0
        %2440 = vmatpush1.msra.mxu0 0.0
        %2441 = vmatprep.subr.mxu0 0.0
        %2442 = vmatpush1.msra.mxu0 0.0
        %2443 = vmatprep.subr.mxu0 0.0
        %2444 = vmatpush1.msra.mxu0 0.0
        %2445 = vmatprep.subr.mxu0 0.0
        %2446 = vmatpush1.msra.mxu0 0.0
        %2447 = vmatprep.subr.mxu0 0.0
        %2448 = vmatpush1.msra.mxu0 0.0
        %2449 = vmatprep.subr.mxu0 0.0
        %2450 = vmatpush1.msra.mxu0 0.0
        %2451 = vmatprep.subr.mxu0 0.0
        %2452 = vmatpush1.msra.mxu0 0.0
        %2453 = vmatprep.subr.mxu0 0.0
        %2454 = vmatpush1.msra.mxu0 0.0
        %2455 = vmatprep.mubr.f32.mxu0 0.0
        %v2456 = vand.u32 %v2150, 4294901760
        %v2457 = vsub.f32 %v2150, %v2456
        %v2458 = vand.u32 %v2457, 4294901760
        %2459 = vmatmul.mubr.f32.gmra.mrb[0].mxu0 %v2458
        %v2460 = vpop.f32.mrb[0].mxu0
        %v2461 = vadd.f32 %v2385, %v2460
        %v2462 = vpop.f32.mrb[0].mxu0
        %v2463 = vadd.f32 %v2387, %v2462
        %2464 = vdwg.mxu0
        %v2465 = vand.u32 %v2144, 4294901760
        %v2466 = vsub.f32 %v2144, %v2465
        %v2467 = vand.u32 %v2466, 4294901760
        %2468 = vmatprep.subr.mxu0 %v2467
        %v2469 = vand.u32 %v2143, 4294901760
        %v2470 = vsub.f32 %v2143, %v2469
        %v2471 = vand.u32 %v2470, 4294901760
        %2472 = vmatpush1.msra.mxu0 %v2471
        %2473 = vmatprep.subr.mxu0 0.0
        %2474 = vmatpush1.msra.mxu0 0.0
        %2475 = vmatprep.subr.mxu0 0.0
        %2476 = vmatpush1.msra.mxu0 0.0
        %2477 = vmatprep.subr.mxu0 0.0
        %2478 = vmatpush1.msra.mxu0 0.0
        %2479 = vmatprep.subr.mxu0 0.0
        %2480 = vmatpush1.msra.mxu0 0.0
        %2481 = vmatprep.subr.mxu0 0.0
        %2482 = vmatpush1.msra.mxu0 0.0
        %2483 = vmatprep.subr.mxu0 0.0
        %2484 = vmatpush1.msra.mxu0 0.0
        %2485 = vmatprep.subr.mxu0 0.0
        %2486 = vmatpush1.msra.mxu0 0.0
        %2487 = vmatprep.subr.mxu0 0.0
        %2488 = vmatpush1.msra.mxu0 0.0
        %2489 = vmatprep.subr.mxu0 0.0
        %2490 = vmatpush1.msra.mxu0 0.0
        %2491 = vmatprep.subr.mxu0 0.0
        %2492 = vmatpush1.msra.mxu0 0.0
        %2493 = vmatprep.subr.mxu0 0.0
        %2494 = vmatpush1.msra.mxu0 0.0
        %2495 = vmatprep.subr.mxu0 0.0
        %2496 = vmatpush1.msra.mxu0 0.0
        %2497 = vmatprep.subr.mxu0 0.0
        %2498 = vmatpush1.msra.mxu0 0.0
        %2499 = vmatprep.subr.mxu0 0.0
        %2500 = vmatpush1.msra.mxu0 0.0
        %2501 = vmatprep.subr.mxu0 0.0
        %2502 = vmatpush1.msra.mxu0 0.0
        %2503 = vmatprep.subr.mxu0 0.0
        %2504 = vmatpush1.msra.mxu0 0.0
        %2505 = vmatprep.subr.mxu0 0.0
        %2506 = vmatpush1.msra.mxu0 0.0
        %2507 = vmatprep.subr.mxu0 0.0
        %2508 = vmatpush1.msra.mxu0 0.0
        %2509 = vmatprep.subr.mxu0 0.0
        %2510 = vmatpush1.msra.mxu0 0.0
        %2511 = vmatprep.subr.mxu0 0.0
        %2512 = vmatpush1.msra.mxu0 0.0
        %2513 = vmatprep.subr.mxu0 0.0
        %2514 = vmatpush1.msra.mxu0 0.0
        %2515 = vmatprep.subr.mxu0 0.0
        %2516 = vmatpush1.msra.mxu0 0.0
        %2517 = vmatprep.subr.mxu0 0.0
        %2518 = vmatpush1.msra.mxu0 0.0
        %2519 = vmatprep.subr.mxu0 0.0
        %2520 = vmatpush1.msra.mxu0 0.0
        %2521 = vmatprep.subr.mxu0 0.0
        %2522 = vmatpush1.msra.mxu0 0.0
        %2523 = vmatprep.subr.mxu0 0.0
        %2524 = vmatpush1.msra.mxu0 0.0
        %2525 = vmatprep.subr.mxu0 0.0
        %2526 = vmatpush1.msra.mxu0 0.0
        %2527 = vmatprep.subr.mxu0 0.0
        %2528 = vmatpush1.msra.mxu0 0.0
        %2529 = vmatprep.subr.mxu0 0.0
        %2530 = vmatpush1.msra.mxu0 0.0
        %2531 = vmatprep.subr.mxu0 0.0
        %2532 = vmatpush1.msra.mxu0 0.0
        %2533 = vmatprep.subr.mxu0 0.0
        %2534 = vmatpush1.msra.mxu0 0.0
        %2535 = vmatprep.mubr.f32.mxu0 0.0
        %v2536 = vand.u32 %v2150, 4294901760
        %2537 = vmatmul.mubr.f32.gmra.mrb[0].mxu0 %v2536
        %v2538 = vpop.f32.mrb[0].mxu0
        %v2539 = vadd.f32 %v2461, %v2538
        %v2540 = vpop.f32.mrb[0].mxu0
        %v2541 = vadd.f32 %v2463, %v2540
        %2542 = vdwg.mxu0
        %v2543 = vand.u32 %v2144, 4294901760
        %2544 = vmatprep.subr.mxu0 %v2543
        %v2545 = vand.u32 %v2143, 4294901760
        %2546 = vmatpush1.msra.mxu0 %v2545
        %2547 = vmatprep.subr.mxu0 0.0
        %2548 = vmatpush1.msra.mxu0 0.0
        %2549 = vmatprep.subr.mxu0 0.0
        %2550 = vmatpush1.msra.mxu0 0.0
        %2551 = vmatprep.subr.mxu0 0.0
        %2552 = vmatpush1.msra.mxu0 0.0
        %2553 = vmatprep.subr.mxu0 0.0
        %2554 = vmatpush1.msra.mxu0 0.0
        %2555 = vmatprep.subr.mxu0 0.0
        %2556 = vmatpush1.msra.mxu0 0.0
        %2557 = vmatprep.subr.mxu0 0.0
        %2558 = vmatpush1.msra.mxu0 0.0
        %2559 = vmatprep.subr.mxu0 0.0
        %2560 = vmatpush1.msra.mxu0 0.0
        %2561 = vmatprep.subr.mxu0 0.0
        %2562 = vmatpush1.msra.mxu0 0.0
        %2563 = vmatprep.subr.mxu0 0.0
        %2564 = vmatpush1.msra.mxu0 0.0
        %2565 = vmatprep.subr.mxu0 0.0
        %2566 = vmatpush1.msra.mxu0 0.0
        %2567 = vmatprep.subr.mxu0 0.0
        %2568 = vmatpush1.msra.mxu0 0.0
        %2569 = vmatprep.subr.mxu0 0.0
        %2570 = vmatpush1.msra.mxu0 0.0
        %2571 = vmatprep.subr.mxu0 0.0
        %2572 = vmatpush1.msra.mxu0 0.0
        %2573 = vmatprep.subr.mxu0 0.0
        %2574 = vmatpush1.msra.mxu0 0.0
        %2575 = vmatprep.subr.mxu0 0.0
        %2576 = vmatpush1.msra.mxu0 0.0
        %2577 = vmatprep.subr.mxu0 0.0
        %2578 = vmatpush1.msra.mxu0 0.0
        %2579 = vmatprep.subr.mxu0 0.0
        %2580 = vmatpush1.msra.mxu0 0.0
        %2581 = vmatprep.subr.mxu0 0.0
        %2582 = vmatpush1.msra.mxu0 0.0
        %2583 = vmatprep.subr.mxu0 0.0
        %2584 = vmatpush1.msra.mxu0 0.0
        %2585 = vmatprep.subr.mxu0 0.0
        %2586 = vmatpush1.msra.mxu0 0.0
        %2587 = vmatprep.subr.mxu0 0.0
        %2588 = vmatpush1.msra.mxu0 0.0
        %2589 = vmatprep.subr.mxu0 0.0
        %2590 = vmatpush1.msra.mxu0 0.0
        %2591 = vmatprep.subr.mxu0 0.0
        %2592 = vmatpush1.msra.mxu0 0.0
        %2593 = vmatprep.subr.mxu0 0.0
        %2594 = vmatpush1.msra.mxu0 0.0
        %2595 = vmatprep.subr.mxu0 0.0
        %2596 = vmatpush1.msra.mxu0 0.0
        %2597 = vmatprep.subr.mxu0 0.0
        %2598 = vmatpush1.msra.mxu0 0.0
        %2599 = vmatprep.subr.mxu0 0.0
        %2600 = vmatpush1.msra.mxu0 0.0
        %2601 = vmatprep.subr.mxu0 0.0
        %2602 = vmatpush1.msra.mxu0 0.0
        %2603 = vmatprep.subr.mxu0 0.0
        %2604 = vmatpush1.msra.mxu0 0.0
        %2605 = vmatprep.subr.mxu0 0.0
        %2606 = vmatpush1.msra.mxu0 0.0
        %2607 = vmatprep.subr.mxu0 0.0
        %2608 = vmatpush1.msra.mxu0 0.0
        %2609 = vmatprep.mubr.f32.mxu0 0.0
        %v2610 = vand.u32 %v2150, 4294901760
        %2611 = vmatmul.mubr.f32.gmra.mrb[0].mxu0 %v2610
        %v2612 = vpop.f32.mrb[0].mxu0
        %v2613 = vadd.f32 %v2539, %v2612
        %v2614 = vpop.f32.mrb[0].mxu0
        %v2615 = vadd.f32 %v2541, %v2614
        %2616 = vdwg.mxu0
        %2617 = vmatprep.subr.mxu0 0.0
        %v2618 = vand.u32 %v2145, 4294901760
        %2619 = vmatpush1.msra.mxu0 %v2618
        %2620 = vmatprep.subr.mxu0 0.0
        %2621 = vmatpush1.msra.mxu0 0.0
        %2622 = vmatprep.subr.mxu0 0.0
        %2623 = vmatpush1.msra.mxu0 0.0
        %2624 = vmatprep.subr.mxu0 0.0
        %2625 = vmatpush1.msra.mxu0 0.0
        %2626 = vmatprep.subr.mxu0 0.0
        %2627 = vmatpush1.msra.mxu0 0.0
        %2628 = vmatprep.subr.mxu0 0.0
        %2629 = vmatpush1.msra.mxu0 0.0
        %2630 = vmatprep.subr.mxu0 0.0
        %2631 = vmatpush1.msra.mxu0 0.0
        %2632 = vmatprep.subr.mxu0 0.0
        %2633 = vmatpush1.msra.mxu0 0.0
        %2634 = vmatprep.subr.mxu0 0.0
        %2635 = vmatpush1.msra.mxu0 0.0
        %2636 = vmatprep.subr.mxu0 0.0
        %2637 = vmatpush1.msra.mxu0 0.0
        %2638 = vmatprep.subr.mxu0 0.0
        %2639 = vmatpush1.msra.mxu0 0.0
        %2640 = vmatprep.subr.mxu0 0.0
        %2641 = vmatpush1.msra.mxu0 0.0
        %2642 = vmatprep.subr.mxu0 0.0
        %2643 = vmatpush1.msra.mxu0 0.0
        %2644 = vmatprep.subr.mxu0 0.0
        %2645 = vmatpush1.msra.mxu0 0.0
        %2646 = vmatprep.subr.mxu0 0.0
        %2647 = vmatpush1.msra.mxu0 0.0
        %2648 = vmatprep.subr.mxu0 0.0
        %2649 = vmatpush1.msra.mxu0 0.0
        %2650 = vmatprep.subr.mxu0 0.0
        %2651 = vmatpush1.msra.mxu0 0.0
        %2652 = vmatprep.subr.mxu0 0.0
        %2653 = vmatpush1.msra.mxu0 0.0
        %2654 = vmatprep.subr.mxu0 0.0
        %2655 = vmatpush1.msra.mxu0 0.0
        %2656 = vmatprep.subr.mxu0 0.0
        %2657 = vmatpush1.msra.mxu0 0.0
        %2658 = vmatprep.subr.mxu0 0.0
        %2659 = vmatpush1.msra.mxu0 0.0
        %2660 = vmatprep.subr.mxu0 0.0
        %2661 = vmatpush1.msra.mxu0 0.0
        %2662 = vmatprep.subr.mxu0 0.0
        %2663 = vmatpush1.msra.mxu0 0.0
        %2664 = vmatprep.subr.mxu0 0.0
        %2665 = vmatpush1.msra.mxu0 0.0
        %2666 = vmatprep.subr.mxu0 0.0
        %2667 = vmatpush1.msra.mxu0 0.0
        %2668 = vmatprep.subr.mxu0 0.0
        %2669 = vmatpush1.msra.mxu0 0.0
        %2670 = vmatprep.subr.mxu0 0.0
        %2671 = vmatpush1.msra.mxu0 0.0
        %2672 = vmatprep.subr.mxu0 0.0
        %2673 = vmatpush1.msra.mxu0 0.0
        %2674 = vmatprep.subr.mxu0 0.0
        %2675 = vmatpush1.msra.mxu0 0.0
        %2676 = vmatprep.subr.mxu0 0.0
        %2677 = vmatpush1.msra.mxu0 0.0
        %2678 = vmatprep.subr.mxu0 0.0
        %2679 = vmatpush1.msra.mxu0 0.0
        %2680 = vmatprep.subr.mxu0 0.0
        %2681 = vmatpush1.msra.mxu0 0.0
        %2682 = vmatprep.mubr.f32.mxu0 0.0
        %v2683 = vand.u32 %v2150, 4294901760
        %v2684 = vsub.f32 %v2150, %v2683
        %v2685 = vand.u32 %v2684, 4294901760
        %v2686 = vsub.f32 %v2684, %v2685
        %v2687 = vand.u32 %v2686, 4294901760
        %2688 = vmatmul.mubr.f32.gmra.mrb[0].mxu0 %v2687
        %v2689 = vpop.f32.mrb[0].mxu0
        %v2690 = vadd.f32 0.0, %v2689
        %v2691 = vpop.f32.mrb[0].mxu0
        %2692 = vdwg.mxu0
        %2693 = vmatprep.subr.mxu0 0.0
        %v2694 = vand.u32 %v2145, 4294901760
        %v2695 = vsub.f32 %v2145, %v2694
        %v2696 = vand.u32 %v2695, 4294901760
        %v2697 = vsub.f32 %v2695, %v2696
        %v2698 = vand.u32 %v2697, 4294901760
        %2699 = vmatpush1.msra.mxu0 %v2698
        %2700 = vmatprep.subr.mxu0 0.0
        %2701 = vmatpush1.msra.mxu0 0.0
        %2702 = vmatprep.subr.mxu0 0.0
        %2703 = vmatpush1.msra.mxu0 0.0
        %2704 = vmatprep.subr.mxu0 0.0
        %2705 = vmatpush1.msra.mxu0 0.0
        %2706 = vmatprep.subr.mxu0 0.0
        %2707 = vmatpush1.msra.mxu0 0.0
        %2708 = vmatprep.subr.mxu0 0.0
        %2709 = vmatpush1.msra.mxu0 0.0
        %2710 = vmatprep.subr.mxu0 0.0
        %2711 = vmatpush1.msra.mxu0 0.0
        %2712 = vmatprep.subr.mxu0 0.0
        %2713 = vmatpush1.msra.mxu0 0.0
        %2714 = vmatprep.subr.mxu0 0.0
        %2715 = vmatpush1.msra.mxu0 0.0
        %2716 = vmatprep.subr.mxu0 0.0
        %2717 = vmatpush1.msra.mxu0 0.0
        %2718 = vmatprep.subr.mxu0 0.0
        %2719 = vmatpush1.msra.mxu0 0.0
        %2720 = vmatprep.subr.mxu0 0.0
        %2721 = vmatpush1.msra.mxu0 0.0
        %2722 = vmatprep.subr.mxu0 0.0
        %2723 = vmatpush1.msra.mxu0 0.0
        %2724 = vmatprep.subr.mxu0 0.0
        %2725 = vmatpush1.msra.mxu0 0.0
        %2726 = vmatprep.subr.mxu0 0.0
        %2727 = vmatpush1.msra.mxu0 0.0
        %2728 = vmatprep.subr.mxu0 0.0
        %2729 = vmatpush1.msra.mxu0 0.0
        %2730 = vmatprep.subr.mxu0 0.0
        %2731 = vmatpush1.msra.mxu0 0.0
        %2732 = vmatprep.subr.mxu0 0.0
        %2733 = vmatpush1.msra.mxu0 0.0
        %2734 = vmatprep.subr.mxu0 0.0
        %2735 = vmatpush1.msra.mxu0 0.0
        %2736 = vmatprep.subr.mxu0 0.0
        %2737 = vmatpush1.msra.mxu0 0.0
        %2738 = vmatprep.subr.mxu0 0.0
        %2739 = vmatpush1.msra.mxu0 0.0
        %2740 = vmatprep.subr.mxu0 0.0
        %2741 = vmatpush1.msra.mxu0 0.0
        %2742 = vmatprep.subr.mxu0 0.0
        %2743 = vmatpush1.msra.mxu0 0.0
        %2744 = vmatprep.subr.mxu0 0.0
        %2745 = vmatpush1.msra.mxu0 0.0
        %2746 = vmatprep.subr.mxu0 0.0
        %2747 = vmatpush1.msra.mxu0 0.0
        %2748 = vmatprep.subr.mxu0 0.0
        %2749 = vmatpush1.msra.mxu0 0.0
        %2750 = vmatprep.subr.mxu0 0.0
        %2751 = vmatpush1.msra.mxu0 0.0
        %2752 = vmatprep.subr.mxu0 0.0
        %2753 = vmatpush1.msra.mxu0 0.0
        %2754 = vmatprep.subr.mxu0 0.0
        %2755 = vmatpush1.msra.mxu0 0.0
        %2756 = vmatprep.subr.mxu0 0.0
        %2757 = vmatpush1.msra.mxu0 0.0
        %2758 = vmatprep.subr.mxu0 0.0
        %2759 = vmatpush1.msra.mxu0 0.0
        %2760 = vmatprep.subr.mxu0 0.0
        %2761 = vmatpush1.msra.mxu0 0.0
        %2762 = vmatprep.mubr.f32.mxu0 0.0
        %v2763 = vand.u32 %v2150, 4294901760
        %2764 = vmatmul.mubr.f32.gmra.mrb[0].mxu0 %v2763
        %v2765 = vpop.f32.mrb[0].mxu0
        %v2766 = vadd.f32 %v2690, %v2765
        %v2767 = vpop.f32.mrb[0].mxu0
        %2768 = vdwg.mxu0
        %2769 = vmatprep.subr.mxu0 0.0
        %v2770 = vand.u32 %v2145, 4294901760
        %v2771 = vsub.f32 %v2145, %v2770
        %2772 = vmatpush1.msra.mxu0 %v2771
        %2773 = vmatprep.subr.mxu0 0.0
        %2774 = vmatpush1.msra.mxu0 0.0
        %2775 = vmatprep.subr.mxu0 0.0
        %2776 = vmatpush1.msra.mxu0 0.0
        %2777 = vmatprep.subr.mxu0 0.0
        %2778 = vmatpush1.msra.mxu0 0.0
        %2779 = vmatprep.subr.mxu0 0.0
        %2780 = vmatpush1.msra.mxu0 0.0
        %2781 = vmatprep.subr.mxu0 0.0
        %2782 = vmatpush1.msra.mxu0 0.0
        %2783 = vmatprep.subr.mxu0 0.0
        %2784 = vmatpush1.msra.mxu0 0.0
        %2785 = vmatprep.subr.mxu0 0.0
        %2786 = vmatpush1.msra.mxu0 0.0
        %2787 = vmatprep.subr.mxu0 0.0
        %2788 = vmatpush1.msra.mxu0 0.0
        %2789 = vmatprep.subr.mxu0 0.0
        %2790 = vmatpush1.msra.mxu0 0.0
        %2791 = vmatprep.subr.mxu0 0.0
        %2792 = vmatpush1.msra.mxu0 0.0
        %2793 = vmatprep.subr.mxu0 0.0
        %2794 = vmatpush1.msra.mxu0 0.0
        %2795 = vmatprep.subr.mxu0 0.0
        %2796 = vmatpush1.msra.mxu0 0.0
        %2797 = vmatprep.subr.mxu0 0.0
        %2798 = vmatpush1.msra.mxu0 0.0
        %2799 = vmatprep.subr.mxu0 0.0
        %2800 = vmatpush1.msra.mxu0 0.0
        %2801 = vmatprep.subr.mxu0 0.0
        %2802 = vmatpush1.msra.mxu0 0.0
        %2803 = vmatprep.subr.mxu0 0.0
        %2804 = vmatpush1.msra.mxu0 0.0
        %2805 = vmatprep.subr.mxu0 0.0
        %2806 = vmatpush1.msra.mxu0 0.0
        %2807 = vmatprep.subr.mxu0 0.0
        %2808 = vmatpush1.msra.mxu0 0.0
        %2809 = vmatprep.subr.mxu0 0.0
        %2810 = vmatpush1.msra.mxu0 0.0
        %2811 = vmatprep.subr.mxu0 0.0
        %2812 = vmatpush1.msra.mxu0 0.0
        %2813 = vmatprep.subr.mxu0 0.0
        %2814 = vmatpush1.msra.mxu0 0.0
        %2815 = vmatprep.subr.mxu0 0.0
        %2816 = vmatpush1.msra.mxu0 0.0
        %2817 = vmatprep.subr.mxu0 0.0
        %2818 = vmatpush1.msra.mxu0 0.0
        %2819 = vmatprep.subr.mxu0 0.0
        %2820 = vmatpush1.msra.mxu0 0.0
        %2821 = vmatprep.subr.mxu0 0.0
        %2822 = vmatpush1.msra.mxu0 0.0
        %2823 = vmatprep.subr.mxu0 0.0
        %2824 = vmatpush1.msra.mxu0 0.0
        %2825 = vmatprep.subr.mxu0 0.0
        %2826 = vmatpush1.msra.mxu0 0.0
        %2827 = vmatprep.subr.mxu0 0.0
        %2828 = vmatpush1.msra.mxu0 0.0
        %2829 = vmatprep.subr.mxu0 0.0
        %2830 = vmatpush1.msra.mxu0 0.0
        %2831 = vmatprep.subr.mxu0 0.0
        %2832 = vmatpush1.msra.mxu0 0.0
        %2833 = vmatprep.subr.mxu0 0.0
        %2834 = vmatpush1.msra.mxu0 0.0
        %2835 = vmatprep.mubr.f32.mxu0 0.0
        %v2836 = vand.u32 %v2150, 4294901760
        %v2837 = vsub.f32 %v2150, %v2836
        %2838 = vmatmul.mubr.f32.gmra.mrb[0].mxu0 %v2837
        %v2839 = vpop.f32.mrb[0].mxu0
        %v2840 = vadd.f32 %v2766, %v2839
        %v2841 = vpop.f32.mrb[0].mxu0
        %2842 = vdwg.mxu0
        %2843 = vmatprep.subr.mxu0 0.0
        %v2844 = vand.u32 %v2145, 4294901760
        %2845 = vmatpush1.msra.mxu0 %v2844
        %2846 = vmatprep.subr.mxu0 0.0
        %2847 = vmatpush1.msra.mxu0 0.0
        %2848 = vmatprep.subr.mxu0 0.0
        %2849 = vmatpush1.msra.mxu0 0.0
        %2850 = vmatprep.subr.mxu0 0.0
        %2851 = vmatpush1.msra.mxu0 0.0
        %2852 = vmatprep.subr.mxu0 0.0
        %2853 = vmatpush1.msra.mxu0 0.0
        %2854 = vmatprep.subr.mxu0 0.0
        %2855 = vmatpush1.msra.mxu0 0.0
        %2856 = vmatprep.subr.mxu0 0.0
        %2857 = vmatpush1.msra.mxu0 0.0
        %2858 = vmatprep.subr.mxu0 0.0
        %2859 = vmatpush1.msra.mxu0 0.0
        %2860 = vmatprep.subr.mxu0 0.0
        %2861 = vmatpush1.msra.mxu0 0.0
        %2862 = vmatprep.subr.mxu0 0.0
        %2863 = vmatpush1.msra.mxu0 0.0
        %2864 = vmatprep.subr.mxu0 0.0
        %2865 = vmatpush1.msra.mxu0 0.0
        %2866 = vmatprep.subr.mxu0 0.0
        %2867 = vmatpush1.msra.mxu0 0.0
        %2868 = vmatprep.subr.mxu0 0.0
        %2869 = vmatpush1.msra.mxu0 0.0
        %2870 = vmatprep.subr.mxu0 0.0
        %2871 = vmatpush1.msra.mxu0 0.0
        %2872 = vmatprep.subr.mxu0 0.0
        %2873 = vmatpush1.msra.mxu0 0.0
        %2874 = vmatprep.subr.mxu0 0.0
        %2875 = vmatpush1.msra.mxu0 0.0
        %2876 = vmatprep.subr.mxu0 0.0
        %2877 = vmatpush1.msra.mxu0 0.0
        %2878 = vmatprep.subr.mxu0 0.0
        %2879 = vmatpush1.msra.mxu0 0.0
        %2880 = vmatprep.subr.mxu0 0.0
        %2881 = vmatpush1.msra.mxu0 0.0
        %2882 = vmatprep.subr.mxu0 0.0
        %2883 = vmatpush1.msra.mxu0 0.0
        %2884 = vmatprep.subr.mxu0 0.0
        %2885 = vmatpush1.msra.mxu0 0.0
        %2886 = vmatprep.subr.mxu0 0.0
        %2887 = vmatpush1.msra.mxu0 0.0
        %2888 = vmatprep.subr.mxu0 0.0
        %2889 = vmatpush1.msra.mxu0 0.0
        %2890 = vmatprep.subr.mxu0 0.0
        %2891 = vmatpush1.msra.mxu0 0.0
        %2892 = vmatprep.subr.mxu0 0.0
        %2893 = vmatpush1.msra.mxu0 0.0
        %2894 = vmatprep.subr.mxu0 0.0
        %2895 = vmatpush1.msra.mxu0 0.0
        %2896 = vmatprep.subr.mxu0 0.0
        %2897 = vmatpush1.msra.mxu0 0.0
        %2898 = vmatprep.subr.mxu0 0.0
        %2899 = vmatpush1.msra.mxu0 0.0
        %2900 = vmatprep.subr.mxu0 0.0
        %2901 = vmatpush1.msra.mxu0 0.0
        %2902 = vmatprep.subr.mxu0 0.0
        %2903 = vmatpush1.msra.mxu0 0.0
        %2904 = vmatprep.subr.mxu0 0.0
        %2905 = vmatpush1.msra.mxu0 0.0
        %2906 = vmatprep.subr.mxu0 0.0
        %2907 = vmatpush1.msra.mxu0 0.0
        %2908 = vmatprep.mubr.f32.mxu0 0.0
        %v2909 = vand.u32 %v2150, 4294901760
        %v2910 = vsub.f32 %v2150, %v2909
        %v2911 = vand.u32 %v2910, 4294901760
        %2912 = vmatmul.mubr.f32.gmra.mrb[0].mxu0 %v2911
        %v2913 = vpop.f32.mrb[0].mxu0
        %v2914 = vadd.f32 %v2840, %v2913
        %v2915 = vpop.f32.mrb[0].mxu0
        %2916 = vdwg.mxu0
        %2917 = vmatprep.subr.mxu0 0.0
        %v2918 = vand.u32 %v2145, 4294901760
        %v2919 = vsub.f32 %v2145, %v2918
        %v2920 = vand.u32 %v2919, 4294901760
        %2921 = vmatpush1.msra.mxu0 %v2920
        %2922 = vmatprep.subr.mxu0 0.0
        %2923 = vmatpush1.msra.mxu0 0.0
        %2924 = vmatprep.subr.mxu0 0.0
        %2925 = vmatpush1.msra.mxu0 0.0
        %2926 = vmatprep.subr.mxu0 0.0
        %2927 = vmatpush1.msra.mxu0 0.0
        %2928 = vmatprep.subr.mxu0 0.0
        %2929 = vmatpush1.msra.mxu0 0.0
        %2930 = vmatprep.subr.mxu0 0.0
        %2931 = vmatpush1.msra.mxu0 0.0
        %2932 = vmatprep.subr.mxu0 0.0
        %2933 = vmatpush1.msra.mxu0 0.0
        %2934 = vmatprep.subr.mxu0 0.0
        %2935 = vmatpush1.msra.mxu0 0.0
        %2936 = vmatprep.subr.mxu0 0.0
        %2937 = vmatpush1.msra.mxu0 0.0
        %2938 = vmatprep.subr.mxu0 0.0
        %2939 = vmatpush1.msra.mxu0 0.0
        %2940 = vmatprep.subr.mxu0 0.0
        %2941 = vmatpush1.msra.mxu0 0.0
        %2942 = vmatprep.subr.mxu0 0.0
        %2943 = vmatpush1.msra.mxu0 0.0
        %2944 = vmatprep.subr.mxu0 0.0
        %2945 = vmatpush1.msra.mxu0 0.0
        %2946 = vmatprep.subr.mxu0 0.0
        %2947 = vmatpush1.msra.mxu0 0.0
        %2948 = vmatprep.subr.mxu0 0.0
        %2949 = vmatpush1.msra.mxu0 0.0
        %2950 = vmatprep.subr.mxu0 0.0
        %2951 = vmatpush1.msra.mxu0 0.0
        %2952 = vmatprep.subr.mxu0 0.0
        %2953 = vmatpush1.msra.mxu0 0.0
        %2954 = vmatprep.subr.mxu0 0.0
        %2955 = vmatpush1.msra.mxu0 0.0
        %2956 = vmatprep.subr.mxu0 0.0
        %2957 = vmatpush1.msra.mxu0 0.0
        %2958 = vmatprep.subr.mxu0 0.0
        %2959 = vmatpush1.msra.mxu0 0.0
        %2960 = vmatprep.subr.mxu0 0.0
        %2961 = vmatpush1.msra.mxu0 0.0
        %2962 = vmatprep.subr.mxu0 0.0
        %2963 = vmatpush1.msra.mxu0 0.0
        %2964 = vmatprep.subr.mxu0 0.0
        %2965 = vmatpush1.msra.mxu0 0.0
        %2966 = vmatprep.subr.mxu0 0.0
        %2967 = vmatpush1.msra.mxu0 0.0
        %2968 = vmatprep.subr.mxu0 0.0
        %2969 = vmatpush1.msra.mxu0 0.0
        %2970 = vmatprep.subr.mxu0 0.0
        %2971 = vmatpush1.msra.mxu0 0.0
        %2972 = vmatprep.subr.mxu0 0.0
        %2973 = vmatpush1.msra.mxu0 0.0
        %2974 = vmatprep.subr.mxu0 0.0
        %2975 = vmatpush1.msra.mxu0 0.0
        %2976 = vmatprep.subr.mxu0 0.0
        %2977 = vmatpush1.msra.mxu0 0.0
        %2978 = vmatprep.subr.mxu0 0.0
        %2979 = vmatpush1.msra.mxu0 0.0
        %2980 = vmatprep.subr.mxu0 0.0
        %2981 = vmatpush1.msra.mxu0 0.0
        %2982 = vmatprep.subr.mxu0 0.0
        %2983 = vmatpush1.msra.mxu0 0.0
        %2984 = vmatprep.mubr.f32.mxu0 0.0
        %v2985 = vand.u32 %v2150, 4294901760
        %2986 = vmatmul.mubr.f32.gmra.mrb[0].mxu0 %v2985
        %v2987 = vpop.f32.mrb[0].mxu0
        %v2988 = vadd.f32 %v2914, %v2987
        %v2989 = vpop.f32.mrb[0].mxu0
        %2990 = vdwg.mxu0
        %2991 = vmatprep.subr.mxu0 0.0
        %v2992 = vand.u32 %v2145, 4294901760
        %2993 = vmatpush1.msra.mxu0 %v2992
        %2994 = vmatprep.subr.mxu0 0.0
        %2995 = vmatpush1.msra.mxu0 0.0
        %2996 = vmatprep.subr.mxu0 0.0
        %2997 = vmatpush1.msra.mxu0 0.0
        %2998 = vmatprep.subr.mxu0 0.0
        %2999 = vmatpush1.msra.mxu0 0.0
        %3000 = vmatprep.subr.mxu0 0.0
        %3001 = vmatpush1.msra.mxu0 0.0
        %3002 = vmatprep.subr.mxu0 0.0
        %3003 = vmatpush1.msra.mxu0 0.0
        %3004 = vmatprep.subr.mxu0 0.0
        %3005 = vmatpush1.msra.mxu0 0.0
        %3006 = vmatprep.subr.mxu0 0.0
        %3007 = vmatpush1.msra.mxu0 0.0
        %3008 = vmatprep.subr.mxu0 0.0
        %3009 = vmatpush1.msra.mxu0 0.0
        %3010 = vmatprep.subr.mxu0 0.0
        %3011 = vmatpush1.msra.mxu0 0.0
        %3012 = vmatprep.subr.mxu0 0.0
        %3013 = vmatpush1.msra.mxu0 0.0
        %3014 = vmatprep.subr.mxu0 0.0
        %3015 = vmatpush1.msra.mxu0 0.0
        %3016 = vmatprep.subr.mxu0 0.0
        %3017 = vmatpush1.msra.mxu0 0.0
        %3018 = vmatprep.subr.mxu0 0.0
        %3019 = vmatpush1.msra.mxu0 0.0
        %3020 = vmatprep.subr.mxu0 0.0
        %3021 = vmatpush1.msra.mxu0 0.0
        %3022 = vmatprep.subr.mxu0 0.0
        %3023 = vmatpush1.msra.mxu0 0.0
        %3024 = vmatprep.subr.mxu0 0.0
        %3025 = vmatpush1.msra.mxu0 0.0
        %3026 = vmatprep.subr.mxu0 0.0
        %3027 = vmatpush1.msra.mxu0 0.0
        %3028 = vmatprep.subr.mxu0 0.0
        %3029 = vmatpush1.msra.mxu0 0.0
        %3030 = vmatprep.subr.mxu0 0.0
        %3031 = vmatpush1.msra.mxu0 0.0
        %3032 = vmatprep.subr.mxu0 0.0
        %3033 = vmatpush1.msra.mxu0 0.0
        %3034 = vmatprep.subr.mxu0 0.0
        %3035 = vmatpush1.msra.mxu0 0.0
        %3036 = vmatprep.subr.mxu0 0.0
        %3037 = vmatpush1.msra.mxu0 0.0
        %3038 = vmatprep.subr.mxu0 0.0
        %3039 = vmatpush1.msra.mxu0 0.0
        %3040 = vmatprep.subr.mxu0 0.0
        %3041 = vmatpush1.msra.mxu0 0.0
        %3042 = vmatprep.subr.mxu0 0.0
        %3043 = vmatpush1.msra.mxu0 0.0
        %3044 = vmatprep.subr.mxu0 0.0
        %3045 = vmatpush1.msra.mxu0 0.0
        %3046 = vmatprep.subr.mxu0 0.0
        %3047 = vmatpush1.msra.mxu0 0.0
        %3048 = vmatprep.subr.mxu0 0.0
        %3049 = vmatpush1.msra.mxu0 0.0
        %3050 = vmatprep.subr.mxu0 0.0
        %3051 = vmatpush1.msra.mxu0 0.0
        %3052 = vmatprep.subr.mxu0 0.0
        %3053 = vmatpush1.msra.mxu0 0.0
        %3054 = vmatprep.subr.mxu0 0.0
        %3055 = vmatpush1.msra.mxu0 0.0
        %3056 = vmatprep.mubr.f32.mxu0 0.0
        %v3057 = vand.u32 %v2150, 4294901760
        %3058 = vmatmul.mubr.f32.gmra.mrb[0].mxu0 %v3057
        %v3059 = vpop.f32.mrb[0].mxu0
        %v3060 = vadd.f32 %v2988, %v3059
        %v3061 = vpop.f32.mrb[0].mxu0
        %3062 = vdwg.mxu0
        %v3063 = vadd.f32 %v1682, %v2613
        %v3064 = vadd.f32 %v1684, %v2615
        %v3065 = vadd.f32 %v2129, %v3060
        %s3066 = scalar_lea.vmem %s1, 24
        %v3067 = vld [vmem:[%s3066] sm:$0xff]
        %3068 = vrot.lane.b32.xlu0 %v277, 110
        %v3069 = vpop.permute.xlu0 %3068
        %3070 = vrot.lane.b32.xlu0 %v278, 110
        %v3071 = vpop.permute.xlu0 %3070
        %3072 = vrot.lane.b32.xlu0 %v279, 110
        %v3073 = vpop.permute.xlu0 %3072
        %3074 = vrot.lane.b32.xlu0 %v280, 110
        %v3075 = vpop.permute.xlu0 %3074
        %vm3076 = vcmask 900096
        %v3077 = vsel %vm3076, %v3069, %v3071
        %v3078 = vsel %vm3076, %v3071, %v3073
        %v3079 = vsel %vm3076, %v3073, %v3075
        %v3084 = vsel %vm303, %v3067, 0
        %v3086 = vand.u32 %v3078, 4294901760
        %3087 = vmatprep.subr.mxu0 %v3086
        %v3088 = vand.u32 %v3077, 4294901760
        %3089 = vmatpush1.msra.mxu0 %v3088
        %3090 = vmatprep.subr.mxu0 0.0
        %3091 = vmatpush1.msra.mxu0 0.0
        %3092 = vmatprep.subr.mxu0 0.0
        %3093 = vmatpush1.msra.mxu0 0.0
        %3094 = vmatprep.subr.mxu0 0.0
        %3095 = vmatpush1.msra.mxu0 0.0
        %3096 = vmatprep.subr.mxu0 0.0
        %3097 = vmatpush1.msra.mxu0 0.0
        %3098 = vmatprep.subr.mxu0 0.0
        %3099 = vmatpush1.msra.mxu0 0.0
        %3100 = vmatprep.subr.mxu0 0.0
        %3101 = vmatpush1.msra.mxu0 0.0
        %3102 = vmatprep.subr.mxu0 0.0
        %3103 = vmatpush1.msra.mxu0 0.0
        %3104 = vmatprep.subr.mxu0 0.0
        %3105 = vmatpush1.msra.mxu0 0.0
        %3106 = vmatprep.subr.mxu0 0.0
        %3107 = vmatpush1.msra.mxu0 0.0
        %3108 = vmatprep.subr.mxu0 0.0
        %3109 = vmatpush1.msra.mxu0 0.0
        %3110 = vmatprep.subr.mxu0 0.0
        %3111 = vmatpush1.msra.mxu0 0.0
        %3112 = vmatprep.subr.mxu0 0.0
        %3113 = vmatpush1.msra.mxu0 0.0
        %3114 = vmatprep.subr.mxu0 0.0
        %3115 = vmatpush1.msra.mxu0 0.0
        %3116 = vmatprep.subr.mxu0 0.0
        %3117 = vmatpush1.msra.mxu0 0.0
        %3118 = vmatprep.subr.mxu0 0.0
        %3119 = vmatpush1.msra.mxu0 0.0
        %3120 = vmatprep.subr.mxu0 0.0
        %3121 = vmatpush1.msra.mxu0 0.0
        %3122 = vmatprep.subr.mxu0 0.0
        %3123 = vmatpush1.msra.mxu0 0.0
        %3124 = vmatprep.subr.mxu0 0.0
        %3125 = vmatpush1.msra.mxu0 0.0
        %3126 = vmatprep.subr.mxu0 0.0
        %3127 = vmatpush1.msra.mxu0 0.0
        %3128 = vmatprep.subr.mxu0 0.0
        %3129 = vmatpush1.msra.mxu0 0.0
        %3130 = vmatprep.subr.mxu0 0.0
        %3131 = vmatpush1.msra.mxu0 0.0
        %3132 = vmatprep.subr.mxu0 0.0
        %3133 = vmatpush1.msra.mxu0 0.0
        %3134 = vmatprep.subr.mxu0 0.0
        %3135 = vmatpush1.msra.mxu0 0.0
        %3136 = vmatprep.subr.mxu0 0.0
        %3137 = vmatpush1.msra.mxu0 0.0
        %3138 = vmatprep.subr.mxu0 0.0
        %3139 = vmatpush1.msra.mxu0 0.0
        %3140 = vmatprep.subr.mxu0 0.0
        %3141 = vmatpush1.msra.mxu0 0.0
        %3142 = vmatprep.subr.mxu0 0.0
        %3143 = vmatpush1.msra.mxu0 0.0
        %3144 = vmatprep.subr.mxu0 0.0
        %3145 = vmatpush1.msra.mxu0 0.0
        %3146 = vmatprep.subr.mxu0 0.0
        %3147 = vmatpush1.msra.mxu0 0.0
        %3148 = vmatprep.subr.mxu0 0.0
        %3149 = vmatpush1.msra.mxu0 0.0
        %3150 = vmatprep.subr.mxu0 0.0
        %3151 = vmatpush1.msra.mxu0 0.0
        %3152 = vmatprep.mubr.f32.mxu0 0.0
        %v3153 = vand.u32 %v3084, 4294901760
        %v3154 = vsub.f32 %v3084, %v3153
        %v3155 = vand.u32 %v3154, 4294901760
        %v3156 = vsub.f32 %v3154, %v3155
        %v3157 = vand.u32 %v3156, 4294901760
        %3158 = vmatmul.mubr.f32.gmra.mrb[0].mxu0 %v3157
        %v3159 = vpop.f32.mrb[0].mxu0
        %v3160 = vadd.f32 0.0, %v3159
        %v3161 = vpop.f32.mrb[0].mxu0
        %v3162 = vadd.f32 0.0, %v3161
        %3163 = vdwg.mxu0
        %v3164 = vand.u32 %v3078, 4294901760
        %v3165 = vsub.f32 %v3078, %v3164
        %v3166 = vand.u32 %v3165, 4294901760
        %v3167 = vsub.f32 %v3165, %v3166
        %v3168 = vand.u32 %v3167, 4294901760
        %3169 = vmatprep.subr.mxu0 %v3168
        %v3170 = vand.u32 %v3077, 4294901760
        %v3171 = vsub.f32 %v3077, %v3170
        %v3172 = vand.u32 %v3171, 4294901760
        %v3173 = vsub.f32 %v3171, %v3172
        %v3174 = vand.u32 %v3173, 4294901760
        %3175 = vmatpush1.msra.mxu0 %v3174
        %3176 = vmatprep.subr.mxu0 0.0
        %3177 = vmatpush1.msra.mxu0 0.0
        %3178 = vmatprep.subr.mxu0 0.0
        %3179 = vmatpush1.msra.mxu0 0.0
        %3180 = vmatprep.subr.mxu0 0.0
        %3181 = vmatpush1.msra.mxu0 0.0
        %3182 = vmatprep.subr.mxu0 0.0
        %3183 = vmatpush1.msra.mxu0 0.0
        %3184 = vmatprep.subr.mxu0 0.0
        %3185 = vmatpush1.msra.mxu0 0.0
        %3186 = vmatprep.subr.mxu0 0.0
        %3187 = vmatpush1.msra.mxu0 0.0
        %3188 = vmatprep.subr.mxu0 0.0
        %3189 = vmatpush1.msra.mxu0 0.0
        %3190 = vmatprep.subr.mxu0 0.0
        %3191 = vmatpush1.msra.mxu0 0.0
        %3192 = vmatprep.subr.mxu0 0.0
        %3193 = vmatpush1.msra.mxu0 0.0
        %3194 = vmatprep.subr.mxu0 0.0
        %3195 = vmatpush1.msra.mxu0 0.0
        %3196 = vmatprep.subr.mxu0 0.0
        %3197 = vmatpush1.msra.mxu0 0.0
        %3198 = vmatprep.subr.mxu0 0.0
        %3199 = vmatpush1.msra.mxu0 0.0
        %3200 = vmatprep.subr.mxu0 0.0
        %3201 = vmatpush1.msra.mxu0 0.0
        %3202 = vmatprep.subr.mxu0 0.0
        %3203 = vmatpush1.msra.mxu0 0.0
        %3204 = vmatprep.subr.mxu0 0.0
        %3205 = vmatpush1.msra.mxu0 0.0
        %3206 = vmatprep.subr.mxu0 0.0
        %3207 = vmatpush1.msra.mxu0 0.0
        %3208 = vmatprep.subr.mxu0 0.0
        %3209 = vmatpush1.msra.mxu0 0.0
        %3210 = vmatprep.subr.mxu0 0.0
        %3211 = vmatpush1.msra.mxu0 0.0
        %3212 = vmatprep.subr.mxu0 0.0
        %3213 = vmatpush1.msra.mxu0 0.0
        %3214 = vmatprep.subr.mxu0 0.0
        %3215 = vmatpush1.msra.mxu0 0.0
        %3216 = vmatprep.subr.mxu0 0.0
        %3217 = vmatpush1.msra.mxu0 0.0
        %3218 = vmatprep.subr.mxu0 0.0
        %3219 = vmatpush1.msra.mxu0 0.0
        %3220 = vmatprep.subr.mxu0 0.0
        %3221 = vmatpush1.msra.mxu0 0.0
        %3222 = vmatprep.subr.mxu0 0.0
        %3223 = vmatpush1.msra.mxu0 0.0
        %3224 = vmatprep.subr.mxu0 0.0
        %3225 = vmatpush1.msra.mxu0 0.0
        %3226 = vmatprep.subr.mxu0 0.0
        %3227 = vmatpush1.msra.mxu0 0.0
        %3228 = vmatprep.subr.mxu0 0.0
        %3229 = vmatpush1.msra.mxu0 0.0
        %3230 = vmatprep.subr.mxu0 0.0
        %3231 = vmatpush1.msra.mxu0 0.0
        %3232 = vmatprep.subr.mxu0 0.0
        %3233 = vmatpush1.msra.mxu0 0.0
        %3234 = vmatprep.subr.mxu0 0.0
        %3235 = vmatpush1.msra.mxu0 0.0
        %3236 = vmatprep.subr.mxu0 0.0
        %3237 = vmatpush1.msra.mxu0 0.0
        %3238 = vmatprep.mubr.f32.mxu0 0.0
        %v3239 = vand.u32 %v3084, 4294901760
        %3240 = vmatmul.mubr.f32.gmra.mrb[0].mxu0 %v3239
        %v3241 = vpop.f32.mrb[0].mxu0
        %v3242 = vadd.f32 %v3160, %v3241
        %v3243 = vpop.f32.mrb[0].mxu0
        %v3244 = vadd.f32 %v3162, %v3243
        %3245 = vdwg.mxu0
        %v3246 = vand.u32 %v3078, 4294901760
        %v3247 = vsub.f32 %v3078, %v3246
        %3248 = vmatprep.subr.mxu0 %v3247
        %v3249 = vand.u32 %v3077, 4294901760
        %v3250 = vsub.f32 %v3077, %v3249
        %3251 = vmatpush1.msra.mxu0 %v3250
        %3252 = vmatprep.subr.mxu0 0.0
        %3253 = vmatpush1.msra.mxu0 0.0
        %3254 = vmatprep.subr.mxu0 0.0
        %3255 = vmatpush1.msra.mxu0 0.0
        %3256 = vmatprep.subr.mxu0 0.0
        %3257 = vmatpush1.msra.mxu0 0.0
        %3258 = vmatprep.subr.mxu0 0.0
        %3259 = vmatpush1.msra.mxu0 0.0
        %3260 = vmatprep.subr.mxu0 0.0
        %3261 = vmatpush1.msra.mxu0 0.0
        %3262 = vmatprep.subr.mxu0 0.0
        %3263 = vmatpush1.msra.mxu0 0.0
        %3264 = vmatprep.subr.mxu0 0.0
        %3265 = vmatpush1.msra.mxu0 0.0
        %3266 = vmatprep.subr.mxu0 0.0
        %3267 = vmatpush1.msra.mxu0 0.0
        %3268 = vmatprep.subr.mxu0 0.0
        %3269 = vmatpush1.msra.mxu0 0.0
        %3270 = vmatprep.subr.mxu0 0.0
        %3271 = vmatpush1.msra.mxu0 0.0
        %3272 = vmatprep.subr.mxu0 0.0
        %3273 = vmatpush1.msra.mxu0 0.0
        %3274 = vmatprep.subr.mxu0 0.0
        %3275 = vmatpush1.msra.mxu0 0.0
        %3276 = vmatprep.subr.mxu0 0.0
        %3277 = vmatpush1.msra.mxu0 0.0
        %3278 = vmatprep.subr.mxu0 0.0
        %3279 = vmatpush1.msra.mxu0 0.0
        %3280 = vmatprep.subr.mxu0 0.0
        %3281 = vmatpush1.msra.mxu0 0.0
        %3282 = vmatprep.subr.mxu0 0.0
        %3283 = vmatpush1.msra.mxu0 0.0
        %3284 = vmatprep.subr.mxu0 0.0
        %3285 = vmatpush1.msra.mxu0 0.0
        %3286 = vmatprep.subr.mxu0 0.0
        %3287 = vmatpush1.msra.mxu0 0.0
        %3288 = vmatprep.subr.mxu0 0.0
        %3289 = vmatpush1.msra.mxu0 0.0
        %3290 = vmatprep.subr.mxu0 0.0
        %3291 = vmatpush1.msra.mxu0 0.0
        %3292 = vmatprep.subr.mxu0 0.0
        %3293 = vmatpush1.msra.mxu0 0.0
        %3294 = vmatprep.subr.mxu0 0.0
        %3295 = vmatpush1.msra.mxu0 0.0
        %3296 = vmatprep.subr.mxu0 0.0
        %3297 = vmatpush1.msra.mxu0 0.0
        %3298 = vmatprep.subr.mxu0 0.0
        %3299 = vmatpush1.msra.mxu0 0.0
        %3300 = vmatprep.subr.mxu0 0.0
        %3301 = vmatpush1.msra.mxu0 0.0
        %3302 = vmatprep.subr.mxu0 0.0
        %3303 = vmatpush1.msra.mxu0 0.0
        %3304 = vmatprep.subr.mxu0 0.0
        %3305 = vmatpush1.msra.mxu0 0.0
        %3306 = vmatprep.subr.mxu0 0.0
        %3307 = vmatpush1.msra.mxu0 0.0
        %3308 = vmatprep.subr.mxu0 0.0
        %3309 = vmatpush1.msra.mxu0 0.0
        %3310 = vmatprep.subr.mxu0 0.0
        %3311 = vmatpush1.msra.mxu0 0.0
        %3312 = vmatprep.subr.mxu0 0.0
        %3313 = vmatpush1.msra.mxu0 0.0
        %3314 = vmatprep.mubr.f32.mxu0 0.0
        %v3315 = vand.u32 %v3084, 4294901760
        %v3316 = vsub.f32 %v3084, %v3315
        %3317 = vmatmul.mubr.f32.gmra.mrb[0].mxu0 %v3316
        %v3318 = vpop.f32.mrb[0].mxu0
        %v3319 = vadd.f32 %v3242, %v3318
        %v3320 = vpop.f32.mrb[0].mxu0
        %v3321 = vadd.f32 %v3244, %v3320
        %3322 = vdwg.mxu0
        %v3323 = vand.u32 %v3078, 4294901760
        %3324 = vmatprep.subr.mxu0 %v3323
        %v3325 = vand.u32 %v3077, 4294901760
        %3326 = vmatpush1.msra.mxu0 %v3325
        %3327 = vmatprep.subr.mxu0 0.0
        %3328 = vmatpush1.msra.mxu0 0.0
        %3329 = vmatprep.subr.mxu0 0.0
        %3330 = vmatpush1.msra.mxu0 0.0
        %3331 = vmatprep.subr.mxu0 0.0
        %3332 = vmatpush1.msra.mxu0 0.0
        %3333 = vmatprep.subr.mxu0 0.0
        %3334 = vmatpush1.msra.mxu0 0.0
        %3335 = vmatprep.subr.mxu0 0.0
        %3336 = vmatpush1.msra.mxu0 0.0
        %3337 = vmatprep.subr.mxu0 0.0
        %3338 = vmatpush1.msra.mxu0 0.0
        %3339 = vmatprep.subr.mxu0 0.0
        %3340 = vmatpush1.msra.mxu0 0.0
        %3341 = vmatprep.subr.mxu0 0.0
        %3342 = vmatpush1.msra.mxu0 0.0
        %3343 = vmatprep.subr.mxu0 0.0
        %3344 = vmatpush1.msra.mxu0 0.0
        %3345 = vmatprep.subr.mxu0 0.0
        %3346 = vmatpush1.msra.mxu0 0.0
        %3347 = vmatprep.subr.mxu0 0.0
        %3348 = vmatpush1.msra.mxu0 0.0
        %3349 = vmatprep.subr.mxu0 0.0
        %3350 = vmatpush1.msra.mxu0 0.0
        %3351 = vmatprep.subr.mxu0 0.0
        %3352 = vmatpush1.msra.mxu0 0.0
        %3353 = vmatprep.subr.mxu0 0.0
        %3354 = vmatpush1.msra.mxu0 0.0
        %3355 = vmatprep.subr.mxu0 0.0
        %3356 = vmatpush1.msra.mxu0 0.0
        %3357 = vmatprep.subr.mxu0 0.0
        %3358 = vmatpush1.msra.mxu0 0.0
        %3359 = vmatprep.subr.mxu0 0.0
        %3360 = vmatpush1.msra.mxu0 0.0
        %3361 = vmatprep.subr.mxu0 0.0
        %3362 = vmatpush1.msra.mxu0 0.0
        %3363 = vmatprep.subr.mxu0 0.0
        %3364 = vmatpush1.msra.mxu0 0.0
        %3365 = vmatprep.subr.mxu0 0.0
        %3366 = vmatpush1.msra.mxu0 0.0
        %3367 = vmatprep.subr.mxu0 0.0
        %3368 = vmatpush1.msra.mxu0 0.0
        %3369 = vmatprep.subr.mxu0 0.0
        %3370 = vmatpush1.msra.mxu0 0.0
        %3371 = vmatprep.subr.mxu0 0.0
        %3372 = vmatpush1.msra.mxu0 0.0
        %3373 = vmatprep.subr.mxu0 0.0
        %3374 = vmatpush1.msra.mxu0 0.0
        %3375 = vmatprep.subr.mxu0 0.0
        %3376 = vmatpush1.msra.mxu0 0.0
        %3377 = vmatprep.subr.mxu0 0.0
        %3378 = vmatpush1.msra.mxu0 0.0
        %3379 = vmatprep.subr.mxu0 0.0
        %3380 = vmatpush1.msra.mxu0 0.0
        %3381 = vmatprep.subr.mxu0 0.0
        %3382 = vmatpush1.msra.mxu0 0.0
        %3383 = vmatprep.subr.mxu0 0.0
        %3384 = vmatpush1.msra.mxu0 0.0
        %3385 = vmatprep.subr.mxu0 0.0
        %3386 = vmatpush1.msra.mxu0 0.0
        %3387 = vmatprep.subr.mxu0 0.0
        %3388 = vmatpush1.msra.mxu0 0.0
        %3389 = vmatprep.mubr.f32.mxu0 0.0
        %v3390 = vand.u32 %v3084, 4294901760
        %v3391 = vsub.f32 %v3084, %v3390
        %v3392 = vand.u32 %v3391, 4294901760
        %3393 = vmatmul.mubr.f32.gmra.mrb[0].mxu0 %v3392
        %v3394 = vpop.f32.mrb[0].mxu0
        %v3395 = vadd.f32 %v3319, %v3394
        %v3396 = vpop.f32.mrb[0].mxu0
        %v3397 = vadd.f32 %v3321, %v3396
        %3398 = vdwg.mxu0
        %v3399 = vand.u32 %v3078, 4294901760
        %v3400 = vsub.f32 %v3078, %v3399
        %v3401 = vand.u32 %v3400, 4294901760
        %3402 = vmatprep.subr.mxu0 %v3401
        %v3403 = vand.u32 %v3077, 4294901760
        %v3404 = vsub.f32 %v3077, %v3403
        %v3405 = vand.u32 %v3404, 4294901760
        %3406 = vmatpush1.msra.mxu0 %v3405
        %3407 = vmatprep.subr.mxu0 0.0
        %3408 = vmatpush1.msra.mxu0 0.0
        %3409 = vmatprep.subr.mxu0 0.0
        %3410 = vmatpush1.msra.mxu0 0.0
        %3411 = vmatprep.subr.mxu0 0.0
        %3412 = vmatpush1.msra.mxu0 0.0
        %3413 = vmatprep.subr.mxu0 0.0
        %3414 = vmatpush1.msra.mxu0 0.0
        %3415 = vmatprep.subr.mxu0 0.0
        %3416 = vmatpush1.msra.mxu0 0.0
        %3417 = vmatprep.subr.mxu0 0.0
        %3418 = vmatpush1.msra.mxu0 0.0
        %3419 = vmatprep.subr.mxu0 0.0
        %3420 = vmatpush1.msra.mxu0 0.0
        %3421 = vmatprep.subr.mxu0 0.0
        %3422 = vmatpush1.msra.mxu0 0.0
        %3423 = vmatprep.subr.mxu0 0.0
        %3424 = vmatpush1.msra.mxu0 0.0
        %3425 = vmatprep.subr.mxu0 0.0
        %3426 = vmatpush1.msra.mxu0 0.0
        %3427 = vmatprep.subr.mxu0 0.0
        %3428 = vmatpush1.msra.mxu0 0.0
        %3429 = vmatprep.subr.mxu0 0.0
        %3430 = vmatpush1.msra.mxu0 0.0
        %3431 = vmatprep.subr.mxu0 0.0
        %3432 = vmatpush1.msra.mxu0 0.0
        %3433 = vmatprep.subr.mxu0 0.0
        %3434 = vmatpush1.msra.mxu0 0.0
        %3435 = vmatprep.subr.mxu0 0.0
        %3436 = vmatpush1.msra.mxu0 0.0
        %3437 = vmatprep.subr.mxu0 0.0
        %3438 = vmatpush1.msra.mxu0 0.0
        %3439 = vmatprep.subr.mxu0 0.0
        %3440 = vmatpush1.msra.mxu0 0.0
        %3441 = vmatprep.subr.mxu0 0.0
        %3442 = vmatpush1.msra.mxu0 0.0
        %3443 = vmatprep.subr.mxu0 0.0
        %3444 = vmatpush1.msra.mxu0 0.0
        %3445 = vmatprep.subr.mxu0 0.0
        %3446 = vmatpush1.msra.mxu0 0.0
        %3447 = vmatprep.subr.mxu0 0.0
        %3448 = vmatpush1.msra.mxu0 0.0
        %3449 = vmatprep.subr.mxu0 0.0
        %3450 = vmatpush1.msra.mxu0 0.0
        %3451 = vmatprep.subr.mxu0 0.0
        %3452 = vmatpush1.msra.mxu0 0.0
        %3453 = vmatprep.subr.mxu0 0.0
        %3454 = vmatpush1.msra.mxu0 0.0
        %3455 = vmatprep.subr.mxu0 0.0
        %3456 = vmatpush1.msra.mxu0 0.0
        %3457 = vmatprep.subr.mxu0 0.0
        %3458 = vmatpush1.msra.mxu0 0.0
        %3459 = vmatprep.subr.mxu0 0.0
        %3460 = vmatpush1.msra.mxu0 0.0
        %3461 = vmatprep.subr.mxu0 0.0
        %3462 = vmatpush1.msra.mxu0 0.0
        %3463 = vmatprep.subr.mxu0 0.0
        %3464 = vmatpush1.msra.mxu0 0.0
        %3465 = vmatprep.subr.mxu0 0.0
        %3466 = vmatpush1.msra.mxu0 0.0
        %3467 = vmatprep.subr.mxu0 0.0
        %3468 = vmatpush1.msra.mxu0 0.0
        %3469 = vmatprep.mubr.f32.mxu0 0.0
        %v3470 = vand.u32 %v3084, 4294901760
        %3471 = vmatmul.mubr.f32.gmra.mrb[0].mxu0 %v3470
        %v3472 = vpop.f32.mrb[0].mxu0
        %v3473 = vadd.f32 %v3395, %v3472
        %v3474 = vpop.f32.mrb[0].mxu0
        %v3475 = vadd.f32 %v3397, %v3474
        %3476 = vdwg.mxu0
        %v3477 = vand.u32 %v3078, 4294901760
        %3478 = vmatprep.subr.mxu0 %v3477
        %v3479 = vand.u32 %v3077, 4294901760
        %3480 = vmatpush1.msra.mxu0 %v3479
        %3481 = vmatprep.subr.mxu0 0.0
        %3482 = vmatpush1.msra.mxu0 0.0
        %3483 = vmatprep.subr.mxu0 0.0
        %3484 = vmatpush1.msra.mxu0 0.0
        %3485 = vmatprep.subr.mxu0 0.0
        %3486 = vmatpush1.msra.mxu0 0.0
        %3487 = vmatprep.subr.mxu0 0.0
        %3488 = vmatpush1.msra.mxu0 0.0
        %3489 = vmatprep.subr.mxu0 0.0
        %3490 = vmatpush1.msra.mxu0 0.0
        %3491 = vmatprep.subr.mxu0 0.0
        %3492 = vmatpush1.msra.mxu0 0.0
        %3493 = vmatprep.subr.mxu0 0.0
        %3494 = vmatpush1.msra.mxu0 0.0
        %3495 = vmatprep.subr.mxu0 0.0
        %3496 = vmatpush1.msra.mxu0 0.0
        %3497 = vmatprep.subr.mxu0 0.0
        %3498 = vmatpush1.msra.mxu0 0.0
        %3499 = vmatprep.subr.mxu0 0.0
        %3500 = vmatpush1.msra.mxu0 0.0
        %3501 = vmatprep.subr.mxu0 0.0
        %3502 = vmatpush1.msra.mxu0 0.0
        %3503 = vmatprep.subr.mxu0 0.0
        %3504 = vmatpush1.msra.mxu0 0.0
        %3505 = vmatprep.subr.mxu0 0.0
        %3506 = vmatpush1.msra.mxu0 0.0
        %3507 = vmatprep.subr.mxu0 0.0
        %3508 = vmatpush1.msra.mxu0 0.0
        %3509 = vmatprep.subr.mxu0 0.0
        %3510 = vmatpush1.msra.mxu0 0.0
        %3511 = vmatprep.subr.mxu0 0.0
        %3512 = vmatpush1.msra.mxu0 0.0
        %3513 = vmatprep.subr.mxu0 0.0
        %3514 = vmatpush1.msra.mxu0 0.0
        %3515 = vmatprep.subr.mxu0 0.0
        %3516 = vmatpush1.msra.mxu0 0.0
        %3517 = vmatprep.subr.mxu0 0.0
        %3518 = vmatpush1.msra.mxu0 0.0
        %3519 = vmatprep.subr.mxu0 0.0
        %3520 = vmatpush1.msra.mxu0 0.0
        %3521 = vmatprep.subr.mxu0 0.0
        %3522 = vmatpush1.msra.mxu0 0.0
        %3523 = vmatprep.subr.mxu0 0.0
        %3524 = vmatpush1.msra.mxu0 0.0
        %3525 = vmatprep.subr.mxu0 0.0
        %3526 = vmatpush1.msra.mxu0 0.0
        %3527 = vmatprep.subr.mxu0 0.0
        %3528 = vmatpush1.msra.mxu0 0.0
        %3529 = vmatprep.subr.mxu0 0.0
        %3530 = vmatpush1.msra.mxu0 0.0
        %3531 = vmatprep.subr.mxu0 0.0
        %3532 = vmatpush1.msra.mxu0 0.0
        %3533 = vmatprep.subr.mxu0 0.0
        %3534 = vmatpush1.msra.mxu0 0.0
        %3535 = vmatprep.subr.mxu0 0.0
        %3536 = vmatpush1.msra.mxu0 0.0
        %3537 = vmatprep.subr.mxu0 0.0
        %3538 = vmatpush1.msra.mxu0 0.0
        %3539 = vmatprep.subr.mxu0 0.0
        %3540 = vmatpush1.msra.mxu0 0.0
        %3541 = vmatprep.subr.mxu0 0.0
        %3542 = vmatpush1.msra.mxu0 0.0
        %3543 = vmatprep.mubr.f32.mxu0 0.0
        %v3544 = vand.u32 %v3084, 4294901760
        %3545 = vmatmul.mubr.f32.gmra.mrb[0].mxu0 %v3544
        %v3546 = vpop.f32.mrb[0].mxu0
        %v3547 = vadd.f32 %v3473, %v3546
        %v3548 = vpop.f32.mrb[0].mxu0
        %v3549 = vadd.f32 %v3475, %v3548
        %3550 = vdwg.mxu0
        %3551 = vmatprep.subr.mxu0 0.0
        %v3552 = vand.u32 %v3079, 4294901760
        %3553 = vmatpush1.msra.mxu0 %v3552
        %3554 = vmatprep.subr.mxu0 0.0
        %3555 = vmatpush1.msra.mxu0 0.0
        %3556 = vmatprep.subr.mxu0 0.0
        %3557 = vmatpush1.msra.mxu0 0.0
        %3558 = vmatprep.subr.mxu0 0.0
        %3559 = vmatpush1.msra.mxu0 0.0
        %3560 = vmatprep.subr.mxu0 0.0
        %3561 = vmatpush1.msra.mxu0 0.0
        %3562 = vmatprep.subr.mxu0 0.0
        %3563 = vmatpush1.msra.mxu0 0.0
        %3564 = vmatprep.subr.mxu0 0.0
        %3565 = vmatpush1.msra.mxu0 0.0
        %3566 = vmatprep.subr.mxu0 0.0
        %3567 = vmatpush1.msra.mxu0 0.0
        %3568 = vmatprep.subr.mxu0 0.0
        %3569 = vmatpush1.msra.mxu0 0.0
        %3570 = vmatprep.subr.mxu0 0.0
        %3571 = vmatpush1.msra.mxu0 0.0
        %3572 = vmatprep.subr.mxu0 0.0
        %3573 = vmatpush1.msra.mxu0 0.0
        %3574 = vmatprep.subr.mxu0 0.0
        %3575 = vmatpush1.msra.mxu0 0.0
        %3576 = vmatprep.subr.mxu0 0.0
        %3577 = vmatpush1.msra.mxu0 0.0
        %3578 = vmatprep.subr.mxu0 0.0
        %3579 = vmatpush1.msra.mxu0 0.0
        %3580 = vmatprep.subr.mxu0 0.0
        %3581 = vmatpush1.msra.mxu0 0.0
        %3582 = vmatprep.subr.mxu0 0.0
        %3583 = vmatpush1.msra.mxu0 0.0
        %3584 = vmatprep.subr.mxu0 0.0
        %3585 = vmatpush1.msra.mxu0 0.0
        %3586 = vmatprep.subr.mxu0 0.0
        %3587 = vmatpush1.msra.mxu0 0.0
        %3588 = vmatprep.subr.mxu0 0.0
        %3589 = vmatpush1.msra.mxu0 0.0
        %3590 = vmatprep.subr.mxu0 0.0
        %3591 = vmatpush1.msra.mxu0 0.0
        %3592 = vmatprep.subr.mxu0 0.0
        %3593 = vmatpush1.msra.mxu0 0.0
        %3594 = vmatprep.subr.mxu0 0.0
        %3595 = vmatpush1.msra.mxu0 0.0
        %3596 = vmatprep.subr.mxu0 0.0
        %3597 = vmatpush1.msra.mxu0 0.0
        %3598 = vmatprep.subr.mxu0 0.0
        %3599 = vmatpush1.msra.mxu0 0.0
        %3600 = vmatprep.subr.mxu0 0.0
        %3601 = vmatpush1.msra.mxu0 0.0
        %3602 = vmatprep.subr.mxu0 0.0
        %3603 = vmatpush1.msra.mxu0 0.0
        %3604 = vmatprep.subr.mxu0 0.0
        %3605 = vmatpush1.msra.mxu0 0.0
        %3606 = vmatprep.subr.mxu0 0.0
        %3607 = vmatpush1.msra.mxu0 0.0
        %3608 = vmatprep.subr.mxu0 0.0
        %3609 = vmatpush1.msra.mxu0 0.0
        %3610 = vmatprep.subr.mxu0 0.0
        %3611 = vmatpush1.msra.mxu0 0.0
        %3612 = vmatprep.subr.mxu0 0.0
        %3613 = vmatpush1.msra.mxu0 0.0
        %3614 = vmatprep.subr.mxu0 0.0
        %3615 = vmatpush1.msra.mxu0 0.0
        %3616 = vmatprep.mubr.f32.mxu0 0.0
        %v3617 = vand.u32 %v3084, 4294901760
        %v3618 = vsub.f32 %v3084, %v3617
        %v3619 = vand.u32 %v3618, 4294901760
        %v3620 = vsub.f32 %v3618, %v3619
        %v3621 = vand.u32 %v3620, 4294901760
        %3622 = vmatmul.mubr.f32.gmra.mrb[0].mxu0 %v3621
        %v3623 = vpop.f32.mrb[0].mxu0
        %v3624 = vadd.f32 0.0, %v3623
        %v3625 = vpop.f32.mrb[0].mxu0
        %3626 = vdwg.mxu0
        %3627 = vmatprep.subr.mxu0 0.0
        %v3628 = vand.u32 %v3079, 4294901760
        %v3629 = vsub.f32 %v3079, %v3628
        %v3630 = vand.u32 %v3629, 4294901760
        %v3631 = vsub.f32 %v3629, %v3630
        %v3632 = vand.u32 %v3631, 4294901760
        %3633 = vmatpush1.msra.mxu0 %v3632
        %3634 = vmatprep.subr.mxu0 0.0
        %3635 = vmatpush1.msra.mxu0 0.0
        %3636 = vmatprep.subr.mxu0 0.0
        %3637 = vmatpush1.msra.mxu0 0.0
        %3638 = vmatprep.subr.mxu0 0.0
        %3639 = vmatpush1.msra.mxu0 0.0
        %3640 = vmatprep.subr.mxu0 0.0
        %3641 = vmatpush1.msra.mxu0 0.0
        %3642 = vmatprep.subr.mxu0 0.0
        %3643 = vmatpush1.msra.mxu0 0.0
        %3644 = vmatprep.subr.mxu0 0.0
        %3645 = vmatpush1.msra.mxu0 0.0
        %3646 = vmatprep.subr.mxu0 0.0
        %3647 = vmatpush1.msra.mxu0 0.0
        %3648 = vmatprep.subr.mxu0 0.0
        %3649 = vmatpush1.msra.mxu0 0.0
        %3650 = vmatprep.subr.mxu0 0.0
        %3651 = vmatpush1.msra.mxu0 0.0
        %3652 = vmatprep.subr.mxu0 0.0
        %3653 = vmatpush1.msra.mxu0 0.0
        %3654 = vmatprep.subr.mxu0 0.0
        %3655 = vmatpush1.msra.mxu0 0.0
        %3656 = vmatprep.subr.mxu0 0.0
        %3657 = vmatpush1.msra.mxu0 0.0
        %3658 = vmatprep.subr.mxu0 0.0
        %3659 = vmatpush1.msra.mxu0 0.0
        %3660 = vmatprep.subr.mxu0 0.0
        %3661 = vmatpush1.msra.mxu0 0.0
        %3662 = vmatprep.subr.mxu0 0.0
        %3663 = vmatpush1.msra.mxu0 0.0
        %3664 = vmatprep.subr.mxu0 0.0
        %3665 = vmatpush1.msra.mxu0 0.0
        %3666 = vmatprep.subr.mxu0 0.0
        %3667 = vmatpush1.msra.mxu0 0.0
        %3668 = vmatprep.subr.mxu0 0.0
        %3669 = vmatpush1.msra.mxu0 0.0
        %3670 = vmatprep.subr.mxu0 0.0
        %3671 = vmatpush1.msra.mxu0 0.0
        %3672 = vmatprep.subr.mxu0 0.0
        %3673 = vmatpush1.msra.mxu0 0.0
        %3674 = vmatprep.subr.mxu0 0.0
        %3675 = vmatpush1.msra.mxu0 0.0
        %3676 = vmatprep.subr.mxu0 0.0
        %3677 = vmatpush1.msra.mxu0 0.0
        %3678 = vmatprep.subr.mxu0 0.0
        %3679 = vmatpush1.msra.mxu0 0.0
        %3680 = vmatprep.subr.mxu0 0.0
        %3681 = vmatpush1.msra.mxu0 0.0
        %3682 = vmatprep.subr.mxu0 0.0
        %3683 = vmatpush1.msra.mxu0 0.0
        %3684 = vmatprep.subr.mxu0 0.0
        %3685 = vmatpush1.msra.mxu0 0.0
        %3686 = vmatprep.subr.mxu0 0.0
        %3687 = vmatpush1.msra.mxu0 0.0
        %3688 = vmatprep.subr.mxu0 0.0
        %3689 = vmatpush1.msra.mxu0 0.0
        %3690 = vmatprep.subr.mxu0 0.0
        %3691 = vmatpush1.msra.mxu0 0.0
        %3692 = vmatprep.subr.mxu0 0.0
        %3693 = vmatpush1.msra.mxu0 0.0
        %3694 = vmatprep.subr.mxu0 0.0
        %3695 = vmatpush1.msra.mxu0 0.0
        %3696 = vmatprep.mubr.f32.mxu0 0.0
        %v3697 = vand.u32 %v3084, 4294901760
        %3698 = vmatmul.mubr.f32.gmra.mrb[0].mxu0 %v3697
        %v3699 = vpop.f32.mrb[0].mxu0
        %v3700 = vadd.f32 %v3624, %v3699
        %v3701 = vpop.f32.mrb[0].mxu0
        %3702 = vdwg.mxu0
        %3703 = vmatprep.subr.mxu0 0.0
        %v3704 = vand.u32 %v3079, 4294901760
        %v3705 = vsub.f32 %v3079, %v3704
        %3706 = vmatpush1.msra.mxu0 %v3705
        %3707 = vmatprep.subr.mxu0 0.0
        %3708 = vmatpush1.msra.mxu0 0.0
        %3709 = vmatprep.subr.mxu0 0.0
        %3710 = vmatpush1.msra.mxu0 0.0
        %3711 = vmatprep.subr.mxu0 0.0
        %3712 = vmatpush1.msra.mxu0 0.0
        %3713 = vmatprep.subr.mxu0 0.0
        %3714 = vmatpush1.msra.mxu0 0.0
        %3715 = vmatprep.subr.mxu0 0.0
        %3716 = vmatpush1.msra.mxu0 0.0
        %3717 = vmatprep.subr.mxu0 0.0
        %3718 = vmatpush1.msra.mxu0 0.0
        %3719 = vmatprep.subr.mxu0 0.0
        %3720 = vmatpush1.msra.mxu0 0.0
        %3721 = vmatprep.subr.mxu0 0.0
        %3722 = vmatpush1.msra.mxu0 0.0
        %3723 = vmatprep.subr.mxu0 0.0
        %3724 = vmatpush1.msra.mxu0 0.0
        %3725 = vmatprep.subr.mxu0 0.0
        %3726 = vmatpush1.msra.mxu0 0.0
        %3727 = vmatprep.subr.mxu0 0.0
        %3728 = vmatpush1.msra.mxu0 0.0
        %3729 = vmatprep.subr.mxu0 0.0
        %3730 = vmatpush1.msra.mxu0 0.0
        %3731 = vmatprep.subr.mxu0 0.0
        %3732 = vmatpush1.msra.mxu0 0.0
        %3733 = vmatprep.subr.mxu0 0.0
        %3734 = vmatpush1.msra.mxu0 0.0
        %3735 = vmatprep.subr.mxu0 0.0
        %3736 = vmatpush1.msra.mxu0 0.0
        %3737 = vmatprep.subr.mxu0 0.0
        %3738 = vmatpush1.msra.mxu0 0.0
        %3739 = vmatprep.subr.mxu0 0.0
        %3740 = vmatpush1.msra.mxu0 0.0
        %3741 = vmatprep.subr.mxu0 0.0
        %3742 = vmatpush1.msra.mxu0 0.0
        %3743 = vmatprep.subr.mxu0 0.0
        %3744 = vmatpush1.msra.mxu0 0.0
        %3745 = vmatprep.subr.mxu0 0.0
        %3746 = vmatpush1.msra.mxu0 0.0
        %3747 = vmatprep.subr.mxu0 0.0
        %3748 = vmatpush1.msra.mxu0 0.0
        %3749 = vmatprep.subr.mxu0 0.0
        %3750 = vmatpush1.msra.mxu0 0.0
        %3751 = vmatprep.subr.mxu0 0.0
        %3752 = vmatpush1.msra.mxu0 0.0
        %3753 = vmatprep.subr.mxu0 0.0
        %3754 = vmatpush1.msra.mxu0 0.0
        %3755 = vmatprep.subr.mxu0 0.0
        %3756 = vmatpush1.msra.mxu0 0.0
        %3757 = vmatprep.subr.mxu0 0.0
        %3758 = vmatpush1.msra.mxu0 0.0
        %3759 = vmatprep.subr.mxu0 0.0
        %3760 = vmatpush1.msra.mxu0 0.0
        %3761 = vmatprep.subr.mxu0 0.0
        %3762 = vmatpush1.msra.mxu0 0.0
        %3763 = vmatprep.subr.mxu0 0.0
        %3764 = vmatpush1.msra.mxu0 0.0
        %3765 = vmatprep.subr.mxu0 0.0
        %3766 = vmatpush1.msra.mxu0 0.0
        %3767 = vmatprep.subr.mxu0 0.0
        %3768 = vmatpush1.msra.mxu0 0.0
        %3769 = vmatprep.mubr.f32.mxu0 0.0
        %v3770 = vand.u32 %v3084, 4294901760
        %v3771 = vsub.f32 %v3084, %v3770
        %3772 = vmatmul.mubr.f32.gmra.mrb[0].mxu0 %v3771
        %v3773 = vpop.f32.mrb[0].mxu0
        %v3774 = vadd.f32 %v3700, %v3773
        %v3775 = vpop.f32.mrb[0].mxu0
        %3776 = vdwg.mxu0
        %3777 = vmatprep.subr.mxu0 0.0
        %v3778 = vand.u32 %v3079, 4294901760
        %3779 = vmatpush1.msra.mxu0 %v3778
        %3780 = vmatprep.subr.mxu0 0.0
        %3781 = vmatpush1.msra.mxu0 0.0
        %3782 = vmatprep.subr.mxu0 0.0
        %3783 = vmatpush1.msra.mxu0 0.0
        %3784 = vmatprep.subr.mxu0 0.0
        %3785 = vmatpush1.msra.mxu0 0.0
        %3786 = vmatprep.subr.mxu0 0.0
        %3787 = vmatpush1.msra.mxu0 0.0
        %3788 = vmatprep.subr.mxu0 0.0
        %3789 = vmatpush1.msra.mxu0 0.0
        %3790 = vmatprep.subr.mxu0 0.0
        %3791 = vmatpush1.msra.mxu0 0.0
        %3792 = vmatprep.subr.mxu0 0.0
        %3793 = vmatpush1.msra.mxu0 0.0
        %3794 = vmatprep.subr.mxu0 0.0
        %3795 = vmatpush1.msra.mxu0 0.0
        %3796 = vmatprep.subr.mxu0 0.0
        %3797 = vmatpush1.msra.mxu0 0.0
        %3798 = vmatprep.subr.mxu0 0.0
        %3799 = vmatpush1.msra.mxu0 0.0
        %3800 = vmatprep.subr.mxu0 0.0
        %3801 = vmatpush1.msra.mxu0 0.0
        %3802 = vmatprep.subr.mxu0 0.0
        %3803 = vmatpush1.msra.mxu0 0.0
        %3804 = vmatprep.subr.mxu0 0.0
        %3805 = vmatpush1.msra.mxu0 0.0
        %3806 = vmatprep.subr.mxu0 0.0
        %3807 = vmatpush1.msra.mxu0 0.0
        %3808 = vmatprep.subr.mxu0 0.0
        %3809 = vmatpush1.msra.mxu0 0.0
        %3810 = vmatprep.subr.mxu0 0.0
        %3811 = vmatpush1.msra.mxu0 0.0
        %3812 = vmatprep.subr.mxu0 0.0
        %3813 = vmatpush1.msra.mxu0 0.0
        %3814 = vmatprep.subr.mxu0 0.0
        %3815 = vmatpush1.msra.mxu0 0.0
        %3816 = vmatprep.subr.mxu0 0.0
        %3817 = vmatpush1.msra.mxu0 0.0
        %3818 = vmatprep.subr.mxu0 0.0
        %3819 = vmatpush1.msra.mxu0 0.0
        %3820 = vmatprep.subr.mxu0 0.0
        %3821 = vmatpush1.msra.mxu0 0.0
        %3822 = vmatprep.subr.mxu0 0.0
        %3823 = vmatpush1.msra.mxu0 0.0
        %3824 = vmatprep.subr.mxu0 0.0
        %3825 = vmatpush1.msra.mxu0 0.0
        %3826 = vmatprep.subr.mxu0 0.0
        %3827 = vmatpush1.msra.mxu0 0.0
        %3828 = vmatprep.subr.mxu0 0.0
        %3829 = vmatpush1.msra.mxu0 0.0
        %3830 = vmatprep.subr.mxu0 0.0
        %3831 = vmatpush1.msra.mxu0 0.0
        %3832 = vmatprep.subr.mxu0 0.0
        %3833 = vmatpush1.msra.mxu0 0.0
        %3834 = vmatprep.subr.mxu0 0.0
        %3835 = vmatpush1.msra.mxu0 0.0
        %3836 = vmatprep.subr.mxu0 0.0
        %3837 = vmatpush1.msra.mxu0 0.0
        %3838 = vmatprep.subr.mxu0 0.0
        %3839 = vmatpush1.msra.mxu0 0.0
        %3840 = vmatprep.subr.mxu0 0.0
        %3841 = vmatpush1.msra.mxu0 0.0
        %3842 = vmatprep.mubr.f32.mxu0 0.0
        %v3843 = vand.u32 %v3084, 4294901760
        %v3844 = vsub.f32 %v3084, %v3843
        %v3845 = vand.u32 %v3844, 4294901760
        %3846 = vmatmul.mubr.f32.gmra.mrb[0].mxu0 %v3845
        %v3847 = vpop.f32.mrb[0].mxu0
        %v3848 = vadd.f32 %v3774, %v3847
        %v3849 = vpop.f32.mrb[0].mxu0
        %3850 = vdwg.mxu0
        %3851 = vmatprep.subr.mxu0 0.0
        %v3852 = vand.u32 %v3079, 4294901760
        %v3853 = vsub.f32 %v3079, %v3852
        %v3854 = vand.u32 %v3853, 4294901760
        %3855 = vmatpush1.msra.mxu0 %v3854
        %3856 = vmatprep.subr.mxu0 0.0
        %3857 = vmatpush1.msra.mxu0 0.0
        %3858 = vmatprep.subr.mxu0 0.0
        %3859 = vmatpush1.msra.mxu0 0.0
        %3860 = vmatprep.subr.mxu0 0.0
        %3861 = vmatpush1.msra.mxu0 0.0
        %3862 = vmatprep.subr.mxu0 0.0
        %3863 = vmatpush1.msra.mxu0 0.0
        %3864 = vmatprep.subr.mxu0 0.0
        %3865 = vmatpush1.msra.mxu0 0.0
        %3866 = vmatprep.subr.mxu0 0.0
        %3867 = vmatpush1.msra.mxu0 0.0
        %3868 = vmatprep.subr.mxu0 0.0
        %3869 = vmatpush1.msra.mxu0 0.0
        %3870 = vmatprep.subr.mxu0 0.0
        %3871 = vmatpush1.msra.mxu0 0.0
        %3872 = vmatprep.subr.mxu0 0.0
        %3873 = vmatpush1.msra.mxu0 0.0
        %3874 = vmatprep.subr.mxu0 0.0
        %3875 = vmatpush1.msra.mxu0 0.0
        %3876 = vmatprep.subr.mxu0 0.0
        %3877 = vmatpush1.msra.mxu0 0.0
        %3878 = vmatprep.subr.mxu0 0.0
        %3879 = vmatpush1.msra.mxu0 0.0
        %3880 = vmatprep.subr.mxu0 0.0
        %3881 = vmatpush1.msra.mxu0 0.0
        %3882 = vmatprep.subr.mxu0 0.0
        %3883 = vmatpush1.msra.mxu0 0.0
        %3884 = vmatprep.subr.mxu0 0.0
        %3885 = vmatpush1.msra.mxu0 0.0
        %3886 = vmatprep.subr.mxu0 0.0
        %3887 = vmatpush1.msra.mxu0 0.0
        %3888 = vmatprep.subr.mxu0 0.0
        %3889 = vmatpush1.msra.mxu0 0.0
        %3890 = vmatprep.subr.mxu0 0.0
        %3891 = vmatpush1.msra.mxu0 0.0
        %3892 = vmatprep.subr.mxu0 0.0
        %3893 = vmatpush1.msra.mxu0 0.0
        %3894 = vmatprep.subr.mxu0 0.0
        %3895 = vmatpush1.msra.mxu0 0.0
        %3896 = vmatprep.subr.mxu0 0.0
        %3897 = vmatpush1.msra.mxu0 0.0
        %3898 = vmatprep.subr.mxu0 0.0
        %3899 = vmatpush1.msra.mxu0 0.0
        %3900 = vmatprep.subr.mxu0 0.0
        %3901 = vmatpush1.msra.mxu0 0.0
        %3902 = vmatprep.subr.mxu0 0.0
        %3903 = vmatpush1.msra.mxu0 0.0
        %3904 = vmatprep.subr.mxu0 0.0
        %3905 = vmatpush1.msra.mxu0 0.0
        %3906 = vmatprep.subr.mxu0 0.0
        %3907 = vmatpush1.msra.mxu0 0.0
        %3908 = vmatprep.subr.mxu0 0.0
        %3909 = vmatpush1.msra.mxu0 0.0
        %3910 = vmatprep.subr.mxu0 0.0
        %3911 = vmatpush1.msra.mxu0 0.0
        %3912 = vmatprep.subr.mxu0 0.0
        %3913 = vmatpush1.msra.mxu0 0.0
        %3914 = vmatprep.subr.mxu0 0.0
        %3915 = vmatpush1.msra.mxu0 0.0
        %3916 = vmatprep.subr.mxu0 0.0
        %3917 = vmatpush1.msra.mxu0 0.0
        %3918 = vmatprep.mubr.f32.mxu0 0.0
        %v3919 = vand.u32 %v3084, 4294901760
        %3920 = vmatmul.mubr.f32.gmra.mrb[0].mxu0 %v3919
        %v3921 = vpop.f32.mrb[0].mxu0
        %v3922 = vadd.f32 %v3848, %v3921
        %v3923 = vpop.f32.mrb[0].mxu0
        %3924 = vdwg.mxu0
        %3925 = vmatprep.subr.mxu0 0.0
        %v3926 = vand.u32 %v3079, 4294901760
        %3927 = vmatpush1.msra.mxu0 %v3926
        %3928 = vmatprep.subr.mxu0 0.0
        %3929 = vmatpush1.msra.mxu0 0.0
        %3930 = vmatprep.subr.mxu0 0.0
        %3931 = vmatpush1.msra.mxu0 0.0
        %3932 = vmatprep.subr.mxu0 0.0
        %3933 = vmatpush1.msra.mxu0 0.0
        %3934 = vmatprep.subr.mxu0 0.0
        %3935 = vmatpush1.msra.mxu0 0.0
        %3936 = vmatprep.subr.mxu0 0.0
        %3937 = vmatpush1.msra.mxu0 0.0
        %3938 = vmatprep.subr.mxu0 0.0
        %3939 = vmatpush1.msra.mxu0 0.0
        %3940 = vmatprep.subr.mxu0 0.0
        %3941 = vmatpush1.msra.mxu0 0.0
        %3942 = vmatprep.subr.mxu0 0.0
        %3943 = vmatpush1.msra.mxu0 0.0
        %3944 = vmatprep.subr.mxu0 0.0
        %3945 = vmatpush1.msra.mxu0 0.0
        %3946 = vmatprep.subr.mxu0 0.0
        %3947 = vmatpush1.msra.mxu0 0.0
        %3948 = vmatprep.subr.mxu0 0.0
        %3949 = vmatpush1.msra.mxu0 0.0
        %3950 = vmatprep.subr.mxu0 0.0
        %3951 = vmatpush1.msra.mxu0 0.0
        %3952 = vmatprep.subr.mxu0 0.0
        %3953 = vmatpush1.msra.mxu0 0.0
        %3954 = vmatprep.subr.mxu0 0.0
        %3955 = vmatpush1.msra.mxu0 0.0
        %3956 = vmatprep.subr.mxu0 0.0
        %3957 = vmatpush1.msra.mxu0 0.0
        %3958 = vmatprep.subr.mxu0 0.0
        %3959 = vmatpush1.msra.mxu0 0.0
        %3960 = vmatprep.subr.mxu0 0.0
        %3961 = vmatpush1.msra.mxu0 0.0
        %3962 = vmatprep.subr.mxu0 0.0
        %3963 = vmatpush1.msra.mxu0 0.0
        %3964 = vmatprep.subr.mxu0 0.0
        %3965 = vmatpush1.msra.mxu0 0.0
        %3966 = vmatprep.subr.mxu0 0.0
        %3967 = vmatpush1.msra.mxu0 0.0
        %3968 = vmatprep.subr.mxu0 0.0
        %3969 = vmatpush1.msra.mxu0 0.0
        %3970 = vmatprep.subr.mxu0 0.0
        %3971 = vmatpush1.msra.mxu0 0.0
        %3972 = vmatprep.subr.mxu0 0.0
        %3973 = vmatpush1.msra.mxu0 0.0
        %3974 = vmatprep.subr.mxu0 0.0
        %3975 = vmatpush1.msra.mxu0 0.0
        %3976 = vmatprep.subr.mxu0 0.0
        %3977 = vmatpush1.msra.mxu0 0.0
        %3978 = vmatprep.subr.mxu0 0.0
        %3979 = vmatpush1.msra.mxu0 0.0
        %3980 = vmatprep.subr.mxu0 0.0
        %3981 = vmatpush1.msra.mxu0 0.0
        %3982 = vmatprep.subr.mxu0 0.0
        %3983 = vmatpush1.msra.mxu0 0.0
        %3984 = vmatprep.subr.mxu0 0.0
        %3985 = vmatpush1.msra.mxu0 0.0
        %3986 = vmatprep.subr.mxu0 0.0
        %3987 = vmatpush1.msra.mxu0 0.0
        %3988 = vmatprep.subr.mxu0 0.0
        %3989 = vmatpush1.msra.mxu0 0.0
        %3990 = vmatprep.mubr.f32.mxu0 0.0
        %v3991 = vand.u32 %v3084, 4294901760
        %3992 = vmatmul.mubr.f32.gmra.mrb[0].mxu0 %v3991
        %v3993 = vpop.f32.mrb[0].mxu0
        %v3994 = vadd.f32 %v3922, %v3993
        %v3995 = vpop.f32.mrb[0].mxu0
        %3996 = vdwg.mxu0
        %v3997 = vadd.f32 %v3063, %v3547
        %v3998 = vadd.f32 %v3064, %v3549
        %v3999 = vadd.f32 %v3065, %v3994
        %s4000 = scalar_lea.vmem %s1, 32
        %v4001 = vld [vmem:[%s4000] sm:$0xff]
        %4002 = vrot.lane.b32.xlu0 %v277, 109
        %v4003 = vpop.permute.xlu0 %4002
        %4004 = vrot.lane.b32.xlu0 %v278, 109
        %v4005 = vpop.permute.xlu0 %4004
        %4006 = vrot.lane.b32.xlu0 %v279, 109
        %v4007 = vpop.permute.xlu0 %4006
        %4008 = vrot.lane.b32.xlu0 %v280, 109
        %v4009 = vpop.permute.xlu0 %4008
        %vm4010 = vcmask 891904
        %v4011 = vsel %vm4010, %v4003, %v4005
        %v4012 = vsel %vm4010, %v4005, %v4007
        %v4013 = vsel %vm4010, %v4007, %v4009
        %v4018 = vsel %vm303, %v4001, 0
        %v4020 = vand.u32 %v4012, 4294901760
        %4021 = vmatprep.subr.mxu0 %v4020
        %v4022 = vand.u32 %v4011, 4294901760
        %4023 = vmatpush1.msra.mxu0 %v4022
        %4024 = vmatprep.subr.mxu0 0.0
        %4025 = vmatpush1.msra.mxu0 0.0
        %4026 = vmatprep.subr.mxu0 0.0
        %4027 = vmatpush1.msra.mxu0 0.0
        %4028 = vmatprep.subr.mxu0 0.0
        %4029 = vmatpush1.msra.mxu0 0.0
        %4030 = vmatprep.subr.mxu0 0.0
        %4031 = vmatpush1.msra.mxu0 0.0
        %4032 = vmatprep.subr.mxu0 0.0
        %4033 = vmatpush1.msra.mxu0 0.0
        %4034 = vmatprep.subr.mxu0 0.0
        %4035 = vmatpush1.msra.mxu0 0.0
        %4036 = vmatprep.subr.mxu0 0.0
        %4037 = vmatpush1.msra.mxu0 0.0
        %4038 = vmatprep.subr.mxu0 0.0
        %4039 = vmatpush1.msra.mxu0 0.0
        %4040 = vmatprep.subr.mxu0 0.0
        %4041 = vmatpush1.msra.mxu0 0.0
        %4042 = vmatprep.subr.mxu0 0.0
        %4043 = vmatpush1.msra.mxu0 0.0
        %4044 = vmatprep.subr.mxu0 0.0
        %4045 = vmatpush1.msra.mxu0 0.0
        %4046 = vmatprep.subr.mxu0 0.0
        %4047 = vmatpush1.msra.mxu0 0.0
        %4048 = vmatprep.subr.mxu0 0.0
        %4049 = vmatpush1.msra.mxu0 0.0
        %4050 = vmatprep.subr.mxu0 0.0
        %4051 = vmatpush1.msra.mxu0 0.0
        %4052 = vmatprep.subr.mxu0 0.0
        %4053 = vmatpush1.msra.mxu0 0.0
        %4054 = vmatprep.subr.mxu0 0.0
        %4055 = vmatpush1.msra.mxu0 0.0
        %4056 = vmatprep.subr.mxu0 0.0
        %4057 = vmatpush1.msra.mxu0 0.0
        %4058 = vmatprep.subr.mxu0 0.0
        %4059 = vmatpush1.msra.mxu0 0.0
        %4060 = vmatprep.subr.mxu0 0.0
        %4061 = vmatpush1.msra.mxu0 0.0
        %4062 = vmatprep.subr.mxu0 0.0
        %4063 = vmatpush1.msra.mxu0 0.0
        %4064 = vmatprep.subr.mxu0 0.0
        %4065 = vmatpush1.msra.mxu0 0.0
        %4066 = vmatprep.subr.mxu0 0.0
        %4067 = vmatpush1.msra.mxu0 0.0
        %4068 = vmatprep.subr.mxu0 0.0
        %4069 = vmatpush1.msra.mxu0 0.0
        %4070 = vmatprep.subr.mxu0 0.0
        %4071 = vmatpush1.msra.mxu0 0.0
        %4072 = vmatprep.subr.mxu0 0.0
        %4073 = vmatpush1.msra.mxu0 0.0
        %4074 = vmatprep.subr.mxu0 0.0
        %4075 = vmatpush1.msra.mxu0 0.0
        %4076 = vmatprep.subr.mxu0 0.0
        %4077 = vmatpush1.msra.mxu0 0.0
        %4078 = vmatprep.subr.mxu0 0.0
        %4079 = vmatpush1.msra.mxu0 0.0
        %4080 = vmatprep.subr.mxu0 0.0
        %4081 = vmatpush1.msra.mxu0 0.0
        %4082 = vmatprep.subr.mxu0 0.0
        %4083 = vmatpush1.msra.mxu0 0.0
        %4084 = vmatprep.subr.mxu0 0.0
        %4085 = vmatpush1.msra.mxu0 0.0
        %4086 = vmatprep.mubr.f32.mxu0 0.0
        %v4087 = vand.u32 %v4018, 4294901760
        %v4088 = vsub.f32 %v4018, %v4087
        %v4089 = vand.u32 %v4088, 4294901760
        %v4090 = vsub.f32 %v4088, %v4089
        %v4091 = vand.u32 %v4090, 4294901760
        %4092 = vmatmul.mubr.f32.gmra.mrb[0].mxu0 %v4091
        %v4093 = vpop.f32.mrb[0].mxu0
        %v4094 = vadd.f32 0.0, %v4093
        %v4095 = vpop.f32.mrb[0].mxu0
        %v4096 = vadd.f32 0.0, %v4095
        %4097 = vdwg.mxu0
        %v4098 = vand.u32 %v4012, 4294901760
        %v4099 = vsub.f32 %v4012, %v4098
        %v4100 = vand.u32 %v4099, 4294901760
        %v4101 = vsub.f32 %v4099, %v4100
        %v4102 = vand.u32 %v4101, 4294901760
        %4103 = vmatprep.subr.mxu0 %v4102
        %v4104 = vand.u32 %v4011, 4294901760
        %v4105 = vsub.f32 %v4011, %v4104
        %v4106 = vand.u32 %v4105, 4294901760
        %v4107 = vsub.f32 %v4105, %v4106
        %v4108 = vand.u32 %v4107, 4294901760
        %4109 = vmatpush1.msra.mxu0 %v4108
        %4110 = vmatprep.subr.mxu0 0.0
        %4111 = vmatpush1.msra.mxu0 0.0
        %4112 = vmatprep.subr.mxu0 0.0
        %4113 = vmatpush1.msra.mxu0 0.0
        %4114 = vmatprep.subr.mxu0 0.0
        %4115 = vmatpush1.msra.mxu0 0.0
        %4116 = vmatprep.subr.mxu0 0.0
        %4117 = vmatpush1.msra.mxu0 0.0
        %4118 = vmatprep.subr.mxu0 0.0
        %4119 = vmatpush1.msra.mxu0 0.0
        %4120 = vmatprep.subr.mxu0 0.0
        %4121 = vmatpush1.msra.mxu0 0.0
        %4122 = vmatprep.subr.mxu0 0.0
        %4123 = vmatpush1.msra.mxu0 0.0
        %4124 = vmatprep.subr.mxu0 0.0
        %4125 = vmatpush1.msra.mxu0 0.0
        %4126 = vmatprep.subr.mxu0 0.0
        %4127 = vmatpush1.msra.mxu0 0.0
        %4128 = vmatprep.subr.mxu0 0.0
        %4129 = vmatpush1.msra.mxu0 0.0
        %4130 = vmatprep.subr.mxu0 0.0
        %4131 = vmatpush1.msra.mxu0 0.0
        %4132 = vmatprep.subr.mxu0 0.0
        %4133 = vmatpush1.msra.mxu0 0.0
        %4134 = vmatprep.subr.mxu0 0.0
        %4135 = vmatpush1.msra.mxu0 0.0
        %4136 = vmatprep.subr.mxu0 0.0
        %4137 = vmatpush1.msra.mxu0 0.0
        %4138 = vmatprep.subr.mxu0 0.0
        %4139 = vmatpush1.msra.mxu0 0.0
        %4140 = vmatprep.subr.mxu0 0.0
        %4141 = vmatpush1.msra.mxu0 0.0
        %4142 = vmatprep.subr.mxu0 0.0
        %4143 = vmatpush1.msra.mxu0 0.0
        %4144 = vmatprep.subr.mxu0 0.0
        %4145 = vmatpush1.msra.mxu0 0.0
        %4146 = vmatprep.subr.mxu0 0.0
        %4147 = vmatpush1.msra.mxu0 0.0
        %4148 = vmatprep.subr.mxu0 0.0
        %4149 = vmatpush1.msra.mxu0 0.0
        %4150 = vmatprep.subr.mxu0 0.0
        %4151 = vmatpush1.msra.mxu0 0.0
        %4152 = vmatprep.subr.mxu0 0.0
        %4153 = vmatpush1.msra.mxu0 0.0
        %4154 = vmatprep.subr.mxu0 0.0
        %4155 = vmatpush1.msra.mxu0 0.0
        %4156 = vmatprep.subr.mxu0 0.0
        %4157 = vmatpush1.msra.mxu0 0.0
        %4158 = vmatprep.subr.mxu0 0.0
        %4159 = vmatpush1.msra.mxu0 0.0
        %4160 = vmatprep.subr.mxu0 0.0
        %4161 = vmatpush1.msra.mxu0 0.0
        %4162 = vmatprep.subr.mxu0 0.0
        %4163 = vmatpush1.msra.mxu0 0.0
        %4164 = vmatprep.subr.mxu0 0.0
        %4165 = vmatpush1.msra.mxu0 0.0
        %4166 = vmatprep.subr.mxu0 0.0
        %4167 = vmatpush1.msra.mxu0 0.0
        %4168 = vmatprep.subr.mxu0 0.0
        %4169 = vmatpush1.msra.mxu0 0.0
        %4170 = vmatprep.subr.mxu0 0.0
        %4171 = vmatpush1.msra.mxu0 0.0
        %4172 = vmatprep.mubr.f32.mxu0 0.0
        %v4173 = vand.u32 %v4018, 4294901760
        %4174 = vmatmul.mubr.f32.gmra.mrb[0].mxu0 %v4173
        %v4175 = vpop.f32.mrb[0].mxu0
        %v4176 = vadd.f32 %v4094, %v4175
        %v4177 = vpop.f32.mrb[0].mxu0
        %v4178 = vadd.f32 %v4096, %v4177
        %4179 = vdwg.mxu0
        %v4180 = vand.u32 %v4012, 4294901760
        %v4181 = vsub.f32 %v4012, %v4180
        %4182 = vmatprep.subr.mxu0 %v4181
        %v4183 = vand.u32 %v4011, 4294901760
        %v4184 = vsub.f32 %v4011, %v4183
        %4185 = vmatpush1.msra.mxu0 %v4184
        %4186 = vmatprep.subr.mxu0 0.0
        %4187 = vmatpush1.msra.mxu0 0.0
        %4188 = vmatprep.subr.mxu0 0.0
        %4189 = vmatpush1.msra.mxu0 0.0
        %4190 = vmatprep.subr.mxu0 0.0
        %4191 = vmatpush1.msra.mxu0 0.0
        %4192 = vmatprep.subr.mxu0 0.0
        %4193 = vmatpush1.msra.mxu0 0.0
        %4194 = vmatprep.subr.mxu0 0.0
        %4195 = vmatpush1.msra.mxu0 0.0
        %4196 = vmatprep.subr.mxu0 0.0
        %4197 = vmatpush1.msra.mxu0 0.0
        %4198 = vmatprep.subr.mxu0 0.0
        %4199 = vmatpush1.msra.mxu0 0.0
        %4200 = vmatprep.subr.mxu0 0.0
        %4201 = vmatpush1.msra.mxu0 0.0
        %4202 = vmatprep.subr.mxu0 0.0
        %4203 = vmatpush1.msra.mxu0 0.0
        %4204 = vmatprep.subr.mxu0 0.0
        %4205 = vmatpush1.msra.mxu0 0.0
        %4206 = vmatprep.subr.mxu0 0.0
        %4207 = vmatpush1.msra.mxu0 0.0
        %4208 = vmatprep.subr.mxu0 0.0
        %4209 = vmatpush1.msra.mxu0 0.0
        %4210 = vmatprep.subr.mxu0 0.0
        %4211 = vmatpush1.msra.mxu0 0.0
        %4212 = vmatprep.subr.mxu0 0.0
        %4213 = vmatpush1.msra.mxu0 0.0
        %4214 = vmatprep.subr.mxu0 0.0
        %4215 = vmatpush1.msra.mxu0 0.0
        %4216 = vmatprep.subr.mxu0 0.0
        %4217 = vmatpush1.msra.mxu0 0.0
        %4218 = vmatprep.subr.mxu0 0.0
        %4219 = vmatpush1.msra.mxu0 0.0
        %4220 = vmatprep.subr.mxu0 0.0
        %4221 = vmatpush1.msra.mxu0 0.0
        %4222 = vmatprep.subr.mxu0 0.0
        %4223 = vmatpush1.msra.mxu0 0.0
        %4224 = vmatprep.subr.mxu0 0.0
        %4225 = vmatpush1.msra.mxu0 0.0
        %4226 = vmatprep.subr.mxu0 0.0
        %4227 = vmatpush1.msra.mxu0 0.0
        %4228 = vmatprep.subr.mxu0 0.0
        %4229 = vmatpush1.msra.mxu0 0.0
        %4230 = vmatprep.subr.mxu0 0.0
        %4231 = vmatpush1.msra.mxu0 0.0
        %4232 = vmatprep.subr.mxu0 0.0
        %4233 = vmatpush1.msra.mxu0 0.0
        %4234 = vmatprep.subr.mxu0 0.0
        %4235 = vmatpush1.msra.mxu0 0.0
        %4236 = vmatprep.subr.mxu0 0.0
        %4237 = vmatpush1.msra.mxu0 0.0
        %4238 = vmatprep.subr.mxu0 0.0
        %4239 = vmatpush1.msra.mxu0 0.0
        %4240 = vmatprep.subr.mxu0 0.0
        %4241 = vmatpush1.msra.mxu0 0.0
        %4242 = vmatprep.subr.mxu0 0.0
        %4243 = vmatpush1.msra.mxu0 0.0
        %4244 = vmatprep.subr.mxu0 0.0
        %4245 = vmatpush1.msra.mxu0 0.0
        %4246 = vmatprep.subr.mxu0 0.0
        %4247 = vmatpush1.msra.mxu0 0.0
        %4248 = vmatprep.mubr.f32.mxu0 0.0
        %v4249 = vand.u32 %v4018, 4294901760
        %v4250 = vsub.f32 %v4018, %v4249
        %4251 = vmatmul.mubr.f32.gmra.mrb[0].mxu0 %v4250
        %v4252 = vpop.f32.mrb[0].mxu0
        %v4253 = vadd.f32 %v4176, %v4252
        %v4254 = vpop.f32.mrb[0].mxu0
        %v4255 = vadd.f32 %v4178, %v4254
        %4256 = vdwg.mxu0
        %v4257 = vand.u32 %v4012, 4294901760
        %4258 = vmatprep.subr.mxu0 %v4257
        %v4259 = vand.u32 %v4011, 4294901760
        %4260 = vmatpush1.msra.mxu0 %v4259
        %4261 = vmatprep.subr.mxu0 0.0
        %4262 = vmatpush1.msra.mxu0 0.0
        %4263 = vmatprep.subr.mxu0 0.0
        %4264 = vmatpush1.msra.mxu0 0.0
        %4265 = vmatprep.subr.mxu0 0.0
        %4266 = vmatpush1.msra.mxu0 0.0
        %4267 = vmatprep.subr.mxu0 0.0
        %4268 = vmatpush1.msra.mxu0 0.0
        %4269 = vmatprep.subr.mxu0 0.0
        %4270 = vmatpush1.msra.mxu0 0.0
        %4271 = vmatprep.subr.mxu0 0.0
        %4272 = vmatpush1.msra.mxu0 0.0
        %4273 = vmatprep.subr.mxu0 0.0
        %4274 = vmatpush1.msra.mxu0 0.0
        %4275 = vmatprep.subr.mxu0 0.0
        %4276 = vmatpush1.msra.mxu0 0.0
        %4277 = vmatprep.subr.mxu0 0.0
        %4278 = vmatpush1.msra.mxu0 0.0
        %4279 = vmatprep.subr.mxu0 0.0
        %4280 = vmatpush1.msra.mxu0 0.0
        %4281 = vmatprep.subr.mxu0 0.0
        %4282 = vmatpush1.msra.mxu0 0.0
        %4283 = vmatprep.subr.mxu0 0.0
        %4284 = vmatpush1.msra.mxu0 0.0
        %4285 = vmatprep.subr.mxu0 0.0
        %4286 = vmatpush1.msra.mxu0 0.0
        %4287 = vmatprep.subr.mxu0 0.0
        %4288 = vmatpush1.msra.mxu0 0.0
        %4289 = vmatprep.subr.mxu0 0.0
        %4290 = vmatpush1.msra.mxu0 0.0
        %4291 = vmatprep.subr.mxu0 0.0
        %4292 = vmatpush1.msra.mxu0 0.0
        %4293 = vmatprep.subr.mxu0 0.0
        %4294 = vmatpush1.msra.mxu0 0.0
        %4295 = vmatprep.subr.mxu0 0.0
        %4296 = vmatpush1.msra.mxu0 0.0
        %4297 = vmatprep.subr.mxu0 0.0
        %4298 = vmatpush1.msra.mxu0 0.0
        %4299 = vmatprep.subr.mxu0 0.0
        %4300 = vmatpush1.msra.mxu0 0.0
        %4301 = vmatprep.subr.mxu0 0.0
        %4302 = vmatpush1.msra.mxu0 0.0
        %4303 = vmatprep.subr.mxu0 0.0
        %4304 = vmatpush1.msra.mxu0 0.0
        %4305 = vmatprep.subr.mxu0 0.0
        %4306 = vmatpush1.msra.mxu0 0.0
        %4307 = vmatprep.subr.mxu0 0.0
        %4308 = vmatpush1.msra.mxu0 0.0
        %4309 = vmatprep.subr.mxu0 0.0
        %4310 = vmatpush1.msra.mxu0 0.0
        %4311 = vmatprep.subr.mxu0 0.0
        %4312 = vmatpush1.msra.mxu0 0.0
        %4313 = vmatprep.subr.mxu0 0.0
        %4314 = vmatpush1.msra.mxu0 0.0
        %4315 = vmatprep.subr.mxu0 0.0
        %4316 = vmatpush1.msra.mxu0 0.0
        %4317 = vmatprep.subr.mxu0 0.0
        %4318 = vmatpush1.msra.mxu0 0.0
        %4319 = vmatprep.subr.mxu0 0.0
        %4320 = vmatpush1.msra.mxu0 0.0
        %4321 = vmatprep.subr.mxu0 0.0
        %4322 = vmatpush1.msra.mxu0 0.0
        %4323 = vmatprep.mubr.f32.mxu0 0.0
        %v4324 = vand.u32 %v4018, 4294901760
        %v4325 = vsub.f32 %v4018, %v4324
        %v4326 = vand.u32 %v4325, 4294901760
        %4327 = vmatmul.mubr.f32.gmra.mrb[0].mxu0 %v4326
        %v4328 = vpop.f32.mrb[0].mxu0
        %v4329 = vadd.f32 %v4253, %v4328
        %v4330 = vpop.f32.mrb[0].mxu0
        %v4331 = vadd.f32 %v4255, %v4330
        %4332 = vdwg.mxu0
        %v4333 = vand.u32 %v4012, 4294901760
        %v4334 = vsub.f32 %v4012, %v4333
        %v4335 = vand.u32 %v4334, 4294901760
        %4336 = vmatprep.subr.mxu0 %v4335
        %v4337 = vand.u32 %v4011, 4294901760
        %v4338 = vsub.f32 %v4011, %v4337
        %v4339 = vand.u32 %v4338, 4294901760
        %4340 = vmatpush1.msra.mxu0 %v4339
        %4341 = vmatprep.subr.mxu0 0.0
        %4342 = vmatpush1.msra.mxu0 0.0
        %4343 = vmatprep.subr.mxu0 0.0
        %4344 = vmatpush1.msra.mxu0 0.0
        %4345 = vmatprep.subr.mxu0 0.0
        %4346 = vmatpush1.msra.mxu0 0.0
        %4347 = vmatprep.subr.mxu0 0.0
        %4348 = vmatpush1.msra.mxu0 0.0
        %4349 = vmatprep.subr.mxu0 0.0
        %4350 = vmatpush1.msra.mxu0 0.0
        %4351 = vmatprep.subr.mxu0 0.0
        %4352 = vmatpush1.msra.mxu0 0.0
        %4353 = vmatprep.subr.mxu0 0.0
        %4354 = vmatpush1.msra.mxu0 0.0
        %4355 = vmatprep.subr.mxu0 0.0
        %4356 = vmatpush1.msra.mxu0 0.0
        %4357 = vmatprep.subr.mxu0 0.0
        %4358 = vmatpush1.msra.mxu0 0.0
        %4359 = vmatprep.subr.mxu0 0.0
        %4360 = vmatpush1.msra.mxu0 0.0
        %4361 = vmatprep.subr.mxu0 0.0
        %4362 = vmatpush1.msra.mxu0 0.0
        %4363 = vmatprep.subr.mxu0 0.0
        %4364 = vmatpush1.msra.mxu0 0.0
        %4365 = vmatprep.subr.mxu0 0.0
        %4366 = vmatpush1.msra.mxu0 0.0
        %4367 = vmatprep.subr.mxu0 0.0
        %4368 = vmatpush1.msra.mxu0 0.0
        %4369 = vmatprep.subr.mxu0 0.0
        %4370 = vmatpush1.msra.mxu0 0.0
        %4371 = vmatprep.subr.mxu0 0.0
        %4372 = vmatpush1.msra.mxu0 0.0
        %4373 = vmatprep.subr.mxu0 0.0
        %4374 = vmatpush1.msra.mxu0 0.0
        %4375 = vmatprep.subr.mxu0 0.0
        %4376 = vmatpush1.msra.mxu0 0.0
        %4377 = vmatprep.subr.mxu0 0.0
        %4378 = vmatpush1.msra.mxu0 0.0
        %4379 = vmatprep.subr.mxu0 0.0
        %4380 = vmatpush1.msra.mxu0 0.0
        %4381 = vmatprep.subr.mxu0 0.0
        %4382 = vmatpush1.msra.mxu0 0.0
        %4383 = vmatprep.subr.mxu0 0.0
        %4384 = vmatpush1.msra.mxu0 0.0
        %4385 = vmatprep.subr.mxu0 0.0
        %4386 = vmatpush1.msra.mxu0 0.0
        %4387 = vmatprep.subr.mxu0 0.0
        %4388 = vmatpush1.msra.mxu0 0.0
        %4389 = vmatprep.subr.mxu0 0.0
        %4390 = vmatpush1.msra.mxu0 0.0
        %4391 = vmatprep.subr.mxu0 0.0
        %4392 = vmatpush1.msra.mxu0 0.0
        %4393 = vmatprep.subr.mxu0 0.0
        %4394 = vmatpush1.msra.mxu0 0.0
        %4395 = vmatprep.subr.mxu0 0.0
        %4396 = vmatpush1.msra.mxu0 0.0
        %4397 = vmatprep.subr.mxu0 0.0
        %4398 = vmatpush1.msra.mxu0 0.0
        %4399 = vmatprep.subr.mxu0 0.0
        %4400 = vmatpush1.msra.mxu0 0.0
        %4401 = vmatprep.subr.mxu0 0.0
        %4402 = vmatpush1.msra.mxu0 0.0
        %4403 = vmatprep.mubr.f32.mxu0 0.0
        %v4404 = vand.u32 %v4018, 4294901760
        %4405 = vmatmul.mubr.f32.gmra.mrb[0].mxu0 %v4404
        %v4406 = vpop.f32.mrb[0].mxu0
        %v4407 = vadd.f32 %v4329, %v4406
        %v4408 = vpop.f32.mrb[0].mxu0
        %v4409 = vadd.f32 %v4331, %v4408
        %4410 = vdwg.mxu0
        %v4411 = vand.u32 %v4012, 4294901760
        %4412 = vmatprep.subr.mxu0 %v4411
        %v4413 = vand.u32 %v4011, 4294901760
        %4414 = vmatpush1.msra.mxu0 %v4413
        %4415 = vmatprep.subr.mxu0 0.0
        %4416 = vmatpush1.msra.mxu0 0.0
        %4417 = vmatprep.subr.mxu0 0.0
        %4418 = vmatpush1.msra.mxu0 0.0
        %4419 = vmatprep.subr.mxu0 0.0
        %4420 = vmatpush1.msra.mxu0 0.0
        %4421 = vmatprep.subr.mxu0 0.0
        %4422 = vmatpush1.msra.mxu0 0.0
        %4423 = vmatprep.subr.mxu0 0.0
        %4424 = vmatpush1.msra.mxu0 0.0
        %4425 = vmatprep.subr.mxu0 0.0
        %4426 = vmatpush1.msra.mxu0 0.0
        %4427 = vmatprep.subr.mxu0 0.0
        %4428 = vmatpush1.msra.mxu0 0.0
        %4429 = vmatprep.subr.mxu0 0.0
        %4430 = vmatpush1.msra.mxu0 0.0
        %4431 = vmatprep.subr.mxu0 0.0
        %4432 = vmatpush1.msra.mxu0 0.0
        %4433 = vmatprep.subr.mxu0 0.0
        %4434 = vmatpush1.msra.mxu0 0.0
        %4435 = vmatprep.subr.mxu0 0.0
        %4436 = vmatpush1.msra.mxu0 0.0
        %4437 = vmatprep.subr.mxu0 0.0
        %4438 = vmatpush1.msra.mxu0 0.0
        %4439 = vmatprep.subr.mxu0 0.0
        %4440 = vmatpush1.msra.mxu0 0.0
        %4441 = vmatprep.subr.mxu0 0.0
        %4442 = vmatpush1.msra.mxu0 0.0
        %4443 = vmatprep.subr.mxu0 0.0
        %4444 = vmatpush1.msra.mxu0 0.0
        %4445 = vmatprep.subr.mxu0 0.0
        %4446 = vmatpush1.msra.mxu0 0.0
        %4447 = vmatprep.subr.mxu0 0.0
        %4448 = vmatpush1.msra.mxu0 0.0
        %4449 = vmatprep.subr.mxu0 0.0
        %4450 = vmatpush1.msra.mxu0 0.0
        %4451 = vmatprep.subr.mxu0 0.0
        %4452 = vmatpush1.msra.mxu0 0.0
        %4453 = vmatprep.subr.mxu0 0.0
        %4454 = vmatpush1.msra.mxu0 0.0
        %4455 = vmatprep.subr.mxu0 0.0
        %4456 = vmatpush1.msra.mxu0 0.0
        %4457 = vmatprep.subr.mxu0 0.0
        %4458 = vmatpush1.msra.mxu0 0.0
        %4459 = vmatprep.subr.mxu0 0.0
        %4460 = vmatpush1.msra.mxu0 0.0
        %4461 = vmatprep.subr.mxu0 0.0
        %4462 = vmatpush1.msra.mxu0 0.0
        %4463 = vmatprep.subr.mxu0 0.0
        %4464 = vmatpush1.msra.mxu0 0.0
        %4465 = vmatprep.subr.mxu0 0.0
        %4466 = vmatpush1.msra.mxu0 0.0
        %4467 = vmatprep.subr.mxu0 0.0
        %4468 = vmatpush1.msra.mxu0 0.0
        %4469 = vmatprep.subr.mxu0 0.0
        %4470 = vmatpush1.msra.mxu0 0.0
        %4471 = vmatprep.subr.mxu0 0.0
        %4472 = vmatpush1.msra.mxu0 0.0
        %4473 = vmatprep.subr.mxu0 0.0
        %4474 = vmatpush1.msra.mxu0 0.0
        %4475 = vmatprep.subr.mxu0 0.0
        %4476 = vmatpush1.msra.mxu0 0.0
        %4477 = vmatprep.mubr.f32.mxu0 0.0
        %v4478 = vand.u32 %v4018, 4294901760
        %4479 = vmatmul.mubr.f32.gmra.mrb[0].mxu0 %v4478
        %v4480 = vpop.f32.mrb[0].mxu0
        %v4481 = vadd.f32 %v4407, %v4480
        %v4482 = vpop.f32.mrb[0].mxu0
        %v4483 = vadd.f32 %v4409, %v4482
        %4484 = vdwg.mxu0
        %4485 = vmatprep.subr.mxu0 0.0
        %v4486 = vand.u32 %v4013, 4294901760
        %4487 = vmatpush1.msra.mxu0 %v4486
        %4488 = vmatprep.subr.mxu0 0.0
        %4489 = vmatpush1.msra.mxu0 0.0
        %4490 = vmatprep.subr.mxu0 0.0
        %4491 = vmatpush1.msra.mxu0 0.0
        %4492 = vmatprep.subr.mxu0 0.0
        %4493 = vmatpush1.msra.mxu0 0.0
        %4494 = vmatprep.subr.mxu0 0.0
        %4495 = vmatpush1.msra.mxu0 0.0
        %4496 = vmatprep.subr.mxu0 0.0
        %4497 = vmatpush1.msra.mxu0 0.0
        %4498 = vmatprep.subr.mxu0 0.0
        %4499 = vmatpush1.msra.mxu0 0.0
        %4500 = vmatprep.subr.mxu0 0.0
        %4501 = vmatpush1.msra.mxu0 0.0
        %4502 = vmatprep.subr.mxu0 0.0
        %4503 = vmatpush1.msra.mxu0 0.0
        %4504 = vmatprep.subr.mxu0 0.0
        %4505 = vmatpush1.msra.mxu0 0.0
        %4506 = vmatprep.subr.mxu0 0.0
        %4507 = vmatpush1.msra.mxu0 0.0
        %4508 = vmatprep.subr.mxu0 0.0
        %4509 = vmatpush1.msra.mxu0 0.0
        %4510 = vmatprep.subr.mxu0 0.0
        %4511 = vmatpush1.msra.mxu0 0.0
        %4512 = vmatprep.subr.mxu0 0.0
        %4513 = vmatpush1.msra.mxu0 0.0
        %4514 = vmatprep.subr.mxu0 0.0
        %4515 = vmatpush1.msra.mxu0 0.0
        %4516 = vmatprep.subr.mxu0 0.0
        %4517 = vmatpush1.msra.mxu0 0.0
        %4518 = vmatprep.subr.mxu0 0.0
        %4519 = vmatpush1.msra.mxu0 0.0
        %4520 = vmatprep.subr.mxu0 0.0
        %4521 = vmatpush1.msra.mxu0 0.0
        %4522 = vmatprep.subr.mxu0 0.0
        %4523 = vmatpush1.msra.mxu0 0.0
        %4524 = vmatprep.subr.mxu0 0.0
        %4525 = vmatpush1.msra.mxu0 0.0
        %4526 = vmatprep.subr.mxu0 0.0
        %4527 = vmatpush1.msra.mxu0 0.0
        %4528 = vmatprep.subr.mxu0 0.0
        %4529 = vmatpush1.msra.mxu0 0.0
        %4530 = vmatprep.subr.mxu0 0.0
        %4531 = vmatpush1.msra.mxu0 0.0
        %4532 = vmatprep.subr.mxu0 0.0
        %4533 = vmatpush1.msra.mxu0 0.0
        %4534 = vmatprep.subr.mxu0 0.0
        %4535 = vmatpush1.msra.mxu0 0.0
        %4536 = vmatprep.subr.mxu0 0.0
        %4537 = vmatpush1.msra.mxu0 0.0
        %4538 = vmatprep.subr.mxu0 0.0
        %4539 = vmatpush1.msra.mxu0 0.0
        %4540 = vmatprep.subr.mxu0 0.0
        %4541 = vmatpush1.msra.mxu0 0.0
        %4542 = vmatprep.subr.mxu0 0.0
        %4543 = vmatpush1.msra.mxu0 0.0
        %4544 = vmatprep.subr.mxu0 0.0
        %4545 = vmatpush1.msra.mxu0 0.0
        %4546 = vmatprep.subr.mxu0 0.0
        %4547 = vmatpush1.msra.mxu0 0.0
        %4548 = vmatprep.subr.mxu0 0.0
        %4549 = vmatpush1.msra.mxu0 0.0
        %4550 = vmatprep.mubr.f32.mxu0 0.0
        %v4551 = vand.u32 %v4018, 4294901760
        %v4552 = vsub.f32 %v4018, %v4551
        %v4553 = vand.u32 %v4552, 4294901760
        %v4554 = vsub.f32 %v4552, %v4553
        %v4555 = vand.u32 %v4554, 4294901760
        %4556 = vmatmul.mubr.f32.gmra.mrb[0].mxu0 %v4555
        %v4557 = vpop.f32.mrb[0].mxu0
        %v4558 = vadd.f32 0.0, %v4557
        %v4559 = vpop.f32.mrb[0].mxu0
        %4560 = vdwg.mxu0
        %4561 = vmatprep.subr.mxu0 0.0
        %v4562 = vand.u32 %v4013, 4294901760
        %v4563 = vsub.f32 %v4013, %v4562
        %v4564 = vand.u32 %v4563, 4294901760
        %v4565 = vsub.f32 %v4563, %v4564
        %v4566 = vand.u32 %v4565, 4294901760
        %4567 = vmatpush1.msra.mxu0 %v4566
        %4568 = vmatprep.subr.mxu0 0.0
        %4569 = vmatpush1.msra.mxu0 0.0
        %4570 = vmatprep.subr.mxu0 0.0
        %4571 = vmatpush1.msra.mxu0 0.0
        %4572 = vmatprep.subr.mxu0 0.0
        %4573 = vmatpush1.msra.mxu0 0.0
        %4574 = vmatprep.subr.mxu0 0.0
        %4575 = vmatpush1.msra.mxu0 0.0
        %4576 = vmatprep.subr.mxu0 0.0
        %4577 = vmatpush1.msra.mxu0 0.0
        %4578 = vmatprep.subr.mxu0 0.0
        %4579 = vmatpush1.msra.mxu0 0.0
        %4580 = vmatprep.subr.mxu0 0.0
        %4581 = vmatpush1.msra.mxu0 0.0
        %4582 = vmatprep.subr.mxu0 0.0
        %4583 = vmatpush1.msra.mxu0 0.0
        %4584 = vmatprep.subr.mxu0 0.0
        %4585 = vmatpush1.msra.mxu0 0.0
        %4586 = vmatprep.subr.mxu0 0.0
        %4587 = vmatpush1.msra.mxu0 0.0
        %4588 = vmatprep.subr.mxu0 0.0
        %4589 = vmatpush1.msra.mxu0 0.0
        %4590 = vmatprep.subr.mxu0 0.0
        %4591 = vmatpush1.msra.mxu0 0.0
        %4592 = vmatprep.subr.mxu0 0.0
        %4593 = vmatpush1.msra.mxu0 0.0
        %4594 = vmatprep.subr.mxu0 0.0
        %4595 = vmatpush1.msra.mxu0 0.0
        %4596 = vmatprep.subr.mxu0 0.0
        %4597 = vmatpush1.msra.mxu0 0.0
        %4598 = vmatprep.subr.mxu0 0.0
        %4599 = vmatpush1.msra.mxu0 0.0
        %4600 = vmatprep.subr.mxu0 0.0
        %4601 = vmatpush1.msra.mxu0 0.0
        %4602 = vmatprep.subr.mxu0 0.0
        %4603 = vmatpush1.msra.mxu0 0.0
        %4604 = vmatprep.subr.mxu0 0.0
        %4605 = vmatpush1.msra.mxu0 0.0
        %4606 = vmatprep.subr.mxu0 0.0
        %4607 = vmatpush1.msra.mxu0 0.0
        %4608 = vmatprep.subr.mxu0 0.0
        %4609 = vmatpush1.msra.mxu0 0.0
        %4610 = vmatprep.subr.mxu0 0.0
        %4611 = vmatpush1.msra.mxu0 0.0
        %4612 = vmatprep.subr.mxu0 0.0
        %4613 = vmatpush1.msra.mxu0 0.0
        %4614 = vmatprep.subr.mxu0 0.0
        %4615 = vmatpush1.msra.mxu0 0.0
        %4616 = vmatprep.subr.mxu0 0.0
        %4617 = vmatpush1.msra.mxu0 0.0
        %4618 = vmatprep.subr.mxu0 0.0
        %4619 = vmatpush1.msra.mxu0 0.0
        %4620 = vmatprep.subr.mxu0 0.0
        %4621 = vmatpush1.msra.mxu0 0.0
        %4622 = vmatprep.subr.mxu0 0.0
        %4623 = vmatpush1.msra.mxu0 0.0
        %4624 = vmatprep.subr.mxu0 0.0
        %4625 = vmatpush1.msra.mxu0 0.0
        %4626 = vmatprep.subr.mxu0 0.0
        %4627 = vmatpush1.msra.mxu0 0.0
        %4628 = vmatprep.subr.mxu0 0.0
        %4629 = vmatpush1.msra.mxu0 0.0
        %4630 = vmatprep.mubr.f32.mxu0 0.0
        %v4631 = vand.u32 %v4018, 4294901760
        %4632 = vmatmul.mubr.f32.gmra.mrb[0].mxu0 %v4631
        %v4633 = vpop.f32.mrb[0].mxu0
        %v4634 = vadd.f32 %v4558, %v4633
        %v4635 = vpop.f32.mrb[0].mxu0
        %4636 = vdwg.mxu0
        %4637 = vmatprep.subr.mxu0 0.0
        %v4638 = vand.u32 %v4013, 4294901760
        %v4639 = vsub.f32 %v4013, %v4638
        %4640 = vmatpush1.msra.mxu0 %v4639
        %4641 = vmatprep.subr.mxu0 0.0
        %4642 = vmatpush1.msra.mxu0 0.0
        %4643 = vmatprep.subr.mxu0 0.0
        %4644 = vmatpush1.msra.mxu0 0.0
        %4645 = vmatprep.subr.mxu0 0.0
        %4646 = vmatpush1.msra.mxu0 0.0
        %4647 = vmatprep.subr.mxu0 0.0
        %4648 = vmatpush1.msra.mxu0 0.0
        %4649 = vmatprep.subr.mxu0 0.0
        %4650 = vmatpush1.msra.mxu0 0.0
        %4651 = vmatprep.subr.mxu0 0.0
        %4652 = vmatpush1.msra.mxu0 0.0
        %4653 = vmatprep.subr.mxu0 0.0
        %4654 = vmatpush1.msra.mxu0 0.0
        %4655 = vmatprep.subr.mxu0 0.0
        %4656 = vmatpush1.msra.mxu0 0.0
        %4657 = vmatprep.subr.mxu0 0.0
        %4658 = vmatpush1.msra.mxu0 0.0
        %4659 = vmatprep.subr.mxu0 0.0
        %4660 = vmatpush1.msra.mxu0 0.0
        %4661 = vmatprep.subr.mxu0 0.0
        %4662 = vmatpush1.msra.mxu0 0.0
        %4663 = vmatprep.subr.mxu0 0.0
        %4664 = vmatpush1.msra.mxu0 0.0
        %4665 = vmatprep.subr.mxu0 0.0
        %4666 = vmatpush1.msra.mxu0 0.0
        %4667 = vmatprep.subr.mxu0 0.0
        %4668 = vmatpush1.msra.mxu0 0.0
        %4669 = vmatprep.subr.mxu0 0.0
        %4670 = vmatpush1.msra.mxu0 0.0
        %4671 = vmatprep.subr.mxu0 0.0
        %4672 = vmatpush1.msra.mxu0 0.0
        %4673 = vmatprep.subr.mxu0 0.0
        %4674 = vmatpush1.msra.mxu0 0.0
        %4675 = vmatprep.subr.mxu0 0.0
        %4676 = vmatpush1.msra.mxu0 0.0
        %4677 = vmatprep.subr.mxu0 0.0
        %4678 = vmatpush1.msra.mxu0 0.0
        %4679 = vmatprep.subr.mxu0 0.0
        %4680 = vmatpush1.msra.mxu0 0.0
        %4681 = vmatprep.subr.mxu0 0.0
        %4682 = vmatpush1.msra.mxu0 0.0
        %4683 = vmatprep.subr.mxu0 0.0
        %4684 = vmatpush1.msra.mxu0 0.0
        %4685 = vmatprep.subr.mxu0 0.0
        %4686 = vmatpush1.msra.mxu0 0.0
        %4687 = vmatprep.subr.mxu0 0.0
        %4688 = vmatpush1.msra.mxu0 0.0
        %4689 = vmatprep.subr.mxu0 0.0
        %4690 = vmatpush1.msra.mxu0 0.0
        %4691 = vmatprep.subr.mxu0 0.0
        %4692 = vmatpush1.msra.mxu0 0.0
        %4693 = vmatprep.subr.mxu0 0.0
        %4694 = vmatpush1.msra.mxu0 0.0
        %4695 = vmatprep.subr.mxu0 0.0
        %4696 = vmatpush1.msra.mxu0 0.0
        %4697 = vmatprep.subr.mxu0 0.0
        %4698 = vmatpush1.msra.mxu0 0.0
        %4699 = vmatprep.subr.mxu0 0.0
        %4700 = vmatpush1.msra.mxu0 0.0
        %4701 = vmatprep.subr.mxu0 0.0
        %4702 = vmatpush1.msra.mxu0 0.0
        %4703 = vmatprep.mubr.f32.mxu0 0.0
        %v4704 = vand.u32 %v4018, 4294901760
        %v4705 = vsub.f32 %v4018, %v4704
        %4706 = vmatmul.mubr.f32.gmra.mrb[0].mxu0 %v4705
        %v4707 = vpop.f32.mrb[0].mxu0
        %v4708 = vadd.f32 %v4634, %v4707
        %v4709 = vpop.f32.mrb[0].mxu0
        %4710 = vdwg.mxu0
        %4711 = vmatprep.subr.mxu0 0.0
        %v4712 = vand.u32 %v4013, 4294901760
        %4713 = vmatpush1.msra.mxu0 %v4712
        %4714 = vmatprep.subr.mxu0 0.0
        %4715 = vmatpush1.msra.mxu0 0.0
        %4716 = vmatprep.subr.mxu0 0.0
        %4717 = vmatpush1.msra.mxu0 0.0
        %4718 = vmatprep.subr.mxu0 0.0
        %4719 = vmatpush1.msra.mxu0 0.0
        %4720 = vmatprep.subr.mxu0 0.0
        %4721 = vmatpush1.msra.mxu0 0.0
        %4722 = vmatprep.subr.mxu0 0.0
        %4723 = vmatpush1.msra.mxu0 0.0
        %4724 = vmatprep.subr.mxu0 0.0
        %4725 = vmatpush1.msra.mxu0 0.0
        %4726 = vmatprep.subr.mxu0 0.0
        %4727 = vmatpush1.msra.mxu0 0.0
        %4728 = vmatprep.subr.mxu0 0.0
        %4729 = vmatpush1.msra.mxu0 0.0
        %4730 = vmatprep.subr.mxu0 0.0
        %4731 = vmatpush1.msra.mxu0 0.0
        %4732 = vmatprep.subr.mxu0 0.0
        %4733 = vmatpush1.msra.mxu0 0.0
        %4734 = vmatprep.subr.mxu0 0.0
        %4735 = vmatpush1.msra.mxu0 0.0
        %4736 = vmatprep.subr.mxu0 0.0
        %4737 = vmatpush1.msra.mxu0 0.0
        %4738 = vmatprep.subr.mxu0 0.0
        %4739 = vmatpush1.msra.mxu0 0.0
        %4740 = vmatprep.subr.mxu0 0.0
        %4741 = vmatpush1.msra.mxu0 0.0
        %4742 = vmatprep.subr.mxu0 0.0
        %4743 = vmatpush1.msra.mxu0 0.0
        %4744 = vmatprep.subr.mxu0 0.0
        %4745 = vmatpush1.msra.mxu0 0.0
        %4746 = vmatprep.subr.mxu0 0.0
        %4747 = vmatpush1.msra.mxu0 0.0
        %4748 = vmatprep.subr.mxu0 0.0
        %4749 = vmatpush1.msra.mxu0 0.0
        %4750 = vmatprep.subr.mxu0 0.0
        %4751 = vmatpush1.msra.mxu0 0.0
        %4752 = vmatprep.subr.mxu0 0.0
        %4753 = vmatpush1.msra.mxu0 0.0
        %4754 = vmatprep.subr.mxu0 0.0
        %4755 = vmatpush1.msra.mxu0 0.0
        %4756 = vmatprep.subr.mxu0 0.0
        %4757 = vmatpush1.msra.mxu0 0.0
        %4758 = vmatprep.subr.mxu0 0.0
        %4759 = vmatpush1.msra.mxu0 0.0
        %4760 = vmatprep.subr.mxu0 0.0
        %4761 = vmatpush1.msra.mxu0 0.0
        %4762 = vmatprep.subr.mxu0 0.0
        %4763 = vmatpush1.msra.mxu0 0.0
        %4764 = vmatprep.subr.mxu0 0.0
        %4765 = vmatpush1.msra.mxu0 0.0
        %4766 = vmatprep.subr.mxu0 0.0
        %4767 = vmatpush1.msra.mxu0 0.0
        %4768 = vmatprep.subr.mxu0 0.0
        %4769 = vmatpush1.msra.mxu0 0.0
        %4770 = vmatprep.subr.mxu0 0.0
        %4771 = vmatpush1.msra.mxu0 0.0
        %4772 = vmatprep.subr.mxu0 0.0
        %4773 = vmatpush1.msra.mxu0 0.0
        %4774 = vmatprep.subr.mxu0 0.0
        %4775 = vmatpush1.msra.mxu0 0.0
        %4776 = vmatprep.mubr.f32.mxu0 0.0
        %v4777 = vand.u32 %v4018, 4294901760
        %v4778 = vsub.f32 %v4018, %v4777
        %v4779 = vand.u32 %v4778, 4294901760
        %4780 = vmatmul.mubr.f32.gmra.mrb[0].mxu0 %v4779
        %v4781 = vpop.f32.mrb[0].mxu0
        %v4782 = vadd.f32 %v4708, %v4781
        %v4783 = vpop.f32.mrb[0].mxu0
        %4784 = vdwg.mxu0
        %4785 = vmatprep.subr.mxu0 0.0
        %v4786 = vand.u32 %v4013, 4294901760
        %v4787 = vsub.f32 %v4013, %v4786
        %v4788 = vand.u32 %v4787, 4294901760
        %4789 = vmatpush1.msra.mxu0 %v4788
        %4790 = vmatprep.subr.mxu0 0.0
        %4791 = vmatpush1.msra.mxu0 0.0
        %4792 = vmatprep.subr.mxu0 0.0
        %4793 = vmatpush1.msra.mxu0 0.0
        %4794 = vmatprep.subr.mxu0 0.0
        %4795 = vmatpush1.msra.mxu0 0.0
        %4796 = vmatprep.subr.mxu0 0.0
        %4797 = vmatpush1.msra.mxu0 0.0
        %4798 = vmatprep.subr.mxu0 0.0
        %4799 = vmatpush1.msra.mxu0 0.0
        %4800 = vmatprep.subr.mxu0 0.0
        %4801 = vmatpush1.msra.mxu0 0.0
        %4802 = vmatprep.subr.mxu0 0.0
        %4803 = vmatpush1.msra.mxu0 0.0
        %4804 = vmatprep.subr.mxu0 0.0
        %4805 = vmatpush1.msra.mxu0 0.0
        %4806 = vmatprep.subr.mxu0 0.0
        %4807 = vmatpush1.msra.mxu0 0.0
        %4808 = vmatprep.subr.mxu0 0.0
        %4809 = vmatpush1.msra.mxu0 0.0
        %4810 = vmatprep.subr.mxu0 0.0
        %4811 = vmatpush1.msra.mxu0 0.0
        %4812 = vmatprep.subr.mxu0 0.0
        %4813 = vmatpush1.msra.mxu0 0.0
        %4814 = vmatprep.subr.mxu0 0.0
        %4815 = vmatpush1.msra.mxu0 0.0
        %4816 = vmatprep.subr.mxu0 0.0
        %4817 = vmatpush1.msra.mxu0 0.0
        %4818 = vmatprep.subr.mxu0 0.0
        %4819 = vmatpush1.msra.mxu0 0.0
        %4820 = vmatprep.subr.mxu0 0.0
        %4821 = vmatpush1.msra.mxu0 0.0
        %4822 = vmatprep.subr.mxu0 0.0
        %4823 = vmatpush1.msra.mxu0 0.0
        %4824 = vmatprep.subr.mxu0 0.0
        %4825 = vmatpush1.msra.mxu0 0.0
        %4826 = vmatprep.subr.mxu0 0.0
        %4827 = vmatpush1.msra.mxu0 0.0
        %4828 = vmatprep.subr.mxu0 0.0
        %4829 = vmatpush1.msra.mxu0 0.0
        %4830 = vmatprep.subr.mxu0 0.0
        %4831 = vmatpush1.msra.mxu0 0.0
        %4832 = vmatprep.subr.mxu0 0.0
        %4833 = vmatpush1.msra.mxu0 0.0
        %4834 = vmatprep.subr.mxu0 0.0
        %4835 = vmatpush1.msra.mxu0 0.0
        %4836 = vmatprep.subr.mxu0 0.0
        %4837 = vmatpush1.msra.mxu0 0.0
        %4838 = vmatprep.subr.mxu0 0.0
        %4839 = vmatpush1.msra.mxu0 0.0
        %4840 = vmatprep.subr.mxu0 0.0
        %4841 = vmatpush1.msra.mxu0 0.0
        %4842 = vmatprep.subr.mxu0 0.0
        %4843 = vmatpush1.msra.mxu0 0.0
        %4844 = vmatprep.subr.mxu0 0.0
        %4845 = vmatpush1.msra.mxu0 0.0
        %4846 = vmatprep.subr.mxu0 0.0
        %4847 = vmatpush1.msra.mxu0 0.0
        %4848 = vmatprep.subr.mxu0 0.0
        %4849 = vmatpush1.msra.mxu0 0.0
        %4850 = vmatprep.subr.mxu0 0.0
        %4851 = vmatpush1.msra.mxu0 0.0
        %4852 = vmatprep.mubr.f32.mxu0 0.0
        %v4853 = vand.u32 %v4018, 4294901760
        %4854 = vmatmul.mubr.f32.gmra.mrb[0].mxu0 %v4853
        %v4855 = vpop.f32.mrb[0].mxu0
        %v4856 = vadd.f32 %v4782, %v4855
        %v4857 = vpop.f32.mrb[0].mxu0
        %4858 = vdwg.mxu0
        %4859 = vmatprep.subr.mxu0 0.0
        %v4860 = vand.u32 %v4013, 4294901760
        %4861 = vmatpush1.msra.mxu0 %v4860
        %4862 = vmatprep.subr.mxu0 0.0
        %4863 = vmatpush1.msra.mxu0 0.0
        %4864 = vmatprep.subr.mxu0 0.0
        %4865 = vmatpush1.msra.mxu0 0.0
        %4866 = vmatprep.subr.mxu0 0.0
        %4867 = vmatpush1.msra.mxu0 0.0
        %4868 = vmatprep.subr.mxu0 0.0
        %4869 = vmatpush1.msra.mxu0 0.0
        %4870 = vmatprep.subr.mxu0 0.0
        %4871 = vmatpush1.msra.mxu0 0.0
        %4872 = vmatprep.subr.mxu0 0.0
        %4873 = vmatpush1.msra.mxu0 0.0
        %4874 = vmatprep.subr.mxu0 0.0
        %4875 = vmatpush1.msra.mxu0 0.0
        %4876 = vmatprep.subr.mxu0 0.0
        %4877 = vmatpush1.msra.mxu0 0.0
        %4878 = vmatprep.subr.mxu0 0.0
        %4879 = vmatpush1.msra.mxu0 0.0
        %4880 = vmatprep.subr.mxu0 0.0
        %4881 = vmatpush1.msra.mxu0 0.0
        %4882 = vmatprep.subr.mxu0 0.0
        %4883 = vmatpush1.msra.mxu0 0.0
        %4884 = vmatprep.subr.mxu0 0.0
        %4885 = vmatpush1.msra.mxu0 0.0
        %4886 = vmatprep.subr.mxu0 0.0
        %4887 = vmatpush1.msra.mxu0 0.0
        %4888 = vmatprep.subr.mxu0 0.0
        %4889 = vmatpush1.msra.mxu0 0.0
        %4890 = vmatprep.subr.mxu0 0.0
        %4891 = vmatpush1.msra.mxu0 0.0
        %4892 = vmatprep.subr.mxu0 0.0
        %4893 = vmatpush1.msra.mxu0 0.0
        %4894 = vmatprep.subr.mxu0 0.0
        %4895 = vmatpush1.msra.mxu0 0.0
        %4896 = vmatprep.subr.mxu0 0.0
        %4897 = vmatpush1.msra.mxu0 0.0
        %4898 = vmatprep.subr.mxu0 0.0
        %4899 = vmatpush1.msra.mxu0 0.0
        %4900 = vmatprep.subr.mxu0 0.0
        %4901 = vmatpush1.msra.mxu0 0.0
        %4902 = vmatprep.subr.mxu0 0.0
        %4903 = vmatpush1.msra.mxu0 0.0
        %4904 = vmatprep.subr.mxu0 0.0
        %4905 = vmatpush1.msra.mxu0 0.0
        %4906 = vmatprep.subr.mxu0 0.0
        %4907 = vmatpush1.msra.mxu0 0.0
        %4908 = vmatprep.subr.mxu0 0.0
        %4909 = vmatpush1.msra.mxu0 0.0
        %4910 = vmatprep.subr.mxu0 0.0
        %4911 = vmatpush1.msra.mxu0 0.0
        %4912 = vmatprep.subr.mxu0 0.0
        %4913 = vmatpush1.msra.mxu0 0.0
        %4914 = vmatprep.subr.mxu0 0.0
        %4915 = vmatpush1.msra.mxu0 0.0
        %4916 = vmatprep.subr.mxu0 0.0
        %4917 = vmatpush1.msra.mxu0 0.0
        %4918 = vmatprep.subr.mxu0 0.0
        %4919 = vmatpush1.msra.mxu0 0.0
        %4920 = vmatprep.subr.mxu0 0.0
        %4921 = vmatpush1.msra.mxu0 0.0
        %4922 = vmatprep.subr.mxu0 0.0
        %4923 = vmatpush1.msra.mxu0 0.0
        %4924 = vmatprep.mubr.f32.mxu0 0.0
        %v4925 = vand.u32 %v4018, 4294901760
        %4926 = vmatmul.mubr.f32.gmra.mrb[0].mxu0 %v4925
        %v4927 = vpop.f32.mrb[0].mxu0
        %v4928 = vadd.f32 %v4856, %v4927
        %v4929 = vpop.f32.mrb[0].mxu0
        %4930 = vdwg.mxu0
        %v4931 = vadd.f32 %v3997, %v4481
        %v4932 = vadd.f32 %v3998, %v4483
        %v4933 = vadd.f32 %v3999, %v4928
        %s4934 = scalar_lea.vmem %s1, 40
        %v4935 = vld [vmem:[%s4934] sm:$0xff]
        %4936 = vrot.lane.b32.xlu0 %v277, 108
        %v4937 = vpop.permute.xlu0 %4936
        %4938 = vrot.lane.b32.xlu0 %v278, 108
        %v4939 = vpop.permute.xlu0 %4938
        %4940 = vrot.lane.b32.xlu0 %v279, 108
        %v4941 = vpop.permute.xlu0 %4940
        %4942 = vrot.lane.b32.xlu0 %v280, 108
        %v4943 = vpop.permute.xlu0 %4942
        %vm4944 = vcmask 883712
        %v4945 = vsel %vm4944, %v4937, %v4939
        %v4946 = vsel %vm4944, %v4939, %v4941
        %v4947 = vsel %vm4944, %v4941, %v4943
        %v4952 = vsel %vm303, %v4935, 0
        %v4954 = vand.u32 %v4946, 4294901760
        %4955 = vmatprep.subr.mxu0 %v4954
        %v4956 = vand.u32 %v4945, 4294901760
        %4957 = vmatpush1.msra.mxu0 %v4956
        %4958 = vmatprep.subr.mxu0 0.0
        %4959 = vmatpush1.msra.mxu0 0.0
        %4960 = vmatprep.subr.mxu0 0.0
        %4961 = vmatpush1.msra.mxu0 0.0
        %4962 = vmatprep.subr.mxu0 0.0
        %4963 = vmatpush1.msra.mxu0 0.0
        %4964 = vmatprep.subr.mxu0 0.0
        %4965 = vmatpush1.msra.mxu0 0.0
        %4966 = vmatprep.subr.mxu0 0.0
        %4967 = vmatpush1.msra.mxu0 0.0
        %4968 = vmatprep.subr.mxu0 0.0
        %4969 = vmatpush1.msra.mxu0 0.0
        %4970 = vmatprep.subr.mxu0 0.0
        %4971 = vmatpush1.msra.mxu0 0.0
        %4972 = vmatprep.subr.mxu0 0.0
        %4973 = vmatpush1.msra.mxu0 0.0
        %4974 = vmatprep.subr.mxu0 0.0
        %4975 = vmatpush1.msra.mxu0 0.0
        %4976 = vmatprep.subr.mxu0 0.0
        %4977 = vmatpush1.msra.mxu0 0.0
        %4978 = vmatprep.subr.mxu0 0.0
        %4979 = vmatpush1.msra.mxu0 0.0
        %4980 = vmatprep.subr.mxu0 0.0
        %4981 = vmatpush1.msra.mxu0 0.0
        %4982 = vmatprep.subr.mxu0 0.0
        %4983 = vmatpush1.msra.mxu0 0.0
        %4984 = vmatprep.subr.mxu0 0.0
        %4985 = vmatpush1.msra.mxu0 0.0
        %4986 = vmatprep.subr.mxu0 0.0
        %4987 = vmatpush1.msra.mxu0 0.0
        %4988 = vmatprep.subr.mxu0 0.0
        %4989 = vmatpush1.msra.mxu0 0.0
        %4990 = vmatprep.subr.mxu0 0.0
        %4991 = vmatpush1.msra.mxu0 0.0
        %4992 = vmatprep.subr.mxu0 0.0
        %4993 = vmatpush1.msra.mxu0 0.0
        %4994 = vmatprep.subr.mxu0 0.0
        %4995 = vmatpush1.msra.mxu0 0.0
        %4996 = vmatprep.subr.mxu0 0.0
        %4997 = vmatpush1.msra.mxu0 0.0
        %4998 = vmatprep.subr.mxu0 0.0
        %4999 = vmatpush1.msra.mxu0 0.0
        %5000 = vmatprep.subr.mxu0 0.0
        %5001 = vmatpush1.msra.mxu0 0.0
        %5002 = vmatprep.subr.mxu0 0.0
        %5003 = vmatpush1.msra.mxu0 0.0
        %5004 = vmatprep.subr.mxu0 0.0
        %5005 = vmatpush1.msra.mxu0 0.0
        %5006 = vmatprep.subr.mxu0 0.0
        %5007 = vmatpush1.msra.mxu0 0.0
        %5008 = vmatprep.subr.mxu0 0.0
        %5009 = vmatpush1.msra.mxu0 0.0
        %5010 = vmatprep.subr.mxu0 0.0
        %5011 = vmatpush1.msra.mxu0 0.0
        %5012 = vmatprep.subr.mxu0 0.0
        %5013 = vmatpush1.msra.mxu0 0.0
        %5014 = vmatprep.subr.mxu0 0.0
        %5015 = vmatpush1.msra.mxu0 0.0
        %5016 = vmatprep.subr.mxu0 0.0
        %5017 = vmatpush1.msra.mxu0 0.0
        %5018 = vmatprep.subr.mxu0 0.0
        %5019 = vmatpush1.msra.mxu0 0.0
        %5020 = vmatprep.mubr.f32.mxu0 0.0
        %v5021 = vand.u32 %v4952, 4294901760
        %v5022 = vsub.f32 %v4952, %v5021
        %v5023 = vand.u32 %v5022, 4294901760
        %v5024 = vsub.f32 %v5022, %v5023
        %v5025 = vand.u32 %v5024, 4294901760
        %5026 = vmatmul.mubr.f32.gmra.mrb[0].mxu0 %v5025
        %v5027 = vpop.f32.mrb[0].mxu0
        %v5028 = vadd.f32 0.0, %v5027
        %v5029 = vpop.f32.mrb[0].mxu0
        %v5030 = vadd.f32 0.0, %v5029
        %5031 = vdwg.mxu0
        %v5032 = vand.u32 %v4946, 4294901760
        %v5033 = vsub.f32 %v4946, %v5032
        %v5034 = vand.u32 %v5033, 4294901760
        %v5035 = vsub.f32 %v5033, %v5034
        %v5036 = vand.u32 %v5035, 4294901760
        %5037 = vmatprep.subr.mxu0 %v5036
        %v5038 = vand.u32 %v4945, 4294901760
        %v5039 = vsub.f32 %v4945, %v5038
        %v5040 = vand.u32 %v5039, 4294901760
        %v5041 = vsub.f32 %v5039, %v5040
        %v5042 = vand.u32 %v5041, 4294901760
        %5043 = vmatpush1.msra.mxu0 %v5042
        %5044 = vmatprep.subr.mxu0 0.0
        %5045 = vmatpush1.msra.mxu0 0.0
        %5046 = vmatprep.subr.mxu0 0.0
        %5047 = vmatpush1.msra.mxu0 0.0
        %5048 = vmatprep.subr.mxu0 0.0
        %5049 = vmatpush1.msra.mxu0 0.0
        %5050 = vmatprep.subr.mxu0 0.0
        %5051 = vmatpush1.msra.mxu0 0.0
        %5052 = vmatprep.subr.mxu0 0.0
        %5053 = vmatpush1.msra.mxu0 0.0
        %5054 = vmatprep.subr.mxu0 0.0
        %5055 = vmatpush1.msra.mxu0 0.0
        %5056 = vmatprep.subr.mxu0 0.0
        %5057 = vmatpush1.msra.mxu0 0.0
        %5058 = vmatprep.subr.mxu0 0.0
        %5059 = vmatpush1.msra.mxu0 0.0
        %5060 = vmatprep.subr.mxu0 0.0
        %5061 = vmatpush1.msra.mxu0 0.0
        %5062 = vmatprep.subr.mxu0 0.0
        %5063 = vmatpush1.msra.mxu0 0.0
        %5064 = vmatprep.subr.mxu0 0.0
        %5065 = vmatpush1.msra.mxu0 0.0
        %5066 = vmatprep.subr.mxu0 0.0
        %5067 = vmatpush1.msra.mxu0 0.0
        %5068 = vmatprep.subr.mxu0 0.0
        %5069 = vmatpush1.msra.mxu0 0.0
        %5070 = vmatprep.subr.mxu0 0.0
        %5071 = vmatpush1.msra.mxu0 0.0
        %5072 = vmatprep.subr.mxu0 0.0
        %5073 = vmatpush1.msra.mxu0 0.0
        %5074 = vmatprep.subr.mxu0 0.0
        %5075 = vmatpush1.msra.mxu0 0.0
        %5076 = vmatprep.subr.mxu0 0.0
        %5077 = vmatpush1.msra.mxu0 0.0
        %5078 = vmatprep.subr.mxu0 0.0
        %5079 = vmatpush1.msra.mxu0 0.0
        %5080 = vmatprep.subr.mxu0 0.0
        %5081 = vmatpush1.msra.mxu0 0.0
        %5082 = vmatprep.subr.mxu0 0.0
        %5083 = vmatpush1.msra.mxu0 0.0
        %5084 = vmatprep.subr.mxu0 0.0
        %5085 = vmatpush1.msra.mxu0 0.0
        %5086 = vmatprep.subr.mxu0 0.0
        %5087 = vmatpush1.msra.mxu0 0.0
        %5088 = vmatprep.subr.mxu0 0.0
        %5089 = vmatpush1.msra.mxu0 0.0
        %5090 = vmatprep.subr.mxu0 0.0
        %5091 = vmatpush1.msra.mxu0 0.0
        %5092 = vmatprep.subr.mxu0 0.0
        %5093 = vmatpush1.msra.mxu0 0.0
        %5094 = vmatprep.subr.mxu0 0.0
        %5095 = vmatpush1.msra.mxu0 0.0
        %5096 = vmatprep.subr.mxu0 0.0
        %5097 = vmatpush1.msra.mxu0 0.0
        %5098 = vmatprep.subr.mxu0 0.0
        %5099 = vmatpush1.msra.mxu0 0.0
        %5100 = vmatprep.subr.mxu0 0.0
        %5101 = vmatpush1.msra.mxu0 0.0
        %5102 = vmatprep.subr.mxu0 0.0
        %5103 = vmatpush1.msra.mxu0 0.0
        %5104 = vmatprep.subr.mxu0 0.0
        %5105 = vmatpush1.msra.mxu0 0.0
        %5106 = vmatprep.mubr.f32.mxu0 0.0
        %v5107 = vand.u32 %v4952, 4294901760
        %5108 = vmatmul.mubr.f32.gmra.mrb[0].mxu0 %v5107
        %v5109 = vpop.f32.mrb[0].mxu0
        %v5110 = vadd.f32 %v5028, %v5109
        %v5111 = vpop.f32.mrb[0].mxu0
        %v5112 = vadd.f32 %v5030, %v5111
        %5113 = vdwg.mxu0
        %v5114 = vand.u32 %v4946, 4294901760
        %v5115 = vsub.f32 %v4946, %v5114
        %5116 = vmatprep.subr.mxu0 %v5115
        %v5117 = vand.u32 %v4945, 4294901760
        %v5118 = vsub.f32 %v4945, %v5117
        %5119 = vmatpush1.msra.mxu0 %v5118
        %5120 = vmatprep.subr.mxu0 0.0
        %5121 = vmatpush1.msra.mxu0 0.0
        %5122 = vmatprep.subr.mxu0 0.0
        %5123 = vmatpush1.msra.mxu0 0.0
        %5124 = vmatprep.subr.mxu0 0.0
        %5125 = vmatpush1.msra.mxu0 0.0
        %5126 = vmatprep.subr.mxu0 0.0
        %5127 = vmatpush1.msra.mxu0 0.0
        %5128 = vmatprep.subr.mxu0 0.0
        %5129 = vmatpush1.msra.mxu0 0.0
        %5130 = vmatprep.subr.mxu0 0.0
        %5131 = vmatpush1.msra.mxu0 0.0
        %5132 = vmatprep.subr.mxu0 0.0
        %5133 = vmatpush1.msra.mxu0 0.0
        %5134 = vmatprep.subr.mxu0 0.0
        %5135 = vmatpush1.msra.mxu0 0.0
        %5136 = vmatprep.subr.mxu0 0.0
        %5137 = vmatpush1.msra.mxu0 0.0
        %5138 = vmatprep.subr.mxu0 0.0
        %5139 = vmatpush1.msra.mxu0 0.0
        %5140 = vmatprep.subr.mxu0 0.0
        %5141 = vmatpush1.msra.mxu0 0.0
        %5142 = vmatprep.subr.mxu0 0.0
        %5143 = vmatpush1.msra.mxu0 0.0
        %5144 = vmatprep.subr.mxu0 0.0
        %5145 = vmatpush1.msra.mxu0 0.0
        %5146 = vmatprep.subr.mxu0 0.0
        %5147 = vmatpush1.msra.mxu0 0.0
        %5148 = vmatprep.subr.mxu0 0.0
        %5149 = vmatpush1.msra.mxu0 0.0
        %5150 = vmatprep.subr.mxu0 0.0
        %5151 = vmatpush1.msra.mxu0 0.0
        %5152 = vmatprep.subr.mxu0 0.0
        %5153 = vmatpush1.msra.mxu0 0.0
        %5154 = vmatprep.subr.mxu0 0.0
        %5155 = vmatpush1.msra.mxu0 0.0
        %5156 = vmatprep.subr.mxu0 0.0
        %5157 = vmatpush1.msra.mxu0 0.0
        %5158 = vmatprep.subr.mxu0 0.0
        %5159 = vmatpush1.msra.mxu0 0.0
        %5160 = vmatprep.subr.mxu0 0.0
        %5161 = vmatpush1.msra.mxu0 0.0
        %5162 = vmatprep.subr.mxu0 0.0
        %5163 = vmatpush1.msra.mxu0 0.0
        %5164 = vmatprep.subr.mxu0 0.0
        %5165 = vmatpush1.msra.mxu0 0.0
        %5166 = vmatprep.subr.mxu0 0.0
        %5167 = vmatpush1.msra.mxu0 0.0
        %5168 = vmatprep.subr.mxu0 0.0
        %5169 = vmatpush1.msra.mxu0 0.0
        %5170 = vmatprep.subr.mxu0 0.0
        %5171 = vmatpush1.msra.mxu0 0.0
        %5172 = vmatprep.subr.mxu0 0.0
        %5173 = vmatpush1.msra.mxu0 0.0
        %5174 = vmatprep.subr.mxu0 0.0
        %5175 = vmatpush1.msra.mxu0 0.0
        %5176 = vmatprep.subr.mxu0 0.0
        %5177 = vmatpush1.msra.mxu0 0.0
        %5178 = vmatprep.subr.mxu0 0.0
        %5179 = vmatpush1.msra.mxu0 0.0
        %5180 = vmatprep.subr.mxu0 0.0
        %5181 = vmatpush1.msra.mxu0 0.0
        %5182 = vmatprep.mubr.f32.mxu0 0.0
        %v5183 = vand.u32 %v4952, 4294901760
        %v5184 = vsub.f32 %v4952, %v5183
        %5185 = vmatmul.mubr.f32.gmra.mrb[0].mxu0 %v5184
        %v5186 = vpop.f32.mrb[0].mxu0
        %v5187 = vadd.f32 %v5110, %v5186
        %v5188 = vpop.f32.mrb[0].mxu0
        %v5189 = vadd.f32 %v5112, %v5188
        %5190 = vdwg.mxu0
        %v5191 = vand.u32 %v4946, 4294901760
        %5192 = vmatprep.subr.mxu0 %v5191
        %v5193 = vand.u32 %v4945, 4294901760
        %5194 = vmatpush1.msra.mxu0 %v5193
        %5195 = vmatprep.subr.mxu0 0.0
        %5196 = vmatpush1.msra.mxu0 0.0
        %5197 = vmatprep.subr.mxu0 0.0
        %5198 = vmatpush1.msra.mxu0 0.0
        %5199 = vmatprep.subr.mxu0 0.0
        %5200 = vmatpush1.msra.mxu0 0.0
        %5201 = vmatprep.subr.mxu0 0.0
        %5202 = vmatpush1.msra.mxu0 0.0
        %5203 = vmatprep.subr.mxu0 0.0
        %5204 = vmatpush1.msra.mxu0 0.0
        %5205 = vmatprep.subr.mxu0 0.0
        %5206 = vmatpush1.msra.mxu0 0.0
        %5207 = vmatprep.subr.mxu0 0.0
        %5208 = vmatpush1.msra.mxu0 0.0
        %5209 = vmatprep.subr.mxu0 0.0
        %5210 = vmatpush1.msra.mxu0 0.0
        %5211 = vmatprep.subr.mxu0 0.0
        %5212 = vmatpush1.msra.mxu0 0.0
        %5213 = vmatprep.subr.mxu0 0.0
        %5214 = vmatpush1.msra.mxu0 0.0
        %5215 = vmatprep.subr.mxu0 0.0
        %5216 = vmatpush1.msra.mxu0 0.0
        %5217 = vmatprep.subr.mxu0 0.0
        %5218 = vmatpush1.msra.mxu0 0.0
        %5219 = vmatprep.subr.mxu0 0.0
        %5220 = vmatpush1.msra.mxu0 0.0
        %5221 = vmatprep.subr.mxu0 0.0
        %5222 = vmatpush1.msra.mxu0 0.0
        %5223 = vmatprep.subr.mxu0 0.0
        %5224 = vmatpush1.msra.mxu0 0.0
        %5225 = vmatprep.subr.mxu0 0.0
        %5226 = vmatpush1.msra.mxu0 0.0
        %5227 = vmatprep.subr.mxu0 0.0
        %5228 = vmatpush1.msra.mxu0 0.0
        %5229 = vmatprep.subr.mxu0 0.0
        %5230 = vmatpush1.msra.mxu0 0.0
        %5231 = vmatprep.subr.mxu0 0.0
        %5232 = vmatpush1.msra.mxu0 0.0
        %5233 = vmatprep.subr.mxu0 0.0
        %5234 = vmatpush1.msra.mxu0 0.0
        %5235 = vmatprep.subr.mxu0 0.0
        %5236 = vmatpush1.msra.mxu0 0.0
        %5237 = vmatprep.subr.mxu0 0.0
        %5238 = vmatpush1.msra.mxu0 0.0
        %5239 = vmatprep.subr.mxu0 0.0
        %5240 = vmatpush1.msra.mxu0 0.0
        %5241 = vmatprep.subr.mxu0 0.0
        %5242 = vmatpush1.msra.mxu0 0.0
        %5243 = vmatprep.subr.mxu0 0.0
        %5244 = vmatpush1.msra.mxu0 0.0
        %5245 = vmatprep.subr.mxu0 0.0
        %5246 = vmatpush1.msra.mxu0 0.0
        %5247 = vmatprep.subr.mxu0 0.0
        %5248 = vmatpush1.msra.mxu0 0.0
        %5249 = vmatprep.subr.mxu0 0.0
        %5250 = vmatpush1.msra.mxu0 0.0
        %5251 = vmatprep.subr.mxu0 0.0
        %5252 = vmatpush1.msra.mxu0 0.0
        %5253 = vmatprep.subr.mxu0 0.0
        %5254 = vmatpush1.msra.mxu0 0.0
        %5255 = vmatprep.subr.mxu0 0.0
        %5256 = vmatpush1.msra.mxu0 0.0
        %5257 = vmatprep.mubr.f32.mxu0 0.0
        %v5258 = vand.u32 %v4952, 4294901760
        %v5259 = vsub.f32 %v4952, %v5258
        %v5260 = vand.u32 %v5259, 4294901760
        %5261 = vmatmul.mubr.f32.gmra.mrb[0].mxu0 %v5260
        %v5262 = vpop.f32.mrb[0].mxu0
        %v5263 = vadd.f32 %v5187, %v5262
        %v5264 = vpop.f32.mrb[0].mxu0
        %v5265 = vadd.f32 %v5189, %v5264
        %5266 = vdwg.mxu0
        %v5267 = vand.u32 %v4946, 4294901760
        %v5268 = vsub.f32 %v4946, %v5267
        %v5269 = vand.u32 %v5268, 4294901760
        %5270 = vmatprep.subr.mxu0 %v5269
        %v5271 = vand.u32 %v4945, 4294901760
        %v5272 = vsub.f32 %v4945, %v5271
        %v5273 = vand.u32 %v5272, 4294901760
        %5274 = vmatpush1.msra.mxu0 %v5273
        %5275 = vmatprep.subr.mxu0 0.0
        %5276 = vmatpush1.msra.mxu0 0.0
        %5277 = vmatprep.subr.mxu0 0.0
        %5278 = vmatpush1.msra.mxu0 0.0
        %5279 = vmatprep.subr.mxu0 0.0
        %5280 = vmatpush1.msra.mxu0 0.0
        %5281 = vmatprep.subr.mxu0 0.0
        %5282 = vmatpush1.msra.mxu0 0.0
        %5283 = vmatprep.subr.mxu0 0.0
        %5284 = vmatpush1.msra.mxu0 0.0
        %5285 = vmatprep.subr.mxu0 0.0
        %5286 = vmatpush1.msra.mxu0 0.0
        %5287 = vmatprep.subr.mxu0 0.0
        %5288 = vmatpush1.msra.mxu0 0.0
        %5289 = vmatprep.subr.mxu0 0.0
        %5290 = vmatpush1.msra.mxu0 0.0
        %5291 = vmatprep.subr.mxu0 0.0
        %5292 = vmatpush1.msra.mxu0 0.0
        %5293 = vmatprep.subr.mxu0 0.0
        %5294 = vmatpush1.msra.mxu0 0.0
        %5295 = vmatprep.subr.mxu0 0.0
        %5296 = vmatpush1.msra.mxu0 0.0
        %5297 = vmatprep.subr.mxu0 0.0
        %5298 = vmatpush1.msra.mxu0 0.0
        %5299 = vmatprep.subr.mxu0 0.0
        %5300 = vmatpush1.msra.mxu0 0.0
        %5301 = vmatprep.subr.mxu0 0.0
        %5302 = vmatpush1.msra.mxu0 0.0
        %5303 = vmatprep.subr.mxu0 0.0
        %5304 = vmatpush1.msra.mxu0 0.0
        %5305 = vmatprep.subr.mxu0 0.0
        %5306 = vmatpush1.msra.mxu0 0.0
        %5307 = vmatprep.subr.mxu0 0.0
        %5308 = vmatpush1.msra.mxu0 0.0
        %5309 = vmatprep.subr.mxu0 0.0
        %5310 = vmatpush1.msra.mxu0 0.0
        %5311 = vmatprep.subr.mxu0 0.0
        %5312 = vmatpush1.msra.mxu0 0.0
        %5313 = vmatprep.subr.mxu0 0.0
        %5314 = vmatpush1.msra.mxu0 0.0
        %5315 = vmatprep.subr.mxu0 0.0
        %5316 = vmatpush1.msra.mxu0 0.0
        %5317 = vmatprep.subr.mxu0 0.0
        %5318 = vmatpush1.msra.mxu0 0.0
        %5319 = vmatprep.subr.mxu0 0.0
        %5320 = vmatpush1.msra.mxu0 0.0
        %5321 = vmatprep.subr.mxu0 0.0
        %5322 = vmatpush1.msra.mxu0 0.0
        %5323 = vmatprep.subr.mxu0 0.0
        %5324 = vmatpush1.msra.mxu0 0.0
        %5325 = vmatprep.subr.mxu0 0.0
        %5326 = vmatpush1.msra.mxu0 0.0
        %5327 = vmatprep.subr.mxu0 0.0
        %5328 = vmatpush1.msra.mxu0 0.0
        %5329 = vmatprep.subr.mxu0 0.0
        %5330 = vmatpush1.msra.mxu0 0.0
        %5331 = vmatprep.subr.mxu0 0.0
        %5332 = vmatpush1.msra.mxu0 0.0
        %5333 = vmatprep.subr.mxu0 0.0
        %5334 = vmatpush1.msra.mxu0 0.0
        %5335 = vmatprep.subr.mxu0 0.0
        %5336 = vmatpush1.msra.mxu0 0.0
        %5337 = vmatprep.mubr.f32.mxu0 0.0
        %v5338 = vand.u32 %v4952, 4294901760
        %5339 = vmatmul.mubr.f32.gmra.mrb[0].mxu0 %v5338
        %v5340 = vpop.f32.mrb[0].mxu0
        %v5341 = vadd.f32 %v5263, %v5340
        %v5342 = vpop.f32.mrb[0].mxu0
        %v5343 = vadd.f32 %v5265, %v5342
        %5344 = vdwg.mxu0
        %v5345 = vand.u32 %v4946, 4294901760
        %5346 = vmatprep.subr.mxu0 %v5345
        %v5347 = vand.u32 %v4945, 4294901760
        %5348 = vmatpush1.msra.mxu0 %v5347
        %5349 = vmatprep.subr.mxu0 0.0
        %5350 = vmatpush1.msra.mxu0 0.0
        %5351 = vmatprep.subr.mxu0 0.0
        %5352 = vmatpush1.msra.mxu0 0.0
        %5353 = vmatprep.subr.mxu0 0.0
        %5354 = vmatpush1.msra.mxu0 0.0
        %5355 = vmatprep.subr.mxu0 0.0
        %5356 = vmatpush1.msra.mxu0 0.0
        %5357 = vmatprep.subr.mxu0 0.0
        %5358 = vmatpush1.msra.mxu0 0.0
        %5359 = vmatprep.subr.mxu0 0.0
        %5360 = vmatpush1.msra.mxu0 0.0
        %5361 = vmatprep.subr.mxu0 0.0
        %5362 = vmatpush1.msra.mxu0 0.0
        %5363 = vmatprep.subr.mxu0 0.0
        %5364 = vmatpush1.msra.mxu0 0.0
        %5365 = vmatprep.subr.mxu0 0.0
        %5366 = vmatpush1.msra.mxu0 0.0
        %5367 = vmatprep.subr.mxu0 0.0
        %5368 = vmatpush1.msra.mxu0 0.0
        %5369 = vmatprep.subr.mxu0 0.0
        %5370 = vmatpush1.msra.mxu0 0.0
        %5371 = vmatprep.subr.mxu0 0.0
        %5372 = vmatpush1.msra.mxu0 0.0
        %5373 = vmatprep.subr.mxu0 0.0
        %5374 = vmatpush1.msra.mxu0 0.0
        %5375 = vmatprep.subr.mxu0 0.0
        %5376 = vmatpush1.msra.mxu0 0.0
        %5377 = vmatprep.subr.mxu0 0.0
        %5378 = vmatpush1.msra.mxu0 0.0
        %5379 = vmatprep.subr.mxu0 0.0
        %5380 = vmatpush1.msra.mxu0 0.0
        %5381 = vmatprep.subr.mxu0 0.0
        %5382 = vmatpush1.msra.mxu0 0.0
        %5383 = vmatprep.subr.mxu0 0.0
        %5384 = vmatpush1.msra.mxu0 0.0
        %5385 = vmatprep.subr.mxu0 0.0
        %5386 = vmatpush1.msra.mxu0 0.0
        %5387 = vmatprep.subr.mxu0 0.0
        %5388 = vmatpush1.msra.mxu0 0.0
        %5389 = vmatprep.subr.mxu0 0.0
        %5390 = vmatpush1.msra.mxu0 0.0
        %5391 = vmatprep.subr.mxu0 0.0
        %5392 = vmatpush1.msra.mxu0 0.0
        %5393 = vmatprep.subr.mxu0 0.0
        %5394 = vmatpush1.msra.mxu0 0.0
        %5395 = vmatprep.subr.mxu0 0.0
        %5396 = vmatpush1.msra.mxu0 0.0
        %5397 = vmatprep.subr.mxu0 0.0
        %5398 = vmatpush1.msra.mxu0 0.0
        %5399 = vmatprep.subr.mxu0 0.0
        %5400 = vmatpush1.msra.mxu0 0.0
        %5401 = vmatprep.subr.mxu0 0.0
        %5402 = vmatpush1.msra.mxu0 0.0
        %5403 = vmatprep.subr.mxu0 0.0
        %5404 = vmatpush1.msra.mxu0 0.0
        %5405 = vmatprep.subr.mxu0 0.0
        %5406 = vmatpush1.msra.mxu0 0.0
        %5407 = vmatprep.subr.mxu0 0.0
        %5408 = vmatpush1.msra.mxu0 0.0
        %5409 = vmatprep.subr.mxu0 0.0
        %5410 = vmatpush1.msra.mxu0 0.0
        %5411 = vmatprep.mubr.f32.mxu0 0.0
        %v5412 = vand.u32 %v4952, 4294901760
        %5413 = vmatmul.mubr.f32.gmra.mrb[0].mxu0 %v5412
        %v5414 = vpop.f32.mrb[0].mxu0
        %v5415 = vadd.f32 %v5341, %v5414
        %v5416 = vpop.f32.mrb[0].mxu0
        %v5417 = vadd.f32 %v5343, %v5416
        %5418 = vdwg.mxu0
        %5419 = vmatprep.subr.mxu0 0.0
        %v5420 = vand.u32 %v4947, 4294901760
        %5421 = vmatpush1.msra.mxu0 %v5420
        %5422 = vmatprep.subr.mxu0 0.0
        %5423 = vmatpush1.msra.mxu0 0.0
        %5424 = vmatprep.subr.mxu0 0.0
        %5425 = vmatpush1.msra.mxu0 0.0
        %5426 = vmatprep.subr.mxu0 0.0
        %5427 = vmatpush1.msra.mxu0 0.0
        %5428 = vmatprep.subr.mxu0 0.0
        %5429 = vmatpush1.msra.mxu0 0.0
        %5430 = vmatprep.subr.mxu0 0.0
        %5431 = vmatpush1.msra.mxu0 0.0
        %5432 = vmatprep.subr.mxu0 0.0
        %5433 = vmatpush1.msra.mxu0 0.0
        %5434 = vmatprep.subr.mxu0 0.0
        %5435 = vmatpush1.msra.mxu0 0.0
        %5436 = vmatprep.subr.mxu0 0.0
        %5437 = vmatpush1.msra.mxu0 0.0
        %5438 = vmatprep.subr.mxu0 0.0
        %5439 = vmatpush1.msra.mxu0 0.0
        %5440 = vmatprep.subr.mxu0 0.0
        %5441 = vmatpush1.msra.mxu0 0.0
        %5442 = vmatprep.subr.mxu0 0.0
        %5443 = vmatpush1.msra.mxu0 0.0
        %5444 = vmatprep.subr.mxu0 0.0
        %5445 = vmatpush1.msra.mxu0 0.0
        %5446 = vmatprep.subr.mxu0 0.0
        %5447 = vmatpush1.msra.mxu0 0.0
        %5448 = vmatprep.subr.mxu0 0.0
        %5449 = vmatpush1.msra.mxu0 0.0
        %5450 = vmatprep.subr.mxu0 0.0
        %5451 = vmatpush1.msra.mxu0 0.0
        %5452 = vmatprep.subr.mxu0 0.0
        %5453 = vmatpush1.msra.mxu0 0.0
        %5454 = vmatprep.subr.mxu0 0.0
        %5455 = vmatpush1.msra.mxu0 0.0
        %5456 = vmatprep.subr.mxu0 0.0
        %5457 = vmatpush1.msra.mxu0 0.0
        %5458 = vmatprep.subr.mxu0 0.0
        %5459 = vmatpush1.msra.mxu0 0.0
        %5460 = vmatprep.subr.mxu0 0.0
        %5461 = vmatpush1.msra.mxu0 0.0
        %5462 = vmatprep.subr.mxu0 0.0
        %5463 = vmatpush1.msra.mxu0 0.0
        %5464 = vmatprep.subr.mxu0 0.0
        %5465 = vmatpush1.msra.mxu0 0.0
        %5466 = vmatprep.subr.mxu0 0.0
        %5467 = vmatpush1.msra.mxu0 0.0
        %5468 = vmatprep.subr.mxu0 0.0
        %5469 = vmatpush1.msra.mxu0 0.0
        %5470 = vmatprep.subr.mxu0 0.0
        %5471 = vmatpush1.msra.mxu0 0.0
        %5472 = vmatprep.subr.mxu0 0.0
        %5473 = vmatpush1.msra.mxu0 0.0
        %5474 = vmatprep.subr.mxu0 0.0
        %5475 = vmatpush1.msra.mxu0 0.0
        %5476 = vmatprep.subr.mxu0 0.0
        %5477 = vmatpush1.msra.mxu0 0.0
        %5478 = vmatprep.subr.mxu0 0.0
        %5479 = vmatpush1.msra.mxu0 0.0
        %5480 = vmatprep.subr.mxu0 0.0
        %5481 = vmatpush1.msra.mxu0 0.0
        %5482 = vmatprep.subr.mxu0 0.0
        %5483 = vmatpush1.msra.mxu0 0.0
        %5484 = vmatprep.mubr.f32.mxu0 0.0
        %v5485 = vand.u32 %v4952, 4294901760
        %v5486 = vsub.f32 %v4952, %v5485
        %v5487 = vand.u32 %v5486, 4294901760
        %v5488 = vsub.f32 %v5486, %v5487
        %v5489 = vand.u32 %v5488, 4294901760
        %5490 = vmatmul.mubr.f32.gmra.mrb[0].mxu0 %v5489
        %v5491 = vpop.f32.mrb[0].mxu0
        %v5492 = vadd.f32 0.0, %v5491
        %v5493 = vpop.f32.mrb[0].mxu0
        %5494 = vdwg.mxu0
        %5495 = vmatprep.subr.mxu0 0.0
        %v5496 = vand.u32 %v4947, 4294901760
        %v5497 = vsub.f32 %v4947, %v5496
        %v5498 = vand.u32 %v5497, 4294901760
        %v5499 = vsub.f32 %v5497, %v5498
        %v5500 = vand.u32 %v5499, 4294901760
        %5501 = vmatpush1.msra.mxu0 %v5500
        %5502 = vmatprep.subr.mxu0 0.0
        %5503 = vmatpush1.msra.mxu0 0.0
        %5504 = vmatprep.subr.mxu0 0.0
        %5505 = vmatpush1.msra.mxu0 0.0
        %5506 = vmatprep.subr.mxu0 0.0
        %5507 = vmatpush1.msra.mxu0 0.0
        %5508 = vmatprep.subr.mxu0 0.0
        %5509 = vmatpush1.msra.mxu0 0.0
        %5510 = vmatprep.subr.mxu0 0.0
        %5511 = vmatpush1.msra.mxu0 0.0
        %5512 = vmatprep.subr.mxu0 0.0
        %5513 = vmatpush1.msra.mxu0 0.0
        %5514 = vmatprep.subr.mxu0 0.0
        %5515 = vmatpush1.msra.mxu0 0.0
        %5516 = vmatprep.subr.mxu0 0.0
        %5517 = vmatpush1.msra.mxu0 0.0
        %5518 = vmatprep.subr.mxu0 0.0
        %5519 = vmatpush1.msra.mxu0 0.0
        %5520 = vmatprep.subr.mxu0 0.0
        %5521 = vmatpush1.msra.mxu0 0.0
        %5522 = vmatprep.subr.mxu0 0.0
        %5523 = vmatpush1.msra.mxu0 0.0
        %5524 = vmatprep.subr.mxu0 0.0
        %5525 = vmatpush1.msra.mxu0 0.0
        %5526 = vmatprep.subr.mxu0 0.0
        %5527 = vmatpush1.msra.mxu0 0.0
        %5528 = vmatprep.subr.mxu0 0.0
        %5529 = vmatpush1.msra.mxu0 0.0
        %5530 = vmatprep.subr.mxu0 0.0
        %5531 = vmatpush1.msra.mxu0 0.0
        %5532 = vmatprep.subr.mxu0 0.0
        %5533 = vmatpush1.msra.mxu0 0.0
        %5534 = vmatprep.subr.mxu0 0.0
        %5535 = vmatpush1.msra.mxu0 0.0
        %5536 = vmatprep.subr.mxu0 0.0
        %5537 = vmatpush1.msra.mxu0 0.0
        %5538 = vmatprep.subr.mxu0 0.0
        %5539 = vmatpush1.msra.mxu0 0.0
        %5540 = vmatprep.subr.mxu0 0.0
        %5541 = vmatpush1.msra.mxu0 0.0
        %5542 = vmatprep.subr.mxu0 0.0
        %5543 = vmatpush1.msra.mxu0 0.0
        %5544 = vmatprep.subr.mxu0 0.0
        %5545 = vmatpush1.msra.mxu0 0.0
        %5546 = vmatprep.subr.mxu0 0.0
        %5547 = vmatpush1.msra.mxu0 0.0
        %5548 = vmatprep.subr.mxu0 0.0
        %5549 = vmatpush1.msra.mxu0 0.0
        %5550 = vmatprep.subr.mxu0 0.0
        %5551 = vmatpush1.msra.mxu0 0.0
        %5552 = vmatprep.subr.mxu0 0.0
        %5553 = vmatpush1.msra.mxu0 0.0
        %5554 = vmatprep.subr.mxu0 0.0
        %5555 = vmatpush1.msra.mxu0 0.0
        %5556 = vmatprep.subr.mxu0 0.0
        %5557 = vmatpush1.msra.mxu0 0.0
        %5558 = vmatprep.subr.mxu0 0.0
        %5559 = vmatpush1.msra.mxu0 0.0
        %5560 = vmatprep.subr.mxu0 0.0
        %5561 = vmatpush1.msra.mxu0 0.0
        %5562 = vmatprep.subr.mxu0 0.0
        %5563 = vmatpush1.msra.mxu0 0.0
        %5564 = vmatprep.mubr.f32.mxu0 0.0
        %v5565 = vand.u32 %v4952, 4294901760
        %5566 = vmatmul.mubr.f32.gmra.mrb[0].mxu0 %v5565
        %v5567 = vpop.f32.mrb[0].mxu0
        %v5568 = vadd.f32 %v5492, %v5567
        %v5569 = vpop.f32.mrb[0].mxu0
        %5570 = vdwg.mxu0
        %5571 = vmatprep.subr.mxu0 0.0
        %v5572 = vand.u32 %v4947, 4294901760
        %v5573 = vsub.f32 %v4947, %v5572
        %5574 = vmatpush1.msra.mxu0 %v5573
        %5575 = vmatprep.subr.mxu0 0.0
        %5576 = vmatpush1.msra.mxu0 0.0
        %5577 = vmatprep.subr.mxu0 0.0
        %5578 = vmatpush1.msra.mxu0 0.0
        %5579 = vmatprep.subr.mxu0 0.0
        %5580 = vmatpush1.msra.mxu0 0.0
        %5581 = vmatprep.subr.mxu0 0.0
        %5582 = vmatpush1.msra.mxu0 0.0
        %5583 = vmatprep.subr.mxu0 0.0
        %5584 = vmatpush1.msra.mxu0 0.0
        %5585 = vmatprep.subr.mxu0 0.0
        %5586 = vmatpush1.msra.mxu0 0.0
        %5587 = vmatprep.subr.mxu0 0.0
        %5588 = vmatpush1.msra.mxu0 0.0
        %5589 = vmatprep.subr.mxu0 0.0
        %5590 = vmatpush1.msra.mxu0 0.0
        %5591 = vmatprep.subr.mxu0 0.0
        %5592 = vmatpush1.msra.mxu0 0.0
        %5593 = vmatprep.subr.mxu0 0.0
        %5594 = vmatpush1.msra.mxu0 0.0
        %5595 = vmatprep.subr.mxu0 0.0
        %5596 = vmatpush1.msra.mxu0 0.0
        %5597 = vmatprep.subr.mxu0 0.0
        %5598 = vmatpush1.msra.mxu0 0.0
        %5599 = vmatprep.subr.mxu0 0.0
        %5600 = vmatpush1.msra.mxu0 0.0
        %5601 = vmatprep.subr.mxu0 0.0
        %5602 = vmatpush1.msra.mxu0 0.0
        %5603 = vmatprep.subr.mxu0 0.0
        %5604 = vmatpush1.msra.mxu0 0.0
        %5605 = vmatprep.subr.mxu0 0.0
        %5606 = vmatpush1.msra.mxu0 0.0
        %5607 = vmatprep.subr.mxu0 0.0
        %5608 = vmatpush1.msra.mxu0 0.0
        %5609 = vmatprep.subr.mxu0 0.0
        %5610 = vmatpush1.msra.mxu0 0.0
        %5611 = vmatprep.subr.mxu0 0.0
        %5612 = vmatpush1.msra.mxu0 0.0
        %5613 = vmatprep.subr.mxu0 0.0
        %5614 = vmatpush1.msra.mxu0 0.0
        %5615 = vmatprep.subr.mxu0 0.0
        %5616 = vmatpush1.msra.mxu0 0.0
        %5617 = vmatprep.subr.mxu0 0.0
        %5618 = vmatpush1.msra.mxu0 0.0
        %5619 = vmatprep.subr.mxu0 0.0
        %5620 = vmatpush1.msra.mxu0 0.0
        %5621 = vmatprep.subr.mxu0 0.0
        %5622 = vmatpush1.msra.mxu0 0.0
        %5623 = vmatprep.subr.mxu0 0.0
        %5624 = vmatpush1.msra.mxu0 0.0
        %5625 = vmatprep.subr.mxu0 0.0
        %5626 = vmatpush1.msra.mxu0 0.0
        %5627 = vmatprep.subr.mxu0 0.0
        %5628 = vmatpush1.msra.mxu0 0.0
        %5629 = vmatprep.subr.mxu0 0.0
        %5630 = vmatpush1.msra.mxu0 0.0
        %5631 = vmatprep.subr.mxu0 0.0
        %5632 = vmatpush1.msra.mxu0 0.0
        %5633 = vmatprep.subr.mxu0 0.0
        %5634 = vmatpush1.msra.mxu0 0.0
        %5635 = vmatprep.subr.mxu0 0.0
        %5636 = vmatpush1.msra.mxu0 0.0
        %5637 = vmatprep.mubr.f32.mxu0 0.0
        %v5638 = vand.u32 %v4952, 4294901760
        %v5639 = vsub.f32 %v4952, %v5638
        %5640 = vmatmul.mubr.f32.gmra.mrb[0].mxu0 %v5639
        %v5641 = vpop.f32.mrb[0].mxu0
        %v5642 = vadd.f32 %v5568, %v5641
        %v5643 = vpop.f32.mrb[0].mxu0
        %5644 = vdwg.mxu0
        %5645 = vmatprep.subr.mxu0 0.0
        %v5646 = vand.u32 %v4947, 4294901760
        %5647 = vmatpush1.msra.mxu0 %v5646
        %5648 = vmatprep.subr.mxu0 0.0
        %5649 = vmatpush1.msra.mxu0 0.0
        %5650 = vmatprep.subr.mxu0 0.0
        %5651 = vmatpush1.msra.mxu0 0.0
        %5652 = vmatprep.subr.mxu0 0.0
        %5653 = vmatpush1.msra.mxu0 0.0
        %5654 = vmatprep.subr.mxu0 0.0
        %5655 = vmatpush1.msra.mxu0 0.0
        %5656 = vmatprep.subr.mxu0 0.0
        %5657 = vmatpush1.msra.mxu0 0.0
        %5658 = vmatprep.subr.mxu0 0.0
        %5659 = vmatpush1.msra.mxu0 0.0
        %5660 = vmatprep.subr.mxu0 0.0
        %5661 = vmatpush1.msra.mxu0 0.0
        %5662 = vmatprep.subr.mxu0 0.0
        %5663 = vmatpush1.msra.mxu0 0.0
        %5664 = vmatprep.subr.mxu0 0.0
        %5665 = vmatpush1.msra.mxu0 0.0
        %5666 = vmatprep.subr.mxu0 0.0
        %5667 = vmatpush1.msra.mxu0 0.0
        %5668 = vmatprep.subr.mxu0 0.0
        %5669 = vmatpush1.msra.mxu0 0.0
        %5670 = vmatprep.subr.mxu0 0.0
        %5671 = vmatpush1.msra.mxu0 0.0
        %5672 = vmatprep.subr.mxu0 0.0
        %5673 = vmatpush1.msra.mxu0 0.0
        %5674 = vmatprep.subr.mxu0 0.0
        %5675 = vmatpush1.msra.mxu0 0.0
        %5676 = vmatprep.subr.mxu0 0.0
        %5677 = vmatpush1.msra.mxu0 0.0
        %5678 = vmatprep.subr.mxu0 0.0
        %5679 = vmatpush1.msra.mxu0 0.0
        %5680 = vmatprep.subr.mxu0 0.0
        %5681 = vmatpush1.msra.mxu0 0.0
        %5682 = vmatprep.subr.mxu0 0.0
        %5683 = vmatpush1.msra.mxu0 0.0
        %5684 = vmatprep.subr.mxu0 0.0
        %5685 = vmatpush1.msra.mxu0 0.0
        %5686 = vmatprep.subr.mxu0 0.0
        %5687 = vmatpush1.msra.mxu0 0.0
        %5688 = vmatprep.subr.mxu0 0.0
        %5689 = vmatpush1.msra.mxu0 0.0
        %5690 = vmatprep.subr.mxu0 0.0
        %5691 = vmatpush1.msra.mxu0 0.0
        %5692 = vmatprep.subr.mxu0 0.0
        %5693 = vmatpush1.msra.mxu0 0.0
        %5694 = vmatprep.subr.mxu0 0.0
        %5695 = vmatpush1.msra.mxu0 0.0
        %5696 = vmatprep.subr.mxu0 0.0
        %5697 = vmatpush1.msra.mxu0 0.0
        %5698 = vmatprep.subr.mxu0 0.0
        %5699 = vmatpush1.msra.mxu0 0.0
        %5700 = vmatprep.subr.mxu0 0.0
        %5701 = vmatpush1.msra.mxu0 0.0
        %5702 = vmatprep.subr.mxu0 0.0
        %5703 = vmatpush1.msra.mxu0 0.0
        %5704 = vmatprep.subr.mxu0 0.0
        %5705 = vmatpush1.msra.mxu0 0.0
        %5706 = vmatprep.subr.mxu0 0.0
        %5707 = vmatpush1.msra.mxu0 0.0
        %5708 = vmatprep.subr.mxu0 0.0
        %5709 = vmatpush1.msra.mxu0 0.0
        %5710 = vmatprep.mubr.f32.mxu0 0.0
        %v5711 = vand.u32 %v4952, 4294901760
        %v5712 = vsub.f32 %v4952, %v5711
        %v5713 = vand.u32 %v5712, 4294901760
        %5714 = vmatmul.mubr.f32.gmra.mrb[0].mxu0 %v5713
        %v5715 = vpop.f32.mrb[0].mxu0
        %v5716 = vadd.f32 %v5642, %v5715
        %v5717 = vpop.f32.mrb[0].mxu0
        %5718 = vdwg.mxu0
        %5719 = vmatprep.subr.mxu0 0.0
        %v5720 = vand.u32 %v4947, 4294901760
        %v5721 = vsub.f32 %v4947, %v5720
        %v5722 = vand.u32 %v5721, 4294901760
        %5723 = vmatpush1.msra.mxu0 %v5722
        %5724 = vmatprep.subr.mxu0 0.0
        %5725 = vmatpush1.msra.mxu0 0.0
        %5726 = vmatprep.subr.mxu0 0.0
        %5727 = vmatpush1.msra.mxu0 0.0
        %5728 = vmatprep.subr.mxu0 0.0
        %5729 = vmatpush1.msra.mxu0 0.0
        %5730 = vmatprep.subr.mxu0 0.0
        %5731 = vmatpush1.msra.mxu0 0.0
        %5732 = vmatprep.subr.mxu0 0.0
        %5733 = vmatpush1.msra.mxu0 0.0
        %5734 = vmatprep.subr.mxu0 0.0
        %5735 = vmatpush1.msra.mxu0 0.0
        %5736 = vmatprep.subr.mxu0 0.0
        %5737 = vmatpush1.msra.mxu0 0.0
        %5738 = vmatprep.subr.mxu0 0.0
        %5739 = vmatpush1.msra.mxu0 0.0
        %5740 = vmatprep.subr.mxu0 0.0
        %5741 = vmatpush1.msra.mxu0 0.0
        %5742 = vmatprep.subr.mxu0 0.0
        %5743 = vmatpush1.msra.mxu0 0.0
        %5744 = vmatprep.subr.mxu0 0.0
        %5745 = vmatpush1.msra.mxu0 0.0
        %5746 = vmatprep.subr.mxu0 0.0
        %5747 = vmatpush1.msra.mxu0 0.0
        %5748 = vmatprep.subr.mxu0 0.0
        %5749 = vmatpush1.msra.mxu0 0.0
        %5750 = vmatprep.subr.mxu0 0.0
        %5751 = vmatpush1.msra.mxu0 0.0
        %5752 = vmatprep.subr.mxu0 0.0
        %5753 = vmatpush1.msra.mxu0 0.0
        %5754 = vmatprep.subr.mxu0 0.0
        %5755 = vmatpush1.msra.mxu0 0.0
        %5756 = vmatprep.subr.mxu0 0.0
        %5757 = vmatpush1.msra.mxu0 0.0
        %5758 = vmatprep.subr.mxu0 0.0
        %5759 = vmatpush1.msra.mxu0 0.0
        %5760 = vmatprep.subr.mxu0 0.0
        %5761 = vmatpush1.msra.mxu0 0.0
        %5762 = vmatprep.subr.mxu0 0.0
        %5763 = vmatpush1.msra.mxu0 0.0
        %5764 = vmatprep.subr.mxu0 0.0
        %5765 = vmatpush1.msra.mxu0 0.0
        %5766 = vmatprep.subr.mxu0 0.0
        %5767 = vmatpush1.msra.mxu0 0.0
        %5768 = vmatprep.subr.mxu0 0.0
        %5769 = vmatpush1.msra.mxu0 0.0
        %5770 = vmatprep.subr.mxu0 0.0
        %5771 = vmatpush1.msra.mxu0 0.0
        %5772 = vmatprep.subr.mxu0 0.0
        %5773 = vmatpush1.msra.mxu0 0.0
        %5774 = vmatprep.subr.mxu0 0.0
        %5775 = vmatpush1.msra.mxu0 0.0
        %5776 = vmatprep.subr.mxu0 0.0
        %5777 = vmatpush1.msra.mxu0 0.0
        %5778 = vmatprep.subr.mxu0 0.0
        %5779 = vmatpush1.msra.mxu0 0.0
        %5780 = vmatprep.subr.mxu0 0.0
        %5781 = vmatpush1.msra.mxu0 0.0
        %5782 = vmatprep.subr.mxu0 0.0
        %5783 = vmatpush1.msra.mxu0 0.0
        %5784 = vmatprep.subr.mxu0 0.0
        %5785 = vmatpush1.msra.mxu0 0.0
        %5786 = vmatprep.mubr.f32.mxu0 0.0
        %v5787 = vand.u32 %v4952, 4294901760
        %5788 = vmatmul.mubr.f32.gmra.mrb[0].mxu0 %v5787
        %v5789 = vpop.f32.mrb[0].mxu0
        %v5790 = vadd.f32 %v5716, %v5789
        %v5791 = vpop.f32.mrb[0].mxu0
        %5792 = vdwg.mxu0
        %5793 = vmatprep.subr.mxu0 0.0
        %v5794 = vand.u32 %v4947, 4294901760
        %5795 = vmatpush1.msra.mxu0 %v5794
        %5796 = vmatprep.subr.mxu0 0.0
        %5797 = vmatpush1.msra.mxu0 0.0
        %5798 = vmatprep.subr.mxu0 0.0
        %5799 = vmatpush1.msra.mxu0 0.0
        %5800 = vmatprep.subr.mxu0 0.0
        %5801 = vmatpush1.msra.mxu0 0.0
        %5802 = vmatprep.subr.mxu0 0.0
        %5803 = vmatpush1.msra.mxu0 0.0
        %5804 = vmatprep.subr.mxu0 0.0
        %5805 = vmatpush1.msra.mxu0 0.0
        %5806 = vmatprep.subr.mxu0 0.0
        %5807 = vmatpush1.msra.mxu0 0.0
        %5808 = vmatprep.subr.mxu0 0.0
        %5809 = vmatpush1.msra.mxu0 0.0
        %5810 = vmatprep.subr.mxu0 0.0
        %5811 = vmatpush1.msra.mxu0 0.0
        %5812 = vmatprep.subr.mxu0 0.0
        %5813 = vmatpush1.msra.mxu0 0.0
        %5814 = vmatprep.subr.mxu0 0.0
        %5815 = vmatpush1.msra.mxu0 0.0
        %5816 = vmatprep.subr.mxu0 0.0
        %5817 = vmatpush1.msra.mxu0 0.0
        %5818 = vmatprep.subr.mxu0 0.0
        %5819 = vmatpush1.msra.mxu0 0.0
        %5820 = vmatprep.subr.mxu0 0.0
        %5821 = vmatpush1.msra.mxu0 0.0
        %5822 = vmatprep.subr.mxu0 0.0
        %5823 = vmatpush1.msra.mxu0 0.0
        %5824 = vmatprep.subr.mxu0 0.0
        %5825 = vmatpush1.msra.mxu0 0.0
        %5826 = vmatprep.subr.mxu0 0.0
        %5827 = vmatpush1.msra.mxu0 0.0
        %5828 = vmatprep.subr.mxu0 0.0
        %5829 = vmatpush1.msra.mxu0 0.0
        %5830 = vmatprep.subr.mxu0 0.0
        %5831 = vmatpush1.msra.mxu0 0.0
        %5832 = vmatprep.subr.mxu0 0.0
        %5833 = vmatpush1.msra.mxu0 0.0
        %5834 = vmatprep.subr.mxu0 0.0
        %5835 = vmatpush1.msra.mxu0 0.0
        %5836 = vmatprep.subr.mxu0 0.0
        %5837 = vmatpush1.msra.mxu0 0.0
        %5838 = vmatprep.subr.mxu0 0.0
        %5839 = vmatpush1.msra.mxu0 0.0
        %5840 = vmatprep.subr.mxu0 0.0
        %5841 = vmatpush1.msra.mxu0 0.0
        %5842 = vmatprep.subr.mxu0 0.0
        %5843 = vmatpush1.msra.mxu0 0.0
        %5844 = vmatprep.subr.mxu0 0.0
        %5845 = vmatpush1.msra.mxu0 0.0
        %5846 = vmatprep.subr.mxu0 0.0
        %5847 = vmatpush1.msra.mxu0 0.0
        %5848 = vmatprep.subr.mxu0 0.0
        %5849 = vmatpush1.msra.mxu0 0.0
        %5850 = vmatprep.subr.mxu0 0.0
        %5851 = vmatpush1.msra.mxu0 0.0
        %5852 = vmatprep.subr.mxu0 0.0
        %5853 = vmatpush1.msra.mxu0 0.0
        %5854 = vmatprep.subr.mxu0 0.0
        %5855 = vmatpush1.msra.mxu0 0.0
        %5856 = vmatprep.subr.mxu0 0.0
        %5857 = vmatpush1.msra.mxu0 0.0
        %5858 = vmatprep.mubr.f32.mxu0 0.0
        %v5859 = vand.u32 %v4952, 4294901760
        %5860 = vmatmul.mubr.f32.gmra.mrb[0].mxu0 %v5859
        %v5861 = vpop.f32.mrb[0].mxu0
        %v5862 = vadd.f32 %v5790, %v5861
        %v5863 = vpop.f32.mrb[0].mxu0
        %5864 = vdwg.mxu0
        %v5865 = vadd.f32 %v4931, %v5415
        %v5866 = vadd.f32 %v4932, %v5417
        %v5867 = vadd.f32 %v4933, %v5862
        %s5868 = scalar_lea.vmem %s1, 48
        %v5869 = vld [vmem:[%s5868] sm:$0xff]
        %5870 = vrot.lane.b32.xlu0 %v277, 92
        %v5871 = vpop.permute.xlu0 %5870
        %5872 = vrot.lane.b32.xlu0 %v278, 92
        %v5873 = vpop.permute.xlu0 %5872
        %5874 = vrot.lane.b32.xlu0 %v279, 92
        %v5875 = vpop.permute.xlu0 %5874
        %5876 = vrot.lane.b32.xlu0 %v280, 92
        %v5877 = vpop.permute.xlu0 %5876
        %vm5878 = vcmask 752640
        %v5879 = vsel %vm5878, %v5871, %v5873
        %v5880 = vsel %vm5878, %v5873, %v5875
        %v5881 = vsel %vm5878, %v5875, %v5877
        %v5886 = vsel %vm303, %v5869, 0
        %v5888 = vand.u32 %v5880, 4294901760
        %5889 = vmatprep.subr.mxu0 %v5888
        %v5890 = vand.u32 %v5879, 4294901760
        %5891 = vmatpush1.msra.mxu0 %v5890
        %5892 = vmatprep.subr.mxu0 0.0
        %5893 = vmatpush1.msra.mxu0 0.0
        %5894 = vmatprep.subr.mxu0 0.0
        %5895 = vmatpush1.msra.mxu0 0.0
        %5896 = vmatprep.subr.mxu0 0.0
        %5897 = vmatpush1.msra.mxu0 0.0
        %5898 = vmatprep.subr.mxu0 0.0
        %5899 = vmatpush1.msra.mxu0 0.0
        %5900 = vmatprep.subr.mxu0 0.0
        %5901 = vmatpush1.msra.mxu0 0.0
        %5902 = vmatprep.subr.mxu0 0.0
        %5903 = vmatpush1.msra.mxu0 0.0
        %5904 = vmatprep.subr.mxu0 0.0
        %5905 = vmatpush1.msra.mxu0 0.0
        %5906 = vmatprep.subr.mxu0 0.0
        %5907 = vmatpush1.msra.mxu0 0.0
        %5908 = vmatprep.subr.mxu0 0.0
        %5909 = vmatpush1.msra.mxu0 0.0
        %5910 = vmatprep.subr.mxu0 0.0
        %5911 = vmatpush1.msra.mxu0 0.0
        %5912 = vmatprep.subr.mxu0 0.0
        %5913 = vmatpush1.msra.mxu0 0.0
        %5914 = vmatprep.subr.mxu0 0.0
        %5915 = vmatpush1.msra.mxu0 0.0
        %5916 = vmatprep.subr.mxu0 0.0
        %5917 = vmatpush1.msra.mxu0 0.0
        %5918 = vmatprep.subr.mxu0 0.0
        %5919 = vmatpush1.msra.mxu0 0.0
        %5920 = vmatprep.subr.mxu0 0.0
        %5921 = vmatpush1.msra.mxu0 0.0
        %5922 = vmatprep.subr.mxu0 0.0
        %5923 = vmatpush1.msra.mxu0 0.0
        %5924 = vmatprep.subr.mxu0 0.0
        %5925 = vmatpush1.msra.mxu0 0.0
        %5926 = vmatprep.subr.mxu0 0.0
        %5927 = vmatpush1.msra.mxu0 0.0
        %5928 = vmatprep.subr.mxu0 0.0
        %5929 = vmatpush1.msra.mxu0 0.0
        %5930 = vmatprep.subr.mxu0 0.0
        %5931 = vmatpush1.msra.mxu0 0.0
        %5932 = vmatprep.subr.mxu0 0.0
        %5933 = vmatpush1.msra.mxu0 0.0
        %5934 = vmatprep.subr.mxu0 0.0
        %5935 = vmatpush1.msra.mxu0 0.0
        %5936 = vmatprep.subr.mxu0 0.0
        %5937 = vmatpush1.msra.mxu0 0.0
        %5938 = vmatprep.subr.mxu0 0.0
        %5939 = vmatpush1.msra.mxu0 0.0
        %5940 = vmatprep.subr.mxu0 0.0
        %5941 = vmatpush1.msra.mxu0 0.0
        %5942 = vmatprep.subr.mxu0 0.0
        %5943 = vmatpush1.msra.mxu0 0.0
        %5944 = vmatprep.subr.mxu0 0.0
        %5945 = vmatpush1.msra.mxu0 0.0
        %5946 = vmatprep.subr.mxu0 0.0
        %5947 = vmatpush1.msra.mxu0 0.0
        %5948 = vmatprep.subr.mxu0 0.0
        %5949 = vmatpush1.msra.mxu0 0.0
        %5950 = vmatprep.subr.mxu0 0.0
        %5951 = vmatpush1.msra.mxu0 0.0
        %5952 = vmatprep.subr.mxu0 0.0
        %5953 = vmatpush1.msra.mxu0 0.0
        %5954 = vmatprep.mubr.f32.mxu0 0.0
        %v5955 = vand.u32 %v5886, 4294901760
        %v5956 = vsub.f32 %v5886, %v5955
        %v5957 = vand.u32 %v5956, 4294901760
        %v5958 = vsub.f32 %v5956, %v5957
        %v5959 = vand.u32 %v5958, 4294901760
        %5960 = vmatmul.mubr.f32.gmra.mrb[0].mxu0 %v5959
        %v5961 = vpop.f32.mrb[0].mxu0
        %v5962 = vadd.f32 0.0, %v5961
        %v5963 = vpop.f32.mrb[0].mxu0
        %v5964 = vadd.f32 0.0, %v5963
        %5965 = vdwg.mxu0
        %v5966 = vand.u32 %v5880, 4294901760
        %v5967 = vsub.f32 %v5880, %v5966
        %v5968 = vand.u32 %v5967, 4294901760
        %v5969 = vsub.f32 %v5967, %v5968
        %v5970 = vand.u32 %v5969, 4294901760
        %5971 = vmatprep.subr.mxu0 %v5970
        %v5972 = vand.u32 %v5879, 4294901760
        %v5973 = vsub.f32 %v5879, %v5972
        %v5974 = vand.u32 %v5973, 4294901760
        %v5975 = vsub.f32 %v5973, %v5974
        %v5976 = vand.u32 %v5975, 4294901760
        %5977 = vmatpush1.msra.mxu0 %v5976
        %5978 = vmatprep.subr.mxu0 0.0
        %5979 = vmatpush1.msra.mxu0 0.0
        %5980 = vmatprep.subr.mxu0 0.0
        %5981 = vmatpush1.msra.mxu0 0.0
        %5982 = vmatprep.subr.mxu0 0.0
        %5983 = vmatpush1.msra.mxu0 0.0
        %5984 = vmatprep.subr.mxu0 0.0
        %5985 = vmatpush1.msra.mxu0 0.0
        %5986 = vmatprep.subr.mxu0 0.0
        %5987 = vmatpush1.msra.mxu0 0.0
        %5988 = vmatprep.subr.mxu0 0.0
        %5989 = vmatpush1.msra.mxu0 0.0
        %5990 = vmatprep.subr.mxu0 0.0
        %5991 = vmatpush1.msra.mxu0 0.0
        %5992 = vmatprep.subr.mxu0 0.0
        %5993 = vmatpush1.msra.mxu0 0.0
        %5994 = vmatprep.subr.mxu0 0.0
        %5995 = vmatpush1.msra.mxu0 0.0
        %5996 = vmatprep.subr.mxu0 0.0
        %5997 = vmatpush1.msra.mxu0 0.0
        %5998 = vmatprep.subr.mxu0 0.0
        %5999 = vmatpush1.msra.mxu0 0.0
        %6000 = vmatprep.subr.mxu0 0.0
        %6001 = vmatpush1.msra.mxu0 0.0
        %6002 = vmatprep.subr.mxu0 0.0
        %6003 = vmatpush1.msra.mxu0 0.0
        %6004 = vmatprep.subr.mxu0 0.0
        %6005 = vmatpush1.msra.mxu0 0.0
        %6006 = vmatprep.subr.mxu0 0.0
        %6007 = vmatpush1.msra.mxu0 0.0
        %6008 = vmatprep.subr.mxu0 0.0
        %6009 = vmatpush1.msra.mxu0 0.0
        %6010 = vmatprep.subr.mxu0 0.0
        %6011 = vmatpush1.msra.mxu0 0.0
        %6012 = vmatprep.subr.mxu0 0.0
        %6013 = vmatpush1.msra.mxu0 0.0
        %6014 = vmatprep.subr.mxu0 0.0
        %6015 = vmatpush1.msra.mxu0 0.0
        %6016 = vmatprep.subr.mxu0 0.0
        %6017 = vmatpush1.msra.mxu0 0.0
        %6018 = vmatprep.subr.mxu0 0.0
        %6019 = vmatpush1.msra.mxu0 0.0
        %6020 = vmatprep.subr.mxu0 0.0
        %6021 = vmatpush1.msra.mxu0 0.0
        %6022 = vmatprep.subr.mxu0 0.0
        %6023 = vmatpush1.msra.mxu0 0.0
        %6024 = vmatprep.subr.mxu0 0.0
        %6025 = vmatpush1.msra.mxu0 0.0
        %6026 = vmatprep.subr.mxu0 0.0
        %6027 = vmatpush1.msra.mxu0 0.0
        %6028 = vmatprep.subr.mxu0 0.0
        %6029 = vmatpush1.msra.mxu0 0.0
        %6030 = vmatprep.subr.mxu0 0.0
        %6031 = vmatpush1.msra.mxu0 0.0
        %6032 = vmatprep.subr.mxu0 0.0
        %6033 = vmatpush1.msra.mxu0 0.0
        %6034 = vmatprep.subr.mxu0 0.0
        %6035 = vmatpush1.msra.mxu0 0.0
        %6036 = vmatprep.subr.mxu0 0.0
        %6037 = vmatpush1.msra.mxu0 0.0
        %6038 = vmatprep.subr.mxu0 0.0
        %6039 = vmatpush1.msra.mxu0 0.0
        %6040 = vmatprep.mubr.f32.mxu0 0.0
        %v6041 = vand.u32 %v5886, 4294901760
        %6042 = vmatmul.mubr.f32.gmra.mrb[0].mxu0 %v6041
        %v6043 = vpop.f32.mrb[0].mxu0
        %v6044 = vadd.f32 %v5962, %v6043
        %v6045 = vpop.f32.mrb[0].mxu0
        %v6046 = vadd.f32 %v5964, %v6045
        %6047 = vdwg.mxu0
        %v6048 = vand.u32 %v5880, 4294901760
        %v6049 = vsub.f32 %v5880, %v6048
        %6050 = vmatprep.subr.mxu0 %v6049
        %v6051 = vand.u32 %v5879, 4294901760
        %v6052 = vsub.f32 %v5879, %v6051
        %6053 = vmatpush1.msra.mxu0 %v6052
        %6054 = vmatprep.subr.mxu0 0.0
        %6055 = vmatpush1.msra.mxu0 0.0
        %6056 = vmatprep.subr.mxu0 0.0
        %6057 = vmatpush1.msra.mxu0 0.0
        %6058 = vmatprep.subr.mxu0 0.0
        %6059 = vmatpush1.msra.mxu0 0.0
        %6060 = vmatprep.subr.mxu0 0.0
        %6061 = vmatpush1.msra.mxu0 0.0
        %6062 = vmatprep.subr.mxu0 0.0
        %6063 = vmatpush1.msra.mxu0 0.0
        %6064 = vmatprep.subr.mxu0 0.0
        %6065 = vmatpush1.msra.mxu0 0.0
        %6066 = vmatprep.subr.mxu0 0.0
        %6067 = vmatpush1.msra.mxu0 0.0
        %6068 = vmatprep.subr.mxu0 0.0
        %6069 = vmatpush1.msra.mxu0 0.0
        %6070 = vmatprep.subr.mxu0 0.0
        %6071 = vmatpush1.msra.mxu0 0.0
        %6072 = vmatprep.subr.mxu0 0.0
        %6073 = vmatpush1.msra.mxu0 0.0
        %6074 = vmatprep.subr.mxu0 0.0
        %6075 = vmatpush1.msra.mxu0 0.0
        %6076 = vmatprep.subr.mxu0 0.0
        %6077 = vmatpush1.msra.mxu0 0.0
        %6078 = vmatprep.subr.mxu0 0.0
        %6079 = vmatpush1.msra.mxu0 0.0
        %6080 = vmatprep.subr.mxu0 0.0
        %6081 = vmatpush1.msra.mxu0 0.0
        %6082 = vmatprep.subr.mxu0 0.0
        %6083 = vmatpush1.msra.mxu0 0.0
        %6084 = vmatprep.subr.mxu0 0.0
        %6085 = vmatpush1.msra.mxu0 0.0
        %6086 = vmatprep.subr.mxu0 0.0
        %6087 = vmatpush1.msra.mxu0 0.0
        %6088 = vmatprep.subr.mxu0 0.0
        %6089 = vmatpush1.msra.mxu0 0.0
        %6090 = vmatprep.subr.mxu0 0.0
        %6091 = vmatpush1.msra.mxu0 0.0
        %6092 = vmatprep.subr.mxu0 0.0
        %6093 = vmatpush1.msra.mxu0 0.0
        %6094 = vmatprep.subr.mxu0 0.0
        %6095 = vmatpush1.msra.mxu0 0.0
        %6096 = vmatprep.subr.mxu0 0.0
        %6097 = vmatpush1.msra.mxu0 0.0
        %6098 = vmatprep.subr.mxu0 0.0
        %6099 = vmatpush1.msra.mxu0 0.0
        %6100 = vmatprep.subr.mxu0 0.0
        %6101 = vmatpush1.msra.mxu0 0.0
        %6102 = vmatprep.subr.mxu0 0.0
        %6103 = vmatpush1.msra.mxu0 0.0
        %6104 = vmatprep.subr.mxu0 0.0
        %6105 = vmatpush1.msra.mxu0 0.0
        %6106 = vmatprep.subr.mxu0 0.0
        %6107 = vmatpush1.msra.mxu0 0.0
        %6108 = vmatprep.subr.mxu0 0.0
        %6109 = vmatpush1.msra.mxu0 0.0
        %6110 = vmatprep.subr.mxu0 0.0
        %6111 = vmatpush1.msra.mxu0 0.0
        %6112 = vmatprep.subr.mxu0 0.0
        %6113 = vmatpush1.msra.mxu0 0.0
        %6114 = vmatprep.subr.mxu0 0.0
        %6115 = vmatpush1.msra.mxu0 0.0
        %6116 = vmatprep.mubr.f32.mxu0 0.0
        %v6117 = vand.u32 %v5886, 4294901760
        %v6118 = vsub.f32 %v5886, %v6117
        %6119 = vmatmul.mubr.f32.gmra.mrb[0].mxu0 %v6118
        %v6120 = vpop.f32.mrb[0].mxu0
        %v6121 = vadd.f32 %v6044, %v6120
        %v6122 = vpop.f32.mrb[0].mxu0
        %v6123 = vadd.f32 %v6046, %v6122
        %6124 = vdwg.mxu0
        %v6125 = vand.u32 %v5880, 4294901760
        %6126 = vmatprep.subr.mxu0 %v6125
        %v6127 = vand.u32 %v5879, 4294901760
        %6128 = vmatpush1.msra.mxu0 %v6127
        %6129 = vmatprep.subr.mxu0 0.0
        %6130 = vmatpush1.msra.mxu0 0.0
        %6131 = vmatprep.subr.mxu0 0.0
        %6132 = vmatpush1.msra.mxu0 0.0
        %6133 = vmatprep.subr.mxu0 0.0
        %6134 = vmatpush1.msra.mxu0 0.0
        %6135 = vmatprep.subr.mxu0 0.0
        %6136 = vmatpush1.msra.mxu0 0.0
        %6137 = vmatprep.subr.mxu0 0.0
        %6138 = vmatpush1.msra.mxu0 0.0
        %6139 = vmatprep.subr.mxu0 0.0
        %6140 = vmatpush1.msra.mxu0 0.0
        %6141 = vmatprep.subr.mxu0 0.0
        %6142 = vmatpush1.msra.mxu0 0.0
        %6143 = vmatprep.subr.mxu0 0.0
        %6144 = vmatpush1.msra.mxu0 0.0
        %6145 = vmatprep.subr.mxu0 0.0
        %6146 = vmatpush1.msra.mxu0 0.0
        %6147 = vmatprep.subr.mxu0 0.0
        %6148 = vmatpush1.msra.mxu0 0.0
        %6149 = vmatprep.subr.mxu0 0.0
        %6150 = vmatpush1.msra.mxu0 0.0
        %6151 = vmatprep.subr.mxu0 0.0
        %6152 = vmatpush1.msra.mxu0 0.0
        %6153 = vmatprep.subr.mxu0 0.0
        %6154 = vmatpush1.msra.mxu0 0.0
        %6155 = vmatprep.subr.mxu0 0.0
        %6156 = vmatpush1.msra.mxu0 0.0
        %6157 = vmatprep.subr.mxu0 0.0
        %6158 = vmatpush1.msra.mxu0 0.0
        %6159 = vmatprep.subr.mxu0 0.0
        %6160 = vmatpush1.msra.mxu0 0.0
        %6161 = vmatprep.subr.mxu0 0.0
        %6162 = vmatpush1.msra.mxu0 0.0
        %6163 = vmatprep.subr.mxu0 0.0
        %6164 = vmatpush1.msra.mxu0 0.0
        %6165 = vmatprep.subr.mxu0 0.0
        %6166 = vmatpush1.msra.mxu0 0.0
        %6167 = vmatprep.subr.mxu0 0.0
        %6168 = vmatpush1.msra.mxu0 0.0
        %6169 = vmatprep.subr.mxu0 0.0
        %6170 = vmatpush1.msra.mxu0 0.0
        %6171 = vmatprep.subr.mxu0 0.0
        %6172 = vmatpush1.msra.mxu0 0.0
        %6173 = vmatprep.subr.mxu0 0.0
        %6174 = vmatpush1.msra.mxu0 0.0
        %6175 = vmatprep.subr.mxu0 0.0
        %6176 = vmatpush1.msra.mxu0 0.0
        %6177 = vmatprep.subr.mxu0 0.0
        %6178 = vmatpush1.msra.mxu0 0.0
        %6179 = vmatprep.subr.mxu0 0.0
        %6180 = vmatpush1.msra.mxu0 0.0
        %6181 = vmatprep.subr.mxu0 0.0
        %6182 = vmatpush1.msra.mxu0 0.0
        %6183 = vmatprep.subr.mxu0 0.0
        %6184 = vmatpush1.msra.mxu0 0.0
        %6185 = vmatprep.subr.mxu0 0.0
        %6186 = vmatpush1.msra.mxu0 0.0
        %6187 = vmatprep.subr.mxu0 0.0
        %6188 = vmatpush1.msra.mxu0 0.0
        %6189 = vmatprep.subr.mxu0 0.0
        %6190 = vmatpush1.msra.mxu0 0.0
        %6191 = vmatprep.mubr.f32.mxu0 0.0
        %v6192 = vand.u32 %v5886, 4294901760
        %v6193 = vsub.f32 %v5886, %v6192
        %v6194 = vand.u32 %v6193, 4294901760
        %6195 = vmatmul.mubr.f32.gmra.mrb[0].mxu0 %v6194
        %v6196 = vpop.f32.mrb[0].mxu0
        %v6197 = vadd.f32 %v6121, %v6196
        %v6198 = vpop.f32.mrb[0].mxu0
        %v6199 = vadd.f32 %v6123, %v6198
        %6200 = vdwg.mxu0
        %v6201 = vand.u32 %v5880, 4294901760
        %v6202 = vsub.f32 %v5880, %v6201
        %v6203 = vand.u32 %v6202, 4294901760
        %6204 = vmatprep.subr.mxu0 %v6203
        %v6205 = vand.u32 %v5879, 4294901760
        %v6206 = vsub.f32 %v5879, %v6205
        %v6207 = vand.u32 %v6206, 4294901760
        %6208 = vmatpush1.msra.mxu0 %v6207
        %6209 = vmatprep.subr.mxu0 0.0
        %6210 = vmatpush1.msra.mxu0 0.0
        %6211 = vmatprep.subr.mxu0 0.0
        %6212 = vmatpush1.msra.mxu0 0.0
        %6213 = vmatprep.subr.mxu0 0.0
        %6214 = vmatpush1.msra.mxu0 0.0
        %6215 = vmatprep.subr.mxu0 0.0
        %6216 = vmatpush1.msra.mxu0 0.0
        %6217 = vmatprep.subr.mxu0 0.0
        %6218 = vmatpush1.msra.mxu0 0.0
        %6219 = vmatprep.subr.mxu0 0.0
        %6220 = vmatpush1.msra.mxu0 0.0
        %6221 = vmatprep.subr.mxu0 0.0
        %6222 = vmatpush1.msra.mxu0 0.0
        %6223 = vmatprep.subr.mxu0 0.0
        %6224 = vmatpush1.msra.mxu0 0.0
        %6225 = vmatprep.subr.mxu0 0.0
        %6226 = vmatpush1.msra.mxu0 0.0
        %6227 = vmatprep.subr.mxu0 0.0
        %6228 = vmatpush1.msra.mxu0 0.0
        %6229 = vmatprep.subr.mxu0 0.0
        %6230 = vmatpush1.msra.mxu0 0.0
        %6231 = vmatprep.subr.mxu0 0.0
        %6232 = vmatpush1.msra.mxu0 0.0
        %6233 = vmatprep.subr.mxu0 0.0
        %6234 = vmatpush1.msra.mxu0 0.0
        %6235 = vmatprep.subr.mxu0 0.0
        %6236 = vmatpush1.msra.mxu0 0.0
        %6237 = vmatprep.subr.mxu0 0.0
        %6238 = vmatpush1.msra.mxu0 0.0
        %6239 = vmatprep.subr.mxu0 0.0
        %6240 = vmatpush1.msra.mxu0 0.0
        %6241 = vmatprep.subr.mxu0 0.0
        %6242 = vmatpush1.msra.mxu0 0.0
        %6243 = vmatprep.subr.mxu0 0.0
        %6244 = vmatpush1.msra.mxu0 0.0
        %6245 = vmatprep.subr.mxu0 0.0
        %6246 = vmatpush1.msra.mxu0 0.0
        %6247 = vmatprep.subr.mxu0 0.0
        %6248 = vmatpush1.msra.mxu0 0.0
        %6249 = vmatprep.subr.mxu0 0.0
        %6250 = vmatpush1.msra.mxu0 0.0
        %6251 = vmatprep.subr.mxu0 0.0
        %6252 = vmatpush1.msra.mxu0 0.0
        %6253 = vmatprep.subr.mxu0 0.0
        %6254 = vmatpush1.msra.mxu0 0.0
        %6255 = vmatprep.subr.mxu0 0.0
        %6256 = vmatpush1.msra.mxu0 0.0
        %6257 = vmatprep.subr.mxu0 0.0
        %6258 = vmatpush1.msra.mxu0 0.0
        %6259 = vmatprep.subr.mxu0 0.0
        %6260 = vmatpush1.msra.mxu0 0.0
        %6261 = vmatprep.subr.mxu0 0.0
        %6262 = vmatpush1.msra.mxu0 0.0
        %6263 = vmatprep.subr.mxu0 0.0
        %6264 = vmatpush1.msra.mxu0 0.0
        %6265 = vmatprep.subr.mxu0 0.0
        %6266 = vmatpush1.msra.mxu0 0.0
        %6267 = vmatprep.subr.mxu0 0.0
        %6268 = vmatpush1.msra.mxu0 0.0
        %6269 = vmatprep.subr.mxu0 0.0
        %6270 = vmatpush1.msra.mxu0 0.0
        %6271 = vmatprep.mubr.f32.mxu0 0.0
        %v6272 = vand.u32 %v5886, 4294901760
        %6273 = vmatmul.mubr.f32.gmra.mrb[0].mxu0 %v6272
        %v6274 = vpop.f32.mrb[0].mxu0
        %v6275 = vadd.f32 %v6197, %v6274
        %v6276 = vpop.f32.mrb[0].mxu0
        %v6277 = vadd.f32 %v6199, %v6276
        %6278 = vdwg.mxu0
        %v6279 = vand.u32 %v5880, 4294901760
        %6280 = vmatprep.subr.mxu0 %v6279
        %v6281 = vand.u32 %v5879, 4294901760
        %6282 = vmatpush1.msra.mxu0 %v6281
        %6283 = vmatprep.subr.mxu0 0.0
        %6284 = vmatpush1.msra.mxu0 0.0
        %6285 = vmatprep.subr.mxu0 0.0
        %6286 = vmatpush1.msra.mxu0 0.0
        %6287 = vmatprep.subr.mxu0 0.0
        %6288 = vmatpush1.msra.mxu0 0.0
        %6289 = vmatprep.subr.mxu0 0.0
        %6290 = vmatpush1.msra.mxu0 0.0
        %6291 = vmatprep.subr.mxu0 0.0
        %6292 = vmatpush1.msra.mxu0 0.0
        %6293 = vmatprep.subr.mxu0 0.0
        %6294 = vmatpush1.msra.mxu0 0.0
        %6295 = vmatprep.subr.mxu0 0.0
        %6296 = vmatpush1.msra.mxu0 0.0
        %6297 = vmatprep.subr.mxu0 0.0
        %6298 = vmatpush1.msra.mxu0 0.0
        %6299 = vmatprep.subr.mxu0 0.0
        %6300 = vmatpush1.msra.mxu0 0.0
        %6301 = vmatprep.subr.mxu0 0.0
        %6302 = vmatpush1.msra.mxu0 0.0
        %6303 = vmatprep.subr.mxu0 0.0
        %6304 = vmatpush1.msra.mxu0 0.0
        %6305 = vmatprep.subr.mxu0 0.0
        %6306 = vmatpush1.msra.mxu0 0.0
        %6307 = vmatprep.subr.mxu0 0.0
        %6308 = vmatpush1.msra.mxu0 0.0
        %6309 = vmatprep.subr.mxu0 0.0
        %6310 = vmatpush1.msra.mxu0 0.0
        %6311 = vmatprep.subr.mxu0 0.0
        %6312 = vmatpush1.msra.mxu0 0.0
        %6313 = vmatprep.subr.mxu0 0.0
        %6314 = vmatpush1.msra.mxu0 0.0
        %6315 = vmatprep.subr.mxu0 0.0
        %6316 = vmatpush1.msra.mxu0 0.0
        %6317 = vmatprep.subr.mxu0 0.0
        %6318 = vmatpush1.msra.mxu0 0.0
        %6319 = vmatprep.subr.mxu0 0.0
        %6320 = vmatpush1.msra.mxu0 0.0
        %6321 = vmatprep.subr.mxu0 0.0
        %6322 = vmatpush1.msra.mxu0 0.0
        %6323 = vmatprep.subr.mxu0 0.0
        %6324 = vmatpush1.msra.mxu0 0.0
        %6325 = vmatprep.subr.mxu0 0.0
        %6326 = vmatpush1.msra.mxu0 0.0
        %6327 = vmatprep.subr.mxu0 0.0
        %6328 = vmatpush1.msra.mxu0 0.0
        %6329 = vmatprep.subr.mxu0 0.0
        %6330 = vmatpush1.msra.mxu0 0.0
        %6331 = vmatprep.subr.mxu0 0.0
        %6332 = vmatpush1.msra.mxu0 0.0
        %6333 = vmatprep.subr.mxu0 0.0
        %6334 = vmatpush1.msra.mxu0 0.0
        %6335 = vmatprep.subr.mxu0 0.0
        %6336 = vmatpush1.msra.mxu0 0.0
        %6337 = vmatprep.subr.mxu0 0.0
        %6338 = vmatpush1.msra.mxu0 0.0
        %6339 = vmatprep.subr.mxu0 0.0
        %6340 = vmatpush1.msra.mxu0 0.0
        %6341 = vmatprep.subr.mxu0 0.0
        %6342 = vmatpush1.msra.mxu0 0.0
        %6343 = vmatprep.subr.mxu0 0.0
        %6344 = vmatpush1.msra.mxu0 0.0
        %6345 = vmatprep.mubr.f32.mxu0 0.0
        %v6346 = vand.u32 %v5886, 4294901760
        %6347 = vmatmul.mubr.f32.gmra.mrb[0].mxu0 %v6346
        %v6348 = vpop.f32.mrb[0].mxu0
        %v6349 = vadd.f32 %v6275, %v6348
        %v6350 = vpop.f32.mrb[0].mxu0
        %v6351 = vadd.f32 %v6277, %v6350
        %6352 = vdwg.mxu0
        %6353 = vmatprep.subr.mxu0 0.0
        %v6354 = vand.u32 %v5881, 4294901760
        %6355 = vmatpush1.msra.mxu0 %v6354
        %6356 = vmatprep.subr.mxu0 0.0
        %6357 = vmatpush1.msra.mxu0 0.0
        %6358 = vmatprep.subr.mxu0 0.0
        %6359 = vmatpush1.msra.mxu0 0.0
        %6360 = vmatprep.subr.mxu0 0.0
        %6361 = vmatpush1.msra.mxu0 0.0
        %6362 = vmatprep.subr.mxu0 0.0
        %6363 = vmatpush1.msra.mxu0 0.0
        %6364 = vmatprep.subr.mxu0 0.0
        %6365 = vmatpush1.msra.mxu0 0.0
        %6366 = vmatprep.subr.mxu0 0.0
        %6367 = vmatpush1.msra.mxu0 0.0
        %6368 = vmatprep.subr.mxu0 0.0
        %6369 = vmatpush1.msra.mxu0 0.0
        %6370 = vmatprep.subr.mxu0 0.0
        %6371 = vmatpush1.msra.mxu0 0.0
        %6372 = vmatprep.subr.mxu0 0.0
        %6373 = vmatpush1.msra.mxu0 0.0
        %6374 = vmatprep.subr.mxu0 0.0
        %6375 = vmatpush1.msra.mxu0 0.0
        %6376 = vmatprep.subr.mxu0 0.0
        %6377 = vmatpush1.msra.mxu0 0.0
        %6378 = vmatprep.subr.mxu0 0.0
        %6379 = vmatpush1.msra.mxu0 0.0
        %6380 = vmatprep.subr.mxu0 0.0
        %6381 = vmatpush1.msra.mxu0 0.0
        %6382 = vmatprep.subr.mxu0 0.0
        %6383 = vmatpush1.msra.mxu0 0.0
        %6384 = vmatprep.subr.mxu0 0.0
        %6385 = vmatpush1.msra.mxu0 0.0
        %6386 = vmatprep.subr.mxu0 0.0
        %6387 = vmatpush1.msra.mxu0 0.0
        %6388 = vmatprep.subr.mxu0 0.0
        %6389 = vmatpush1.msra.mxu0 0.0
        %6390 = vmatprep.subr.mxu0 0.0
        %6391 = vmatpush1.msra.mxu0 0.0
        %6392 = vmatprep.subr.mxu0 0.0
        %6393 = vmatpush1.msra.mxu0 0.0
        %6394 = vmatprep.subr.mxu0 0.0
        %6395 = vmatpush1.msra.mxu0 0.0
        %6396 = vmatprep.subr.mxu0 0.0
        %6397 = vmatpush1.msra.mxu0 0.0
        %6398 = vmatprep.subr.mxu0 0.0
        %6399 = vmatpush1.msra.mxu0 0.0
        %6400 = vmatprep.subr.mxu0 0.0
        %6401 = vmatpush1.msra.mxu0 0.0
        %6402 = vmatprep.subr.mxu0 0.0
        %6403 = vmatpush1.msra.mxu0 0.0
        %6404 = vmatprep.subr.mxu0 0.0
        %6405 = vmatpush1.msra.mxu0 0.0
        %6406 = vmatprep.subr.mxu0 0.0
        %6407 = vmatpush1.msra.mxu0 0.0
        %6408 = vmatprep.subr.mxu0 0.0
        %6409 = vmatpush1.msra.mxu0 0.0
        %6410 = vmatprep.subr.mxu0 0.0
        %6411 = vmatpush1.msra.mxu0 0.0
        %6412 = vmatprep.subr.mxu0 0.0
        %6413 = vmatpush1.msra.mxu0 0.0
        %6414 = vmatprep.subr.mxu0 0.0
        %6415 = vmatpush1.msra.mxu0 0.0
        %6416 = vmatprep.subr.mxu0 0.0
        %6417 = vmatpush1.msra.mxu0 0.0
        %6418 = vmatprep.mubr.f32.mxu0 0.0
        %v6419 = vand.u32 %v5886, 4294901760
        %v6420 = vsub.f32 %v5886, %v6419
        %v6421 = vand.u32 %v6420, 4294901760
        %v6422 = vsub.f32 %v6420, %v6421
        %v6423 = vand.u32 %v6422, 4294901760
        %6424 = vmatmul.mubr.f32.gmra.mrb[0].mxu0 %v6423
        %v6425 = vpop.f32.mrb[0].mxu0
        %v6426 = vadd.f32 0.0, %v6425
        %v6427 = vpop.f32.mrb[0].mxu0
        %6428 = vdwg.mxu0
        %6429 = vmatprep.subr.mxu0 0.0
        %v6430 = vand.u32 %v5881, 4294901760
        %v6431 = vsub.f32 %v5881, %v6430
        %v6432 = vand.u32 %v6431, 4294901760
        %v6433 = vsub.f32 %v6431, %v6432
        %v6434 = vand.u32 %v6433, 4294901760
        %6435 = vmatpush1.msra.mxu0 %v6434
        %6436 = vmatprep.subr.mxu0 0.0
        %6437 = vmatpush1.msra.mxu0 0.0
        %6438 = vmatprep.subr.mxu0 0.0
        %6439 = vmatpush1.msra.mxu0 0.0
        %6440 = vmatprep.subr.mxu0 0.0
        %6441 = vmatpush1.msra.mxu0 0.0
        %6442 = vmatprep.subr.mxu0 0.0
        %6443 = vmatpush1.msra.mxu0 0.0
        %6444 = vmatprep.subr.mxu0 0.0
        %6445 = vmatpush1.msra.mxu0 0.0
        %6446 = vmatprep.subr.mxu0 0.0
        %6447 = vmatpush1.msra.mxu0 0.0
        %6448 = vmatprep.subr.mxu0 0.0
        %6449 = vmatpush1.msra.mxu0 0.0
        %6450 = vmatprep.subr.mxu0 0.0
        %6451 = vmatpush1.msra.mxu0 0.0
        %6452 = vmatprep.subr.mxu0 0.0
        %6453 = vmatpush1.msra.mxu0 0.0
        %6454 = vmatprep.subr.mxu0 0.0
        %6455 = vmatpush1.msra.mxu0 0.0
        %6456 = vmatprep.subr.mxu0 0.0
        %6457 = vmatpush1.msra.mxu0 0.0
        %6458 = vmatprep.subr.mxu0 0.0
        %6459 = vmatpush1.msra.mxu0 0.0
        %6460 = vmatprep.subr.mxu0 0.0
        %6461 = vmatpush1.msra.mxu0 0.0
        %6462 = vmatprep.subr.mxu0 0.0
        %6463 = vmatpush1.msra.mxu0 0.0
        %6464 = vmatprep.subr.mxu0 0.0
        %6465 = vmatpush1.msra.mxu0 0.0
        %6466 = vmatprep.subr.mxu0 0.0
        %6467 = vmatpush1.msra.mxu0 0.0
        %6468 = vmatprep.subr.mxu0 0.0
        %6469 = vmatpush1.msra.mxu0 0.0
        %6470 = vmatprep.subr.mxu0 0.0
        %6471 = vmatpush1.msra.mxu0 0.0
        %6472 = vmatprep.subr.mxu0 0.0
        %6473 = vmatpush1.msra.mxu0 0.0
        %6474 = vmatprep.subr.mxu0 0.0
        %6475 = vmatpush1.msra.mxu0 0.0
        %6476 = vmatprep.subr.mxu0 0.0
        %6477 = vmatpush1.msra.mxu0 0.0
        %6478 = vmatprep.subr.mxu0 0.0
        %6479 = vmatpush1.msra.mxu0 0.0
        %6480 = vmatprep.subr.mxu0 0.0
        %6481 = vmatpush1.msra.mxu0 0.0
        %6482 = vmatprep.subr.mxu0 0.0
        %6483 = vmatpush1.msra.mxu0 0.0
        %6484 = vmatprep.subr.mxu0 0.0
        %6485 = vmatpush1.msra.mxu0 0.0
        %6486 = vmatprep.subr.mxu0 0.0
        %6487 = vmatpush1.msra.mxu0 0.0
        %6488 = vmatprep.subr.mxu0 0.0
        %6489 = vmatpush1.msra.mxu0 0.0
        %6490 = vmatprep.subr.mxu0 0.0
        %6491 = vmatpush1.msra.mxu0 0.0
        %6492 = vmatprep.subr.mxu0 0.0
        %6493 = vmatpush1.msra.mxu0 0.0
        %6494 = vmatprep.subr.mxu0 0.0
        %6495 = vmatpush1.msra.mxu0 0.0
        %6496 = vmatprep.subr.mxu0 0.0
        %6497 = vmatpush1.msra.mxu0 0.0
        %6498 = vmatprep.mubr.f32.mxu0 0.0
        %v6499 = vand.u32 %v5886, 4294901760
        %6500 = vmatmul.mubr.f32.gmra.mrb[0].mxu0 %v6499
        %v6501 = vpop.f32.mrb[0].mxu0
        %v6502 = vadd.f32 %v6426, %v6501
        %v6503 = vpop.f32.mrb[0].mxu0
        %6504 = vdwg.mxu0
        %6505 = vmatprep.subr.mxu0 0.0
        %v6506 = vand.u32 %v5881, 4294901760
        %v6507 = vsub.f32 %v5881, %v6506
        %6508 = vmatpush1.msra.mxu0 %v6507
        %6509 = vmatprep.subr.mxu0 0.0
        %6510 = vmatpush1.msra.mxu0 0.0
        %6511 = vmatprep.subr.mxu0 0.0
        %6512 = vmatpush1.msra.mxu0 0.0
        %6513 = vmatprep.subr.mxu0 0.0
        %6514 = vmatpush1.msra.mxu0 0.0
        %6515 = vmatprep.subr.mxu0 0.0
        %6516 = vmatpush1.msra.mxu0 0.0
        %6517 = vmatprep.subr.mxu0 0.0
        %6518 = vmatpush1.msra.mxu0 0.0
        %6519 = vmatprep.subr.mxu0 0.0
        %6520 = vmatpush1.msra.mxu0 0.0
        %6521 = vmatprep.subr.mxu0 0.0
        %6522 = vmatpush1.msra.mxu0 0.0
        %6523 = vmatprep.subr.mxu0 0.0
        %6524 = vmatpush1.msra.mxu0 0.0
        %6525 = vmatprep.subr.mxu0 0.0
        %6526 = vmatpush1.msra.mxu0 0.0
        %6527 = vmatprep.subr.mxu0 0.0
        %6528 = vmatpush1.msra.mxu0 0.0
        %6529 = vmatprep.subr.mxu0 0.0
        %6530 = vmatpush1.msra.mxu0 0.0
        %6531 = vmatprep.subr.mxu0 0.0
        %6532 = vmatpush1.msra.mxu0 0.0
        %6533 = vmatprep.subr.mxu0 0.0
        %6534 = vmatpush1.msra.mxu0 0.0
        %6535 = vmatprep.subr.mxu0 0.0
        %6536 = vmatpush1.msra.mxu0 0.0
        %6537 = vmatprep.subr.mxu0 0.0
        %6538 = vmatpush1.msra.mxu0 0.0
        %6539 = vmatprep.subr.mxu0 0.0
        %6540 = vmatpush1.msra.mxu0 0.0
        %6541 = vmatprep.subr.mxu0 0.0
        %6542 = vmatpush1.msra.mxu0 0.0
        %6543 = vmatprep.subr.mxu0 0.0
        %6544 = vmatpush1.msra.mxu0 0.0
        %6545 = vmatprep.subr.mxu0 0.0
        %6546 = vmatpush1.msra.mxu0 0.0
        %6547 = vmatprep.subr.mxu0 0.0
        %6548 = vmatpush1.msra.mxu0 0.0
        %6549 = vmatprep.subr.mxu0 0.0
        %6550 = vmatpush1.msra.mxu0 0.0
        %6551 = vmatprep.subr.mxu0 0.0
        %6552 = vmatpush1.msra.mxu0 0.0
        %6553 = vmatprep.subr.mxu0 0.0
        %6554 = vmatpush1.msra.mxu0 0.0
        %6555 = vmatprep.subr.mxu0 0.0
        %6556 = vmatpush1.msra.mxu0 0.0
        %6557 = vmatprep.subr.mxu0 0.0
        %6558 = vmatpush1.msra.mxu0 0.0
        %6559 = vmatprep.subr.mxu0 0.0
        %6560 = vmatpush1.msra.mxu0 0.0
        %6561 = vmatprep.subr.mxu0 0.0
        %6562 = vmatpush1.msra.mxu0 0.0
        %6563 = vmatprep.subr.mxu0 0.0
        %6564 = vmatpush1.msra.mxu0 0.0
        %6565 = vmatprep.subr.mxu0 0.0
        %6566 = vmatpush1.msra.mxu0 0.0
        %6567 = vmatprep.subr.mxu0 0.0
        %6568 = vmatpush1.msra.mxu0 0.0
        %6569 = vmatprep.subr.mxu0 0.0
        %6570 = vmatpush1.msra.mxu0 0.0
        %6571 = vmatprep.mubr.f32.mxu0 0.0
        %v6572 = vand.u32 %v5886, 4294901760
        %v6573 = vsub.f32 %v5886, %v6572
        %6574 = vmatmul.mubr.f32.gmra.mrb[0].mxu0 %v6573
        %v6575 = vpop.f32.mrb[0].mxu0
        %v6576 = vadd.f32 %v6502, %v6575
        %v6577 = vpop.f32.mrb[0].mxu0
        %6578 = vdwg.mxu0
        %6579 = vmatprep.subr.mxu0 0.0
        %v6580 = vand.u32 %v5881, 4294901760
        %6581 = vmatpush1.msra.mxu0 %v6580
        %6582 = vmatprep.subr.mxu0 0.0
        %6583 = vmatpush1.msra.mxu0 0.0
        %6584 = vmatprep.subr.mxu0 0.0
        %6585 = vmatpush1.msra.mxu0 0.0
        %6586 = vmatprep.subr.mxu0 0.0
        %6587 = vmatpush1.msra.mxu0 0.0
        %6588 = vmatprep.subr.mxu0 0.0
        %6589 = vmatpush1.msra.mxu0 0.0
        %6590 = vmatprep.subr.mxu0 0.0
        %6591 = vmatpush1.msra.mxu0 0.0
        %6592 = vmatprep.subr.mxu0 0.0
        %6593 = vmatpush1.msra.mxu0 0.0
        %6594 = vmatprep.subr.mxu0 0.0
        %6595 = vmatpush1.msra.mxu0 0.0
        %6596 = vmatprep.subr.mxu0 0.0
        %6597 = vmatpush1.msra.mxu0 0.0
        %6598 = vmatprep.subr.mxu0 0.0
        %6599 = vmatpush1.msra.mxu0 0.0
        %6600 = vmatprep.subr.mxu0 0.0
        %6601 = vmatpush1.msra.mxu0 0.0
        %6602 = vmatprep.subr.mxu0 0.0
        %6603 = vmatpush1.msra.mxu0 0.0
        %6604 = vmatprep.subr.mxu0 0.0
        %6605 = vmatpush1.msra.mxu0 0.0
        %6606 = vmatprep.subr.mxu0 0.0
        %6607 = vmatpush1.msra.mxu0 0.0
        %6608 = vmatprep.subr.mxu0 0.0
        %6609 = vmatpush1.msra.mxu0 0.0
        %6610 = vmatprep.subr.mxu0 0.0
        %6611 = vmatpush1.msra.mxu0 0.0
        %6612 = vmatprep.subr.mxu0 0.0
        %6613 = vmatpush1.msra.mxu0 0.0
        %6614 = vmatprep.subr.mxu0 0.0
        %6615 = vmatpush1.msra.mxu0 0.0
        %6616 = vmatprep.subr.mxu0 0.0
        %6617 = vmatpush1.msra.mxu0 0.0
        %6618 = vmatprep.subr.mxu0 0.0
        %6619 = vmatpush1.msra.mxu0 0.0
        %6620 = vmatprep.subr.mxu0 0.0
        %6621 = vmatpush1.msra.mxu0 0.0
        %6622 = vmatprep.subr.mxu0 0.0
        %6623 = vmatpush1.msra.mxu0 0.0
        %6624 = vmatprep.subr.mxu0 0.0
        %6625 = vmatpush1.msra.mxu0 0.0
        %6626 = vmatprep.subr.mxu0 0.0
        %6627 = vmatpush1.msra.mxu0 0.0
        %6628 = vmatprep.subr.mxu0 0.0
        %6629 = vmatpush1.msra.mxu0 0.0
        %6630 = vmatprep.subr.mxu0 0.0
        %6631 = vmatpush1.msra.mxu0 0.0
        %6632 = vmatprep.subr.mxu0 0.0
        %6633 = vmatpush1.msra.mxu0 0.0
        %6634 = vmatprep.subr.mxu0 0.0
        %6635 = vmatpush1.msra.mxu0 0.0
        %6636 = vmatprep.subr.mxu0 0.0
        %6637 = vmatpush1.msra.mxu0 0.0
        %6638 = vmatprep.subr.mxu0 0.0
        %6639 = vmatpush1.msra.mxu0 0.0
        %6640 = vmatprep.subr.mxu0 0.0
        %6641 = vmatpush1.msra.mxu0 0.0
        %6642 = vmatprep.subr.mxu0 0.0
        %6643 = vmatpush1.msra.mxu0 0.0
        %6644 = vmatprep.mubr.f32.mxu0 0.0
        %v6645 = vand.u32 %v5886, 4294901760
        %v6646 = vsub.f32 %v5886, %v6645
        %v6647 = vand.u32 %v6646, 4294901760
        %6648 = vmatmul.mubr.f32.gmra.mrb[0].mxu0 %v6647
        %v6649 = vpop.f32.mrb[0].mxu0
        %v6650 = vadd.f32 %v6576, %v6649
        %v6651 = vpop.f32.mrb[0].mxu0
        %6652 = vdwg.mxu0
        %6653 = vmatprep.subr.mxu0 0.0
        %v6654 = vand.u32 %v5881, 4294901760
        %v6655 = vsub.f32 %v5881, %v6654
        %v6656 = vand.u32 %v6655, 4294901760
        %6657 = vmatpush1.msra.mxu0 %v6656
        %6658 = vmatprep.subr.mxu0 0.0
        %6659 = vmatpush1.msra.mxu0 0.0
        %6660 = vmatprep.subr.mxu0 0.0
        %6661 = vmatpush1.msra.mxu0 0.0
        %6662 = vmatprep.subr.mxu0 0.0
        %6663 = vmatpush1.msra.mxu0 0.0
        %6664 = vmatprep.subr.mxu0 0.0
        %6665 = vmatpush1.msra.mxu0 0.0
        %6666 = vmatprep.subr.mxu0 0.0
        %6667 = vmatpush1.msra.mxu0 0.0
        %6668 = vmatprep.subr.mxu0 0.0
        %6669 = vmatpush1.msra.mxu0 0.0
        %6670 = vmatprep.subr.mxu0 0.0
        %6671 = vmatpush1.msra.mxu0 0.0
        %6672 = vmatprep.subr.mxu0 0.0
        %6673 = vmatpush1.msra.mxu0 0.0
        %6674 = vmatprep.subr.mxu0 0.0
        %6675 = vmatpush1.msra.mxu0 0.0
        %6676 = vmatprep.subr.mxu0 0.0
        %6677 = vmatpush1.msra.mxu0 0.0
        %6678 = vmatprep.subr.mxu0 0.0
        %6679 = vmatpush1.msra.mxu0 0.0
        %6680 = vmatprep.subr.mxu0 0.0
        %6681 = vmatpush1.msra.mxu0 0.0
        %6682 = vmatprep.subr.mxu0 0.0
        %6683 = vmatpush1.msra.mxu0 0.0
        %6684 = vmatprep.subr.mxu0 0.0
        %6685 = vmatpush1.msra.mxu0 0.0
        %6686 = vmatprep.subr.mxu0 0.0
        %6687 = vmatpush1.msra.mxu0 0.0
        %6688 = vmatprep.subr.mxu0 0.0
        %6689 = vmatpush1.msra.mxu0 0.0
        %6690 = vmatprep.subr.mxu0 0.0
        %6691 = vmatpush1.msra.mxu0 0.0
        %6692 = vmatprep.subr.mxu0 0.0
        %6693 = vmatpush1.msra.mxu0 0.0
        %6694 = vmatprep.subr.mxu0 0.0
        %6695 = vmatpush1.msra.mxu0 0.0
        %6696 = vmatprep.subr.mxu0 0.0
        %6697 = vmatpush1.msra.mxu0 0.0
        %6698 = vmatprep.subr.mxu0 0.0
        %6699 = vmatpush1.msra.mxu0 0.0
        %6700 = vmatprep.subr.mxu0 0.0
        %6701 = vmatpush1.msra.mxu0 0.0
        %6702 = vmatprep.subr.mxu0 0.0
        %6703 = vmatpush1.msra.mxu0 0.0
        %6704 = vmatprep.subr.mxu0 0.0
        %6705 = vmatpush1.msra.mxu0 0.0
        %6706 = vmatprep.subr.mxu0 0.0
        %6707 = vmatpush1.msra.mxu0 0.0
        %6708 = vmatprep.subr.mxu0 0.0
        %6709 = vmatpush1.msra.mxu0 0.0
        %6710 = vmatprep.subr.mxu0 0.0
        %6711 = vmatpush1.msra.mxu0 0.0
        %6712 = vmatprep.subr.mxu0 0.0
        %6713 = vmatpush1.msra.mxu0 0.0
        %6714 = vmatprep.subr.mxu0 0.0
        %6715 = vmatpush1.msra.mxu0 0.0
        %6716 = vmatprep.subr.mxu0 0.0
        %6717 = vmatpush1.msra.mxu0 0.0
        %6718 = vmatprep.subr.mxu0 0.0
        %6719 = vmatpush1.msra.mxu0 0.0
        %6720 = vmatprep.mubr.f32.mxu0 0.0
        %v6721 = vand.u32 %v5886, 4294901760
        %6722 = vmatmul.mubr.f32.gmra.mrb[0].mxu0 %v6721
        %v6723 = vpop.f32.mrb[0].mxu0
        %v6724 = vadd.f32 %v6650, %v6723
        %v6725 = vpop.f32.mrb[0].mxu0
        %6726 = vdwg.mxu0
        %6727 = vmatprep.subr.mxu0 0.0
        %v6728 = vand.u32 %v5881, 4294901760
        %6729 = vmatpush1.msra.mxu0 %v6728
        %6730 = vmatprep.subr.mxu0 0.0
        %6731 = vmatpush1.msra.mxu0 0.0
        %6732 = vmatprep.subr.mxu0 0.0
        %6733 = vmatpush1.msra.mxu0 0.0
        %6734 = vmatprep.subr.mxu0 0.0
        %6735 = vmatpush1.msra.mxu0 0.0
        %6736 = vmatprep.subr.mxu0 0.0
        %6737 = vmatpush1.msra.mxu0 0.0
        %6738 = vmatprep.subr.mxu0 0.0
        %6739 = vmatpush1.msra.mxu0 0.0
        %6740 = vmatprep.subr.mxu0 0.0
        %6741 = vmatpush1.msra.mxu0 0.0
        %6742 = vmatprep.subr.mxu0 0.0
        %6743 = vmatpush1.msra.mxu0 0.0
        %6744 = vmatprep.subr.mxu0 0.0
        %6745 = vmatpush1.msra.mxu0 0.0
        %6746 = vmatprep.subr.mxu0 0.0
        %6747 = vmatpush1.msra.mxu0 0.0
        %6748 = vmatprep.subr.mxu0 0.0
        %6749 = vmatpush1.msra.mxu0 0.0
        %6750 = vmatprep.subr.mxu0 0.0
        %6751 = vmatpush1.msra.mxu0 0.0
        %6752 = vmatprep.subr.mxu0 0.0
        %6753 = vmatpush1.msra.mxu0 0.0
        %6754 = vmatprep.subr.mxu0 0.0
        %6755 = vmatpush1.msra.mxu0 0.0
        %6756 = vmatprep.subr.mxu0 0.0
        %6757 = vmatpush1.msra.mxu0 0.0
        %6758 = vmatprep.subr.mxu0 0.0
        %6759 = vmatpush1.msra.mxu0 0.0
        %6760 = vmatprep.subr.mxu0 0.0
        %6761 = vmatpush1.msra.mxu0 0.0
        %6762 = vmatprep.subr.mxu0 0.0
        %6763 = vmatpush1.msra.mxu0 0.0
        %6764 = vmatprep.subr.mxu0 0.0
        %6765 = vmatpush1.msra.mxu0 0.0
        %6766 = vmatprep.subr.mxu0 0.0
        %6767 = vmatpush1.msra.mxu0 0.0
        %6768 = vmatprep.subr.mxu0 0.0
        %6769 = vmatpush1.msra.mxu0 0.0
        %6770 = vmatprep.subr.mxu0 0.0
        %6771 = vmatpush1.msra.mxu0 0.0
        %6772 = vmatprep.subr.mxu0 0.0
        %6773 = vmatpush1.msra.mxu0 0.0
        %6774 = vmatprep.subr.mxu0 0.0
        %6775 = vmatpush1.msra.mxu0 0.0
        %6776 = vmatprep.subr.mxu0 0.0
        %6777 = vmatpush1.msra.mxu0 0.0
        %6778 = vmatprep.subr.mxu0 0.0
        %6779 = vmatpush1.msra.mxu0 0.0
        %6780 = vmatprep.subr.mxu0 0.0
        %6781 = vmatpush1.msra.mxu0 0.0
        %6782 = vmatprep.subr.mxu0 0.0
        %6783 = vmatpush1.msra.mxu0 0.0
        %6784 = vmatprep.subr.mxu0 0.0
        %6785 = vmatpush1.msra.mxu0 0.0
        %6786 = vmatprep.subr.mxu0 0.0
        %6787 = vmatpush1.msra.mxu0 0.0
        %6788 = vmatprep.subr.mxu0 0.0
        %6789 = vmatpush1.msra.mxu0 0.0
        %6790 = vmatprep.subr.mxu0 0.0
        %6791 = vmatpush1.msra.mxu0 0.0
        %6792 = vmatprep.mubr.f32.mxu0 0.0
        %v6793 = vand.u32 %v5886, 4294901760
        %6794 = vmatmul.mubr.f32.gmra.mrb[0].mxu0 %v6793
        %v6795 = vpop.f32.mrb[0].mxu0
        %v6796 = vadd.f32 %v6724, %v6795
        %v6797 = vpop.f32.mrb[0].mxu0
        %6798 = vdwg.mxu0
        %v6799 = vadd.f32 %v5865, %v6349
        %v6800 = vadd.f32 %v5866, %v6351
        %v6801 = vadd.f32 %v5867, %v6796
        %s6802 = scalar_lea.vmem %s1, 56
        %v6803 = vld [vmem:[%s6802] sm:$0xff]
        %6804 = vrot.lane.b32.xlu0 %v277, 91
        %v6805 = vpop.permute.xlu0 %6804
        %6806 = vrot.lane.b32.xlu0 %v278, 91
        %v6807 = vpop.permute.xlu0 %6806
        %6808 = vrot.lane.b32.xlu0 %v279, 91
        %v6809 = vpop.permute.xlu0 %6808
        %6810 = vrot.lane.b32.xlu0 %v280, 91
        %v6811 = vpop.permute.xlu0 %6810
        %vm6812 = vcmask 744448
        %v6813 = vsel %vm6812, %v6805, %v6807
        %v6814 = vsel %vm6812, %v6807, %v6809
        %v6815 = vsel %vm6812, %v6809, %v6811
        %v6820 = vsel %vm303, %v6803, 0
        %v6822 = vand.u32 %v6814, 4294901760
        %6823 = vmatprep.subr.mxu0 %v6822
        %v6824 = vand.u32 %v6813, 4294901760
        %6825 = vmatpush1.msra.mxu0 %v6824
        %6826 = vmatprep.subr.mxu0 0.0
        %6827 = vmatpush1.msra.mxu0 0.0
        %6828 = vmatprep.subr.mxu0 0.0
        %6829 = vmatpush1.msra.mxu0 0.0
        %6830 = vmatprep.subr.mxu0 0.0
        %6831 = vmatpush1.msra.mxu0 0.0
        %6832 = vmatprep.subr.mxu0 0.0
        %6833 = vmatpush1.msra.mxu0 0.0
        %6834 = vmatprep.subr.mxu0 0.0
        %6835 = vmatpush1.msra.mxu0 0.0
        %6836 = vmatprep.subr.mxu0 0.0
        %6837 = vmatpush1.msra.mxu0 0.0
        %6838 = vmatprep.subr.mxu0 0.0
        %6839 = vmatpush1.msra.mxu0 0.0
        %6840 = vmatprep.subr.mxu0 0.0
        %6841 = vmatpush1.msra.mxu0 0.0
        %6842 = vmatprep.subr.mxu0 0.0
        %6843 = vmatpush1.msra.mxu0 0.0
        %6844 = vmatprep.subr.mxu0 0.0
        %6845 = vmatpush1.msra.mxu0 0.0
        %6846 = vmatprep.subr.mxu0 0.0
        %6847 = vmatpush1.msra.mxu0 0.0
        %6848 = vmatprep.subr.mxu0 0.0
        %6849 = vmatpush1.msra.mxu0 0.0
        %6850 = vmatprep.subr.mxu0 0.0
        %6851 = vmatpush1.msra.mxu0 0.0
        %6852 = vmatprep.subr.mxu0 0.0
        %6853 = vmatpush1.msra.mxu0 0.0
        %6854 = vmatprep.subr.mxu0 0.0
        %6855 = vmatpush1.msra.mxu0 0.0
        %6856 = vmatprep.subr.mxu0 0.0
        %6857 = vmatpush1.msra.mxu0 0.0
        %6858 = vmatprep.subr.mxu0 0.0
        %6859 = vmatpush1.msra.mxu0 0.0
        %6860 = vmatprep.subr.mxu0 0.0
        %6861 = vmatpush1.msra.mxu0 0.0
        %6862 = vmatprep.subr.mxu0 0.0
        %6863 = vmatpush1.msra.mxu0 0.0
        %6864 = vmatprep.subr.mxu0 0.0
        %6865 = vmatpush1.msra.mxu0 0.0
        %6866 = vmatprep.subr.mxu0 0.0
        %6867 = vmatpush1.msra.mxu0 0.0
        %6868 = vmatprep.subr.mxu0 0.0
        %6869 = vmatpush1.msra.mxu0 0.0
        %6870 = vmatprep.subr.mxu0 0.0
        %6871 = vmatpush1.msra.mxu0 0.0
        %6872 = vmatprep.subr.mxu0 0.0
        %6873 = vmatpush1.msra.mxu0 0.0
        %6874 = vmatprep.subr.mxu0 0.0
        %6875 = vmatpush1.msra.mxu0 0.0
        %6876 = vmatprep.subr.mxu0 0.0
        %6877 = vmatpush1.msra.mxu0 0.0
        %6878 = vmatprep.subr.mxu0 0.0
        %6879 = vmatpush1.msra.mxu0 0.0
        %6880 = vmatprep.subr.mxu0 0.0
        %6881 = vmatpush1.msra.mxu0 0.0
        %6882 = vmatprep.subr.mxu0 0.0
        %6883 = vmatpush1.msra.mxu0 0.0
        %6884 = vmatprep.subr.mxu0 0.0
        %6885 = vmatpush1.msra.mxu0 0.0
        %6886 = vmatprep.subr.mxu0 0.0
        %6887 = vmatpush1.msra.mxu0 0.0
        %6888 = vmatprep.mubr.f32.mxu0 0.0
        %v6889 = vand.u32 %v6820, 4294901760
        %v6890 = vsub.f32 %v6820, %v6889
        %v6891 = vand.u32 %v6890, 4294901760
        %v6892 = vsub.f32 %v6890, %v6891
        %v6893 = vand.u32 %v6892, 4294901760
        %6894 = vmatmul.mubr.f32.gmra.mrb[0].mxu0 %v6893
        %v6895 = vpop.f32.mrb[0].mxu0
        %v6896 = vadd.f32 0.0, %v6895
        %v6897 = vpop.f32.mrb[0].mxu0
        %v6898 = vadd.f32 0.0, %v6897
        %6899 = vdwg.mxu0
        %v6900 = vand.u32 %v6814, 4294901760
        %v6901 = vsub.f32 %v6814, %v6900
        %v6902 = vand.u32 %v6901, 4294901760
        %v6903 = vsub.f32 %v6901, %v6902
        %v6904 = vand.u32 %v6903, 4294901760
        %6905 = vmatprep.subr.mxu0 %v6904
        %v6906 = vand.u32 %v6813, 4294901760
        %v6907 = vsub.f32 %v6813, %v6906
        %v6908 = vand.u32 %v6907, 4294901760
        %v6909 = vsub.f32 %v6907, %v6908
        %v6910 = vand.u32 %v6909, 4294901760
        %6911 = vmatpush1.msra.mxu0 %v6910
        %6912 = vmatprep.subr.mxu0 0.0
        %6913 = vmatpush1.msra.mxu0 0.0
        %6914 = vmatprep.subr.mxu0 0.0
        %6915 = vmatpush1.msra.mxu0 0.0
        %6916 = vmatprep.subr.mxu0 0.0
        %6917 = vmatpush1.msra.mxu0 0.0
        %6918 = vmatprep.subr.mxu0 0.0
        %6919 = vmatpush1.msra.mxu0 0.0
        %6920 = vmatprep.subr.mxu0 0.0
        %6921 = vmatpush1.msra.mxu0 0.0
        %6922 = vmatprep.subr.mxu0 0.0
        %6923 = vmatpush1.msra.mxu0 0.0
        %6924 = vmatprep.subr.mxu0 0.0
        %6925 = vmatpush1.msra.mxu0 0.0
        %6926 = vmatprep.subr.mxu0 0.0
        %6927 = vmatpush1.msra.mxu0 0.0
        %6928 = vmatprep.subr.mxu0 0.0
        %6929 = vmatpush1.msra.mxu0 0.0
        %6930 = vmatprep.subr.mxu0 0.0
        %6931 = vmatpush1.msra.mxu0 0.0
        %6932 = vmatprep.subr.mxu0 0.0
        %6933 = vmatpush1.msra.mxu0 0.0
        %6934 = vmatprep.subr.mxu0 0.0
        %6935 = vmatpush1.msra.mxu0 0.0
        %6936 = vmatprep.subr.mxu0 0.0
        %6937 = vmatpush1.msra.mxu0 0.0
        %6938 = vmatprep.subr.mxu0 0.0
        %6939 = vmatpush1.msra.mxu0 0.0
        %6940 = vmatprep.subr.mxu0 0.0
        %6941 = vmatpush1.msra.mxu0 0.0
        %6942 = vmatprep.subr.mxu0 0.0
        %6943 = vmatpush1.msra.mxu0 0.0
        %6944 = vmatprep.subr.mxu0 0.0
        %6945 = vmatpush1.msra.mxu0 0.0
        %6946 = vmatprep.subr.mxu0 0.0
        %6947 = vmatpush1.msra.mxu0 0.0
        %6948 = vmatprep.subr.mxu0 0.0
        %6949 = vmatpush1.msra.mxu0 0.0
        %6950 = vmatprep.subr.mxu0 0.0
        %6951 = vmatpush1.msra.mxu0 0.0
        %6952 = vmatprep.subr.mxu0 0.0
        %6953 = vmatpush1.msra.mxu0 0.0
        %6954 = vmatprep.subr.mxu0 0.0
        %6955 = vmatpush1.msra.mxu0 0.0
        %6956 = vmatprep.subr.mxu0 0.0
        %6957 = vmatpush1.msra.mxu0 0.0
        %6958 = vmatprep.subr.mxu0 0.0
        %6959 = vmatpush1.msra.mxu0 0.0
        %6960 = vmatprep.subr.mxu0 0.0
        %6961 = vmatpush1.msra.mxu0 0.0
        %6962 = vmatprep.subr.mxu0 0.0
        %6963 = vmatpush1.msra.mxu0 0.0
        %6964 = vmatprep.subr.mxu0 0.0
        %6965 = vmatpush1.msra.mxu0 0.0
        %6966 = vmatprep.subr.mxu0 0.0
        %6967 = vmatpush1.msra.mxu0 0.0
        %6968 = vmatprep.subr.mxu0 0.0
        %6969 = vmatpush1.msra.mxu0 0.0
        %6970 = vmatprep.subr.mxu0 0.0
        %6971 = vmatpush1.msra.mxu0 0.0
        %6972 = vmatprep.subr.mxu0 0.0
        %6973 = vmatpush1.msra.mxu0 0.0
        %6974 = vmatprep.mubr.f32.mxu0 0.0
        %v6975 = vand.u32 %v6820, 4294901760
        %6976 = vmatmul.mubr.f32.gmra.mrb[0].mxu0 %v6975
        %v6977 = vpop.f32.mrb[0].mxu0
        %v6978 = vadd.f32 %v6896, %v6977
        %v6979 = vpop.f32.mrb[0].mxu0
        %v6980 = vadd.f32 %v6898, %v6979
        %6981 = vdwg.mxu0
        %v6982 = vand.u32 %v6814, 4294901760
        %v6983 = vsub.f32 %v6814, %v6982
        %6984 = vmatprep.subr.mxu0 %v6983
        %v6985 = vand.u32 %v6813, 4294901760
        %v6986 = vsub.f32 %v6813, %v6985
        %6987 = vmatpush1.msra.mxu0 %v6986
        %6988 = vmatprep.subr.mxu0 0.0
        %6989 = vmatpush1.msra.mxu0 0.0
        %6990 = vmatprep.subr.mxu0 0.0
        %6991 = vmatpush1.msra.mxu0 0.0
        %6992 = vmatprep.subr.mxu0 0.0
        %6993 = vmatpush1.msra.mxu0 0.0
        %6994 = vmatprep.subr.mxu0 0.0
        %6995 = vmatpush1.msra.mxu0 0.0
        %6996 = vmatprep.subr.mxu0 0.0
        %6997 = vmatpush1.msra.mxu0 0.0
        %6998 = vmatprep.subr.mxu0 0.0
        %6999 = vmatpush1.msra.mxu0 0.0
        %7000 = vmatprep.subr.mxu0 0.0
        %7001 = vmatpush1.msra.mxu0 0.0
        %7002 = vmatprep.subr.mxu0 0.0
        %7003 = vmatpush1.msra.mxu0 0.0
        %7004 = vmatprep.subr.mxu0 0.0
        %7005 = vmatpush1.msra.mxu0 0.0
        %7006 = vmatprep.subr.mxu0 0.0
        %7007 = vmatpush1.msra.mxu0 0.0
        %7008 = vmatprep.subr.mxu0 0.0
        %7009 = vmatpush1.msra.mxu0 0.0
        %7010 = vmatprep.subr.mxu0 0.0
        %7011 = vmatpush1.msra.mxu0 0.0
        %7012 = vmatprep.subr.mxu0 0.0
        %7013 = vmatpush1.msra.mxu0 0.0
        %7014 = vmatprep.subr.mxu0 0.0
        %7015 = vmatpush1.msra.mxu0 0.0
        %7016 = vmatprep.subr.mxu0 0.0
        %7017 = vmatpush1.msra.mxu0 0.0
        %7018 = vmatprep.subr.mxu0 0.0
        %7019 = vmatpush1.msra.mxu0 0.0
        %7020 = vmatprep.subr.mxu0 0.0
        %7021 = vmatpush1.msra.mxu0 0.0
        %7022 = vmatprep.subr.mxu0 0.0
        %7023 = vmatpush1.msra.mxu0 0.0
        %7024 = vmatprep.subr.mxu0 0.0
        %7025 = vmatpush1.msra.mxu0 0.0
        %7026 = vmatprep.subr.mxu0 0.0
        %7027 = vmatpush1.msra.mxu0 0.0
        %7028 = vmatprep.subr.mxu0 0.0
        %7029 = vmatpush1.msra.mxu0 0.0
        %7030 = vmatprep.subr.mxu0 0.0
        %7031 = vmatpush1.msra.mxu0 0.0
        %7032 = vmatprep.subr.mxu0 0.0
        %7033 = vmatpush1.msra.mxu0 0.0
        %7034 = vmatprep.subr.mxu0 0.0
        %7035 = vmatpush1.msra.mxu0 0.0
        %7036 = vmatprep.subr.mxu0 0.0
        %7037 = vmatpush1.msra.mxu0 0.0
        %7038 = vmatprep.subr.mxu0 0.0
        %7039 = vmatpush1.msra.mxu0 0.0
        %7040 = vmatprep.subr.mxu0 0.0
        %7041 = vmatpush1.msra.mxu0 0.0
        %7042 = vmatprep.subr.mxu0 0.0
        %7043 = vmatpush1.msra.mxu0 0.0
        %7044 = vmatprep.subr.mxu0 0.0
        %7045 = vmatpush1.msra.mxu0 0.0
        %7046 = vmatprep.subr.mxu0 0.0
        %7047 = vmatpush1.msra.mxu0 0.0
        %7048 = vmatprep.subr.mxu0 0.0
        %7049 = vmatpush1.msra.mxu0 0.0
        %7050 = vmatprep.mubr.f32.mxu0 0.0
        %v7051 = vand.u32 %v6820, 4294901760
        %v7052 = vsub.f32 %v6820, %v7051
        %7053 = vmatmul.mubr.f32.gmra.mrb[0].mxu0 %v7052
        %v7054 = vpop.f32.mrb[0].mxu0
        %v7055 = vadd.f32 %v6978, %v7054
        %v7056 = vpop.f32.mrb[0].mxu0
        %v7057 = vadd.f32 %v6980, %v7056
        %7058 = vdwg.mxu0
        %v7059 = vand.u32 %v6814, 4294901760
        %7060 = vmatprep.subr.mxu0 %v7059
        %v7061 = vand.u32 %v6813, 4294901760
        %7062 = vmatpush1.msra.mxu0 %v7061
        %7063 = vmatprep.subr.mxu0 0.0
        %7064 = vmatpush1.msra.mxu0 0.0
        %7065 = vmatprep.subr.mxu0 0.0
        %7066 = vmatpush1.msra.mxu0 0.0
        %7067 = vmatprep.subr.mxu0 0.0
        %7068 = vmatpush1.msra.mxu0 0.0
        %7069 = vmatprep.subr.mxu0 0.0
        %7070 = vmatpush1.msra.mxu0 0.0
        %7071 = vmatprep.subr.mxu0 0.0
        %7072 = vmatpush1.msra.mxu0 0.0
        %7073 = vmatprep.subr.mxu0 0.0
        %7074 = vmatpush1.msra.mxu0 0.0
        %7075 = vmatprep.subr.mxu0 0.0
        %7076 = vmatpush1.msra.mxu0 0.0
        %7077 = vmatprep.subr.mxu0 0.0
        %7078 = vmatpush1.msra.mxu0 0.0
        %7079 = vmatprep.subr.mxu0 0.0
        %7080 = vmatpush1.msra.mxu0 0.0
        %7081 = vmatprep.subr.mxu0 0.0
        %7082 = vmatpush1.msra.mxu0 0.0
        %7083 = vmatprep.subr.mxu0 0.0
        %7084 = vmatpush1.msra.mxu0 0.0
        %7085 = vmatprep.subr.mxu0 0.0
        %7086 = vmatpush1.msra.mxu0 0.0
        %7087 = vmatprep.subr.mxu0 0.0
        %7088 = vmatpush1.msra.mxu0 0.0
        %7089 = vmatprep.subr.mxu0 0.0
        %7090 = vmatpush1.msra.mxu0 0.0
        %7091 = vmatprep.subr.mxu0 0.0
        %7092 = vmatpush1.msra.mxu0 0.0
        %7093 = vmatprep.subr.mxu0 0.0
        %7094 = vmatpush1.msra.mxu0 0.0
        %7095 = vmatprep.subr.mxu0 0.0
        %7096 = vmatpush1.msra.mxu0 0.0
        %7097 = vmatprep.subr.mxu0 0.0
        %7098 = vmatpush1.msra.mxu0 0.0
        %7099 = vmatprep.subr.mxu0 0.0
        %7100 = vmatpush1.msra.mxu0 0.0
        %7101 = vmatprep.subr.mxu0 0.0
        %7102 = vmatpush1.msra.mxu0 0.0
        %7103 = vmatprep.subr.mxu0 0.0
        %7104 = vmatpush1.msra.mxu0 0.0
        %7105 = vmatprep.subr.mxu0 0.0
        %7106 = vmatpush1.msra.mxu0 0.0
        %7107 = vmatprep.subr.mxu0 0.0
        %7108 = vmatpush1.msra.mxu0 0.0
        %7109 = vmatprep.subr.mxu0 0.0
        %7110 = vmatpush1.msra.mxu0 0.0
        %7111 = vmatprep.subr.mxu0 0.0
        %7112 = vmatpush1.msra.mxu0 0.0
        %7113 = vmatprep.subr.mxu0 0.0
        %7114 = vmatpush1.msra.mxu0 0.0
        %7115 = vmatprep.subr.mxu0 0.0
        %7116 = vmatpush1.msra.mxu0 0.0
        %7117 = vmatprep.subr.mxu0 0.0
        %7118 = vmatpush1.msra.mxu0 0.0
        %7119 = vmatprep.subr.mxu0 0.0
        %7120 = vmatpush1.msra.mxu0 0.0
        %7121 = vmatprep.subr.mxu0 0.0
        %7122 = vmatpush1.msra.mxu0 0.0
        %7123 = vmatprep.subr.mxu0 0.0
        %7124 = vmatpush1.msra.mxu0 0.0
        %7125 = vmatprep.mubr.f32.mxu0 0.0
        %v7126 = vand.u32 %v6820, 4294901760
        %v7127 = vsub.f32 %v6820, %v7126
        %v7128 = vand.u32 %v7127, 4294901760
        %7129 = vmatmul.mubr.f32.gmra.mrb[0].mxu0 %v7128
        %v7130 = vpop.f32.mrb[0].mxu0
        %v7131 = vadd.f32 %v7055, %v7130
        %v7132 = vpop.f32.mrb[0].mxu0
        %v7133 = vadd.f32 %v7057, %v7132
        %7134 = vdwg.mxu0
        %v7135 = vand.u32 %v6814, 4294901760
        %v7136 = vsub.f32 %v6814, %v7135
        %v7137 = vand.u32 %v7136, 4294901760
        %7138 = vmatprep.subr.mxu0 %v7137
        %v7139 = vand.u32 %v6813, 4294901760
        %v7140 = vsub.f32 %v6813, %v7139
        %v7141 = vand.u32 %v7140, 4294901760
        %7142 = vmatpush1.msra.mxu0 %v7141
        %7143 = vmatprep.subr.mxu0 0.0
        %7144 = vmatpush1.msra.mxu0 0.0
        %7145 = vmatprep.subr.mxu0 0.0
        %7146 = vmatpush1.msra.mxu0 0.0
        %7147 = vmatprep.subr.mxu0 0.0
        %7148 = vmatpush1.msra.mxu0 0.0
        %7149 = vmatprep.subr.mxu0 0.0
        %7150 = vmatpush1.msra.mxu0 0.0
        %7151 = vmatprep.subr.mxu0 0.0
        %7152 = vmatpush1.msra.mxu0 0.0
        %7153 = vmatprep.subr.mxu0 0.0
        %7154 = vmatpush1.msra.mxu0 0.0
        %7155 = vmatprep.subr.mxu0 0.0
        %7156 = vmatpush1.msra.mxu0 0.0
        %7157 = vmatprep.subr.mxu0 0.0
        %7158 = vmatpush1.msra.mxu0 0.0
        %7159 = vmatprep.subr.mxu0 0.0
        %7160 = vmatpush1.msra.mxu0 0.0
        %7161 = vmatprep.subr.mxu0 0.0
        %7162 = vmatpush1.msra.mxu0 0.0
        %7163 = vmatprep.subr.mxu0 0.0
        %7164 = vmatpush1.msra.mxu0 0.0
        %7165 = vmatprep.subr.mxu0 0.0
        %7166 = vmatpush1.msra.mxu0 0.0
        %7167 = vmatprep.subr.mxu0 0.0
        %7168 = vmatpush1.msra.mxu0 0.0
        %7169 = vmatprep.subr.mxu0 0.0
        %7170 = vmatpush1.msra.mxu0 0.0
        %7171 = vmatprep.subr.mxu0 0.0
        %7172 = vmatpush1.msra.mxu0 0.0
        %7173 = vmatprep.subr.mxu0 0.0
        %7174 = vmatpush1.msra.mxu0 0.0
        %7175 = vmatprep.subr.mxu0 0.0
        %7176 = vmatpush1.msra.mxu0 0.0
        %7177 = vmatprep.subr.mxu0 0.0
        %7178 = vmatpush1.msra.mxu0 0.0
        %7179 = vmatprep.subr.mxu0 0.0
        %7180 = vmatpush1.msra.mxu0 0.0
        %7181 = vmatprep.subr.mxu0 0.0
        %7182 = vmatpush1.msra.mxu0 0.0
        %7183 = vmatprep.subr.mxu0 0.0
        %7184 = vmatpush1.msra.mxu0 0.0
        %7185 = vmatprep.subr.mxu0 0.0
        %7186 = vmatpush1.msra.mxu0 0.0
        %7187 = vmatprep.subr.mxu0 0.0
        %7188 = vmatpush1.msra.mxu0 0.0
        %7189 = vmatprep.subr.mxu0 0.0
        %7190 = vmatpush1.msra.mxu0 0.0
        %7191 = vmatprep.subr.mxu0 0.0
        %7192 = vmatpush1.msra.mxu0 0.0
        %7193 = vmatprep.subr.mxu0 0.0
        %7194 = vmatpush1.msra.mxu0 0.0
        %7195 = vmatprep.subr.mxu0 0.0
        %7196 = vmatpush1.msra.mxu0 0.0
        %7197 = vmatprep.subr.mxu0 0.0
        %7198 = vmatpush1.msra.mxu0 0.0
        %7199 = vmatprep.subr.mxu0 0.0
        %7200 = vmatpush1.msra.mxu0 0.0
        %7201 = vmatprep.subr.mxu0 0.0
        %7202 = vmatpush1.msra.mxu0 0.0
        %7203 = vmatprep.subr.mxu0 0.0
        %7204 = vmatpush1.msra.mxu0 0.0
        %7205 = vmatprep.mubr.f32.mxu0 0.0
        %v7206 = vand.u32 %v6820, 4294901760
        %7207 = vmatmul.mubr.f32.gmra.mrb[0].mxu0 %v7206
        %v7208 = vpop.f32.mrb[0].mxu0
        %v7209 = vadd.f32 %v7131, %v7208
        %v7210 = vpop.f32.mrb[0].mxu0
        %v7211 = vadd.f32 %v7133, %v7210
        %7212 = vdwg.mxu0
        %v7213 = vand.u32 %v6814, 4294901760
        %7214 = vmatprep.subr.mxu0 %v7213
        %v7215 = vand.u32 %v6813, 4294901760
        %7216 = vmatpush1.msra.mxu0 %v7215
        %7217 = vmatprep.subr.mxu0 0.0
        %7218 = vmatpush1.msra.mxu0 0.0
        %7219 = vmatprep.subr.mxu0 0.0
        %7220 = vmatpush1.msra.mxu0 0.0
        %7221 = vmatprep.subr.mxu0 0.0
        %7222 = vmatpush1.msra.mxu0 0.0
        %7223 = vmatprep.subr.mxu0 0.0
        %7224 = vmatpush1.msra.mxu0 0.0
        %7225 = vmatprep.subr.mxu0 0.0
        %7226 = vmatpush1.msra.mxu0 0.0
        %7227 = vmatprep.subr.mxu0 0.0
        %7228 = vmatpush1.msra.mxu0 0.0
        %7229 = vmatprep.subr.mxu0 0.0
        %7230 = vmatpush1.msra.mxu0 0.0
        %7231 = vmatprep.subr.mxu0 0.0
        %7232 = vmatpush1.msra.mxu0 0.0
        %7233 = vmatprep.subr.mxu0 0.0
        %7234 = vmatpush1.msra.mxu0 0.0
        %7235 = vmatprep.subr.mxu0 0.0
        %7236 = vmatpush1.msra.mxu0 0.0
        %7237 = vmatprep.subr.mxu0 0.0
        %7238 = vmatpush1.msra.mxu0 0.0
        %7239 = vmatprep.subr.mxu0 0.0
        %7240 = vmatpush1.msra.mxu0 0.0
        %7241 = vmatprep.subr.mxu0 0.0
        %7242 = vmatpush1.msra.mxu0 0.0
        %7243 = vmatprep.subr.mxu0 0.0
        %7244 = vmatpush1.msra.mxu0 0.0
        %7245 = vmatprep.subr.mxu0 0.0
        %7246 = vmatpush1.msra.mxu0 0.0
        %7247 = vmatprep.subr.mxu0 0.0
        %7248 = vmatpush1.msra.mxu0 0.0
        %7249 = vmatprep.subr.mxu0 0.0
        %7250 = vmatpush1.msra.mxu0 0.0
        %7251 = vmatprep.subr.mxu0 0.0
        %7252 = vmatpush1.msra.mxu0 0.0
        %7253 = vmatprep.subr.mxu0 0.0
        %7254 = vmatpush1.msra.mxu0 0.0
        %7255 = vmatprep.subr.mxu0 0.0
        %7256 = vmatpush1.msra.mxu0 0.0
        %7257 = vmatprep.subr.mxu0 0.0
        %7258 = vmatpush1.msra.mxu0 0.0
        %7259 = vmatprep.subr.mxu0 0.0
        %7260 = vmatpush1.msra.mxu0 0.0
        %7261 = vmatprep.subr.mxu0 0.0
        %7262 = vmatpush1.msra.mxu0 0.0
        %7263 = vmatprep.subr.mxu0 0.0
        %7264 = vmatpush1.msra.mxu0 0.0
        %7265 = vmatprep.subr.mxu0 0.0
        %7266 = vmatpush1.msra.mxu0 0.0
        %7267 = vmatprep.subr.mxu0 0.0
        %7268 = vmatpush1.msra.mxu0 0.0
        %7269 = vmatprep.subr.mxu0 0.0
        %7270 = vmatpush1.msra.mxu0 0.0
        %7271 = vmatprep.subr.mxu0 0.0
        %7272 = vmatpush1.msra.mxu0 0.0
        %7273 = vmatprep.subr.mxu0 0.0
        %7274 = vmatpush1.msra.mxu0 0.0
        %7275 = vmatprep.subr.mxu0 0.0
        %7276 = vmatpush1.msra.mxu0 0.0
        %7277 = vmatprep.subr.mxu0 0.0
        %7278 = vmatpush1.msra.mxu0 0.0
        %7279 = vmatprep.mubr.f32.mxu0 0.0
        %v7280 = vand.u32 %v6820, 4294901760
        %7281 = vmatmul.mubr.f32.gmra.mrb[0].mxu0 %v7280
        %v7282 = vpop.f32.mrb[0].mxu0
        %v7283 = vadd.f32 %v7209, %v7282
        %v7284 = vpop.f32.mrb[0].mxu0
        %v7285 = vadd.f32 %v7211, %v7284
        %7286 = vdwg.mxu0
        %7287 = vmatprep.subr.mxu0 0.0
        %v7288 = vand.u32 %v6815, 4294901760
        %7289 = vmatpush1.msra.mxu0 %v7288
        %7290 = vmatprep.subr.mxu0 0.0
        %7291 = vmatpush1.msra.mxu0 0.0
        %7292 = vmatprep.subr.mxu0 0.0
        %7293 = vmatpush1.msra.mxu0 0.0
        %7294 = vmatprep.subr.mxu0 0.0
        %7295 = vmatpush1.msra.mxu0 0.0
        %7296 = vmatprep.subr.mxu0 0.0
        %7297 = vmatpush1.msra.mxu0 0.0
        %7298 = vmatprep.subr.mxu0 0.0
        %7299 = vmatpush1.msra.mxu0 0.0
        %7300 = vmatprep.subr.mxu0 0.0
        %7301 = vmatpush1.msra.mxu0 0.0
        %7302 = vmatprep.subr.mxu0 0.0
        %7303 = vmatpush1.msra.mxu0 0.0
        %7304 = vmatprep.subr.mxu0 0.0
        %7305 = vmatpush1.msra.mxu0 0.0
        %7306 = vmatprep.subr.mxu0 0.0
        %7307 = vmatpush1.msra.mxu0 0.0
        %7308 = vmatprep.subr.mxu0 0.0
        %7309 = vmatpush1.msra.mxu0 0.0
        %7310 = vmatprep.subr.mxu0 0.0
        %7311 = vmatpush1.msra.mxu0 0.0
        %7312 = vmatprep.subr.mxu0 0.0
        %7313 = vmatpush1.msra.mxu0 0.0
        %7314 = vmatprep.subr.mxu0 0.0
        %7315 = vmatpush1.msra.mxu0 0.0
        %7316 = vmatprep.subr.mxu0 0.0
        %7317 = vmatpush1.msra.mxu0 0.0
        %7318 = vmatprep.subr.mxu0 0.0
        %7319 = vmatpush1.msra.mxu0 0.0
        %7320 = vmatprep.subr.mxu0 0.0
        %7321 = vmatpush1.msra.mxu0 0.0
        %7322 = vmatprep.subr.mxu0 0.0
        %7323 = vmatpush1.msra.mxu0 0.0
        %7324 = vmatprep.subr.mxu0 0.0
        %7325 = vmatpush1.msra.mxu0 0.0
        %7326 = vmatprep.subr.mxu0 0.0
        %7327 = vmatpush1.msra.mxu0 0.0
        %7328 = vmatprep.subr.mxu0 0.0
        %7329 = vmatpush1.msra.mxu0 0.0
        %7330 = vmatprep.subr.mxu0 0.0
        %7331 = vmatpush1.msra.mxu0 0.0
        %7332 = vmatprep.subr.mxu0 0.0
        %7333 = vmatpush1.msra.mxu0 0.0
        %7334 = vmatprep.subr.mxu0 0.0
        %7335 = vmatpush1.msra.mxu0 0.0
        %7336 = vmatprep.subr.mxu0 0.0
        %7337 = vmatpush1.msra.mxu0 0.0
        %7338 = vmatprep.subr.mxu0 0.0
        %7339 = vmatpush1.msra.mxu0 0.0
        %7340 = vmatprep.subr.mxu0 0.0
        %7341 = vmatpush1.msra.mxu0 0.0
        %7342 = vmatprep.subr.mxu0 0.0
        %7343 = vmatpush1.msra.mxu0 0.0
        %7344 = vmatprep.subr.mxu0 0.0
        %7345 = vmatpush1.msra.mxu0 0.0
        %7346 = vmatprep.subr.mxu0 0.0
        %7347 = vmatpush1.msra.mxu0 0.0
        %7348 = vmatprep.subr.mxu0 0.0
        %7349 = vmatpush1.msra.mxu0 0.0
        %7350 = vmatprep.subr.mxu0 0.0
        %7351 = vmatpush1.msra.mxu0 0.0
        %7352 = vmatprep.mubr.f32.mxu0 0.0
        %v7353 = vand.u32 %v6820, 4294901760
        %v7354 = vsub.f32 %v6820, %v7353
        %v7355 = vand.u32 %v7354, 4294901760
        %v7356 = vsub.f32 %v7354, %v7355
        %v7357 = vand.u32 %v7356, 4294901760
        %7358 = vmatmul.mubr.f32.gmra.mrb[0].mxu0 %v7357
        %v7359 = vpop.f32.mrb[0].mxu0
        %v7360 = vadd.f32 0.0, %v7359
        %v7361 = vpop.f32.mrb[0].mxu0
        %7362 = vdwg.mxu0
        %7363 = vmatprep.subr.mxu0 0.0
        %v7364 = vand.u32 %v6815, 4294901760
        %v7365 = vsub.f32 %v6815, %v7364
        %v7366 = vand.u32 %v7365, 4294901760
        %v7367 = vsub.f32 %v7365, %v7366
        %v7368 = vand.u32 %v7367, 4294901760
        %7369 = vmatpush1.msra.mxu0 %v7368
        %7370 = vmatprep.subr.mxu0 0.0
        %7371 = vmatpush1.msra.mxu0 0.0
        %7372 = vmatprep.subr.mxu0 0.0
        %7373 = vmatpush1.msra.mxu0 0.0
        %7374 = vmatprep.subr.mxu0 0.0
        %7375 = vmatpush1.msra.mxu0 0.0
        %7376 = vmatprep.subr.mxu0 0.0
        %7377 = vmatpush1.msra.mxu0 0.0
        %7378 = vmatprep.subr.mxu0 0.0
        %7379 = vmatpush1.msra.mxu0 0.0
        %7380 = vmatprep.subr.mxu0 0.0
        %7381 = vmatpush1.msra.mxu0 0.0
        %7382 = vmatprep.subr.mxu0 0.0
        %7383 = vmatpush1.msra.mxu0 0.0
        %7384 = vmatprep.subr.mxu0 0.0
        %7385 = vmatpush1.msra.mxu0 0.0
        %7386 = vmatprep.subr.mxu0 0.0
        %7387 = vmatpush1.msra.mxu0 0.0
        %7388 = vmatprep.subr.mxu0 0.0
        %7389 = vmatpush1.msra.mxu0 0.0
        %7390 = vmatprep.subr.mxu0 0.0
        %7391 = vmatpush1.msra.mxu0 0.0
        %7392 = vmatprep.subr.mxu0 0.0
        %7393 = vmatpush1.msra.mxu0 0.0
        %7394 = vmatprep.subr.mxu0 0.0
        %7395 = vmatpush1.msra.mxu0 0.0
        %7396 = vmatprep.subr.mxu0 0.0
        %7397 = vmatpush1.msra.mxu0 0.0
        %7398 = vmatprep.subr.mxu0 0.0
        %7399 = vmatpush1.msra.mxu0 0.0
        %7400 = vmatprep.subr.mxu0 0.0
        %7401 = vmatpush1.msra.mxu0 0.0
        %7402 = vmatprep.subr.mxu0 0.0
        %7403 = vmatpush1.msra.mxu0 0.0
        %7404 = vmatprep.subr.mxu0 0.0
        %7405 = vmatpush1.msra.mxu0 0.0
        %7406 = vmatprep.subr.mxu0 0.0
        %7407 = vmatpush1.msra.mxu0 0.0
        %7408 = vmatprep.subr.mxu0 0.0
        %7409 = vmatpush1.msra.mxu0 0.0
        %7410 = vmatprep.subr.mxu0 0.0
        %7411 = vmatpush1.msra.mxu0 0.0
        %7412 = vmatprep.subr.mxu0 0.0
        %7413 = vmatpush1.msra.mxu0 0.0
        %7414 = vmatprep.subr.mxu0 0.0
        %7415 = vmatpush1.msra.mxu0 0.0
        %7416 = vmatprep.subr.mxu0 0.0
        %7417 = vmatpush1.msra.mxu0 0.0
        %7418 = vmatprep.subr.mxu0 0.0
        %7419 = vmatpush1.msra.mxu0 0.0
        %7420 = vmatprep.subr.mxu0 0.0
        %7421 = vmatpush1.msra.mxu0 0.0
        %7422 = vmatprep.subr.mxu0 0.0
        %7423 = vmatpush1.msra.mxu0 0.0
        %7424 = vmatprep.subr.mxu0 0.0
        %7425 = vmatpush1.msra.mxu0 0.0
        %7426 = vmatprep.subr.mxu0 0.0
        %7427 = vmatpush1.msra.mxu0 0.0
        %7428 = vmatprep.subr.mxu0 0.0
        %7429 = vmatpush1.msra.mxu0 0.0
        %7430 = vmatprep.subr.mxu0 0.0
        %7431 = vmatpush1.msra.mxu0 0.0
        %7432 = vmatprep.mubr.f32.mxu0 0.0
        %v7433 = vand.u32 %v6820, 4294901760
        %7434 = vmatmul.mubr.f32.gmra.mrb[0].mxu0 %v7433
        %v7435 = vpop.f32.mrb[0].mxu0
        %v7436 = vadd.f32 %v7360, %v7435
        %v7437 = vpop.f32.mrb[0].mxu0
        %7438 = vdwg.mxu0
        %7439 = vmatprep.subr.mxu0 0.0
        %v7440 = vand.u32 %v6815, 4294901760
        %v7441 = vsub.f32 %v6815, %v7440
        %7442 = vmatpush1.msra.mxu0 %v7441
        %7443 = vmatprep.subr.mxu0 0.0
        %7444 = vmatpush1.msra.mxu0 0.0
        %7445 = vmatprep.subr.mxu0 0.0
        %7446 = vmatpush1.msra.mxu0 0.0
        %7447 = vmatprep.subr.mxu0 0.0
        %7448 = vmatpush1.msra.mxu0 0.0
        %7449 = vmatprep.subr.mxu0 0.0
        %7450 = vmatpush1.msra.mxu0 0.0
        %7451 = vmatprep.subr.mxu0 0.0
        %7452 = vmatpush1.msra.mxu0 0.0
        %7453 = vmatprep.subr.mxu0 0.0
        %7454 = vmatpush1.msra.mxu0 0.0
        %7455 = vmatprep.subr.mxu0 0.0
        %7456 = vmatpush1.msra.mxu0 0.0
        %7457 = vmatprep.subr.mxu0 0.0
        %7458 = vmatpush1.msra.mxu0 0.0
        %7459 = vmatprep.subr.mxu0 0.0
        %7460 = vmatpush1.msra.mxu0 0.0
        %7461 = vmatprep.subr.mxu0 0.0
        %7462 = vmatpush1.msra.mxu0 0.0
        %7463 = vmatprep.subr.mxu0 0.0
        %7464 = vmatpush1.msra.mxu0 0.0
        %7465 = vmatprep.subr.mxu0 0.0
        %7466 = vmatpush1.msra.mxu0 0.0
        %7467 = vmatprep.subr.mxu0 0.0
        %7468 = vmatpush1.msra.mxu0 0.0
        %7469 = vmatprep.subr.mxu0 0.0
        %7470 = vmatpush1.msra.mxu0 0.0
        %7471 = vmatprep.subr.mxu0 0.0
        %7472 = vmatpush1.msra.mxu0 0.0
        %7473 = vmatprep.subr.mxu0 0.0
        %7474 = vmatpush1.msra.mxu0 0.0
        %7475 = vmatprep.subr.mxu0 0.0
        %7476 = vmatpush1.msra.mxu0 0.0
        %7477 = vmatprep.subr.mxu0 0.0
        %7478 = vmatpush1.msra.mxu0 0.0
        %7479 = vmatprep.subr.mxu0 0.0
        %7480 = vmatpush1.msra.mxu0 0.0
        %7481 = vmatprep.subr.mxu0 0.0
        %7482 = vmatpush1.msra.mxu0 0.0
        %7483 = vmatprep.subr.mxu0 0.0
        %7484 = vmatpush1.msra.mxu0 0.0
        %7485 = vmatprep.subr.mxu0 0.0
        %7486 = vmatpush1.msra.mxu0 0.0
        %7487 = vmatprep.subr.mxu0 0.0
        %7488 = vmatpush1.msra.mxu0 0.0
        %7489 = vmatprep.subr.mxu0 0.0
        %7490 = vmatpush1.msra.mxu0 0.0
        %7491 = vmatprep.subr.mxu0 0.0
        %7492 = vmatpush1.msra.mxu0 0.0
        %7493 = vmatprep.subr.mxu0 0.0
        %7494 = vmatpush1.msra.mxu0 0.0
        %7495 = vmatprep.subr.mxu0 0.0
        %7496 = vmatpush1.msra.mxu0 0.0
        %7497 = vmatprep.subr.mxu0 0.0
        %7498 = vmatpush1.msra.mxu0 0.0
        %7499 = vmatprep.subr.mxu0 0.0
        %7500 = vmatpush1.msra.mxu0 0.0
        %7501 = vmatprep.subr.mxu0 0.0
        %7502 = vmatpush1.msra.mxu0 0.0
        %7503 = vmatprep.subr.mxu0 0.0
        %7504 = vmatpush1.msra.mxu0 0.0
        %7505 = vmatprep.mubr.f32.mxu0 0.0
        %v7506 = vand.u32 %v6820, 4294901760
        %v7507 = vsub.f32 %v6820, %v7506
        %7508 = vmatmul.mubr.f32.gmra.mrb[0].mxu0 %v7507
        %v7509 = vpop.f32.mrb[0].mxu0
        %v7510 = vadd.f32 %v7436, %v7509
        %v7511 = vpop.f32.mrb[0].mxu0
        %7512 = vdwg.mxu0
        %7513 = vmatprep.subr.mxu0 0.0
        %v7514 = vand.u32 %v6815, 4294901760
        %7515 = vmatpush1.msra.mxu0 %v7514
        %7516 = vmatprep.subr.mxu0 0.0
        %7517 = vmatpush1.msra.mxu0 0.0
        %7518 = vmatprep.subr.mxu0 0.0
        %7519 = vmatpush1.msra.mxu0 0.0
        %7520 = vmatprep.subr.mxu0 0.0
        %7521 = vmatpush1.msra.mxu0 0.0
        %7522 = vmatprep.subr.mxu0 0.0
        %7523 = vmatpush1.msra.mxu0 0.0
        %7524 = vmatprep.subr.mxu0 0.0
        %7525 = vmatpush1.msra.mxu0 0.0
        %7526 = vmatprep.subr.mxu0 0.0
        %7527 = vmatpush1.msra.mxu0 0.0
        %7528 = vmatprep.subr.mxu0 0.0
        %7529 = vmatpush1.msra.mxu0 0.0
        %7530 = vmatprep.subr.mxu0 0.0
        %7531 = vmatpush1.msra.mxu0 0.0
        %7532 = vmatprep.subr.mxu0 0.0
        %7533 = vmatpush1.msra.mxu0 0.0
        %7534 = vmatprep.subr.mxu0 0.0
        %7535 = vmatpush1.msra.mxu0 0.0
        %7536 = vmatprep.subr.mxu0 0.0
        %7537 = vmatpush1.msra.mxu0 0.0
        %7538 = vmatprep.subr.mxu0 0.0
        %7539 = vmatpush1.msra.mxu0 0.0
        %7540 = vmatprep.subr.mxu0 0.0
        %7541 = vmatpush1.msra.mxu0 0.0
        %7542 = vmatprep.subr.mxu0 0.0
        %7543 = vmatpush1.msra.mxu0 0.0
        %7544 = vmatprep.subr.mxu0 0.0
        %7545 = vmatpush1.msra.mxu0 0.0
        %7546 = vmatprep.subr.mxu0 0.0
        %7547 = vmatpush1.msra.mxu0 0.0
        %7548 = vmatprep.subr.mxu0 0.0
        %7549 = vmatpush1.msra.mxu0 0.0
        %7550 = vmatprep.subr.mxu0 0.0
        %7551 = vmatpush1.msra.mxu0 0.0
        %7552 = vmatprep.subr.mxu0 0.0
        %7553 = vmatpush1.msra.mxu0 0.0
        %7554 = vmatprep.subr.mxu0 0.0
        %7555 = vmatpush1.msra.mxu0 0.0
        %7556 = vmatprep.subr.mxu0 0.0
        %7557 = vmatpush1.msra.mxu0 0.0
        %7558 = vmatprep.subr.mxu0 0.0
        %7559 = vmatpush1.msra.mxu0 0.0
        %7560 = vmatprep.subr.mxu0 0.0
        %7561 = vmatpush1.msra.mxu0 0.0
        %7562 = vmatprep.subr.mxu0 0.0
        %7563 = vmatpush1.msra.mxu0 0.0
        %7564 = vmatprep.subr.mxu0 0.0
        %7565 = vmatpush1.msra.mxu0 0.0
        %7566 = vmatprep.subr.mxu0 0.0
        %7567 = vmatpush1.msra.mxu0 0.0
        %7568 = vmatprep.subr.mxu0 0.0
        %7569 = vmatpush1.msra.mxu0 0.0
        %7570 = vmatprep.subr.mxu0 0.0
        %7571 = vmatpush1.msra.mxu0 0.0
        %7572 = vmatprep.subr.mxu0 0.0
        %7573 = vmatpush1.msra.mxu0 0.0
        %7574 = vmatprep.subr.mxu0 0.0
        %7575 = vmatpush1.msra.mxu0 0.0
        %7576 = vmatprep.subr.mxu0 0.0
        %7577 = vmatpush1.msra.mxu0 0.0
        %7578 = vmatprep.mubr.f32.mxu0 0.0
        %v7579 = vand.u32 %v6820, 4294901760
        %v7580 = vsub.f32 %v6820, %v7579
        %v7581 = vand.u32 %v7580, 4294901760
        %7582 = vmatmul.mubr.f32.gmra.mrb[0].mxu0 %v7581
        %v7583 = vpop.f32.mrb[0].mxu0
        %v7584 = vadd.f32 %v7510, %v7583
        %v7585 = vpop.f32.mrb[0].mxu0
        %7586 = vdwg.mxu0
        %7587 = vmatprep.subr.mxu0 0.0
        %v7588 = vand.u32 %v6815, 4294901760
        %v7589 = vsub.f32 %v6815, %v7588
        %v7590 = vand.u32 %v7589, 4294901760
        %7591 = vmatpush1.msra.mxu0 %v7590
        %7592 = vmatprep.subr.mxu0 0.0
        %7593 = vmatpush1.msra.mxu0 0.0
        %7594 = vmatprep.subr.mxu0 0.0
        %7595 = vmatpush1.msra.mxu0 0.0
        %7596 = vmatprep.subr.mxu0 0.0
        %7597 = vmatpush1.msra.mxu0 0.0
        %7598 = vmatprep.subr.mxu0 0.0
        %7599 = vmatpush1.msra.mxu0 0.0
        %7600 = vmatprep.subr.mxu0 0.0
        %7601 = vmatpush1.msra.mxu0 0.0
        %7602 = vmatprep.subr.mxu0 0.0
        %7603 = vmatpush1.msra.mxu0 0.0
        %7604 = vmatprep.subr.mxu0 0.0
        %7605 = vmatpush1.msra.mxu0 0.0
        %7606 = vmatprep.subr.mxu0 0.0
        %7607 = vmatpush1.msra.mxu0 0.0
        %7608 = vmatprep.subr.mxu0 0.0
        %7609 = vmatpush1.msra.mxu0 0.0
        %7610 = vmatprep.subr.mxu0 0.0
        %7611 = vmatpush1.msra.mxu0 0.0
        %7612 = vmatprep.subr.mxu0 0.0
        %7613 = vmatpush1.msra.mxu0 0.0
        %7614 = vmatprep.subr.mxu0 0.0
        %7615 = vmatpush1.msra.mxu0 0.0
        %7616 = vmatprep.subr.mxu0 0.0
        %7617 = vmatpush1.msra.mxu0 0.0
        %7618 = vmatprep.subr.mxu0 0.0
        %7619 = vmatpush1.msra.mxu0 0.0
        %7620 = vmatprep.subr.mxu0 0.0
        %7621 = vmatpush1.msra.mxu0 0.0
        %7622 = vmatprep.subr.mxu0 0.0
        %7623 = vmatpush1.msra.mxu0 0.0
        %7624 = vmatprep.subr.mxu0 0.0
        %7625 = vmatpush1.msra.mxu0 0.0
        %7626 = vmatprep.subr.mxu0 0.0
        %7627 = vmatpush1.msra.mxu0 0.0
        %7628 = vmatprep.subr.mxu0 0.0
        %7629 = vmatpush1.msra.mxu0 0.0
        %7630 = vmatprep.subr.mxu0 0.0
        %7631 = vmatpush1.msra.mxu0 0.0
        %7632 = vmatprep.subr.mxu0 0.0
        %7633 = vmatpush1.msra.mxu0 0.0
        %7634 = vmatprep.subr.mxu0 0.0
        %7635 = vmatpush1.msra.mxu0 0.0
        %7636 = vmatprep.subr.mxu0 0.0
        %7637 = vmatpush1.msra.mxu0 0.0
        %7638 = vmatprep.subr.mxu0 0.0
        %7639 = vmatpush1.msra.mxu0 0.0
        %7640 = vmatprep.subr.mxu0 0.0
        %7641 = vmatpush1.msra.mxu0 0.0
        %7642 = vmatprep.subr.mxu0 0.0
        %7643 = vmatpush1.msra.mxu0 0.0
        %7644 = vmatprep.subr.mxu0 0.0
        %7645 = vmatpush1.msra.mxu0 0.0
        %7646 = vmatprep.subr.mxu0 0.0
        %7647 = vmatpush1.msra.mxu0 0.0
        %7648 = vmatprep.subr.mxu0 0.0
        %7649 = vmatpush1.msra.mxu0 0.0
        %7650 = vmatprep.subr.mxu0 0.0
        %7651 = vmatpush1.msra.mxu0 0.0
        %7652 = vmatprep.subr.mxu0 0.0
        %7653 = vmatpush1.msra.mxu0 0.0
        %7654 = vmatprep.mubr.f32.mxu0 0.0
        %v7655 = vand.u32 %v6820, 4294901760
        %7656 = vmatmul.mubr.f32.gmra.mrb[0].mxu0 %v7655
        %v7657 = vpop.f32.mrb[0].mxu0
        %v7658 = vadd.f32 %v7584, %v7657
        %v7659 = vpop.f32.mrb[0].mxu0
        %7660 = vdwg.mxu0
        %7661 = vmatprep.subr.mxu0 0.0
        %v7662 = vand.u32 %v6815, 4294901760
        %7663 = vmatpush1.msra.mxu0 %v7662
        %7664 = vmatprep.subr.mxu0 0.0
        %7665 = vmatpush1.msra.mxu0 0.0
        %7666 = vmatprep.subr.mxu0 0.0
        %7667 = vmatpush1.msra.mxu0 0.0
        %7668 = vmatprep.subr.mxu0 0.0
        %7669 = vmatpush1.msra.mxu0 0.0
        %7670 = vmatprep.subr.mxu0 0.0
        %7671 = vmatpush1.msra.mxu0 0.0
        %7672 = vmatprep.subr.mxu0 0.0
        %7673 = vmatpush1.msra.mxu0 0.0
        %7674 = vmatprep.subr.mxu0 0.0
        %7675 = vmatpush1.msra.mxu0 0.0
        %7676 = vmatprep.subr.mxu0 0.0
        %7677 = vmatpush1.msra.mxu0 0.0
        %7678 = vmatprep.subr.mxu0 0.0
        %7679 = vmatpush1.msra.mxu0 0.0
        %7680 = vmatprep.subr.mxu0 0.0
        %7681 = vmatpush1.msra.mxu0 0.0
        %7682 = vmatprep.subr.mxu0 0.0
        %7683 = vmatpush1.msra.mxu0 0.0
        %7684 = vmatprep.subr.mxu0 0.0
        %7685 = vmatpush1.msra.mxu0 0.0
        %7686 = vmatprep.subr.mxu0 0.0
        %7687 = vmatpush1.msra.mxu0 0.0
        %7688 = vmatprep.subr.mxu0 0.0
        %7689 = vmatpush1.msra.mxu0 0.0
        %7690 = vmatprep.subr.mxu0 0.0
        %7691 = vmatpush1.msra.mxu0 0.0
        %7692 = vmatprep.subr.mxu0 0.0
        %7693 = vmatpush1.msra.mxu0 0.0
        %7694 = vmatprep.subr.mxu0 0.0
        %7695 = vmatpush1.msra.mxu0 0.0
        %7696 = vmatprep.subr.mxu0 0.0
        %7697 = vmatpush1.msra.mxu0 0.0
        %7698 = vmatprep.subr.mxu0 0.0
        %7699 = vmatpush1.msra.mxu0 0.0
        %7700 = vmatprep.subr.mxu0 0.0
        %7701 = vmatpush1.msra.mxu0 0.0
        %7702 = vmatprep.subr.mxu0 0.0
        %7703 = vmatpush1.msra.mxu0 0.0
        %7704 = vmatprep.subr.mxu0 0.0
        %7705 = vmatpush1.msra.mxu0 0.0
        %7706 = vmatprep.subr.mxu0 0.0
        %7707 = vmatpush1.msra.mxu0 0.0
        %7708 = vmatprep.subr.mxu0 0.0
        %7709 = vmatpush1.msra.mxu0 0.0
        %7710 = vmatprep.subr.mxu0 0.0
        %7711 = vmatpush1.msra.mxu0 0.0
        %7712 = vmatprep.subr.mxu0 0.0
        %7713 = vmatpush1.msra.mxu0 0.0
        %7714 = vmatprep.subr.mxu0 0.0
        %7715 = vmatpush1.msra.mxu0 0.0
        %7716 = vmatprep.subr.mxu0 0.0
        %7717 = vmatpush1.msra.mxu0 0.0
        %7718 = vmatprep.subr.mxu0 0.0
        %7719 = vmatpush1.msra.mxu0 0.0
        %7720 = vmatprep.subr.mxu0 0.0
        %7721 = vmatpush1.msra.mxu0 0.0
        %7722 = vmatprep.subr.mxu0 0.0
        %7723 = vmatpush1.msra.mxu0 0.0
        %7724 = vmatprep.subr.mxu0 0.0
        %7725 = vmatpush1.msra.mxu0 0.0
        %7726 = vmatprep.mubr.f32.mxu0 0.0
        %v7727 = vand.u32 %v6820, 4294901760
        %7728 = vmatmul.mubr.f32.gmra.mrb[0].mxu0 %v7727
        %v7729 = vpop.f32.mrb[0].mxu0
        %v7730 = vadd.f32 %v7658, %v7729
        %v7731 = vpop.f32.mrb[0].mxu0
        %7732 = vdwg.mxu0
        %v7733 = vadd.f32 %v6799, %v7283
        %v7734 = vadd.f32 %v6800, %v7285
        %v7735 = vadd.f32 %v6801, %v7730
        %s7736 = scalar_lea.vmem %s1, 64
        %v7737 = vld [vmem:[%s7736] sm:$0xff]
        %7738 = vrot.lane.b32.xlu0 %v277, 90
        %v7739 = vpop.permute.xlu0 %7738
        %7740 = vrot.lane.b32.xlu0 %v278, 90
        %v7741 = vpop.permute.xlu0 %7740
        %7742 = vrot.lane.b32.xlu0 %v279, 90
        %v7743 = vpop.permute.xlu0 %7742
        %7744 = vrot.lane.b32.xlu0 %v280, 90
        %v7745 = vpop.permute.xlu0 %7744
        %vm7746 = vcmask 736256
        %v7747 = vsel %vm7746, %v7739, %v7741
        %v7748 = vsel %vm7746, %v7741, %v7743
        %v7749 = vsel %vm7746, %v7743, %v7745
        %v7754 = vsel %vm303, %v7737, 0
        %v7756 = vand.u32 %v7748, 4294901760
        %7757 = vmatprep.subr.mxu0 %v7756
        %v7758 = vand.u32 %v7747, 4294901760
        %7759 = vmatpush1.msra.mxu0 %v7758
        %7760 = vmatprep.subr.mxu0 0.0
        %7761 = vmatpush1.msra.mxu0 0.0
        %7762 = vmatprep.subr.mxu0 0.0
        %7763 = vmatpush1.msra.mxu0 0.0
        %7764 = vmatprep.subr.mxu0 0.0
        %7765 = vmatpush1.msra.mxu0 0.0
        %7766 = vmatprep.subr.mxu0 0.0
        %7767 = vmatpush1.msra.mxu0 0.0
        %7768 = vmatprep.subr.mxu0 0.0
        %7769 = vmatpush1.msra.mxu0 0.0
        %7770 = vmatprep.subr.mxu0 0.0
        %7771 = vmatpush1.msra.mxu0 0.0
        %7772 = vmatprep.subr.mxu0 0.0
        %7773 = vmatpush1.msra.mxu0 0.0
        %7774 = vmatprep.subr.mxu0 0.0
        %7775 = vmatpush1.msra.mxu0 0.0
        %7776 = vmatprep.subr.mxu0 0.0
        %7777 = vmatpush1.msra.mxu0 0.0
        %7778 = vmatprep.subr.mxu0 0.0
        %7779 = vmatpush1.msra.mxu0 0.0
        %7780 = vmatprep.subr.mxu0 0.0
        %7781 = vmatpush1.msra.mxu0 0.0
        %7782 = vmatprep.subr.mxu0 0.0
        %7783 = vmatpush1.msra.mxu0 0.0
        %7784 = vmatprep.subr.mxu0 0.0
        %7785 = vmatpush1.msra.mxu0 0.0
        %7786 = vmatprep.subr.mxu0 0.0
        %7787 = vmatpush1.msra.mxu0 0.0
        %7788 = vmatprep.subr.mxu0 0.0
        %7789 = vmatpush1.msra.mxu0 0.0
        %7790 = vmatprep.subr.mxu0 0.0
        %7791 = vmatpush1.msra.mxu0 0.0
        %7792 = vmatprep.subr.mxu0 0.0
        %7793 = vmatpush1.msra.mxu0 0.0
        %7794 = vmatprep.subr.mxu0 0.0
        %7795 = vmatpush1.msra.mxu0 0.0
        %7796 = vmatprep.subr.mxu0 0.0
        %7797 = vmatpush1.msra.mxu0 0.0
        %7798 = vmatprep.subr.mxu0 0.0
        %7799 = vmatpush1.msra.mxu0 0.0
        %7800 = vmatprep.subr.mxu0 0.0
        %7801 = vmatpush1.msra.mxu0 0.0
        %7802 = vmatprep.subr.mxu0 0.0
        %7803 = vmatpush1.msra.mxu0 0.0
        %7804 = vmatprep.subr.mxu0 0.0
        %7805 = vmatpush1.msra.mxu0 0.0
        %7806 = vmatprep.subr.mxu0 0.0
        %7807 = vmatpush1.msra.mxu0 0.0
        %7808 = vmatprep.subr.mxu0 0.0
        %7809 = vmatpush1.msra.mxu0 0.0
        %7810 = vmatprep.subr.mxu0 0.0
        %7811 = vmatpush1.msra.mxu0 0.0
        %7812 = vmatprep.subr.mxu0 0.0
        %7813 = vmatpush1.msra.mxu0 0.0
        %7814 = vmatprep.subr.mxu0 0.0
        %7815 = vmatpush1.msra.mxu0 0.0
        %7816 = vmatprep.subr.mxu0 0.0
        %7817 = vmatpush1.msra.mxu0 0.0
        %7818 = vmatprep.subr.mxu0 0.0
        %7819 = vmatpush1.msra.mxu0 0.0
        %7820 = vmatprep.subr.mxu0 0.0
        %7821 = vmatpush1.msra.mxu0 0.0
        %7822 = vmatprep.mubr.f32.mxu0 0.0
        %v7823 = vand.u32 %v7754, 4294901760
        %v7824 = vsub.f32 %v7754, %v7823
        %v7825 = vand.u32 %v7824, 4294901760
        %v7826 = vsub.f32 %v7824, %v7825
        %v7827 = vand.u32 %v7826, 4294901760
        %7828 = vmatmul.mubr.f32.gmra.mrb[0].mxu0 %v7827
        %v7829 = vpop.f32.mrb[0].mxu0
        %v7830 = vadd.f32 0.0, %v7829
        %v7831 = vpop.f32.mrb[0].mxu0
        %v7832 = vadd.f32 0.0, %v7831
        %7833 = vdwg.mxu0
        %v7834 = vand.u32 %v7748, 4294901760
        %v7835 = vsub.f32 %v7748, %v7834
        %v7836 = vand.u32 %v7835, 4294901760
        %v7837 = vsub.f32 %v7835, %v7836
        %v7838 = vand.u32 %v7837, 4294901760
        %7839 = vmatprep.subr.mxu0 %v7838
        %v7840 = vand.u32 %v7747, 4294901760
        %v7841 = vsub.f32 %v7747, %v7840
        %v7842 = vand.u32 %v7841, 4294901760
        %v7843 = vsub.f32 %v7841, %v7842
        %v7844 = vand.u32 %v7843, 4294901760
        %7845 = vmatpush1.msra.mxu0 %v7844
        %7846 = vmatprep.subr.mxu0 0.0
        %7847 = vmatpush1.msra.mxu0 0.0
        %7848 = vmatprep.subr.mxu0 0.0
        %7849 = vmatpush1.msra.mxu0 0.0
        %7850 = vmatprep.subr.mxu0 0.0
        %7851 = vmatpush1.msra.mxu0 0.0
        %7852 = vmatprep.subr.mxu0 0.0
        %7853 = vmatpush1.msra.mxu0 0.0
        %7854 = vmatprep.subr.mxu0 0.0
        %7855 = vmatpush1.msra.mxu0 0.0
        %7856 = vmatprep.subr.mxu0 0.0
        %7857 = vmatpush1.msra.mxu0 0.0
        %7858 = vmatprep.subr.mxu0 0.0
        %7859 = vmatpush1.msra.mxu0 0.0
        %7860 = vmatprep.subr.mxu0 0.0
        %7861 = vmatpush1.msra.mxu0 0.0
        %7862 = vmatprep.subr.mxu0 0.0
        %7863 = vmatpush1.msra.mxu0 0.0
        %7864 = vmatprep.subr.mxu0 0.0
        %7865 = vmatpush1.msra.mxu0 0.0
        %7866 = vmatprep.subr.mxu0 0.0
        %7867 = vmatpush1.msra.mxu0 0.0
        %7868 = vmatprep.subr.mxu0 0.0
        %7869 = vmatpush1.msra.mxu0 0.0
        %7870 = vmatprep.subr.mxu0 0.0
        %7871 = vmatpush1.msra.mxu0 0.0
        %7872 = vmatprep.subr.mxu0 0.0
        %7873 = vmatpush1.msra.mxu0 0.0
        %7874 = vmatprep.subr.mxu0 0.0
        %7875 = vmatpush1.msra.mxu0 0.0
        %7876 = vmatprep.subr.mxu0 0.0
        %7877 = vmatpush1.msra.mxu0 0.0
        %7878 = vmatprep.subr.mxu0 0.0
        %7879 = vmatpush1.msra.mxu0 0.0
        %7880 = vmatprep.subr.mxu0 0.0
        %7881 = vmatpush1.msra.mxu0 0.0
        %7882 = vmatprep.subr.mxu0 0.0
        %7883 = vmatpush1.msra.mxu0 0.0
        %7884 = vmatprep.subr.mxu0 0.0
        %7885 = vmatpush1.msra.mxu0 0.0
        %7886 = vmatprep.subr.mxu0 0.0
        %7887 = vmatpush1.msra.mxu0 0.0
        %7888 = vmatprep.subr.mxu0 0.0
        %7889 = vmatpush1.msra.mxu0 0.0
        %7890 = vmatprep.subr.mxu0 0.0
        %7891 = vmatpush1.msra.mxu0 0.0
        %7892 = vmatprep.subr.mxu0 0.0
        %7893 = vmatpush1.msra.mxu0 0.0
        %7894 = vmatprep.subr.mxu0 0.0
        %7895 = vmatpush1.msra.mxu0 0.0
        %7896 = vmatprep.subr.mxu0 0.0
        %7897 = vmatpush1.msra.mxu0 0.0
        %7898 = vmatprep.subr.mxu0 0.0
        %7899 = vmatpush1.msra.mxu0 0.0
        %7900 = vmatprep.subr.mxu0 0.0
        %7901 = vmatpush1.msra.mxu0 0.0
        %7902 = vmatprep.subr.mxu0 0.0
        %7903 = vmatpush1.msra.mxu0 0.0
        %7904 = vmatprep.subr.mxu0 0.0
        %7905 = vmatpush1.msra.mxu0 0.0
        %7906 = vmatprep.subr.mxu0 0.0
        %7907 = vmatpush1.msra.mxu0 0.0
        %7908 = vmatprep.mubr.f32.mxu0 0.0
        %v7909 = vand.u32 %v7754, 4294901760
        %7910 = vmatmul.mubr.f32.gmra.mrb[0].mxu0 %v7909
        %v7911 = vpop.f32.mrb[0].mxu0
        %v7912 = vadd.f32 %v7830, %v7911
        %v7913 = vpop.f32.mrb[0].mxu0
        %v7914 = vadd.f32 %v7832, %v7913
        %7915 = vdwg.mxu0
        %v7916 = vand.u32 %v7748, 4294901760
        %v7917 = vsub.f32 %v7748, %v7916
        %7918 = vmatprep.subr.mxu0 %v7917
        %v7919 = vand.u32 %v7747, 4294901760
        %v7920 = vsub.f32 %v7747, %v7919
        %7921 = vmatpush1.msra.mxu0 %v7920
        %7922 = vmatprep.subr.mxu0 0.0
        %7923 = vmatpush1.msra.mxu0 0.0
        %7924 = vmatprep.subr.mxu0 0.0
        %7925 = vmatpush1.msra.mxu0 0.0
        %7926 = vmatprep.subr.mxu0 0.0
        %7927 = vmatpush1.msra.mxu0 0.0
        %7928 = vmatprep.subr.mxu0 0.0
        %7929 = vmatpush1.msra.mxu0 0.0
        %7930 = vmatprep.subr.mxu0 0.0
        %7931 = vmatpush1.msra.mxu0 0.0
        %7932 = vmatprep.subr.mxu0 0.0
        %7933 = vmatpush1.msra.mxu0 0.0
        %7934 = vmatprep.subr.mxu0 0.0
        %7935 = vmatpush1.msra.mxu0 0.0
        %7936 = vmatprep.subr.mxu0 0.0
        %7937 = vmatpush1.msra.mxu0 0.0
        %7938 = vmatprep.subr.mxu0 0.0
        %7939 = vmatpush1.msra.mxu0 0.0
        %7940 = vmatprep.subr.mxu0 0.0
        %7941 = vmatpush1.msra.mxu0 0.0
        %7942 = vmatprep.subr.mxu0 0.0
        %7943 = vmatpush1.msra.mxu0 0.0
        %7944 = vmatprep.subr.mxu0 0.0
        %7945 = vmatpush1.msra.mxu0 0.0
        %7946 = vmatprep.subr.mxu0 0.0
        %7947 = vmatpush1.msra.mxu0 0.0
        %7948 = vmatprep.subr.mxu0 0.0
        %7949 = vmatpush1.msra.mxu0 0.0
        %7950 = vmatprep.subr.mxu0 0.0
        %7951 = vmatpush1.msra.mxu0 0.0
        %7952 = vmatprep.subr.mxu0 0.0
        %7953 = vmatpush1.msra.mxu0 0.0
        %7954 = vmatprep.subr.mxu0 0.0
        %7955 = vmatpush1.msra.mxu0 0.0
        %7956 = vmatprep.subr.mxu0 0.0
        %7957 = vmatpush1.msra.mxu0 0.0
        %7958 = vmatprep.subr.mxu0 0.0
        %7959 = vmatpush1.msra.mxu0 0.0
        %7960 = vmatprep.subr.mxu0 0.0
        %7961 = vmatpush1.msra.mxu0 0.0
        %7962 = vmatprep.subr.mxu0 0.0
        %7963 = vmatpush1.msra.mxu0 0.0
        %7964 = vmatprep.subr.mxu0 0.0
        %7965 = vmatpush1.msra.mxu0 0.0
        %7966 = vmatprep.subr.mxu0 0.0
        %7967 = vmatpush1.msra.mxu0 0.0
        %7968 = vmatprep.subr.mxu0 0.0
        %7969 = vmatpush1.msra.mxu0 0.0
        %7970 = vmatprep.subr.mxu0 0.0
        %7971 = vmatpush1.msra.mxu0 0.0
        %7972 = vmatprep.subr.mxu0 0.0
        %7973 = vmatpush1.msra.mxu0 0.0
        %7974 = vmatprep.subr.mxu0 0.0
        %7975 = vmatpush1.msra.mxu0 0.0
        %7976 = vmatprep.subr.mxu0 0.0
        %7977 = vmatpush1.msra.mxu0 0.0
        %7978 = vmatprep.subr.mxu0 0.0
        %7979 = vmatpush1.msra.mxu0 0.0
        %7980 = vmatprep.subr.mxu0 0.0
        %7981 = vmatpush1.msra.mxu0 0.0
        %7982 = vmatprep.subr.mxu0 0.0
        %7983 = vmatpush1.msra.mxu0 0.0
        %7984 = vmatprep.mubr.f32.mxu0 0.0
        %v7985 = vand.u32 %v7754, 4294901760
        %v7986 = vsub.f32 %v7754, %v7985
        %7987 = vmatmul.mubr.f32.gmra.mrb[0].mxu0 %v7986
        %v7988 = vpop.f32.mrb[0].mxu0
        %v7989 = vadd.f32 %v7912, %v7988
        %v7990 = vpop.f32.mrb[0].mxu0
        %v7991 = vadd.f32 %v7914, %v7990
        %7992 = vdwg.mxu0
        %v7993 = vand.u32 %v7748, 4294901760
        %7994 = vmatprep.subr.mxu0 %v7993
        %v7995 = vand.u32 %v7747, 4294901760
        %7996 = vmatpush1.msra.mxu0 %v7995
        %7997 = vmatprep.subr.mxu0 0.0
        %7998 = vmatpush1.msra.mxu0 0.0
        %7999 = vmatprep.subr.mxu0 0.0
        %8000 = vmatpush1.msra.mxu0 0.0
        %8001 = vmatprep.subr.mxu0 0.0
        %8002 = vmatpush1.msra.mxu0 0.0
        %8003 = vmatprep.subr.mxu0 0.0
        %8004 = vmatpush1.msra.mxu0 0.0
        %8005 = vmatprep.subr.mxu0 0.0
        %8006 = vmatpush1.msra.mxu0 0.0
        %8007 = vmatprep.subr.mxu0 0.0
        %8008 = vmatpush1.msra.mxu0 0.0
        %8009 = vmatprep.subr.mxu0 0.0
        %8010 = vmatpush1.msra.mxu0 0.0
        %8011 = vmatprep.subr.mxu0 0.0
        %8012 = vmatpush1.msra.mxu0 0.0
        %8013 = vmatprep.subr.mxu0 0.0
        %8014 = vmatpush1.msra.mxu0 0.0
        %8015 = vmatprep.subr.mxu0 0.0
        %8016 = vmatpush1.msra.mxu0 0.0
        %8017 = vmatprep.subr.mxu0 0.0
        %8018 = vmatpush1.msra.mxu0 0.0
        %8019 = vmatprep.subr.mxu0 0.0
        %8020 = vmatpush1.msra.mxu0 0.0
        %8021 = vmatprep.subr.mxu0 0.0
        %8022 = vmatpush1.msra.mxu0 0.0
        %8023 = vmatprep.subr.mxu0 0.0
        %8024 = vmatpush1.msra.mxu0 0.0
        %8025 = vmatprep.subr.mxu0 0.0
        %8026 = vmatpush1.msra.mxu0 0.0
        %8027 = vmatprep.subr.mxu0 0.0
        %8028 = vmatpush1.msra.mxu0 0.0
        %8029 = vmatprep.subr.mxu0 0.0
        %8030 = vmatpush1.msra.mxu0 0.0
        %8031 = vmatprep.subr.mxu0 0.0
        %8032 = vmatpush1.msra.mxu0 0.0
        %8033 = vmatprep.subr.mxu0 0.0
        %8034 = vmatpush1.msra.mxu0 0.0
        %8035 = vmatprep.subr.mxu0 0.0
        %8036 = vmatpush1.msra.mxu0 0.0
        %8037 = vmatprep.subr.mxu0 0.0
        %8038 = vmatpush1.msra.mxu0 0.0
        %8039 = vmatprep.subr.mxu0 0.0
        %8040 = vmatpush1.msra.mxu0 0.0
        %8041 = vmatprep.subr.mxu0 0.0
        %8042 = vmatpush1.msra.mxu0 0.0
        %8043 = vmatprep.subr.mxu0 0.0
        %8044 = vmatpush1.msra.mxu0 0.0
        %8045 = vmatprep.subr.mxu0 0.0
        %8046 = vmatpush1.msra.mxu0 0.0
        %8047 = vmatprep.subr.mxu0 0.0
        %8048 = vmatpush1.msra.mxu0 0.0
        %8049 = vmatprep.subr.mxu0 0.0
        %8050 = vmatpush1.msra.mxu0 0.0
        %8051 = vmatprep.subr.mxu0 0.0
        %8052 = vmatpush1.msra.mxu0 0.0
        %8053 = vmatprep.subr.mxu0 0.0
        %8054 = vmatpush1.msra.mxu0 0.0
        %8055 = vmatprep.subr.mxu0 0.0
        %8056 = vmatpush1.msra.mxu0 0.0
        %8057 = vmatprep.subr.mxu0 0.0
        %8058 = vmatpush1.msra.mxu0 0.0
        %8059 = vmatprep.mubr.f32.mxu0 0.0
        %v8060 = vand.u32 %v7754, 4294901760
        %v8061 = vsub.f32 %v7754, %v8060
        %v8062 = vand.u32 %v8061, 4294901760
        %8063 = vmatmul.mubr.f32.gmra.mrb[0].mxu0 %v8062
        %v8064 = vpop.f32.mrb[0].mxu0
        %v8065 = vadd.f32 %v7989, %v8064
        %v8066 = vpop.f32.mrb[0].mxu0
        %v8067 = vadd.f32 %v7991, %v8066
        %8068 = vdwg.mxu0
        %v8069 = vand.u32 %v7748, 4294901760
        %v8070 = vsub.f32 %v7748, %v8069
        %v8071 = vand.u32 %v8070, 4294901760
        %8072 = vmatprep.subr.mxu0 %v8071
        %v8073 = vand.u32 %v7747, 4294901760
        %v8074 = vsub.f32 %v7747, %v8073
        %v8075 = vand.u32 %v8074, 4294901760
        %8076 = vmatpush1.msra.mxu0 %v8075
        %8077 = vmatprep.subr.mxu0 0.0
        %8078 = vmatpush1.msra.mxu0 0.0
        %8079 = vmatprep.subr.mxu0 0.0
        %8080 = vmatpush1.msra.mxu0 0.0
        %8081 = vmatprep.subr.mxu0 0.0
        %8082 = vmatpush1.msra.mxu0 0.0
        %8083 = vmatprep.subr.mxu0 0.0
        %8084 = vmatpush1.msra.mxu0 0.0
        %8085 = vmatprep.subr.mxu0 0.0
        %8086 = vmatpush1.msra.mxu0 0.0
        %8087 = vmatprep.subr.mxu0 0.0
        %8088 = vmatpush1.msra.mxu0 0.0
        %8089 = vmatprep.subr.mxu0 0.0
        %8090 = vmatpush1.msra.mxu0 0.0
        %8091 = vmatprep.subr.mxu0 0.0
        %8092 = vmatpush1.msra.mxu0 0.0
        %8093 = vmatprep.subr.mxu0 0.0
        %8094 = vmatpush1.msra.mxu0 0.0
        %8095 = vmatprep.subr.mxu0 0.0
        %8096 = vmatpush1.msra.mxu0 0.0
        %8097 = vmatprep.subr.mxu0 0.0
        %8098 = vmatpush1.msra.mxu0 0.0
        %8099 = vmatprep.subr.mxu0 0.0
        %8100 = vmatpush1.msra.mxu0 0.0
        %8101 = vmatprep.subr.mxu0 0.0
        %8102 = vmatpush1.msra.mxu0 0.0
        %8103 = vmatprep.subr.mxu0 0.0
        %8104 = vmatpush1.msra.mxu0 0.0
        %8105 = vmatprep.subr.mxu0 0.0
        %8106 = vmatpush1.msra.mxu0 0.0
        %8107 = vmatprep.subr.mxu0 0.0
        %8108 = vmatpush1.msra.mxu0 0.0
        %8109 = vmatprep.subr.mxu0 0.0
        %8110 = vmatpush1.msra.mxu0 0.0
        %8111 = vmatprep.subr.mxu0 0.0
        %8112 = vmatpush1.msra.mxu0 0.0
        %8113 = vmatprep.subr.mxu0 0.0
        %8114 = vmatpush1.msra.mxu0 0.0
        %8115 = vmatprep.subr.mxu0 0.0
        %8116 = vmatpush1.msra.mxu0 0.0
        %8117 = vmatprep.subr.mxu0 0.0
        %8118 = vmatpush1.msra.mxu0 0.0
        %8119 = vmatprep.subr.mxu0 0.0
        %8120 = vmatpush1.msra.mxu0 0.0
        %8121 = vmatprep.subr.mxu0 0.0
        %8122 = vmatpush1.msra.mxu0 0.0
        %8123 = vmatprep.subr.mxu0 0.0
        %8124 = vmatpush1.msra.mxu0 0.0
        %8125 = vmatprep.subr.mxu0 0.0
        %8126 = vmatpush1.msra.mxu0 0.0
        %8127 = vmatprep.subr.mxu0 0.0
        %8128 = vmatpush1.msra.mxu0 0.0
        %8129 = vmatprep.subr.mxu0 0.0
        %8130 = vmatpush1.msra.mxu0 0.0
        %8131 = vmatprep.subr.mxu0 0.0
        %8132 = vmatpush1.msra.mxu0 0.0
        %8133 = vmatprep.subr.mxu0 0.0
        %8134 = vmatpush1.msra.mxu0 0.0
        %8135 = vmatprep.subr.mxu0 0.0
        %8136 = vmatpush1.msra.mxu0 0.0
        %8137 = vmatprep.subr.mxu0 0.0
        %8138 = vmatpush1.msra.mxu0 0.0
        %8139 = vmatprep.mubr.f32.mxu0 0.0
        %v8140 = vand.u32 %v7754, 4294901760
        %8141 = vmatmul.mubr.f32.gmra.mrb[0].mxu0 %v8140
        %v8142 = vpop.f32.mrb[0].mxu0
        %v8143 = vadd.f32 %v8065, %v8142
        %v8144 = vpop.f32.mrb[0].mxu0
        %v8145 = vadd.f32 %v8067, %v8144
        %8146 = vdwg.mxu0
        %v8147 = vand.u32 %v7748, 4294901760
        %8148 = vmatprep.subr.mxu0 %v8147
        %v8149 = vand.u32 %v7747, 4294901760
        %8150 = vmatpush1.msra.mxu0 %v8149
        %8151 = vmatprep.subr.mxu0 0.0
        %8152 = vmatpush1.msra.mxu0 0.0
        %8153 = vmatprep.subr.mxu0 0.0
        %8154 = vmatpush1.msra.mxu0 0.0
        %8155 = vmatprep.subr.mxu0 0.0
        %8156 = vmatpush1.msra.mxu0 0.0
        %8157 = vmatprep.subr.mxu0 0.0
        %8158 = vmatpush1.msra.mxu0 0.0
        %8159 = vmatprep.subr.mxu0 0.0
        %8160 = vmatpush1.msra.mxu0 0.0
        %8161 = vmatprep.subr.mxu0 0.0
        %8162 = vmatpush1.msra.mxu0 0.0
        %8163 = vmatprep.subr.mxu0 0.0
        %8164 = vmatpush1.msra.mxu0 0.0
        %8165 = vmatprep.subr.mxu0 0.0
        %8166 = vmatpush1.msra.mxu0 0.0
        %8167 = vmatprep.subr.mxu0 0.0
        %8168 = vmatpush1.msra.mxu0 0.0
        %8169 = vmatprep.subr.mxu0 0.0
        %8170 = vmatpush1.msra.mxu0 0.0
        %8171 = vmatprep.subr.mxu0 0.0
        %8172 = vmatpush1.msra.mxu0 0.0
        %8173 = vmatprep.subr.mxu0 0.0
        %8174 = vmatpush1.msra.mxu0 0.0
        %8175 = vmatprep.subr.mxu0 0.0
        %8176 = vmatpush1.msra.mxu0 0.0
        %8177 = vmatprep.subr.mxu0 0.0
        %8178 = vmatpush1.msra.mxu0 0.0
        %8179 = vmatprep.subr.mxu0 0.0
        %8180 = vmatpush1.msra.mxu0 0.0
        %8181 = vmatprep.subr.mxu0 0.0
        %8182 = vmatpush1.msra.mxu0 0.0
        %8183 = vmatprep.subr.mxu0 0.0
        %8184 = vmatpush1.msra.mxu0 0.0
        %8185 = vmatprep.subr.mxu0 0.0
        %8186 = vmatpush1.msra.mxu0 0.0
        %8187 = vmatprep.subr.mxu0 0.0
        %8188 = vmatpush1.msra.mxu0 0.0
        %8189 = vmatprep.subr.mxu0 0.0
        %8190 = vmatpush1.msra.mxu0 0.0
        %8191 = vmatprep.subr.mxu0 0.0
        %8192 = vmatpush1.msra.mxu0 0.0
        %8193 = vmatprep.subr.mxu0 0.0
        %8194 = vmatpush1.msra.mxu0 0.0
        %8195 = vmatprep.subr.mxu0 0.0
        %8196 = vmatpush1.msra.mxu0 0.0
        %8197 = vmatprep.subr.mxu0 0.0
        %8198 = vmatpush1.msra.mxu0 0.0
        %8199 = vmatprep.subr.mxu0 0.0
        %8200 = vmatpush1.msra.mxu0 0.0
        %8201 = vmatprep.subr.mxu0 0.0
        %8202 = vmatpush1.msra.mxu0 0.0
        %8203 = vmatprep.subr.mxu0 0.0
        %8204 = vmatpush1.msra.mxu0 0.0
        %8205 = vmatprep.subr.mxu0 0.0
        %8206 = vmatpush1.msra.mxu0 0.0
        %8207 = vmatprep.subr.mxu0 0.0
        %8208 = vmatpush1.msra.mxu0 0.0
        %8209 = vmatprep.subr.mxu0 0.0
        %8210 = vmatpush1.msra.mxu0 0.0
        %8211 = vmatprep.subr.mxu0 0.0
        %8212 = vmatpush1.msra.mxu0 0.0
        %8213 = vmatprep.mubr.f32.mxu0 0.0
        %v8214 = vand.u32 %v7754, 4294901760
        %8215 = vmatmul.mubr.f32.gmra.mrb[0].mxu0 %v8214
        %v8216 = vpop.f32.mrb[0].mxu0
        %v8217 = vadd.f32 %v8143, %v8216
        %v8218 = vpop.f32.mrb[0].mxu0
        %v8219 = vadd.f32 %v8145, %v8218
        %8220 = vdwg.mxu0
        %8221 = vmatprep.subr.mxu0 0.0
        %v8222 = vand.u32 %v7749, 4294901760
        %8223 = vmatpush1.msra.mxu0 %v8222
        %8224 = vmatprep.subr.mxu0 0.0
        %8225 = vmatpush1.msra.mxu0 0.0
        %8226 = vmatprep.subr.mxu0 0.0
        %8227 = vmatpush1.msra.mxu0 0.0
        %8228 = vmatprep.subr.mxu0 0.0
        %8229 = vmatpush1.msra.mxu0 0.0
        %8230 = vmatprep.subr.mxu0 0.0
        %8231 = vmatpush1.msra.mxu0 0.0
        %8232 = vmatprep.subr.mxu0 0.0
        %8233 = vmatpush1.msra.mxu0 0.0
        %8234 = vmatprep.subr.mxu0 0.0
        %8235 = vmatpush1.msra.mxu0 0.0
        %8236 = vmatprep.subr.mxu0 0.0
        %8237 = vmatpush1.msra.mxu0 0.0
        %8238 = vmatprep.subr.mxu0 0.0
        %8239 = vmatpush1.msra.mxu0 0.0
        %8240 = vmatprep.subr.mxu0 0.0
        %8241 = vmatpush1.msra.mxu0 0.0
        %8242 = vmatprep.subr.mxu0 0.0
        %8243 = vmatpush1.msra.mxu0 0.0
        %8244 = vmatprep.subr.mxu0 0.0
        %8245 = vmatpush1.msra.mxu0 0.0
        %8246 = vmatprep.subr.mxu0 0.0
        %8247 = vmatpush1.msra.mxu0 0.0
        %8248 = vmatprep.subr.mxu0 0.0
        %8249 = vmatpush1.msra.mxu0 0.0
        %8250 = vmatprep.subr.mxu0 0.0
        %8251 = vmatpush1.msra.mxu0 0.0
        %8252 = vmatprep.subr.mxu0 0.0
        %8253 = vmatpush1.msra.mxu0 0.0
        %8254 = vmatprep.subr.mxu0 0.0
        %8255 = vmatpush1.msra.mxu0 0.0
        %8256 = vmatprep.subr.mxu0 0.0
        %8257 = vmatpush1.msra.mxu0 0.0
        %8258 = vmatprep.subr.mxu0 0.0
        %8259 = vmatpush1.msra.mxu0 0.0
        %8260 = vmatprep.subr.mxu0 0.0
        %8261 = vmatpush1.msra.mxu0 0.0
        %8262 = vmatprep.subr.mxu0 0.0
        %8263 = vmatpush1.msra.mxu0 0.0
        %8264 = vmatprep.subr.mxu0 0.0
        %8265 = vmatpush1.msra.mxu0 0.0
        %8266 = vmatprep.subr.mxu0 0.0
        %8267 = vmatpush1.msra.mxu0 0.0
        %8268 = vmatprep.subr.mxu0 0.0
        %8269 = vmatpush1.msra.mxu0 0.0
        %8270 = vmatprep.subr.mxu0 0.0
        %8271 = vmatpush1.msra.mxu0 0.0
        %8272 = vmatprep.subr.mxu0 0.0
        %8273 = vmatpush1.msra.mxu0 0.0
        %8274 = vmatprep.subr.mxu0 0.0
        %8275 = vmatpush1.msra.mxu0 0.0
        %8276 = vmatprep.subr.mxu0 0.0
        %8277 = vmatpush1.msra.mxu0 0.0
        %8278 = vmatprep.subr.mxu0 0.0
        %8279 = vmatpush1.msra.mxu0 0.0
        %8280 = vmatprep.subr.mxu0 0.0
        %8281 = vmatpush1.msra.mxu0 0.0
        %8282 = vmatprep.subr.mxu0 0.0
        %8283 = vmatpush1.msra.mxu0 0.0
        %8284 = vmatprep.subr.mxu0 0.0
        %8285 = vmatpush1.msra.mxu0 0.0
        %8286 = vmatprep.mubr.f32.mxu0 0.0
        %v8287 = vand.u32 %v7754, 4294901760
        %v8288 = vsub.f32 %v7754, %v8287
        %v8289 = vand.u32 %v8288, 4294901760
        %v8290 = vsub.f32 %v8288, %v8289
        %v8291 = vand.u32 %v8290, 4294901760
        %8292 = vmatmul.mubr.f32.gmra.mrb[0].mxu0 %v8291
        %v8293 = vpop.f32.mrb[0].mxu0
        %v8294 = vadd.f32 0.0, %v8293
        %v8295 = vpop.f32.mrb[0].mxu0
        %8296 = vdwg.mxu0
        %8297 = vmatprep.subr.mxu0 0.0
        %v8298 = vand.u32 %v7749, 4294901760
        %v8299 = vsub.f32 %v7749, %v8298
        %v8300 = vand.u32 %v8299, 4294901760
        %v8301 = vsub.f32 %v8299, %v8300
        %v8302 = vand.u32 %v8301, 4294901760
        %8303 = vmatpush1.msra.mxu0 %v8302
        %8304 = vmatprep.subr.mxu0 0.0
        %8305 = vmatpush1.msra.mxu0 0.0
        %8306 = vmatprep.subr.mxu0 0.0
        %8307 = vmatpush1.msra.mxu0 0.0
        %8308 = vmatprep.subr.mxu0 0.0
        %8309 = vmatpush1.msra.mxu0 0.0
        %8310 = vmatprep.subr.mxu0 0.0
        %8311 = vmatpush1.msra.mxu0 0.0
        %8312 = vmatprep.subr.mxu0 0.0
        %8313 = vmatpush1.msra.mxu0 0.0
        %8314 = vmatprep.subr.mxu0 0.0
        %8315 = vmatpush1.msra.mxu0 0.0
        %8316 = vmatprep.subr.mxu0 0.0
        %8317 = vmatpush1.msra.mxu0 0.0
        %8318 = vmatprep.subr.mxu0 0.0
        %8319 = vmatpush1.msra.mxu0 0.0
        %8320 = vmatprep.subr.mxu0 0.0
        %8321 = vmatpush1.msra.mxu0 0.0
        %8322 = vmatprep.subr.mxu0 0.0
        %8323 = vmatpush1.msra.mxu0 0.0
        %8324 = vmatprep.subr.mxu0 0.0
        %8325 = vmatpush1.msra.mxu0 0.0
        %8326 = vmatprep.subr.mxu0 0.0
        %8327 = vmatpush1.msra.mxu0 0.0
        %8328 = vmatprep.subr.mxu0 0.0
        %8329 = vmatpush1.msra.mxu0 0.0
        %8330 = vmatprep.subr.mxu0 0.0
        %8331 = vmatpush1.msra.mxu0 0.0
        %8332 = vmatprep.subr.mxu0 0.0
        %8333 = vmatpush1.msra.mxu0 0.0
        %8334 = vmatprep.subr.mxu0 0.0
        %8335 = vmatpush1.msra.mxu0 0.0
        %8336 = vmatprep.subr.mxu0 0.0
        %8337 = vmatpush1.msra.mxu0 0.0
        %8338 = vmatprep.subr.mxu0 0.0
        %8339 = vmatpush1.msra.mxu0 0.0
        %8340 = vmatprep.subr.mxu0 0.0
        %8341 = vmatpush1.msra.mxu0 0.0
        %8342 = vmatprep.subr.mxu0 0.0
        %8343 = vmatpush1.msra.mxu0 0.0
        %8344 = vmatprep.subr.mxu0 0.0
        %8345 = vmatpush1.msra.mxu0 0.0
        %8346 = vmatprep.subr.mxu0 0.0
        %8347 = vmatpush1.msra.mxu0 0.0
        %8348 = vmatprep.subr.mxu0 0.0
        %8349 = vmatpush1.msra.mxu0 0.0
        %8350 = vmatprep.subr.mxu0 0.0
        %8351 = vmatpush1.msra.mxu0 0.0
        %8352 = vmatprep.subr.mxu0 0.0
        %8353 = vmatpush1.msra.mxu0 0.0
        %8354 = vmatprep.subr.mxu0 0.0
        %8355 = vmatpush1.msra.mxu0 0.0
        %8356 = vmatprep.subr.mxu0 0.0
        %8357 = vmatpush1.msra.mxu0 0.0
        %8358 = vmatprep.subr.mxu0 0.0
        %8359 = vmatpush1.msra.mxu0 0.0
        %8360 = vmatprep.subr.mxu0 0.0
        %8361 = vmatpush1.msra.mxu0 0.0
        %8362 = vmatprep.subr.mxu0 0.0
        %8363 = vmatpush1.msra.mxu0 0.0
        %8364 = vmatprep.subr.mxu0 0.0
        %8365 = vmatpush1.msra.mxu0 0.0
        %8366 = vmatprep.mubr.f32.mxu0 0.0
        %v8367 = vand.u32 %v7754, 4294901760
        %8368 = vmatmul.mubr.f32.gmra.mrb[0].mxu0 %v8367
        %v8369 = vpop.f32.mrb[0].mxu0
        %v8370 = vadd.f32 %v8294, %v8369
        %v8371 = vpop.f32.mrb[0].mxu0
        %8372 = vdwg.mxu0
        %8373 = vmatprep.subr.mxu0 0.0
        %v8374 = vand.u32 %v7749, 4294901760
        %v8375 = vsub.f32 %v7749, %v8374
        %8376 = vmatpush1.msra.mxu0 %v8375
        %8377 = vmatprep.subr.mxu0 0.0
        %8378 = vmatpush1.msra.mxu0 0.0
        %8379 = vmatprep.subr.mxu0 0.0
        %8380 = vmatpush1.msra.mxu0 0.0
        %8381 = vmatprep.subr.mxu0 0.0
        %8382 = vmatpush1.msra.mxu0 0.0
        %8383 = vmatprep.subr.mxu0 0.0
        %8384 = vmatpush1.msra.mxu0 0.0
        %8385 = vmatprep.subr.mxu0 0.0
        %8386 = vmatpush1.msra.mxu0 0.0
        %8387 = vmatprep.subr.mxu0 0.0
        %8388 = vmatpush1.msra.mxu0 0.0
        %8389 = vmatprep.subr.mxu0 0.0
        %8390 = vmatpush1.msra.mxu0 0.0
        %8391 = vmatprep.subr.mxu0 0.0
        %8392 = vmatpush1.msra.mxu0 0.0
        %8393 = vmatprep.subr.mxu0 0.0
        %8394 = vmatpush1.msra.mxu0 0.0
        %8395 = vmatprep.subr.mxu0 0.0
        %8396 = vmatpush1.msra.mxu0 0.0
        %8397 = vmatprep.subr.mxu0 0.0
        %8398 = vmatpush1.msra.mxu0 0.0
        %8399 = vmatprep.subr.mxu0 0.0
        %8400 = vmatpush1.msra.mxu0 0.0
        %8401 = vmatprep.subr.mxu0 0.0
        %8402 = vmatpush1.msra.mxu0 0.0
        %8403 = vmatprep.subr.mxu0 0.0
        %8404 = vmatpush1.msra.mxu0 0.0
        %8405 = vmatprep.subr.mxu0 0.0
        %8406 = vmatpush1.msra.mxu0 0.0
        %8407 = vmatprep.subr.mxu0 0.0
        %8408 = vmatpush1.msra.mxu0 0.0
        %8409 = vmatprep.subr.mxu0 0.0
        %8410 = vmatpush1.msra.mxu0 0.0
        %8411 = vmatprep.subr.mxu0 0.0
        %8412 = vmatpush1.msra.mxu0 0.0
        %8413 = vmatprep.subr.mxu0 0.0
        %8414 = vmatpush1.msra.mxu0 0.0
        %8415 = vmatprep.subr.mxu0 0.0
        %8416 = vmatpush1.msra.mxu0 0.0
        %8417 = vmatprep.subr.mxu0 0.0
        %8418 = vmatpush1.msra.mxu0 0.0
        %8419 = vmatprep.subr.mxu0 0.0
        %8420 = vmatpush1.msra.mxu0 0.0
        %8421 = vmatprep.subr.mxu0 0.0
        %8422 = vmatpush1.msra.mxu0 0.0
        %8423 = vmatprep.subr.mxu0 0.0
        %8424 = vmatpush1.msra.mxu0 0.0
        %8425 = vmatprep.subr.mxu0 0.0
        %8426 = vmatpush1.msra.mxu0 0.0
        %8427 = vmatprep.subr.mxu0 0.0
        %8428 = vmatpush1.msra.mxu0 0.0
        %8429 = vmatprep.subr.mxu0 0.0
        %8430 = vmatpush1.msra.mxu0 0.0
        %8431 = vmatprep.subr.mxu0 0.0
        %8432 = vmatpush1.msra.mxu0 0.0
        %8433 = vmatprep.subr.mxu0 0.0
        %8434 = vmatpush1.msra.mxu0 0.0
        %8435 = vmatprep.subr.mxu0 0.0
        %8436 = vmatpush1.msra.mxu0 0.0
        %8437 = vmatprep.subr.mxu0 0.0
        %8438 = vmatpush1.msra.mxu0 0.0
        %8439 = vmatprep.mubr.f32.mxu0 0.0
        %v8440 = vand.u32 %v7754, 4294901760
        %v8441 = vsub.f32 %v7754, %v8440
        %8442 = vmatmul.mubr.f32.gmra.mrb[0].mxu0 %v8441
        %v8443 = vpop.f32.mrb[0].mxu0
        %v8444 = vadd.f32 %v8370, %v8443
        %v8445 = vpop.f32.mrb[0].mxu0
        %8446 = vdwg.mxu0
        %8447 = vmatprep.subr.mxu0 0.0
        %v8448 = vand.u32 %v7749, 4294901760
        %8449 = vmatpush1.msra.mxu0 %v8448
        %8450 = vmatprep.subr.mxu0 0.0
        %8451 = vmatpush1.msra.mxu0 0.0
        %8452 = vmatprep.subr.mxu0 0.0
        %8453 = vmatpush1.msra.mxu0 0.0
        %8454 = vmatprep.subr.mxu0 0.0
        %8455 = vmatpush1.msra.mxu0 0.0
        %8456 = vmatprep.subr.mxu0 0.0
        %8457 = vmatpush1.msra.mxu0 0.0
        %8458 = vmatprep.subr.mxu0 0.0
        %8459 = vmatpush1.msra.mxu0 0.0
        %8460 = vmatprep.subr.mxu0 0.0
        %8461 = vmatpush1.msra.mxu0 0.0
        %8462 = vmatprep.subr.mxu0 0.0
        %8463 = vmatpush1.msra.mxu0 0.0
        %8464 = vmatprep.subr.mxu0 0.0
        %8465 = vmatpush1.msra.mxu0 0.0
        %8466 = vmatprep.subr.mxu0 0.0
        %8467 = vmatpush1.msra.mxu0 0.0
        %8468 = vmatprep.subr.mxu0 0.0
        %8469 = vmatpush1.msra.mxu0 0.0
        %8470 = vmatprep.subr.mxu0 0.0
        %8471 = vmatpush1.msra.mxu0 0.0
        %8472 = vmatprep.subr.mxu0 0.0
        %8473 = vmatpush1.msra.mxu0 0.0
        %8474 = vmatprep.subr.mxu0 0.0
        %8475 = vmatpush1.msra.mxu0 0.0
        %8476 = vmatprep.subr.mxu0 0.0
        %8477 = vmatpush1.msra.mxu0 0.0
        %8478 = vmatprep.subr.mxu0 0.0
        %8479 = vmatpush1.msra.mxu0 0.0
        %8480 = vmatprep.subr.mxu0 0.0
        %8481 = vmatpush1.msra.mxu0 0.0
        %8482 = vmatprep.subr.mxu0 0.0
        %8483 = vmatpush1.msra.mxu0 0.0
        %8484 = vmatprep.subr.mxu0 0.0
        %8485 = vmatpush1.msra.mxu0 0.0
        %8486 = vmatprep.subr.mxu0 0.0
        %8487 = vmatpush1.msra.mxu0 0.0
        %8488 = vmatprep.subr.mxu0 0.0
        %8489 = vmatpush1.msra.mxu0 0.0
        %8490 = vmatprep.subr.mxu0 0.0
        %8491 = vmatpush1.msra.mxu0 0.0
        %8492 = vmatprep.subr.mxu0 0.0
        %8493 = vmatpush1.msra.mxu0 0.0
        %8494 = vmatprep.subr.mxu0 0.0
        %8495 = vmatpush1.msra.mxu0 0.0
        %8496 = vmatprep.subr.mxu0 0.0
        %8497 = vmatpush1.msra.mxu0 0.0
        %8498 = vmatprep.subr.mxu0 0.0
        %8499 = vmatpush1.msra.mxu0 0.0
        %8500 = vmatprep.subr.mxu0 0.0
        %8501 = vmatpush1.msra.mxu0 0.0
        %8502 = vmatprep.subr.mxu0 0.0
        %8503 = vmatpush1.msra.mxu0 0.0
        %8504 = vmatprep.subr.mxu0 0.0
        %8505 = vmatpush1.msra.mxu0 0.0
        %8506 = vmatprep.subr.mxu0 0.0
        %8507 = vmatpush1.msra.mxu0 0.0
        %8508 = vmatprep.subr.mxu0 0.0
        %8509 = vmatpush1.msra.mxu0 0.0
        %8510 = vmatprep.subr.mxu0 0.0
        %8511 = vmatpush1.msra.mxu0 0.0
        %8512 = vmatprep.mubr.f32.mxu0 0.0
        %v8513 = vand.u32 %v7754, 4294901760
        %v8514 = vsub.f32 %v7754, %v8513
        %v8515 = vand.u32 %v8514, 4294901760
        %8516 = vmatmul.mubr.f32.gmra.mrb[0].mxu0 %v8515
        %v8517 = vpop.f32.mrb[0].mxu0
        %v8518 = vadd.f32 %v8444, %v8517
        %v8519 = vpop.f32.mrb[0].mxu0
        %8520 = vdwg.mxu0
        %8521 = vmatprep.subr.mxu0 0.0
        %v8522 = vand.u32 %v7749, 4294901760
        %v8523 = vsub.f32 %v7749, %v8522
        %v8524 = vand.u32 %v8523, 4294901760
        %8525 = vmatpush1.msra.mxu0 %v8524
        %8526 = vmatprep.subr.mxu0 0.0
        %8527 = vmatpush1.msra.mxu0 0.0
        %8528 = vmatprep.subr.mxu0 0.0
        %8529 = vmatpush1.msra.mxu0 0.0
        %8530 = vmatprep.subr.mxu0 0.0
        %8531 = vmatpush1.msra.mxu0 0.0
        %8532 = vmatprep.subr.mxu0 0.0
        %8533 = vmatpush1.msra.mxu0 0.0
        %8534 = vmatprep.subr.mxu0 0.0
        %8535 = vmatpush1.msra.mxu0 0.0
        %8536 = vmatprep.subr.mxu0 0.0
        %8537 = vmatpush1.msra.mxu0 0.0
        %8538 = vmatprep.subr.mxu0 0.0
        %8539 = vmatpush1.msra.mxu0 0.0
        %8540 = vmatprep.subr.mxu0 0.0
        %8541 = vmatpush1.msra.mxu0 0.0
        %8542 = vmatprep.subr.mxu0 0.0
        %8543 = vmatpush1.msra.mxu0 0.0
        %8544 = vmatprep.subr.mxu0 0.0
        %8545 = vmatpush1.msra.mxu0 0.0
        %8546 = vmatprep.subr.mxu0 0.0
        %8547 = vmatpush1.msra.mxu0 0.0
        %8548 = vmatprep.subr.mxu0 0.0
        %8549 = vmatpush1.msra.mxu0 0.0
        %8550 = vmatprep.subr.mxu0 0.0
        %8551 = vmatpush1.msra.mxu0 0.0
        %8552 = vmatprep.subr.mxu0 0.0
        %8553 = vmatpush1.msra.mxu0 0.0
        %8554 = vmatprep.subr.mxu0 0.0
        %8555 = vmatpush1.msra.mxu0 0.0
        %8556 = vmatprep.subr.mxu0 0.0
        %8557 = vmatpush1.msra.mxu0 0.0
        %8558 = vmatprep.subr.mxu0 0.0
        %8559 = vmatpush1.msra.mxu0 0.0
        %8560 = vmatprep.subr.mxu0 0.0
        %8561 = vmatpush1.msra.mxu0 0.0
        %8562 = vmatprep.subr.mxu0 0.0
        %8563 = vmatpush1.msra.mxu0 0.0
        %8564 = vmatprep.subr.mxu0 0.0
        %8565 = vmatpush1.msra.mxu0 0.0
        %8566 = vmatprep.subr.mxu0 0.0
        %8567 = vmatpush1.msra.mxu0 0.0
        %8568 = vmatprep.subr.mxu0 0.0
        %8569 = vmatpush1.msra.mxu0 0.0
        %8570 = vmatprep.subr.mxu0 0.0
        %8571 = vmatpush1.msra.mxu0 0.0
        %8572 = vmatprep.subr.mxu0 0.0
        %8573 = vmatpush1.msra.mxu0 0.0
        %8574 = vmatprep.subr.mxu0 0.0
        %8575 = vmatpush1.msra.mxu0 0.0
        %8576 = vmatprep.subr.mxu0 0.0
        %8577 = vmatpush1.msra.mxu0 0.0
        %8578 = vmatprep.subr.mxu0 0.0
        %8579 = vmatpush1.msra.mxu0 0.0
        %8580 = vmatprep.subr.mxu0 0.0
        %8581 = vmatpush1.msra.mxu0 0.0
        %8582 = vmatprep.subr.mxu0 0.0
        %8583 = vmatpush1.msra.mxu0 0.0
        %8584 = vmatprep.subr.mxu0 0.0
        %8585 = vmatpush1.msra.mxu0 0.0
        %8586 = vmatprep.subr.mxu0 0.0
        %8587 = vmatpush1.msra.mxu0 0.0
        %8588 = vmatprep.mubr.f32.mxu0 0.0
        %v8589 = vand.u32 %v7754, 4294901760
        %8590 = vmatmul.mubr.f32.gmra.mrb[0].mxu0 %v8589
        %v8591 = vpop.f32.mrb[0].mxu0
        %v8592 = vadd.f32 %v8518, %v8591
        %v8593 = vpop.f32.mrb[0].mxu0
        %8594 = vdwg.mxu0
        %8595 = vmatprep.subr.mxu0 0.0
        %v8596 = vand.u32 %v7749, 4294901760
        %8597 = vmatpush1.msra.mxu0 %v8596
        %8598 = vmatprep.subr.mxu0 0.0
        %8599 = vmatpush1.msra.mxu0 0.0
        %8600 = vmatprep.subr.mxu0 0.0
        %8601 = vmatpush1.msra.mxu0 0.0
        %8602 = vmatprep.subr.mxu0 0.0
        %8603 = vmatpush1.msra.mxu0 0.0
        %8604 = vmatprep.subr.mxu0 0.0
        %8605 = vmatpush1.msra.mxu0 0.0
        %8606 = vmatprep.subr.mxu0 0.0
        %8607 = vmatpush1.msra.mxu0 0.0
        %8608 = vmatprep.subr.mxu0 0.0
        %8609 = vmatpush1.msra.mxu0 0.0
        %8610 = vmatprep.subr.mxu0 0.0
        %8611 = vmatpush1.msra.mxu0 0.0
        %8612 = vmatprep.subr.mxu0 0.0
        %8613 = vmatpush1.msra.mxu0 0.0
        %8614 = vmatprep.subr.mxu0 0.0
        %8615 = vmatpush1.msra.mxu0 0.0
        %8616 = vmatprep.subr.mxu0 0.0
        %8617 = vmatpush1.msra.mxu0 0.0
        %8618 = vmatprep.subr.mxu0 0.0
        %8619 = vmatpush1.msra.mxu0 0.0
        %8620 = vmatprep.subr.mxu0 0.0
        %8621 = vmatpush1.msra.mxu0 0.0
        %8622 = vmatprep.subr.mxu0 0.0
        %8623 = vmatpush1.msra.mxu0 0.0
        %8624 = vmatprep.subr.mxu0 0.0
        %8625 = vmatpush1.msra.mxu0 0.0
        %8626 = vmatprep.subr.mxu0 0.0
        %8627 = vmatpush1.msra.mxu0 0.0
        %8628 = vmatprep.subr.mxu0 0.0
        %8629 = vmatpush1.msra.mxu0 0.0
        %8630 = vmatprep.subr.mxu0 0.0
        %8631 = vmatpush1.msra.mxu0 0.0
        %8632 = vmatprep.subr.mxu0 0.0
        %8633 = vmatpush1.msra.mxu0 0.0
        %8634 = vmatprep.subr.mxu0 0.0
        %8635 = vmatpush1.msra.mxu0 0.0
        %8636 = vmatprep.subr.mxu0 0.0
        %8637 = vmatpush1.msra.mxu0 0.0
        %8638 = vmatprep.subr.mxu0 0.0
        %8639 = vmatpush1.msra.mxu0 0.0
        %8640 = vmatprep.subr.mxu0 0.0
        %8641 = vmatpush1.msra.mxu0 0.0
        %8642 = vmatprep.subr.mxu0 0.0
        %8643 = vmatpush1.msra.mxu0 0.0
        %8644 = vmatprep.subr.mxu0 0.0
        %8645 = vmatpush1.msra.mxu0 0.0
        %8646 = vmatprep.subr.mxu0 0.0
        %8647 = vmatpush1.msra.mxu0 0.0
        %8648 = vmatprep.subr.mxu0 0.0
        %8649 = vmatpush1.msra.mxu0 0.0
        %8650 = vmatprep.subr.mxu0 0.0
        %8651 = vmatpush1.msra.mxu0 0.0
        %8652 = vmatprep.subr.mxu0 0.0
        %8653 = vmatpush1.msra.mxu0 0.0
        %8654 = vmatprep.subr.mxu0 0.0
        %8655 = vmatpush1.msra.mxu0 0.0
        %8656 = vmatprep.subr.mxu0 0.0
        %8657 = vmatpush1.msra.mxu0 0.0
        %8658 = vmatprep.subr.mxu0 0.0
        %8659 = vmatpush1.msra.mxu0 0.0
        %8660 = vmatprep.mubr.f32.mxu0 0.0
        %v8661 = vand.u32 %v7754, 4294901760
        %8662 = vmatmul.mubr.f32.gmra.mrb[0].mxu0 %v8661
        %v8663 = vpop.f32.mrb[0].mxu0
        %v8664 = vadd.f32 %v8592, %v8663
        %v8665 = vpop.f32.mrb[0].mxu0
        %8666 = vdwg.mxu0
        %v8667 = vadd.f32 %v7733, %v8217
        %v8668 = vadd.f32 %v7734, %v8219
        %v8669 = vadd.f32 %v7735, %v8664
        %v8670 = vld [vmem:[%s2] sm:$0xff]
        %8672 = vset.pattern.permute.xlu0 0
        %8673 = vperm.xlu0 %8672, %v8670
        %v8674 = vpop.permute.xlu0 %8673
        %v8676 = vadd.f32 %v8667, %v8674
        %v8677 = vadd.f32 %v8668, %v8674
        %v8678 = vadd.f32 %v8669, %v8674
        %v8679 = vrot.slane %v8676, 4
        %v8680 = vadd.f32 %v8676, %v8679
        %v8681 = vrot.slane %v8680, 2
        %v8682 = vadd.f32 %v8680, %v8681
        %v8683 = vrot.slane %v8682, 1
        %v8684 = vadd.f32 %v8682, %v8683
        %v8685 = vrot.slane %v8677, 4
        %v8686 = vadd.f32 %v8677, %v8685
        %v8687 = vrot.slane %v8686, 2
        %v8688 = vadd.f32 %v8686, %v8687
        %v8689 = vrot.slane %v8688, 1
        %v8690 = vadd.f32 %v8688, %v8689
        %v8691 = vrot.slane %v8678, 4
        %v8692 = vadd.f32 %v8678, %v8691
        %v8693 = vrot.slane %v8692, 2
        %v8694 = vadd.f32 %v8692, %v8693
        %v8695 = vrot.slane %v8694, 1
        %v8696 = vadd.f32 %v8694, %v8695
        %v8697 = vrcp.pop 8.0
        %v8698 = vmul.f32 %v8684, %v8697
        %v8699 = vmul.f32 %v8690, %v8697
        %v8700 = vmul.f32 %v8696, %v8697
        %v8701 = vsub.f32 %v8676, %v8698
        %v8702 = vsub.f32 %v8677, %v8699
        %v8703 = vsub.f32 %v8678, %v8700
        %v8704 = vmul.f32 %v8701, %v8701
        %v8705 = vmul.f32 %v8702, %v8702
        %v8706 = vmul.f32 %v8703, %v8703
        %v8707 = vrot.slane %v8704, 4
        %v8708 = vadd.f32 %v8704, %v8707
        %v8709 = vrot.slane %v8708, 2
        %v8710 = vadd.f32 %v8708, %v8709
        %v8711 = vrot.slane %v8710, 1
        %v8712 = vadd.f32 %v8710, %v8711
        %v8713 = vrot.slane %v8705, 4
        %v8714 = vadd.f32 %v8705, %v8713
        %v8715 = vrot.slane %v8714, 2
        %v8716 = vadd.f32 %v8714, %v8715
        %v8717 = vrot.slane %v8716, 1
        %v8718 = vadd.f32 %v8716, %v8717
        %v8719 = vrot.slane %v8706, 4
        %v8720 = vadd.f32 %v8706, %v8719
        %v8721 = vrot.slane %v8720, 2
        %v8722 = vadd.f32 %v8720, %v8721
        %v8723 = vrot.slane %v8722, 1
        %v8724 = vadd.f32 %v8722, %v8723
        %v8725 = vmul.f32 %v8712, %v8697
        %v8726 = vmul.f32 %v8718, %v8697
        %v8727 = vmul.f32 %v8724, %v8697
        %v8728 = vrsqrt.pop %v8725
        %v8729 = vmul.f32 %v8725, %v8728
        %vm8730 = vcmp.eq.f32.partialorder %v8725, inf
        %v8731 = vsel %vm8730, %v8725, %v8729
        %vm8732 = vcmp.eq.f32.partialorder %v8725, 0.0
        %v8733 = vand.u32 %v8725, 2147483648
        %v8734 = vsel %vm8732, %v8733, %v8731
        %v8735 = vrsqrt.pop %v8726
        %v8736 = vmul.f32 %v8726, %v8735
        %vm8737 = vcmp.eq.f32.partialorder %v8726, inf
        %v8738 = vsel %vm8737, %v8726, %v8736
        %vm8739 = vcmp.eq.f32.partialorder %v8726, 0.0
        %v8740 = vand.u32 %v8726, 2147483648
        %v8741 = vsel %vm8739, %v8740, %v8738
        %v8742 = vrsqrt.pop %v8727
        %v8743 = vmul.f32 %v8727, %v8742
        %vm8744 = vcmp.eq.f32.partialorder %v8727, inf
        %v8745 = vsel %vm8744, %v8727, %v8743
        %vm8746 = vcmp.eq.f32.partialorder %v8727, 0.0
        %v8747 = vand.u32 %v8727, 2147483648
        %v8748 = vsel %vm8746, %v8747, %v8745
        %v8749 = vadd.f32 %v8734, 1e-05
        %v8750 = vadd.f32 %v8741, 1e-05
        %v8751 = vadd.f32 %v8748, 1e-05
        %v8752 = vrcp.pop %v8749
        %v8753 = vmul.f32 1.0, %v8752
        %v8754 = vrcp.pop %v8750
        %v8755 = vmul.f32 1.0, %v8754
        %v8756 = vrcp.pop %v8751
        %v8757 = vmul.f32 1.0, %v8756
        %v8758 = vmul.f32 %v8701, %v8753
        %v8759 = vmul.f32 %v8702, %v8755
        %v8760 = vmul.f32 %v8703, %v8757
        %v8761 = vld [vmem:[%s3] sm:$0xff]
        %8763 = vset.pattern.permute.xlu0 0
        %8764 = vperm.xlu0 %8763, %v8761
        %v8765 = vpop.permute.xlu0 %8764
        %v8767 = vmul.f32 %v8758, %v8765
        %v8768 = vmul.f32 %v8759, %v8765
        %v8769 = vmul.f32 %v8760, %v8765
        %v8770 = vld [vmem:[%s4] sm:$0xff]
        %8772 = vset.pattern.permute.xlu0 0
        %8773 = vperm.xlu0 %8772, %v8770
        %v8774 = vpop.permute.xlu0 %8773
        %v8776 = vadd.f32 %v8767, %v8774
        %v8777 = vadd.f32 %v8768, %v8774
        %v8778 = vadd.f32 %v8769, %v8774
        %v8779 = vmul.f32 %v8776, 0.5
        %v8780 = vmul.f32 %v8777, 0.5
        %v8781 = vmul.f32 %v8778, 0.5
        %v8782 = vmul.f32 %v8776, 0.70710677
        %v8783 = vmul.f32 %v8777, 0.70710677
        %v8784 = vmul.f32 %v8778, 0.70710677
        %vm8785 = vcmp.lt.f32.partialorder %v8782, 0.0
        %vm8786 = vcmp.lt.f32.partialorder %v8783, 0.0
        %vm8787 = vcmp.lt.f32.partialorder %v8784, 0.0
        %v8788 = vsel %vm8785, -1.0, 1.0
        %v8789 = vsel %vm8786, -1.0, 1.0
        %v8790 = vsel %vm8787, -1.0, 1.0
        %v8791 = vand.u32 2147483647, %v8782
        %v8792 = vand.u32 2147483647, %v8783
        %v8793 = vand.u32 2147483647, %v8784
        %v8794 = vmul.f32 %v8791, 0.3275911
        %v8795 = vmul.f32 %v8792, 0.3275911
        %v8796 = vmul.f32 %v8793, 0.3275911
        %v8797 = vadd.f32 %v8794, 1.0
        %v8798 = vadd.f32 %v8795, 1.0
        %v8799 = vadd.f32 %v8796, 1.0
        %v8800 = vrcp.pop %v8797
        %v8801 = vmul.f32 1.0, %v8800
        %v8802 = vrcp.pop %v8798
        %v8803 = vmul.f32 1.0, %v8802
        %v8804 = vrcp.pop %v8799
        %v8805 = vmul.f32 1.0, %v8804
        %v8806 = vmul.f32 %v8801, 1.0614054
        %v8807 = vmul.f32 %v8803, 1.0614054
        %v8808 = vmul.f32 %v8805, 1.0614054
        %v8809 = vadd.f32 %v8806, -1.4531521
        %v8810 = vadd.f32 %v8807, -1.4531521
        %v8811 = vadd.f32 %v8808, -1.4531521
        %v8812 = vmul.f32 %v8809, %v8801
        %v8813 = vmul.f32 %v8810, %v8803
        %v8814 = vmul.f32 %v8811, %v8805
        %v8815 = vadd.f32 %v8812, 1.4214138
        %v8816 = vadd.f32 %v8813, 1.4214138
        %v8817 = vadd.f32 %v8814, 1.4214138
        %v8818 = vmul.f32 %v8815, %v8801
        %v8819 = vmul.f32 %v8816, %v8803
        %v8820 = vmul.f32 %v8817, %v8805
        %v8821 = vadd.f32 %v8818, -0.28449672
        %v8822 = vadd.f32 %v8819, -0.28449672
        %v8823 = vadd.f32 %v8820, -0.28449672
        %v8824 = vmul.f32 %v8821, %v8801
        %v8825 = vmul.f32 %v8822, %v8803
        %v8826 = vmul.f32 %v8823, %v8805
        %v8827 = vadd.f32 %v8824, 0.2548296
        %v8828 = vadd.f32 %v8825, 0.2548296
        %v8829 = vadd.f32 %v8826, 0.2548296
        %v8830 = vmul.f32 %v8827, %v8801
        %v8831 = vmul.f32 %v8828, %v8803
        %v8832 = vmul.f32 %v8829, %v8805
        %v8833 = vsub.f32 0.0, %v8791
        %v8834 = vsub.f32 0.0, %v8792
        %v8835 = vsub.f32 0.0, %v8793
        %v8836 = vmul.f32 %v8833, %v8791
        %v8837 = vmul.f32 %v8834, %v8792
        %v8838 = vmul.f32 %v8835, %v8793
        %v8839 = vmul.f32 %v8836, 1.442695
        %v8840 = vpow.pop %v8839
        %v8841 = vmul.f32 %v8837, 1.442695
        %v8842 = vpow.pop %v8841
        %v8843 = vmul.f32 %v8838, 1.442695
        %v8844 = vpow.pop %v8843
        %v8845 = vmul.f32 %v8830, %v8840
        %v8846 = vmul.f32 %v8831, %v8842
        %v8847 = vmul.f32 %v8832, %v8844
        %v8848 = vsub.f32 1.0, %v8845
        %v8849 = vsub.f32 1.0, %v8846
        %v8850 = vsub.f32 1.0, %v8847
        %v8851 = vmul.f32 %v8788, %v8848
        %v8852 = vmul.f32 %v8789, %v8849
        %v8853 = vmul.f32 %v8790, %v8850
        %v8854 = vadd.f32 %v8851, 1.0
        %v8855 = vadd.f32 %v8852, 1.0
        %v8856 = vadd.f32 %v8853, 1.0
        %v8857 = vmul.f32 %v8779, %v8854
        %v8858 = vmul.f32 %v8780, %v8855
        %v8859 = vmul.f32 %v8781, %v8856
        %v8860 = vld [vmem:[%s5] sm:$0xff]
        %v8861 = vld [vmem:[%s6] sm:$0xff]
        %8863 = vset.pattern.permute.xlu0 0
        %8864 = vperm.xlu0 %8863, %v8861
        %v8865 = vpop.permute.xlu0 %8864
        %v8868 = vsel %vm303, %v8860, 0
        %v8870 = vand.u32 %v8858, 4294901760
        %8871 = vmatprep.subr.mxu0 %v8870
        %v8872 = vand.u32 %v8857, 4294901760
        %8873 = vmatpush1.msra.mxu0 %v8872
        %8874 = vmatprep.subr.mxu0 0.0
        %8875 = vmatpush1.msra.mxu0 0.0
        %8876 = vmatprep.subr.mxu0 0.0
        %8877 = vmatpush1.msra.mxu0 0.0
        %8878 = vmatprep.subr.mxu0 0.0
        %8879 = vmatpush1.msra.mxu0 0.0
        %8880 = vmatprep.subr.mxu0 0.0
        %8881 = vmatpush1.msra.mxu0 0.0
        %8882 = vmatprep.subr.mxu0 0.0
        %8883 = vmatpush1.msra.mxu0 0.0
        %8884 = vmatprep.subr.mxu0 0.0
        %8885 = vmatpush1.msra.mxu0 0.0
        %8886 = vmatprep.subr.mxu0 0.0
        %8887 = vmatpush1.msra.mxu0 0.0
        %8888 = vmatprep.subr.mxu0 0.0
        %8889 = vmatpush1.msra.mxu0 0.0
        %8890 = vmatprep.subr.mxu0 0.0
        %8891 = vmatpush1.msra.mxu0 0.0
        %8892 = vmatprep.subr.mxu0 0.0
        %8893 = vmatpush1.msra.mxu0 0.0
        %8894 = vmatprep.subr.mxu0 0.0
        %8895 = vmatpush1.msra.mxu0 0.0
        %8896 = vmatprep.subr.mxu0 0.0
        %8897 = vmatpush1.msra.mxu0 0.0
        %8898 = vmatprep.subr.mxu0 0.0
        %8899 = vmatpush1.msra.mxu0 0.0
        %8900 = vmatprep.subr.mxu0 0.0
        %8901 = vmatpush1.msra.mxu0 0.0
        %8902 = vmatprep.subr.mxu0 0.0
        %8903 = vmatpush1.msra.mxu0 0.0
        %8904 = vmatprep.subr.mxu0 0.0
        %8905 = vmatpush1.msra.mxu0 0.0
        %8906 = vmatprep.subr.mxu0 0.0
        %8907 = vmatpush1.msra.mxu0 0.0
        %8908 = vmatprep.subr.mxu0 0.0
        %8909 = vmatpush1.msra.mxu0 0.0
        %8910 = vmatprep.subr.mxu0 0.0
        %8911 = vmatpush1.msra.mxu0 0.0
        %8912 = vmatprep.subr.mxu0 0.0
        %8913 = vmatpush1.msra.mxu0 0.0
        %8914 = vmatprep.subr.mxu0 0.0
        %8915 = vmatpush1.msra.mxu0 0.0
        %8916 = vmatprep.subr.mxu0 0.0
        %8917 = vmatpush1.msra.mxu0 0.0
        %8918 = vmatprep.subr.mxu0 0.0
        %8919 = vmatpush1.msra.mxu0 0.0
        %8920 = vmatprep.subr.mxu0 0.0
        %8921 = vmatpush1.msra.mxu0 0.0
        %8922 = vmatprep.subr.mxu0 0.0
        %8923 = vmatpush1.msra.mxu0 0.0
        %8924 = vmatprep.subr.mxu0 0.0
        %8925 = vmatpush1.msra.mxu0 0.0
        %8926 = vmatprep.subr.mxu0 0.0
        %8927 = vmatpush1.msra.mxu0 0.0
        %8928 = vmatprep.subr.mxu0 0.0
        %8929 = vmatpush1.msra.mxu0 0.0
        %8930 = vmatprep.subr.mxu0 0.0
        %8931 = vmatpush1.msra.mxu0 0.0
        %8932 = vmatprep.subr.mxu0 0.0
        %8933 = vmatpush1.msra.mxu0 0.0
        %8934 = vmatprep.subr.mxu0 0.0
        %8935 = vmatpush1.msra.mxu0 0.0
        %8936 = vmatprep.mubr.f32.mxu0 0.0
        %v8937 = vand.u32 %v8868, 4294901760
        %v8938 = vsub.f32 %v8868, %v8937
        %v8939 = vand.u32 %v8938, 4294901760
        %v8940 = vsub.f32 %v8938, %v8939
        %v8941 = vand.u32 %v8940, 4294901760
        %8942 = vmatmul.mubr.f32.gmra.mrb[0].mxu0 %v8941
        %v8943 = vpop.f32.mrb[0].mxu0
        %v8944 = vadd.f32 %v8865, %v8943
        %v8945 = vpop.f32.mrb[0].mxu0
        %v8946 = vadd.f32 %v8865, %v8945
        %8947 = vdwg.mxu0
        %v8948 = vand.u32 %v8858, 4294901760
        %v8949 = vsub.f32 %v8858, %v8948
        %v8950 = vand.u32 %v8949, 4294901760
        %v8951 = vsub.f32 %v8949, %v8950
        %v8952 = vand.u32 %v8951, 4294901760
        %8953 = vmatprep.subr.mxu0 %v8952
        %v8954 = vand.u32 %v8857, 4294901760
        %v8955 = vsub.f32 %v8857, %v8954
        %v8956 = vand.u32 %v8955, 4294901760
        %v8957 = vsub.f32 %v8955, %v8956
        %v8958 = vand.u32 %v8957, 4294901760
        %8959 = vmatpush1.msra.mxu0 %v8958
        %8960 = vmatprep.subr.mxu0 0.0
        %8961 = vmatpush1.msra.mxu0 0.0
        %8962 = vmatprep.subr.mxu0 0.0
        %8963 = vmatpush1.msra.mxu0 0.0
        %8964 = vmatprep.subr.mxu0 0.0
        %8965 = vmatpush1.msra.mxu0 0.0
        %8966 = vmatprep.subr.mxu0 0.0
        %8967 = vmatpush1.msra.mxu0 0.0
        %8968 = vmatprep.subr.mxu0 0.0
        %8969 = vmatpush1.msra.mxu0 0.0
        %8970 = vmatprep.subr.mxu0 0.0
        %8971 = vmatpush1.msra.mxu0 0.0
        %8972 = vmatprep.subr.mxu0 0.0
        %8973 = vmatpush1.msra.mxu0 0.0
        %8974 = vmatprep.subr.mxu0 0.0
        %8975 = vmatpush1.msra.mxu0 0.0
        %8976 = vmatprep.subr.mxu0 0.0
        %8977 = vmatpush1.msra.mxu0 0.0
        %8978 = vmatprep.subr.mxu0 0.0
        %8979 = vmatpush1.msra.mxu0 0.0
        %8980 = vmatprep.subr.mxu0 0.0
        %8981 = vmatpush1.msra.mxu0 0.0
        %8982 = vmatprep.subr.mxu0 0.0
        %8983 = vmatpush1.msra.mxu0 0.0
        %8984 = vmatprep.subr.mxu0 0.0
        %8985 = vmatpush1.msra.mxu0 0.0
        %8986 = vmatprep.subr.mxu0 0.0
        %8987 = vmatpush1.msra.mxu0 0.0
        %8988 = vmatprep.subr.mxu0 0.0
        %8989 = vmatpush1.msra.mxu0 0.0
        %8990 = vmatprep.subr.mxu0 0.0
        %8991 = vmatpush1.msra.mxu0 0.0
        %8992 = vmatprep.subr.mxu0 0.0
        %8993 = vmatpush1.msra.mxu0 0.0
        %8994 = vmatprep.subr.mxu0 0.0
        %8995 = vmatpush1.msra.mxu0 0.0
        %8996 = vmatprep.subr.mxu0 0.0
        %8997 = vmatpush1.msra.mxu0 0.0
        %8998 = vmatprep.subr.mxu0 0.0
        %8999 = vmatpush1.msra.mxu0 0.0
        %9000 = vmatprep.subr.mxu0 0.0
        %9001 = vmatpush1.msra.mxu0 0.0
        %9002 = vmatprep.subr.mxu0 0.0
        %9003 = vmatpush1.msra.mxu0 0.0
        %9004 = vmatprep.subr.mxu0 0.0
        %9005 = vmatpush1.msra.mxu0 0.0
        %9006 = vmatprep.subr.mxu0 0.0
        %9007 = vmatpush1.msra.mxu0 0.0
        %9008 = vmatprep.subr.mxu0 0.0
        %9009 = vmatpush1.msra.mxu0 0.0
        %9010 = vmatprep.subr.mxu0 0.0
        %9011 = vmatpush1.msra.mxu0 0.0
        %9012 = vmatprep.subr.mxu0 0.0
        %9013 = vmatpush1.msra.mxu0 0.0
        %9014 = vmatprep.subr.mxu0 0.0
        %9015 = vmatpush1.msra.mxu0 0.0
        %9016 = vmatprep.subr.mxu0 0.0
        %9017 = vmatpush1.msra.mxu0 0.0
        %9018 = vmatprep.subr.mxu0 0.0
        %9019 = vmatpush1.msra.mxu0 0.0
        %9020 = vmatprep.subr.mxu0 0.0
        %9021 = vmatpush1.msra.mxu0 0.0
        %9022 = vmatprep.mubr.f32.mxu0 0.0
        %v9023 = vand.u32 %v8868, 4294901760
        %9024 = vmatmul.mubr.f32.gmra.mrb[0].mxu0 %v9023
        %v9025 = vpop.f32.mrb[0].mxu0
        %v9026 = vadd.f32 %v8944, %v9025
        %v9027 = vpop.f32.mrb[0].mxu0
        %v9028 = vadd.f32 %v8946, %v9027
        %9029 = vdwg.mxu0
        %v9030 = vand.u32 %v8858, 4294901760
        %v9031 = vsub.f32 %v8858, %v9030
        %9032 = vmatprep.subr.mxu0 %v9031
        %v9033 = vand.u32 %v8857, 4294901760
        %v9034 = vsub.f32 %v8857, %v9033
        %9035 = vmatpush1.msra.mxu0 %v9034
        %9036 = vmatprep.subr.mxu0 0.0
        %9037 = vmatpush1.msra.mxu0 0.0
        %9038 = vmatprep.subr.mxu0 0.0
        %9039 = vmatpush1.msra.mxu0 0.0
        %9040 = vmatprep.subr.mxu0 0.0
        %9041 = vmatpush1.msra.mxu0 0.0
        %9042 = vmatprep.subr.mxu0 0.0
        %9043 = vmatpush1.msra.mxu0 0.0
        %9044 = vmatprep.subr.mxu0 0.0
        %9045 = vmatpush1.msra.mxu0 0.0
        %9046 = vmatprep.subr.mxu0 0.0
        %9047 = vmatpush1.msra.mxu0 0.0
        %9048 = vmatprep.subr.mxu0 0.0
        %9049 = vmatpush1.msra.mxu0 0.0
        %9050 = vmatprep.subr.mxu0 0.0
        %9051 = vmatpush1.msra.mxu0 0.0
        %9052 = vmatprep.subr.mxu0 0.0
        %9053 = vmatpush1.msra.mxu0 0.0
        %9054 = vmatprep.subr.mxu0 0.0
        %9055 = vmatpush1.msra.mxu0 0.0
        %9056 = vmatprep.subr.mxu0 0.0
        %9057 = vmatpush1.msra.mxu0 0.0
        %9058 = vmatprep.subr.mxu0 0.0
        %9059 = vmatpush1.msra.mxu0 0.0
        %9060 = vmatprep.subr.mxu0 0.0
        %9061 = vmatpush1.msra.mxu0 0.0
        %9062 = vmatprep.subr.mxu0 0.0
        %9063 = vmatpush1.msra.mxu0 0.0
        %9064 = vmatprep.subr.mxu0 0.0
        %9065 = vmatpush1.msra.mxu0 0.0
        %9066 = vmatprep.subr.mxu0 0.0
        %9067 = vmatpush1.msra.mxu0 0.0
        %9068 = vmatprep.subr.mxu0 0.0
        %9069 = vmatpush1.msra.mxu0 0.0
        %9070 = vmatprep.subr.mxu0 0.0
        %9071 = vmatpush1.msra.mxu0 0.0
        %9072 = vmatprep.subr.mxu0 0.0
        %9073 = vmatpush1.msra.mxu0 0.0
        %9074 = vmatprep.subr.mxu0 0.0
        %9075 = vmatpush1.msra.mxu0 0.0
        %9076 = vmatprep.subr.mxu0 0.0
        %9077 = vmatpush1.msra.mxu0 0.0
        %9078 = vmatprep.subr.mxu0 0.0
        %9079 = vmatpush1.msra.mxu0 0.0
        %9080 = vmatprep.subr.mxu0 0.0
        %9081 = vmatpush1.msra.mxu0 0.0
        %9082 = vmatprep.subr.mxu0 0.0
        %9083 = vmatpush1.msra.mxu0 0.0
        %9084 = vmatprep.subr.mxu0 0.0
        %9085 = vmatpush1.msra.mxu0 0.0
        %9086 = vmatprep.subr.mxu0 0.0
        %9087 = vmatpush1.msra.mxu0 0.0
        %9088 = vmatprep.subr.mxu0 0.0
        %9089 = vmatpush1.msra.mxu0 0.0
        %9090 = vmatprep.subr.mxu0 0.0
        %9091 = vmatpush1.msra.mxu0 0.0
        %9092 = vmatprep.subr.mxu0 0.0
        %9093 = vmatpush1.msra.mxu0 0.0
        %9094 = vmatprep.subr.mxu0 0.0
        %9095 = vmatpush1.msra.mxu0 0.0
        %9096 = vmatprep.subr.mxu0 0.0
        %9097 = vmatpush1.msra.mxu0 0.0
        %9098 = vmatprep.mubr.f32.mxu0 0.0
        %v9099 = vand.u32 %v8868, 4294901760
        %v9100 = vsub.f32 %v8868, %v9099
        %9101 = vmatmul.mubr.f32.gmra.mrb[0].mxu0 %v9100
        %v9102 = vpop.f32.mrb[0].mxu0
        %v9103 = vadd.f32 %v9026, %v9102
        %v9104 = vpop.f32.mrb[0].mxu0
        %v9105 = vadd.f32 %v9028, %v9104
        %9106 = vdwg.mxu0
        %v9107 = vand.u32 %v8858, 4294901760
        %9108 = vmatprep.subr.mxu0 %v9107
        %v9109 = vand.u32 %v8857, 4294901760
        %9110 = vmatpush1.msra.mxu0 %v9109
        %9111 = vmatprep.subr.mxu0 0.0
        %9112 = vmatpush1.msra.mxu0 0.0
        %9113 = vmatprep.subr.mxu0 0.0
        %9114 = vmatpush1.msra.mxu0 0.0
        %9115 = vmatprep.subr.mxu0 0.0
        %9116 = vmatpush1.msra.mxu0 0.0
        %9117 = vmatprep.subr.mxu0 0.0
        %9118 = vmatpush1.msra.mxu0 0.0
        %9119 = vmatprep.subr.mxu0 0.0
        %9120 = vmatpush1.msra.mxu0 0.0
        %9121 = vmatprep.subr.mxu0 0.0
        %9122 = vmatpush1.msra.mxu0 0.0
        %9123 = vmatprep.subr.mxu0 0.0
        %9124 = vmatpush1.msra.mxu0 0.0
        %9125 = vmatprep.subr.mxu0 0.0
        %9126 = vmatpush1.msra.mxu0 0.0
        %9127 = vmatprep.subr.mxu0 0.0
        %9128 = vmatpush1.msra.mxu0 0.0
        %9129 = vmatprep.subr.mxu0 0.0
        %9130 = vmatpush1.msra.mxu0 0.0
        %9131 = vmatprep.subr.mxu0 0.0
        %9132 = vmatpush1.msra.mxu0 0.0
        %9133 = vmatprep.subr.mxu0 0.0
        %9134 = vmatpush1.msra.mxu0 0.0
        %9135 = vmatprep.subr.mxu0 0.0
        %9136 = vmatpush1.msra.mxu0 0.0
        %9137 = vmatprep.subr.mxu0 0.0
        %9138 = vmatpush1.msra.mxu0 0.0
        %9139 = vmatprep.subr.mxu0 0.0
        %9140 = vmatpush1.msra.mxu0 0.0
        %9141 = vmatprep.subr.mxu0 0.0
        %9142 = vmatpush1.msra.mxu0 0.0
        %9143 = vmatprep.subr.mxu0 0.0
        %9144 = vmatpush1.msra.mxu0 0.0
        %9145 = vmatprep.subr.mxu0 0.0
        %9146 = vmatpush1.msra.mxu0 0.0
        %9147 = vmatprep.subr.mxu0 0.0
        %9148 = vmatpush1.msra.mxu0 0.0
        %9149 = vmatprep.subr.mxu0 0.0
        %9150 = vmatpush1.msra.mxu0 0.0
        %9151 = vmatprep.subr.mxu0 0.0
        %9152 = vmatpush1.msra.mxu0 0.0
        %9153 = vmatprep.subr.mxu0 0.0
        %9154 = vmatpush1.msra.mxu0 0.0
        %9155 = vmatprep.subr.mxu0 0.0
        %9156 = vmatpush1.msra.mxu0 0.0
        %9157 = vmatprep.subr.mxu0 0.0
        %9158 = vmatpush1.msra.mxu0 0.0
        %9159 = vmatprep.subr.mxu0 0.0
        %9160 = vmatpush1.msra.mxu0 0.0
        %9161 = vmatprep.subr.mxu0 0.0
        %9162 = vmatpush1.msra.mxu0 0.0
        %9163 = vmatprep.subr.mxu0 0.0
        %9164 = vmatpush1.msra.mxu0 0.0
        %9165 = vmatprep.subr.mxu0 0.0
        %9166 = vmatpush1.msra.mxu0 0.0
        %9167 = vmatprep.subr.mxu0 0.0
        %9168 = vmatpush1.msra.mxu0 0.0
        %9169 = vmatprep.subr.mxu0 0.0
        %9170 = vmatpush1.msra.mxu0 0.0
        %9171 = vmatprep.subr.mxu0 0.0
        %9172 = vmatpush1.msra.mxu0 0.0
        %9173 = vmatprep.mubr.f32.mxu0 0.0
        %v9174 = vand.u32 %v8868, 4294901760
        %v9175 = vsub.f32 %v8868, %v9174
        %v9176 = vand.u32 %v9175, 4294901760
        %9177 = vmatmul.mubr.f32.gmra.mrb[0].mxu0 %v9176
        %v9178 = vpop.f32.mrb[0].mxu0
        %v9179 = vadd.f32 %v9103, %v9178
        %v9180 = vpop.f32.mrb[0].mxu0
        %v9181 = vadd.f32 %v9105, %v9180
        %9182 = vdwg.mxu0
        %v9183 = vand.u32 %v8858, 4294901760
        %v9184 = vsub.f32 %v8858, %v9183
        %v9185 = vand.u32 %v9184, 4294901760
        %9186 = vmatprep.subr.mxu0 %v9185
        %v9187 = vand.u32 %v8857, 4294901760
        %v9188 = vsub.f32 %v8857, %v9187
        %v9189 = vand.u32 %v9188, 4294901760
        %9190 = vmatpush1.msra.mxu0 %v9189
        %9191 = vmatprep.subr.mxu0 0.0
        %9192 = vmatpush1.msra.mxu0 0.0
        %9193 = vmatprep.subr.mxu0 0.0
        %9194 = vmatpush1.msra.mxu0 0.0
        %9195 = vmatprep.subr.mxu0 0.0
        %9196 = vmatpush1.msra.mxu0 0.0
        %9197 = vmatprep.subr.mxu0 0.0
        %9198 = vmatpush1.msra.mxu0 0.0
        %9199 = vmatprep.subr.mxu0 0.0
        %9200 = vmatpush1.msra.mxu0 0.0
        %9201 = vmatprep.subr.mxu0 0.0
        %9202 = vmatpush1.msra.mxu0 0.0
        %9203 = vmatprep.subr.mxu0 0.0
        %9204 = vmatpush1.msra.mxu0 0.0
        %9205 = vmatprep.subr.mxu0 0.0
        %9206 = vmatpush1.msra.mxu0 0.0
        %9207 = vmatprep.subr.mxu0 0.0
        %9208 = vmatpush1.msra.mxu0 0.0
        %9209 = vmatprep.subr.mxu0 0.0
        %9210 = vmatpush1.msra.mxu0 0.0
        %9211 = vmatprep.subr.mxu0 0.0
        %9212 = vmatpush1.msra.mxu0 0.0
        %9213 = vmatprep.subr.mxu0 0.0
        %9214 = vmatpush1.msra.mxu0 0.0
        %9215 = vmatprep.subr.mxu0 0.0
        %9216 = vmatpush1.msra.mxu0 0.0
        %9217 = vmatprep.subr.mxu0 0.0
        %9218 = vmatpush1.msra.mxu0 0.0
        %9219 = vmatprep.subr.mxu0 0.0
        %9220 = vmatpush1.msra.mxu0 0.0
        %9221 = vmatprep.subr.mxu0 0.0
        %9222 = vmatpush1.msra.mxu0 0.0
        %9223 = vmatprep.subr.mxu0 0.0
        %9224 = vmatpush1.msra.mxu0 0.0
        %9225 = vmatprep.subr.mxu0 0.0
        %9226 = vmatpush1.msra.mxu0 0.0
        %9227 = vmatprep.subr.mxu0 0.0
        %9228 = vmatpush1.msra.mxu0 0.0
        %9229 = vmatprep.subr.mxu0 0.0
        %9230 = vmatpush1.msra.mxu0 0.0
        %9231 = vmatprep.subr.mxu0 0.0
        %9232 = vmatpush1.msra.mxu0 0.0
        %9233 = vmatprep.subr.mxu0 0.0
        %9234 = vmatpush1.msra.mxu0 0.0
        %9235 = vmatprep.subr.mxu0 0.0
        %9236 = vmatpush1.msra.mxu0 0.0
        %9237 = vmatprep.subr.mxu0 0.0
        %9238 = vmatpush1.msra.mxu0 0.0
        %9239 = vmatprep.subr.mxu0 0.0
        %9240 = vmatpush1.msra.mxu0 0.0
        %9241 = vmatprep.subr.mxu0 0.0
        %9242 = vmatpush1.msra.mxu0 0.0
        %9243 = vmatprep.subr.mxu0 0.0
        %9244 = vmatpush1.msra.mxu0 0.0
        %9245 = vmatprep.subr.mxu0 0.0
        %9246 = vmatpush1.msra.mxu0 0.0
        %9247 = vmatprep.subr.mxu0 0.0
        %9248 = vmatpush1.msra.mxu0 0.0
        %9249 = vmatprep.subr.mxu0 0.0
        %9250 = vmatpush1.msra.mxu0 0.0
        %9251 = vmatprep.subr.mxu0 0.0
        %9252 = vmatpush1.msra.mxu0 0.0
        %9253 = vmatprep.mubr.f32.mxu0 0.0
        %v9254 = vand.u32 %v8868, 4294901760
        %9255 = vmatmul.mubr.f32.gmra.mrb[0].mxu0 %v9254
        %v9256 = vpop.f32.mrb[0].mxu0
        %v9257 = vadd.f32 %v9179, %v9256
        %v9258 = vpop.f32.mrb[0].mxu0
        %v9259 = vadd.f32 %v9181, %v9258
        %9260 = vdwg.mxu0
        %v9261 = vand.u32 %v8858, 4294901760
        %9262 = vmatprep.subr.mxu0 %v9261
        %v9263 = vand.u32 %v8857, 4294901760
        %9264 = vmatpush1.msra.mxu0 %v9263
        %9265 = vmatprep.subr.mxu0 0.0
        %9266 = vmatpush1.msra.mxu0 0.0
        %9267 = vmatprep.subr.mxu0 0.0
        %9268 = vmatpush1.msra.mxu0 0.0
        %9269 = vmatprep.subr.mxu0 0.0
        %9270 = vmatpush1.msra.mxu0 0.0
        %9271 = vmatprep.subr.mxu0 0.0
        %9272 = vmatpush1.msra.mxu0 0.0
        %9273 = vmatprep.subr.mxu0 0.0
        %9274 = vmatpush1.msra.mxu0 0.0
        %9275 = vmatprep.subr.mxu0 0.0
        %9276 = vmatpush1.msra.mxu0 0.0
        %9277 = vmatprep.subr.mxu0 0.0
        %9278 = vmatpush1.msra.mxu0 0.0
        %9279 = vmatprep.subr.mxu0 0.0
        %9280 = vmatpush1.msra.mxu0 0.0
        %9281 = vmatprep.subr.mxu0 0.0
        %9282 = vmatpush1.msra.mxu0 0.0
        %9283 = vmatprep.subr.mxu0 0.0
        %9284 = vmatpush1.msra.mxu0 0.0
        %9285 = vmatprep.subr.mxu0 0.0
        %9286 = vmatpush1.msra.mxu0 0.0
        %9287 = vmatprep.subr.mxu0 0.0
        %9288 = vmatpush1.msra.mxu0 0.0
        %9289 = vmatprep.subr.mxu0 0.0
        %9290 = vmatpush1.msra.mxu0 0.0
        %9291 = vmatprep.subr.mxu0 0.0
        %9292 = vmatpush1.msra.mxu0 0.0
        %9293 = vmatprep.subr.mxu0 0.0
        %9294 = vmatpush1.msra.mxu0 0.0
        %9295 = vmatprep.subr.mxu0 0.0
        %9296 = vmatpush1.msra.mxu0 0.0
        %9297 = vmatprep.subr.mxu0 0.0
        %9298 = vmatpush1.msra.mxu0 0.0
        %9299 = vmatprep.subr.mxu0 0.0
        %9300 = vmatpush1.msra.mxu0 0.0
        %9301 = vmatprep.subr.mxu0 0.0
        %9302 = vmatpush1.msra.mxu0 0.0
        %9303 = vmatprep.subr.mxu0 0.0
        %9304 = vmatpush1.msra.mxu0 0.0
        %9305 = vmatprep.subr.mxu0 0.0
        %9306 = vmatpush1.msra.mxu0 0.0
        %9307 = vmatprep.subr.mxu0 0.0
        %9308 = vmatpush1.msra.mxu0 0.0
        %9309 = vmatprep.subr.mxu0 0.0
        %9310 = vmatpush1.msra.mxu0 0.0
        %9311 = vmatprep.subr.mxu0 0.0
        %9312 = vmatpush1.msra.mxu0 0.0
        %9313 = vmatprep.subr.mxu0 0.0
        %9314 = vmatpush1.msra.mxu0 0.0
        %9315 = vmatprep.subr.mxu0 0.0
        %9316 = vmatpush1.msra.mxu0 0.0
        %9317 = vmatprep.subr.mxu0 0.0
        %9318 = vmatpush1.msra.mxu0 0.0
        %9319 = vmatprep.subr.mxu0 0.0
        %9320 = vmatpush1.msra.mxu0 0.0
        %9321 = vmatprep.subr.mxu0 0.0
        %9322 = vmatpush1.msra.mxu0 0.0
        %9323 = vmatprep.subr.mxu0 0.0
        %9324 = vmatpush1.msra.mxu0 0.0
        %9325 = vmatprep.subr.mxu0 0.0
        %9326 = vmatpush1.msra.mxu0 0.0
        %9327 = vmatprep.mubr.f32.mxu0 0.0
        %v9328 = vand.u32 %v8868, 4294901760
        %9329 = vmatmul.mubr.f32.gmra.mrb[0].mxu0 %v9328
        %v9330 = vpop.f32.mrb[0].mxu0
        %v9331 = vadd.f32 %v9257, %v9330
        %v9332 = vpop.f32.mrb[0].mxu0
        %v9333 = vadd.f32 %v9259, %v9332
        %9334 = vdwg.mxu0
        %9335 = vmatprep.subr.mxu0 0.0
        %v9336 = vand.u32 %v8859, 4294901760
        %9337 = vmatpush1.msra.mxu0 %v9336
        %9338 = vmatprep.subr.mxu0 0.0
        %9339 = vmatpush1.msra.mxu0 0.0
        %9340 = vmatprep.subr.mxu0 0.0
        %9341 = vmatpush1.msra.mxu0 0.0
        %9342 = vmatprep.subr.mxu0 0.0
        %9343 = vmatpush1.msra.mxu0 0.0
        %9344 = vmatprep.subr.mxu0 0.0
        %9345 = vmatpush1.msra.mxu0 0.0
        %9346 = vmatprep.subr.mxu0 0.0
        %9347 = vmatpush1.msra.mxu0 0.0
        %9348 = vmatprep.subr.mxu0 0.0
        %9349 = vmatpush1.msra.mxu0 0.0
        %9350 = vmatprep.subr.mxu0 0.0
        %9351 = vmatpush1.msra.mxu0 0.0
        %9352 = vmatprep.subr.mxu0 0.0
        %9353 = vmatpush1.msra.mxu0 0.0
        %9354 = vmatprep.subr.mxu0 0.0
        %9355 = vmatpush1.msra.mxu0 0.0
        %9356 = vmatprep.subr.mxu0 0.0
        %9357 = vmatpush1.msra.mxu0 0.0
        %9358 = vmatprep.subr.mxu0 0.0
        %9359 = vmatpush1.msra.mxu0 0.0
        %9360 = vmatprep.subr.mxu0 0.0
        %9361 = vmatpush1.msra.mxu0 0.0
        %9362 = vmatprep.subr.mxu0 0.0
        %9363 = vmatpush1.msra.mxu0 0.0
        %9364 = vmatprep.subr.mxu0 0.0
        %9365 = vmatpush1.msra.mxu0 0.0
        %9366 = vmatprep.subr.mxu0 0.0
        %9367 = vmatpush1.msra.mxu0 0.0
        %9368 = vmatprep.subr.mxu0 0.0
        %9369 = vmatpush1.msra.mxu0 0.0
        %9370 = vmatprep.subr.mxu0 0.0
        %9371 = vmatpush1.msra.mxu0 0.0
        %9372 = vmatprep.subr.mxu0 0.0
        %9373 = vmatpush1.msra.mxu0 0.0
        %9374 = vmatprep.subr.mxu0 0.0
        %9375 = vmatpush1.msra.mxu0 0.0
        %9376 = vmatprep.subr.mxu0 0.0
        %9377 = vmatpush1.msra.mxu0 0.0
        %9378 = vmatprep.subr.mxu0 0.0
        %9379 = vmatpush1.msra.mxu0 0.0
        %9380 = vmatprep.subr.mxu0 0.0
        %9381 = vmatpush1.msra.mxu0 0.0
        %9382 = vmatprep.subr.mxu0 0.0
        %9383 = vmatpush1.msra.mxu0 0.0
        %9384 = vmatprep.subr.mxu0 0.0
        %9385 = vmatpush1.msra.mxu0 0.0
        %9386 = vmatprep.subr.mxu0 0.0
        %9387 = vmatpush1.msra.mxu0 0.0
        %9388 = vmatprep.subr.mxu0 0.0
        %9389 = vmatpush1.msra.mxu0 0.0
        %9390 = vmatprep.subr.mxu0 0.0
        %9391 = vmatpush1.msra.mxu0 0.0
        %9392 = vmatprep.subr.mxu0 0.0
        %9393 = vmatpush1.msra.mxu0 0.0
        %9394 = vmatprep.subr.mxu0 0.0
        %9395 = vmatpush1.msra.mxu0 0.0
        %9396 = vmatprep.subr.mxu0 0.0
        %9397 = vmatpush1.msra.mxu0 0.0
        %9398 = vmatprep.subr.mxu0 0.0
        %9399 = vmatpush1.msra.mxu0 0.0
        %9400 = vmatprep.mubr.f32.mxu0 0.0
        %v9401 = vand.u32 %v8868, 4294901760
        %v9402 = vsub.f32 %v8868, %v9401
        %v9403 = vand.u32 %v9402, 4294901760
        %v9404 = vsub.f32 %v9402, %v9403
        %v9405 = vand.u32 %v9404, 4294901760
        %9406 = vmatmul.mubr.f32.gmra.mrb[0].mxu0 %v9405
        %v9407 = vpop.f32.mrb[0].mxu0
        %v9408 = vadd.f32 %v8865, %v9407
        %v9409 = vpop.f32.mrb[0].mxu0
        %9410 = vdwg.mxu0
        %9411 = vmatprep.subr.mxu0 0.0
        %v9412 = vand.u32 %v8859, 4294901760
        %v9413 = vsub.f32 %v8859, %v9412
        %v9414 = vand.u32 %v9413, 4294901760
        %v9415 = vsub.f32 %v9413, %v9414
        %v9416 = vand.u32 %v9415, 4294901760
        %9417 = vmatpush1.msra.mxu0 %v9416
        %9418 = vmatprep.subr.mxu0 0.0
        %9419 = vmatpush1.msra.mxu0 0.0
        %9420 = vmatprep.subr.mxu0 0.0
        %9421 = vmatpush1.msra.mxu0 0.0
        %9422 = vmatprep.subr.mxu0 0.0
        %9423 = vmatpush1.msra.mxu0 0.0
        %9424 = vmatprep.subr.mxu0 0.0
        %9425 = vmatpush1.msra.mxu0 0.0
        %9426 = vmatprep.subr.mxu0 0.0
        %9427 = vmatpush1.msra.mxu0 0.0
        %9428 = vmatprep.subr.mxu0 0.0
        %9429 = vmatpush1.msra.mxu0 0.0
        %9430 = vmatprep.subr.mxu0 0.0
        %9431 = vmatpush1.msra.mxu0 0.0
        %9432 = vmatprep.subr.mxu0 0.0
        %9433 = vmatpush1.msra.mxu0 0.0
        %9434 = vmatprep.subr.mxu0 0.0
        %9435 = vmatpush1.msra.mxu0 0.0
        %9436 = vmatprep.subr.mxu0 0.0
        %9437 = vmatpush1.msra.mxu0 0.0
        %9438 = vmatprep.subr.mxu0 0.0
        %9439 = vmatpush1.msra.mxu0 0.0
        %9440 = vmatprep.subr.mxu0 0.0
        %9441 = vmatpush1.msra.mxu0 0.0
        %9442 = vmatprep.subr.mxu0 0.0
        %9443 = vmatpush1.msra.mxu0 0.0
        %9444 = vmatprep.subr.mxu0 0.0
        %9445 = vmatpush1.msra.mxu0 0.0
        %9446 = vmatprep.subr.mxu0 0.0
        %9447 = vmatpush1.msra.mxu0 0.0
        %9448 = vmatprep.subr.mxu0 0.0
        %9449 = vmatpush1.msra.mxu0 0.0
        %9450 = vmatprep.subr.mxu0 0.0
        %9451 = vmatpush1.msra.mxu0 0.0
        %9452 = vmatprep.subr.mxu0 0.0
        %9453 = vmatpush1.msra.mxu0 0.0
        %9454 = vmatprep.subr.mxu0 0.0
        %9455 = vmatpush1.msra.mxu0 0.0
        %9456 = vmatprep.subr.mxu0 0.0
        %9457 = vmatpush1.msra.mxu0 0.0
        %9458 = vmatprep.subr.mxu0 0.0
        %9459 = vmatpush1.msra.mxu0 0.0
        %9460 = vmatprep.subr.mxu0 0.0
        %9461 = vmatpush1.msra.mxu0 0.0
        %9462 = vmatprep.subr.mxu0 0.0
        %9463 = vmatpush1.msra.mxu0 0.0
        %9464 = vmatprep.subr.mxu0 0.0
        %9465 = vmatpush1.msra.mxu0 0.0
        %9466 = vmatprep.subr.mxu0 0.0
        %9467 = vmatpush1.msra.mxu0 0.0
        %9468 = vmatprep.subr.mxu0 0.0
        %9469 = vmatpush1.msra.mxu0 0.0
        %9470 = vmatprep.subr.mxu0 0.0
        %9471 = vmatpush1.msra.mxu0 0.0
        %9472 = vmatprep.subr.mxu0 0.0
        %9473 = vmatpush1.msra.mxu0 0.0
        %9474 = vmatprep.subr.mxu0 0.0
        %9475 = vmatpush1.msra.mxu0 0.0
        %9476 = vmatprep.subr.mxu0 0.0
        %9477 = vmatpush1.msra.mxu0 0.0
        %9478 = vmatprep.subr.mxu0 0.0
        %9479 = vmatpush1.msra.mxu0 0.0
        %9480 = vmatprep.mubr.f32.mxu0 0.0
        %v9481 = vand.u32 %v8868, 4294901760
        %9482 = vmatmul.mubr.f32.gmra.mrb[0].mxu0 %v9481
        %v9483 = vpop.f32.mrb[0].mxu0
        %v9484 = vadd.f32 %v9408, %v9483
        %v9485 = vpop.f32.mrb[0].mxu0
        %9486 = vdwg.mxu0
        %9487 = vmatprep.subr.mxu0 0.0
        %v9488 = vand.u32 %v8859, 4294901760
        %v9489 = vsub.f32 %v8859, %v9488
        %9490 = vmatpush1.msra.mxu0 %v9489
        %9491 = vmatprep.subr.mxu0 0.0
        %9492 = vmatpush1.msra.mxu0 0.0
        %9493 = vmatprep.subr.mxu0 0.0
        %9494 = vmatpush1.msra.mxu0 0.0
        %9495 = vmatprep.subr.mxu0 0.0
        %9496 = vmatpush1.msra.mxu0 0.0
        %9497 = vmatprep.subr.mxu0 0.0
        %9498 = vmatpush1.msra.mxu0 0.0
        %9499 = vmatprep.subr.mxu0 0.0
        %9500 = vmatpush1.msra.mxu0 0.0
        %9501 = vmatprep.subr.mxu0 0.0
        %9502 = vmatpush1.msra.mxu0 0.0
        %9503 = vmatprep.subr.mxu0 0.0
        %9504 = vmatpush1.msra.mxu0 0.0
        %9505 = vmatprep.subr.mxu0 0.0
        %9506 = vmatpush1.msra.mxu0 0.0
        %9507 = vmatprep.subr.mxu0 0.0
        %9508 = vmatpush1.msra.mxu0 0.0
        %9509 = vmatprep.subr.mxu0 0.0
        %9510 = vmatpush1.msra.mxu0 0.0
        %9511 = vmatprep.subr.mxu0 0.0
        %9512 = vmatpush1.msra.mxu0 0.0
        %9513 = vmatprep.subr.mxu0 0.0
        %9514 = vmatpush1.msra.mxu0 0.0
        %9515 = vmatprep.subr.mxu0 0.0
        %9516 = vmatpush1.msra.mxu0 0.0
        %9517 = vmatprep.subr.mxu0 0.0
        %9518 = vmatpush1.msra.mxu0 0.0
        %9519 = vmatprep.subr.mxu0 0.0
        %9520 = vmatpush1.msra.mxu0 0.0
        %9521 = vmatprep.subr.mxu0 0.0
        %9522 = vmatpush1.msra.mxu0 0.0
        %9523 = vmatprep.subr.mxu0 0.0
        %9524 = vmatpush1.msra.mxu0 0.0
        %9525 = vmatprep.subr.mxu0 0.0
        %9526 = vmatpush1.msra.mxu0 0.0
        %9527 = vmatprep.subr.mxu0 0.0
        %9528 = vmatpush1.msra.mxu0 0.0
        %9529 = vmatprep.subr.mxu0 0.0
        %9530 = vmatpush1.msra.mxu0 0.0
        %9531 = vmatprep.subr.mxu0 0.0
        %9532 = vmatpush1.msra.mxu0 0.0
        %9533 = vmatprep.subr.mxu0 0.0
        %9534 = vmatpush1.msra.mxu0 0.0
        %9535 = vmatprep.subr.mxu0 0.0
        %9536 = vmatpush1.msra.mxu0 0.0
        %9537 = vmatprep.subr.mxu0 0.0
        %9538 = vmatpush1.msra.mxu0 0.0
        %9539 = vmatprep.subr.mxu0 0.0
        %9540 = vmatpush1.msra.mxu0 0.0
        %9541 = vmatprep.subr.mxu0 0.0
        %9542 = vmatpush1.msra.mxu0 0.0
        %9543 = vmatprep.subr.mxu0 0.0
        %9544 = vmatpush1.msra.mxu0 0.0
        %9545 = vmatprep.subr.mxu0 0.0
        %9546 = vmatpush1.msra.mxu0 0.0
        %9547 = vmatprep.subr.mxu0 0.0
        %9548 = vmatpush1.msra.mxu0 0.0
        %9549 = vmatprep.subr.mxu0 0.0
        %9550 = vmatpush1.msra.mxu0 0.0
        %9551 = vmatprep.subr.mxu0 0.0
        %9552 = vmatpush1.msra.mxu0 0.0
        %9553 = vmatprep.mubr.f32.mxu0 0.0
        %v9554 = vand.u32 %v8868, 4294901760
        %v9555 = vsub.f32 %v8868, %v9554
        %9556 = vmatmul.mubr.f32.gmra.mrb[0].mxu0 %v9555
        %v9557 = vpop.f32.mrb[0].mxu0
        %v9558 = vadd.f32 %v9484, %v9557
        %v9559 = vpop.f32.mrb[0].mxu0
        %9560 = vdwg.mxu0
        %9561 = vmatprep.subr.mxu0 0.0
        %v9562 = vand.u32 %v8859, 4294901760
        %9563 = vmatpush1.msra.mxu0 %v9562
        %9564 = vmatprep.subr.mxu0 0.0
        %9565 = vmatpush1.msra.mxu0 0.0
        %9566 = vmatprep.subr.mxu0 0.0
        %9567 = vmatpush1.msra.mxu0 0.0
        %9568 = vmatprep.subr.mxu0 0.0
        %9569 = vmatpush1.msra.mxu0 0.0
        %9570 = vmatprep.subr.mxu0 0.0
        %9571 = vmatpush1.msra.mxu0 0.0
        %9572 = vmatprep.subr.mxu0 0.0
        %9573 = vmatpush1.msra.mxu0 0.0
        %9574 = vmatprep.subr.mxu0 0.0
        %9575 = vmatpush1.msra.mxu0 0.0
        %9576 = vmatprep.subr.mxu0 0.0
        %9577 = vmatpush1.msra.mxu0 0.0
        %9578 = vmatprep.subr.mxu0 0.0
        %9579 = vmatpush1.msra.mxu0 0.0
        %9580 = vmatprep.subr.mxu0 0.0
        %9581 = vmatpush1.msra.mxu0 0.0
        %9582 = vmatprep.subr.mxu0 0.0
        %9583 = vmatpush1.msra.mxu0 0.0
        %9584 = vmatprep.subr.mxu0 0.0
        %9585 = vmatpush1.msra.mxu0 0.0
        %9586 = vmatprep.subr.mxu0 0.0
        %9587 = vmatpush1.msra.mxu0 0.0
        %9588 = vmatprep.subr.mxu0 0.0
        %9589 = vmatpush1.msra.mxu0 0.0
        %9590 = vmatprep.subr.mxu0 0.0
        %9591 = vmatpush1.msra.mxu0 0.0
        %9592 = vmatprep.subr.mxu0 0.0
        %9593 = vmatpush1.msra.mxu0 0.0
        %9594 = vmatprep.subr.mxu0 0.0
        %9595 = vmatpush1.msra.mxu0 0.0
        %9596 = vmatprep.subr.mxu0 0.0
        %9597 = vmatpush1.msra.mxu0 0.0
        %9598 = vmatprep.subr.mxu0 0.0
        %9599 = vmatpush1.msra.mxu0 0.0
        %9600 = vmatprep.subr.mxu0 0.0
        %9601 = vmatpush1.msra.mxu0 0.0
        %9602 = vmatprep.subr.mxu0 0.0
        %9603 = vmatpush1.msra.mxu0 0.0
        %9604 = vmatprep.subr.mxu0 0.0
        %9605 = vmatpush1.msra.mxu0 0.0
        %9606 = vmatprep.subr.mxu0 0.0
        %9607 = vmatpush1.msra.mxu0 0.0
        %9608 = vmatprep.subr.mxu0 0.0
        %9609 = vmatpush1.msra.mxu0 0.0
        %9610 = vmatprep.subr.mxu0 0.0
        %9611 = vmatpush1.msra.mxu0 0.0
        %9612 = vmatprep.subr.mxu0 0.0
        %9613 = vmatpush1.msra.mxu0 0.0
        %9614 = vmatprep.subr.mxu0 0.0
        %9615 = vmatpush1.msra.mxu0 0.0
        %9616 = vmatprep.subr.mxu0 0.0
        %9617 = vmatpush1.msra.mxu0 0.0
        %9618 = vmatprep.subr.mxu0 0.0
        %9619 = vmatpush1.msra.mxu0 0.0
        %9620 = vmatprep.subr.mxu0 0.0
        %9621 = vmatpush1.msra.mxu0 0.0
        %9622 = vmatprep.subr.mxu0 0.0
        %9623 = vmatpush1.msra.mxu0 0.0
        %9624 = vmatprep.subr.mxu0 0.0
        %9625 = vmatpush1.msra.mxu0 0.0
        %9626 = vmatprep.mubr.f32.mxu0 0.0
        %v9627 = vand.u32 %v8868, 4294901760
        %v9628 = vsub.f32 %v8868, %v9627
        %v9629 = vand.u32 %v9628, 4294901760
        %9630 = vmatmul.mubr.f32.gmra.mrb[0].mxu0 %v9629
        %v9631 = vpop.f32.mrb[0].mxu0
        %v9632 = vadd.f32 %v9558, %v9631
        %v9633 = vpop.f32.mrb[0].mxu0
        %9634 = vdwg.mxu0
        %9635 = vmatprep.subr.mxu0 0.0
        %v9636 = vand.u32 %v8859, 4294901760
        %v9637 = vsub.f32 %v8859, %v9636
        %v9638 = vand.u32 %v9637, 4294901760
        %9639 = vmatpush1.msra.mxu0 %v9638
        %9640 = vmatprep.subr.mxu0 0.0
        %9641 = vmatpush1.msra.mxu0 0.0
        %9642 = vmatprep.subr.mxu0 0.0
        %9643 = vmatpush1.msra.mxu0 0.0
        %9644 = vmatprep.subr.mxu0 0.0
        %9645 = vmatpush1.msra.mxu0 0.0
        %9646 = vmatprep.subr.mxu0 0.0
        %9647 = vmatpush1.msra.mxu0 0.0
        %9648 = vmatprep.subr.mxu0 0.0
        %9649 = vmatpush1.msra.mxu0 0.0
        %9650 = vmatprep.subr.mxu0 0.0
        %9651 = vmatpush1.msra.mxu0 0.0
        %9652 = vmatprep.subr.mxu0 0.0
        %9653 = vmatpush1.msra.mxu0 0.0
        %9654 = vmatprep.subr.mxu0 0.0
        %9655 = vmatpush1.msra.mxu0 0.0
        %9656 = vmatprep.subr.mxu0 0.0
        %9657 = vmatpush1.msra.mxu0 0.0
        %9658 = vmatprep.subr.mxu0 0.0
        %9659 = vmatpush1.msra.mxu0 0.0
        %9660 = vmatprep.subr.mxu0 0.0
        %9661 = vmatpush1.msra.mxu0 0.0
        %9662 = vmatprep.subr.mxu0 0.0
        %9663 = vmatpush1.msra.mxu0 0.0
        %9664 = vmatprep.subr.mxu0 0.0
        %9665 = vmatpush1.msra.mxu0 0.0
        %9666 = vmatprep.subr.mxu0 0.0
        %9667 = vmatpush1.msra.mxu0 0.0
        %9668 = vmatprep.subr.mxu0 0.0
        %9669 = vmatpush1.msra.mxu0 0.0
        %9670 = vmatprep.subr.mxu0 0.0
        %9671 = vmatpush1.msra.mxu0 0.0
        %9672 = vmatprep.subr.mxu0 0.0
        %9673 = vmatpush1.msra.mxu0 0.0
        %9674 = vmatprep.subr.mxu0 0.0
        %9675 = vmatpush1.msra.mxu0 0.0
        %9676 = vmatprep.subr.mxu0 0.0
        %9677 = vmatpush1.msra.mxu0 0.0
        %9678 = vmatprep.subr.mxu0 0.0
        %9679 = vmatpush1.msra.mxu0 0.0
        %9680 = vmatprep.subr.mxu0 0.0
        %9681 = vmatpush1.msra.mxu0 0.0
        %9682 = vmatprep.subr.mxu0 0.0
        %9683 = vmatpush1.msra.mxu0 0.0
        %9684 = vmatprep.subr.mxu0 0.0
        %9685 = vmatpush1.msra.mxu0 0.0
        %9686 = vmatprep.subr.mxu0 0.0
        %9687 = vmatpush1.msra.mxu0 0.0
        %9688 = vmatprep.subr.mxu0 0.0
        %9689 = vmatpush1.msra.mxu0 0.0
        %9690 = vmatprep.subr.mxu0 0.0
        %9691 = vmatpush1.msra.mxu0 0.0
        %9692 = vmatprep.subr.mxu0 0.0
        %9693 = vmatpush1.msra.mxu0 0.0
        %9694 = vmatprep.subr.mxu0 0.0
        %9695 = vmatpush1.msra.mxu0 0.0
        %9696 = vmatprep.subr.mxu0 0.0
        %9697 = vmatpush1.msra.mxu0 0.0
        %9698 = vmatprep.subr.mxu0 0.0
        %9699 = vmatpush1.msra.mxu0 0.0
        %9700 = vmatprep.subr.mxu0 0.0
        %9701 = vmatpush1.msra.mxu0 0.0
        %9702 = vmatprep.mubr.f32.mxu0 0.0
        %v9703 = vand.u32 %v8868, 4294901760
        %9704 = vmatmul.mubr.f32.gmra.mrb[0].mxu0 %v9703
        %v9705 = vpop.f32.mrb[0].mxu0
        %v9706 = vadd.f32 %v9632, %v9705
        %v9707 = vpop.f32.mrb[0].mxu0
        %9708 = vdwg.mxu0
        %9709 = vmatprep.subr.mxu0 0.0
        %v9710 = vand.u32 %v8859, 4294901760
        %9711 = vmatpush1.msra.mxu0 %v9710
        %9712 = vmatprep.subr.mxu0 0.0
        %9713 = vmatpush1.msra.mxu0 0.0
        %9714 = vmatprep.subr.mxu0 0.0
        %9715 = vmatpush1.msra.mxu0 0.0
        %9716 = vmatprep.subr.mxu0 0.0
        %9717 = vmatpush1.msra.mxu0 0.0
        %9718 = vmatprep.subr.mxu0 0.0
        %9719 = vmatpush1.msra.mxu0 0.0
        %9720 = vmatprep.subr.mxu0 0.0
        %9721 = vmatpush1.msra.mxu0 0.0
        %9722 = vmatprep.subr.mxu0 0.0
        %9723 = vmatpush1.msra.mxu0 0.0
        %9724 = vmatprep.subr.mxu0 0.0
        %9725 = vmatpush1.msra.mxu0 0.0
        %9726 = vmatprep.subr.mxu0 0.0
        %9727 = vmatpush1.msra.mxu0 0.0
        %9728 = vmatprep.subr.mxu0 0.0
        %9729 = vmatpush1.msra.mxu0 0.0
        %9730 = vmatprep.subr.mxu0 0.0
        %9731 = vmatpush1.msra.mxu0 0.0
        %9732 = vmatprep.subr.mxu0 0.0
        %9733 = vmatpush1.msra.mxu0 0.0
        %9734 = vmatprep.subr.mxu0 0.0
        %9735 = vmatpush1.msra.mxu0 0.0
        %9736 = vmatprep.subr.mxu0 0.0
        %9737 = vmatpush1.msra.mxu0 0.0
        %9738 = vmatprep.subr.mxu0 0.0
        %9739 = vmatpush1.msra.mxu0 0.0
        %9740 = vmatprep.subr.mxu0 0.0
        %9741 = vmatpush1.msra.mxu0 0.0
        %9742 = vmatprep.subr.mxu0 0.0
        %9743 = vmatpush1.msra.mxu0 0.0
        %9744 = vmatprep.subr.mxu0 0.0
        %9745 = vmatpush1.msra.mxu0 0.0
        %9746 = vmatprep.subr.mxu0 0.0
        %9747 = vmatpush1.msra.mxu0 0.0
        %9748 = vmatprep.subr.mxu0 0.0
        %9749 = vmatpush1.msra.mxu0 0.0
        %9750 = vmatprep.subr.mxu0 0.0
        %9751 = vmatpush1.msra.mxu0 0.0
        %9752 = vmatprep.subr.mxu0 0.0
        %9753 = vmatpush1.msra.mxu0 0.0
        %9754 = vmatprep.subr.mxu0 0.0
        %9755 = vmatpush1.msra.mxu0 0.0
        %9756 = vmatprep.subr.mxu0 0.0
        %9757 = vmatpush1.msra.mxu0 0.0
        %9758 = vmatprep.subr.mxu0 0.0
        %9759 = vmatpush1.msra.mxu0 0.0
        %9760 = vmatprep.subr.mxu0 0.0
        %9761 = vmatpush1.msra.mxu0 0.0
        %9762 = vmatprep.subr.mxu0 0.0
        %9763 = vmatpush1.msra.mxu0 0.0
        %9764 = vmatprep.subr.mxu0 0.0
        %9765 = vmatpush1.msra.mxu0 0.0
        %9766 = vmatprep.subr.mxu0 0.0
        %9767 = vmatpush1.msra.mxu0 0.0
        %9768 = vmatprep.subr.mxu0 0.0
        %9769 = vmatpush1.msra.mxu0 0.0
        %9770 = vmatprep.subr.mxu0 0.0
        %9771 = vmatpush1.msra.mxu0 0.0
        %9772 = vmatprep.subr.mxu0 0.0
        %9773 = vmatpush1.msra.mxu0 0.0
        %9774 = vmatprep.mubr.f32.mxu0 0.0
        %v9775 = vand.u32 %v8868, 4294901760
        %9776 = vmatmul.mubr.f32.gmra.mrb[0].mxu0 %v9775
        %v9777 = vpop.f32.mrb[0].mxu0
        %v9778 = vadd.f32 %v9706, %v9777
        %v9779 = vpop.f32.mrb[0].mxu0
        %9780 = vdwg.mxu0
        %9781 = vst [vmem:[%s271] sm:$0xff] %v9331
        %9782 = vst [vmem:[%s271 + $0x8] sm:$0xff] %v9333
        %9783 = vst [vmem:[%s271 + $0x10] sm:$0xff] %v9778
        %s9784 = sand.u32 %s181, 1
        %s9785 = scalar_lea.sflag [#allocation3], %s9784
        %s9786 = sand.u32 %s181, 1
        %s9787 = smul.addr %s9786, 24
        %s9788 = scalar_lea.vmem [#allocation2], %s9787
        // Predicated region
        $region49: #{tpu_custom_call.1} parent=47 // pred_check
          %p9789 = pneg %p191
        $region50: #{tpu_custom_call.1} parent=47 // pred_check_branch
          %9791 = sbr.rel (%p9789) target = $region52
        $region51: #{tpu_custom_call.1} parent=47 // pred_region
          %s9793 = ssub.s32 384, 384
          %9794 = vsyncadd %s9785, %s9793
          %s9795 = smul.addr %s21, 3
          %s9796 = smul.addr %s9795, 128
          %s9797 = scalar_lea.hbm %s7, %s9796
          %s9799 = sshll.u32 %s9788, 4
          %s9800 = int_to_ptr.vmem [resolvable:$true] %s9799
          %9802 = dma.vmem_to_hbm [thread:$0]  %s9800, 384, %s9797, %s9785
        $region52: #{tpu_custom_call.1} parent=47 // pred_fallthru
          _
      $region48: #{tpu_custom_call.1} parent=5 // pred_fallthru
        _
      %p9803 = scmp.le.s32.totalorder 2, %s16
      // Predicated region
      $region53: #{tpu_custom_call.1} parent=5 // pred_check
        %p9804 = pneg %p9803
      $region54: #{tpu_custom_call.1} parent=5 // pred_check_branch
        %9806 = sbr.rel (%p9804) target = $region56
      $region55: #{tpu_custom_call.1} parent=5 // pred_region
        %s9807 = ssub.s32 %s16, 2
        // Predicated region
        $region57: #{tpu_custom_call.1} parent=55 // pred_check
          %p9808 = pneg %p197
        $region58: #{tpu_custom_call.1} parent=55 // pred_check_branch
          %9810 = sbr.rel (%p9808) target = $region60
        $region59: #{tpu_custom_call.1} parent=55 // pred_region
          %s9811 = sand.u32 %s182, 1
          %s9812 = scalar_lea.sflag [#allocation3], %s9811
          %s9813 = sand.u32 %s182, 1
          %s9814 = smul.addr %s9813, 24
          %s9815 = scalar_lea.vmem [#allocation2], %s9814
          %9816 = dma.done %s9812, 384
        $region60: #{tpu_custom_call.1} parent=55 // pred_fallthru
          _
      $region56: #{tpu_custom_call.1} parent=5 // pred_fallthru
        _
    $region6: #{tpu_custom_call.1} parent=1 // loop_footer
      %s20 = sadd.s32 1, %s16
    $region7: #{tpu_custom_call.1} parent=1 // loop_footer_branch
      %15 = sbr.rel target = $region3
    $region8: #{tpu_custom_call.1} parent=1 // loop_exit
      _
    %9817 = vsyncpa [#allocation3], 1
    %s9818 = scalar_lea.sflag [#allocation3], 1
    %9819 = vsyncpa %s9818, 1

</llo_original>
